<compile_context>
chip_gen: v6e
topology: v6e:2x2x1
jax: 0.10.0
libtpu: 0.0.40
codegen_flags: <defaults>
</compile_context>

<pallas_src>
import functools

import numpy as np

import jax
import jax.numpy as jnp
from jax.experimental import pallas as pl
from jax.experimental.pallas import tpu as pltpu


# ----------------------------------------------------------------------------
# Kernel 1: Linear (latent -> 128*S*S, NHWC-ordered columns) + BN1 statistics
# ----------------------------------------------------------------------------
def _linear_bn_kernel(x_ref, w_ref, b_ref, o_ref, st_ref):
    # x: (B, K) f32   w: (K, N) bf16 (columns permuted to H,W,C-major)
    # b: (1, N) f32   o: (B, N) f32   st: (2, C) f32  (sum / sumsq per channel)
    out = jnp.dot(x_ref[...].astype(jnp.bfloat16), w_ref[...],
                  preferred_element_type=jnp.float32) + b_ref[...]
    o_ref[...] = out

    C = st_ref.shape[-1]                       # 128 (lane dim preserved)
    B, N = out.shape
    r = out.reshape(B * (N // C), C)           # free row-major reshape
    st_ref[0:1, :] = jnp.sum(r, axis=0, keepdims=True)
    st_ref[1:2, :] = jnp.sum(r * r, axis=0, keepdims=True)


def linear_bn_pallas(x, w, b, *, n_channels):
    B = x.shape[0]
    N = w.shape[1]
    out, st = pl.pallas_call(
        _linear_bn_kernel,
        out_shape=(jax.ShapeDtypeStruct((B, N), jnp.float32),
                   jax.ShapeDtypeStruct((2, n_channels), jnp.float32)),
    )(x, w, b)
    return out, st


# ----------------------------------------------------------------------------
# Kernel 2: fused [BN affine (+LeakyReLU)] -> [2x nearest upsample] -> [3x3 conv]
#           (+ bias, optional tanh) -> [optional sum / sumsq stats for next BN]
# ----------------------------------------------------------------------------
def _conv_block_kernel(x_ref, s_ref, t_ref, w_ref, b_ref, o_ref, *rest,
                       up, act_in, act_out, compute_stats):
    if compute_stats:
        st_ref, xpad_ref = rest
    else:
        (xpad_ref,) = rest

    Bblk, H, W, Cin = x_ref.shape
    Hr = 2 * H if up else H
    Nout = w_ref.shape[1]
    M = Bblk * Hr * W

    # Fused BatchNorm affine (+ optional LeakyReLU) on the small *pre-upsample*
    # input in f32; cast to bf16 once, before the upsample / im2col blowup.
    y = x_ref[...] * s_ref[...] + t_ref[...]
    if act_in == "leaky":
        y = jnp.where(y > 0, y, 0.2 * y)
    y = y.astype(jnp.bfloat16)

    # Nearest 2x upsample: rows doubled here (leading-dim broadcast+reshape);
    # column doubling is folded into w_ref, which has 2*Cout output columns
    # ordered (col-parity, cout).
    if up:
        y = jnp.broadcast_to(y[:, :, None, :, :], (Bblk, H, 2, W, Cin))
        y = y.reshape(Bblk, Hr, W, Cin)

    # 1-pixel zero halo in bf16 VMEM scratch.  Only zero it on the first grid
    # step: the interior is fully rewritten every step and the border rows /
    # columns are never touched afterwards.
    @pl.when(pl.program_id(0) == 0)
    def _():
        xpad_ref[...] = jnp.zeros(xpad_ref.shape, xpad_ref.dtype)

    xpad_ref[:, 1:Hr + 1, 1:W + 1, :] = y

    # im2col as 3 accumulated matmuls (one per kernel row, K = 3*Cin) slicing
    # straight from the scratch ref: 3x (not 9x) patch materialization, bf16.
    acc = jnp.zeros((M, Nout), jnp.float32)
    for ky in range(3):                                   # static unroll
        row = xpad_ref[:, ky:ky + Hr, :, :]               # (Bblk,Hr,W+2,Cin)
        taps = [row[:, :, kx:kx + W, :] for kx in range(3)]
        patch = jnp.concatenate(taps, axis=-1).reshape(M, 3 * Cin)
        wk = w_ref[ky * 3 * Cin:(ky + 1) * 3 * Cin, :]
        acc = acc + jnp.dot(patch, wk, preferred_element_type=jnp.float32)
    out = acc + b_ref[...]

    # Per-channel sum / sum-of-squares (pre-activation) for the next BatchNorm,
    # only when a next BatchNorm actually exists.
    if compute_stats:
        st_ref[0, 0:1, :] = jnp.sum(out, axis=0, keepdims=True)
        st_ref[0, 1:2, :] = jnp.sum(out * out, axis=0, keepdims=True)

    if act_out == "tanh":
        out = jnp.tanh(out)
    o_ref[...] = out                                      # dense (M, Nout) store


def _pick_bblk(B, cap=8):
    # Largest divisor of B that is <= cap while keeping >= 2 grid steps, so the
    # "parallel" batch axis can split across v7x's two TensorCores.
    best = 1
    for d in range(1, min(B, cap) + 1):
        if B % d == 0 and (B // d >= 2 or B == 1):
            best = d
    return best


def conv_block_pallas(x, scale, shift, w_eff, b_eff, *, cout, up, act_in,
                      act_out, compute_stats=True):
    B, H, W, Cin = x.shape
    Nout = w_eff.shape[1]            # 2*cout if up else cout (possibly padded)
    Hr = 2 * H if up else H
    Wo = 2 * W if up else W
    bblk = _pick_bblk(B)
    nb = B // bblk
    Mblk = bblk * Hr * W

    kernel = functools.partial(_conv_block_kernel, up=up, act_in=act_in,
                               act_out=act_out, compute_stats=compute_stats)

    out_shape = [jax.ShapeDtypeStruct((B * Hr * W, Nout), jnp.float32)]
    out_specs = [pl.BlockSpec((Mblk, Nout), lambda bi: (bi, 0))]
    if compute_stats:
        out_shape.append(jax.ShapeDtypeStruct((nb, 2, Nout), jnp.float32))
        out_specs.append(pl.BlockSpec((1, 2, Nout), lambda bi: (bi, 0, 0)))

    res = pl.pallas_call(
        kernel,
        out_shape=tuple(out_shape),
        grid=(nb,),
        in_specs=[
            pl.BlockSpec((bblk, H, W, Cin), lambda bi: (bi, 0, 0, 0)),
            pl.BlockSpec((1, Cin), lambda bi: (0, 0)),
            pl.BlockSpec((1, Cin), lambda bi: (0, 0)),
            pl.BlockSpec(w_eff.shape, lambda bi: (0, 0)),
            pl.BlockSpec((1, Nout), lambda bi: (0, 0)),
        ],
        out_specs=tuple(out_specs),
        scratch_shapes=[pltpu.VMEM((bblk, Hr + 2, W + 2, Cin), jnp.bfloat16)],
        compiler_params=pltpu.CompilerParams(
            dimension_semantics=("parallel",),
            vmem_limit_bytes=32 * 1024 * 1024),
    )(x, scale, shift, w_eff, b_eff)

    out = res[0]
    if up:
        # (B*Hr*W, 2*cout) row-major == (B, Hr, 2W, cout): free reshape.
        y = out.reshape(B, Hr, Wo, cout)
    else:
        y = out.reshape(B, Hr, W, Nout)

    if not compute_stats:
        return y, None, None, None

    st = jnp.sum(res[1], axis=0)                          # (2, Nout)
    if up:
        ssum = st[0, :cout] + st[0, cout:]
        ssq = st[1, :cout] + st[1, cout:]
    else:
        ssum, ssq = st[0], st[1]
    return y, ssum, ssq, float(B * Hr * Wo)


# ----------------------------------------------------------------------------
# BatchNorm (training mode: batch stats, biased variance) -> per-channel affine
# ----------------------------------------------------------------------------
def _bn_scale_shift(ssum, ssq, count, gamma, beta, eps):
    mean = ssum / count
    var = jnp.maximum(ssq / count - mean * mean, 0.0)
    scale = gamma * jax.lax.rsqrt(var + eps)
    shift = beta - mean * scale
    return scale.reshape(1, -1), shift.reshape(1, -1)


# ----------------------------------------------------------------------------
# Generator forward
# ----------------------------------------------------------------------------
def generator_forward(params, noise, labels, *, img_size, channels):
    S = img_size // 4
    B = noise.shape[0]

    # label embedding gather * noise (tiny glue, plain JAX)
    gen_input = params["emb"][labels] * noise                      # (B, latent)

    # l1 Linear; columns pre-permuted so the reshape below is already NHWC.
    out, st1 = linear_bn_pallas(gen_input, params["w1p"], params["b1p"],
                                n_channels=128)
    x = out.reshape(B, S, S, 128)                                  # free reshape

    # BatchNorm2d(128) (eps=1e-5, batch stats) -> applied inside next conv
    s1, t1 = _bn_scale_shift(st1[0], st1[1], B * S * S,
                             params["g_bn1"], params["b_bn1"], 1e-5)

    # Upsample(2x) + Conv 128->128; BN1 affine fused, BN2 stats as epilogue.
    x, ssum, ssq, cnt = conv_block_pallas(
        x, s1, t1, params["wce1"], params["bce1"],
        cout=128, up=True, act_in="none", act_out="none")
    s2, t2 = _bn_scale_shift(ssum, ssq, cnt,
                             params["g_bn2"], params["b_bn2"], 0.8)

    # Upsample(2x) + Conv 128->64; BN2 affine + LeakyReLU(0.2) fused.
    x, ssum, ssq, cnt = conv_block_pallas(
        x, s2, t2, params["wce2"], params["bce2"],
        cout=64, up=True, act_in="leaky", act_out="none")
    s3, t3 = _bn_scale_shift(ssum, ssq, cnt,
                             params["g_bn3"], params["b_bn3"], 0.8)

    # Conv 64->channels (lane-padded to 128) + Tanh; BN3 + LeakyReLU fused.
    # No BatchNorm follows -> skip the stats epilogue entirely (dead work).
    x, _, _, _ = conv_block_pallas(
        x, s3, t3, params["wce3"], params["bce3"],
        cout=params["wce3"].shape[1], up=False, act_in="leaky", act_out="tanh",
        compute_stats=False)

    img = x[..., :channels]
    return jnp.transpose(img, (0, 3, 1, 2))                        # NHWC->NCHW


# ----------------------------------------------------------------------------
# Parameter init (torch-like layouts) + one-time layout plumbing for kernels
# ----------------------------------------------------------------------------
def init_params(key, n_classes, latent_dim, img_size, channels):
    S = img_size // 4
    ks = jax.random.split(key, 6)
    f32 = jnp.float32
    return {
        # nn.Embedding(n_classes, latent_dim)
        "emb": jax.random.normal(ks[0], (n_classes, latent_dim), f32),
        # nn.Linear(latent_dim, 128*S*S), stored (K, N), torch column order
        # j = c*S*S + h*S + w  (matches out.view(B,128,S,S))
        "w1": 0.05 * jax.random.normal(ks[1], (latent_dim, 128 * S * S), f32),
        "b1": 0.01 * jax.random.normal(ks[2], (128 * S * S,), f32),
        # BatchNorm (torch default init)
        "g_bn1": jnp.ones((128,), f32), "b_bn1": jnp.zeros((128,), f32),
        "g_bn2": jnp.ones((128,), f32), "b_bn2": jnp.zeros((128,), f32),
        "g_bn3": jnp.ones((64,), f32), "b_bn3": jnp.zeros((64,), f32),
        # Conv weights (3, 3, Cin, Cout)
        "wc1": 0.05 * jax.random.normal(ks[3], (3, 3, 128, 128), f32),
        "bc1": jnp.zeros((128,), f32),
        "wc2": 0.05 * jax.random.normal(ks[4], (3, 3, 128, 64), f32),
        "bc2": jnp.zeros((64,), f32),
        "wc3": 0.05 * jax.random.normal(ks[5], (3, 3, 64, channels), f32),
        "bc3": jnp.zeros((channels,), f32),
    }


def _upsample_conv_weight(wc, b):
    # Fold nearest-2x *column* doubling into the 3x3 conv weight.  Result
    # columns are ordered (rx, cout) with rx = output column parity; for the
    # im2col patch column offset kxs in {0,1,2} (at original resolution):
    #   rx=0:  kxs0 <- w[:,0], kxs1 <- w[:,1]+w[:,2], kxs2 <- 0
    #   rx=1:  kxs0 <- 0,      kxs1 <- w[:,0]+w[:,1], kxs2 <- w[:,2]
    Cin, Cout = wc.shape[2], wc.shape[3]
    w = jnp.zeros((3, 3, Cin, 2, Cout), jnp.float32)
    w = w.at[:, 0, :, 0, :].set(wc[:, 0])
    w = w.at[:, 1, :, 0, :].set(wc[:, 1] + wc[:, 2])
    w = w.at[:, 1, :, 1, :].set(wc[:, 0] + wc[:, 1])
    w = w.at[:, 2, :, 1, :].set(wc[:, 2])
    w = w.reshape(9 * Cin, 2 * Cout).astype(jnp.bfloat16)
    bb = jnp.concatenate([b, b]).reshape(1, 2 * Cout).astype(jnp.float32)
    return w, bb


def prepare_params(p, *, img_size, channels):
    """One-time (outside jit) weight layout plumbing: permute / fold / pad / bf16."""
    S = img_size // 4
    n = 128 * S * S
    q = dict(p)

    # Linear: permute columns from torch (c,h,w)-major to NHWC (h,w,c)-major so
    # the post-linear reshape needs no transpose; cast MXU operand to bf16.
    idx = np.arange(n)
    perm = (idx % 128) * (S * S) + idx // 128
    q["w1p"] = p["w1"][:, perm].astype(jnp.bfloat16)
    q["b1p"] = p["b1"][perm].reshape(1, n).astype(jnp.float32)

    # Upsample+conv effective weights (2*Cout columns), bf16.
    q["wce1"], q["bce1"] = _upsample_conv_weight(p["wc1"], p["bc1"])
    q["wce2"], q["bce2"] = _upsample_conv_weight(p["wc2"], p["bc2"])

    # Last conv: zero-pad Cout (=channels) to a lane-dense 128.
    Cin, Cout = p["wc3"].shape[2], p["wc3"].shape[3]
    pad_to = max(128, ((Cout + 127) // 128) * 128)
    w3 = p["wc3"].reshape(9 * Cin, Cout)
    q["wce3"] = jnp.pad(w3, ((0, 0), (0, pad_to - Cout))).astype(jnp.bfloat16)
    q["bce3"] = jnp.pad(p["bc3"], (0, pad_to - Cout)).reshape(1, pad_to).astype(
        jnp.float32)

    # Drop raw weights that the kernels no longer use.
    for k in ("w1", "b1", "wc1", "bc1", "wc2", "bc2", "wc3", "bc3"):
        q.pop(k)
    return q


if __name__ == "__main__":
    n_classes, latent_dim, img_size, channels = 10, 32, 16, 3
    B = 2

    key = jax.random.PRNGKey(0)
    kp, kn, kl = jax.random.split(key, 3)
    params = prepare_params(
        init_params(kp, n_classes, latent_dim, img_size, channels),
        img_size=img_size, channels=channels)

    noise = jax.random.normal(kn, (B, latent_dim), jnp.float32)
    labels = jax.random.randint(kl, (B,), 0, n_classes, jnp.int32)

    fwd = jax.jit(functools.partial(generator_forward, img_size=img_size,
                                    channels=channels))
    img = fwd(params, noise, labels)
    jax.block_until_ready(img)

    assert img.shape == (B, channels, img_size, img_size), img.shape
    assert bool(jnp.all(jnp.isfinite(img)))
    assert bool(jnp.all(jnp.abs(img) <= 1.0))   # tanh output range
    print("KERNEL_OK")
</pallas_src>

<mosaic_0001>
module attributes {stable_mosaic.version = 11 : i64} {
  func.func @_linear_bn_kernel(%arg0: memref<2x32xf32, #tpu.memory_space<vmem>>, %arg1: memref<32x2048xbf16, #tpu.memory_space<vmem>>, %arg2: memref<1x2048xf32, #tpu.memory_space<vmem>>, %arg3: memref<2x2048xf32, #tpu.memory_space<vmem>>, %arg4: memref<2x128xf32, #tpu.memory_space<vmem>>) attributes {dimension_semantics = [], scalar_prefetch = 0 : i64, scratch_operands = 0 : i64, tpu.core_type = #tpu.core_type<tc>} {
    %c0 = arith.constant 0 : index
    %c0_0 = arith.constant 0 : index
    %0 = vector.load %arg0[%c0, %c0_0] : memref<2x32xf32, #tpu.memory_space<vmem>>, vector<2x32xf32>
    %1 = arith.truncf %0 : vector<2x32xf32> to vector<2x32xbf16>
    %c0_1 = arith.constant 0 : index
    %c0_2 = arith.constant 0 : index
    %2 = vector.load %arg1[%c0_1, %c0_2] : memref<32x2048xbf16, #tpu.memory_space<vmem>>, vector<32x2048xbf16>
    %cst = arith.constant dense<0.000000e+00> : vector<2x2048xf32>
    %3 = tpu.matmul %1, %2, %cst {dimension_numbers = #tpu.dot_dimension_numbers<[1], [0], [0], [1], [0, 0, 1, 1], [], []>} : vector<2x32xbf16>, vector<32x2048xbf16>, vector<2x2048xf32> -> vector<2x2048xf32>
    %c0_3 = arith.constant 0 : index
    %c0_4 = arith.constant 0 : index
    %4 = vector.load %arg2[%c0_3, %c0_4] : memref<1x2048xf32, #tpu.memory_space<vmem>>, vector<1x2048xf32>
    %5 = vector.broadcast %4 : vector<1x2048xf32> to vector<2x2048xf32>
    %6 = arith.addf %3, %5 : vector<2x2048xf32>
    %c0_5 = arith.constant 0 : index
    %c0_6 = arith.constant 0 : index
    %7 = vector.load %arg3[%c0_5, %c0_6] : memref<2x2048xf32, #tpu.memory_space<vmem>>, vector<2x2048xf32>
    tpu.vector_store %arg3[%c0_5, %c0_6], %6 {strides = array<i32>} : memref<2x2048xf32, #tpu.memory_space<vmem>>, vector<2x2048xf32>,
    %8 = vector.shape_cast %6 : vector<2x2048xf32> to vector<32x128xf32>
    %cst_7 = arith.constant dense<0.000000e+00> : vector<128xf32>
    %9 = vector.multi_reduction <add>, %8, %cst_7 [0] : vector<32x128xf32> to vector<128xf32>
    %10 = vector.shape_cast %9 : vector<128xf32> to vector<1x128xf32>
    %c0_8 = arith.constant 0 : index
    %c0_9 = arith.constant 0 : index
    %11 = vector.load %arg4[%c0_8, %c0_9] : memref<2x128xf32, #tpu.memory_space<vmem>>, vector<1x128xf32>
    tpu.vector_store %arg4[%c0_8, %c0_9], %10 {strides = array<i32>} : memref<2x128xf32, #tpu.memory_space<vmem>>, vector<1x128xf32>,
    %12 = arith.mulf %8, %8 : vector<32x128xf32>
    %cst_10 = arith.constant dense<0.000000e+00> : vector<128xf32>
    %13 = vector.multi_reduction <add>, %12, %cst_10 [0] : vector<32x128xf32> to vector<128xf32>
    %14 = vector.shape_cast %13 : vector<128xf32> to vector<1x128xf32>
    %c1 = arith.constant 1 : index
    %c0_11 = arith.constant 0 : index
    %15 = vector.load %arg4[%c1, %c0_11] : memref<2x128xf32, #tpu.memory_space<vmem>>, vector<1x128xf32>
    tpu.vector_store %arg4[%c1, %c0_11], %14 {strides = array<i32>} : memref<2x128xf32, #tpu.memory_space<vmem>>, vector<1x128xf32>,
    return
  }
}

module attributes {stable_mosaic.version = 11 : i64} {
  func.func @_conv_block_kernel(%arg0: i32, %arg1: memref<1x4x4x128xf32, #tpu.memory_space<vmem>>, %arg2: memref<1x128xf32, #tpu.memory_space<vmem>>, %arg3: memref<1x128xf32, #tpu.memory_space<vmem>>, %arg4: memref<1152x256xbf16, #tpu.memory_space<vmem>>, %arg5: memref<1x256xf32, #tpu.memory_space<vmem>>, %arg6: memref<32x256xf32, #tpu.memory_space<vmem>>, %arg7: memref<1x2x256xf32, #tpu.memory_space<vmem>>, %arg8: memref<1x10x6x128xbf16, #tpu.memory_space<vmem>>) attributes {dimension_semantics = [#tpu.dimension_semantics<parallel>], iteration_bounds = array<i64: 2>, scalar_prefetch = 0 : i64, scratch_operands = 1 : i64, tpu.core_type = #tpu.core_type<tc>, window_params = [{transform_indices = @transform_0, window_bounds = array<i64: 1, 4, 4, 128>}, {pipeline_mode = #tpu.pipeline_mode<synchronous>, transform_indices = @transform_1, window_bounds = array<i64: 1, 128>}, {pipeline_mode = #tpu.pipeline_mode<synchronous>, transform_indices = @transform_2, window_bounds = array<i64: 1, 128>}, {pipeline_mode = #tpu.pipeline_mode<synchronous>, transform_indices = @transform_3, window_bounds = array<i64: 1152, 256>}, {pipeline_mode = #tpu.pipeline_mode<synchronous>, transform_indices = @transform_4, window_bounds = array<i64: 1, 256>}, {transform_indices = @transform_5, window_bounds = array<i64: 32, 256>}, {transform_indices = @transform_6, window_bounds = array<i64: 1, 2, 256>}]} {
    %c0 = arith.constant 0 : index
    %c0_0 = arith.constant 0 : index
    %c0_1 = arith.constant 0 : index
    %c0_2 = arith.constant 0 : index
    %0 = vector.load %arg1[%c0, %c0_0, %c0_1, %c0_2] : memref<1x4x4x128xf32, #tpu.memory_space<vmem>>, vector<1x4x4x128xf32>
    %c0_3 = arith.constant 0 : index
    %c0_4 = arith.constant 0 : index
    %1 = vector.load %arg2[%c0_3, %c0_4] : memref<1x128xf32, #tpu.memory_space<vmem>>, vector<1x128xf32>
    %2 = vector.shape_cast %1 : vector<1x128xf32> to vector<1x1x1x128xf32>
    %3 = vector.broadcast %2 : vector<1x1x1x128xf32> to vector<1x4x4x128xf32>
    %4 = arith.mulf %0, %3 : vector<1x4x4x128xf32>
    %c0_5 = arith.constant 0 : index
    %c0_6 = arith.constant 0 : index
    %5 = vector.load %arg3[%c0_5, %c0_6] : memref<1x128xf32, #tpu.memory_space<vmem>>, vector<1x128xf32>
    %6 = vector.shape_cast %5 : vector<1x128xf32> to vector<1x1x1x128xf32>
    %7 = vector.broadcast %6 : vector<1x1x1x128xf32> to vector<1x4x4x128xf32>
    %8 = arith.addf %4, %7 : vector<1x4x4x128xf32>
    %9 = arith.truncf %8 : vector<1x4x4x128xf32> to vector<1x4x4x128xbf16>
    %10 = vector.shape_cast %9 : vector<1x4x4x128xbf16> to vector<1x4x1x4x128xbf16>
    %11 = vector.shape_cast %10 : vector<1x4x1x4x128xbf16> to vector<1x4x1x4x128xbf16>
    %12 = vector.broadcast %11 : vector<1x4x1x4x128xbf16> to vector<1x4x2x4x128xbf16>
    %13 = vector.shape_cast %12 : vector<1x4x2x4x128xbf16> to vector<1x8x4x128xbf16>
    %c0_i32 = arith.constant 0 : i32
    %14 = arith.cmpi eq, %arg0, %c0_i32 : i32
    %15 = arith.extui %14 : i1 to i32
    %c0_i32_7 = arith.constant 0 : i32
    %16 = arith.cmpi ne, %15, %c0_i32_7 : i32
    scf.if %16 {
      %cst_41 = arith.constant 0.000000e+00 : bf16
      %61 = vector.broadcast %cst_41 : bf16 to vector<1x10x6x128xbf16>
      %c0_42 = arith.constant 0 : index
      %c0_43 = arith.constant 0 : index
      %c0_44 = arith.constant 0 : index
      %c0_45 = arith.constant 0 : index
      %62 = vector.load %arg8[%c0_42, %c0_43, %c0_44, %c0_45] : memref<1x10x6x128xbf16, #tpu.memory_space<vmem>>, vector<1x10x6x128xbf16>
      tpu.vector_store %arg8[%c0_42, %c0_43, %c0_44, %c0_45], %61 {strides = array<i32>} : memref<1x10x6x128xbf16, #tpu.memory_space<vmem>>, vector<1x10x6x128xbf16>,
    } else {
    }
    %c0_8 = arith.constant 0 : index
    %c1 = arith.constant 1 : index
    %c1_9 = arith.constant 1 : index
    %c0_10 = arith.constant 0 : index
    %17 = vector.load %arg8[%c0_8, %c1, %c1_9, %c0_10] : memref<1x10x6x128xbf16, #tpu.memory_space<vmem>>, vector<1x8x4x128xbf16>
    tpu.vector_store %arg8[%c0_8, %c1, %c1_9, %c0_10], %13 {strides = array<i32>} : memref<1x10x6x128xbf16, #tpu.memory_space<vmem>>, vector<1x8x4x128xbf16>,
    %cst = arith.constant 0.000000e+00 : f32
    %18 = vector.broadcast %cst : f32 to vector<32x256xf32>
    %c0_11 = arith.constant 0 : index
    %c0_12 = arith.constant 0 : index
    %c0_13 = arith.constant 0 : index
    %c0_14 = arith.constant 0 : index
    %19 = vector.load %arg8[%c0_11, %c0_12, %c0_13, %c0_14] : memref<1x10x6x128xbf16, #tpu.memory_space<vmem>>, vector<1x8x6x128xbf16>
    %20 = vector.extract_strided_slice %19 {offsets = [0, 0, 0, 0], sizes = [1, 8, 4, 128], strides = [1, 1, 1, 1]} : vector<1x8x6x128xbf16> to vector<1x8x4x128xbf16>
    %21 = vector.extract_strided_slice %19 {offsets = [0, 0, 1, 0], sizes = [1, 8, 4, 128], strides = [1, 1, 1, 1]} : vector<1x8x6x128xbf16> to vector<1x8x4x128xbf16>
    %22 = vector.extract_strided_slice %19 {offsets = [0, 0, 2, 0], sizes = [1, 8, 4, 128], strides = [1, 1, 1, 1]} : vector<1x8x6x128xbf16> to vector<1x8x4x128xbf16>
    %23 = tpu.concatenate %20, %21, %22 in 3 : vector<1x8x4x128xbf16>, vector<1x8x4x128xbf16>, vector<1x8x4x128xbf16> -> vector<1x8x4x384xbf16>
    %24 = vector.shape_cast %23 : vector<1x8x4x384xbf16> to vector<32x384xbf16>
    %c0_15 = arith.constant 0 : index
    %c0_16 = arith.constant 0 : index
    %25 = vector.load %arg4[%c0_15, %c0_16] : memref<1152x256xbf16, #tpu.memory_space<vmem>>, vector<384x256xbf16>
    %cst_17 = arith.constant dense<0.000000e+00> : vector<32x256xf32>
    %26 = tpu.matmul %24, %25, %cst_17 {dimension_numbers = #tpu.dot_dimension_numbers<[1], [0], [0], [1], [0, 0, 1, 1], [], []>} : vector<32x384xbf16>, vector<384x256xbf16>, vector<32x256xf32> -> vector<32x256xf32>
    %27 = arith.addf %18, %26 : vector<32x256xf32>
    %c0_18 = arith.constant 0 : index
    %c1_19 = arith.constant 1 : index
    %c0_20 = arith.constant 0 : index
    %c0_21 = arith.constant 0 : index
    %28 = vector.load %arg8[%c0_18, %c1_19, %c0_20, %c0_21] : memref<1x10x6x128xbf16, #tpu.memory_space<vmem>>, vector<1x8x6x128xbf16>
    %29 = vector.extract_strided_slice %28 {offsets = [0, 0, 0, 0], sizes = [1, 8, 4, 128], strides = [1, 1, 1, 1]} : vector<1x8x6x128xbf16> to vector<1x8x4x128xbf16>
    %30 = vector.extract_strided_slice %28 {offsets = [0, 0, 1, 0], sizes = [1, 8, 4, 128], strides = [1, 1, 1, 1]} : vector<1x8x6x128xbf16> to vector<1x8x4x128xbf16>
    %31 = vector.extract_strided_slice %28 {offsets = [0, 0, 2, 0], sizes = [1, 8, 4, 128], strides = [1, 1, 1, 1]} : vector<1x8x6x128xbf16> to vector<1x8x4x128xbf16>
    %32 = tpu.concatenate %29, %30, %31 in 3 : vector<1x8x4x128xbf16>, vector<1x8x4x128xbf16>, vector<1x8x4x128xbf16> -> vector<1x8x4x384xbf16>
    %33 = vector.shape_cast %32 : vector<1x8x4x384xbf16> to vector<32x384xbf16>
    %c384 = arith.constant 384 : index
    %c0_22 = arith.constant 0 : index
    %34 = vector.load %arg4[%c384, %c0_22] : memref<1152x256xbf16, #tpu.memory_space<vmem>>, vector<384x256xbf16>
    %cst_23 = arith.constant dense<0.000000e+00> : vector<32x256xf32>
    %35 = tpu.matmul %33, %34, %cst_23 {dimension_numbers = #tpu.dot_dimension_numbers<[1], [0], [0], [1], [0, 0, 1, 1], [], []>} : vector<32x384xbf16>, vector<384x256xbf16>, vector<32x256xf32> -> vector<32x256xf32>
    %36 = arith.addf %27, %35 : vector<32x256xf32>
    %c0_24 = arith.constant 0 : index
    %c2 = arith.constant 2 : index
    %c0_25 = arith.constant 0 : index
    %c0_26 = arith.constant 0 : index
    %37 = vector.load %arg8[%c0_24, %c2, %c0_25, %c0_26] : memref<1x10x6x128xbf16, #tpu.memory_space<vmem>>, vector<1x8x6x128xbf16>
    %38 = vector.extract_strided_slice %37 {offsets = [0, 0, 0, 0], sizes = [1, 8, 4, 128], strides = [1, 1, 1, 1]} : vector<1x8x6x128xbf16> to vector<1x8x4x128xbf16>
    %39 = vector.extract_strided_slice %37 {offsets = [0, 0, 1, 0], sizes = [1, 8, 4, 128], strides = [1, 1, 1, 1]} : vector<1x8x6x128xbf16> to vector<1x8x4x128xbf16>
    %40 = vector.extract_strided_slice %37 {offsets = [0, 0, 2, 0], sizes = [1, 8, 4, 128], strides = [1, 1, 1, 1]} : vector<1x8x6x128xbf16> to vector<1x8x4x128xbf16>
    %41 = tpu.concatenate %38, %39, %40 in 3 : vector<1x8x4x128xbf16>, vector<1x8x4x128xbf16>, vector<1x8x4x128xbf16> -> vector<1x8x4x384xbf16>
    %42 = vector.shape_cast %41 : vector<1x8x4x384xbf16> to vector<32x384xbf16>
    %c768 = arith.constant 768 : index
    %c0_27 = arith.constant 0 : index
    %43 = vector.load %arg4[%c768, %c0_27] : memref<1152x256xbf16, #tpu.memory_space<vmem>>, vector<384x256xbf16>
    %cst_28 = arith.constant dense<0.000000e+00> : vector<32x256xf32>
    %44 = tpu.matmul %42, %43, %cst_28 {dimension_numbers = #tpu.dot_dimension_numbers<[1], [0], [0], [1], [0, 0, 1, 1], [], []>} : vector<32x384xbf16>, vector<384x256xbf16>, vector<32x256xf32> -> vector<32x256xf32>
    %45 = arith.addf %36, %44 : vector<32x256xf32>
    %c0_29 = arith.constant 0 : index
    %c0_30 = arith.constant 0 : index
    %46 = vector.load %arg5[%c0_29, %c0_30] : memref<1x256xf32, #tpu.memory_space<vmem>>, vector<1x256xf32>
    %47 = vector.broadcast %46 : vector<1x256xf32> to vector<32x256xf32>
    %48 = arith.addf %45, %47 : vector<32x256xf32>
    %cst_31 = arith.constant dense<0.000000e+00> : vector<256xf32>
    %49 = vector.multi_reduction <add>, %48, %cst_31 [0] : vector<32x256xf32> to vector<256xf32>
    %50 = vector.shape_cast %49 : vector<256xf32> to vector<1x256xf32>
    %c0_32 = arith.constant 0 : index
    %c0_33 = arith.constant 0 : index
    %c0_34 = arith.constant 0 : index
    %51 = vector.load %arg7[%c0_32, %c0_33, %c0_34] : memref<1x2x256xf32, #tpu.memory_space<vmem>>, vector<1x1x256xf32>
    %52 = vector.shape_cast %51 : vector<1x1x256xf32> to vector<1x256xf32>
    %53 = vector.shape_cast %50 : vector<1x256xf32> to vector<1x1x256xf32>
    tpu.vector_store %arg7[%c0_32, %c0_33, %c0_34], %53 {strides = array<i32>} : memref<1x2x256xf32, #tpu.memory_space<vmem>>, vector<1x1x256xf32>,
    %54 = arith.mulf %48, %48 : vector<32x256xf32>
    %cst_35 = arith.constant dense<0.000000e+00> : vector<256xf32>
    %55 = vector.multi_reduction <add>, %54, %cst_35 [0] : vector<32x256xf32> to vector<256xf32>
    %56 = vector.shape_cast %55 : vector<256xf32> to vector<1x256xf32>
    %c0_36 = arith.constant 0 : index
    %c1_37 = arith.constant 1 : index
    %c0_38 = arith.constant 0 : index
    %57 = vector.load %arg7[%c0_36, %c1_37, %c0_38] : memref<1x2x256xf32, #tpu.memory_space<vmem>>, vector<1x1x256xf32>
    %58 = vector.shape_cast %57 : vector<1x1x256xf32> to vector<1x256xf32>
    %59 = vector.shape_cast %56 : vector<1x256xf32> to vector<1x1x256xf32>
    tpu.vector_store %arg7[%c0_36, %c1_37, %c0_38], %59 {strides = array<i32>} : memref<1x2x256xf32, #tpu.memory_space<vmem>>, vector<1x1x256xf32>,
    %c0_39 = arith.constant 0 : index
    %c0_40 = arith.constant 0 : index
    %60 = vector.load %arg6[%c0_39, %c0_40] : memref<32x256xf32, #tpu.memory_space<vmem>>, vector<32x256xf32>
    tpu.vector_store %arg6[%c0_39, %c0_40], %48 {strides = array<i32>} : memref<32x256xf32, #tpu.memory_space<vmem>>, vector<32x256xf32>,
    return
  }
  func.func @transform_0(%arg0: i32) -> (i32, i32, i32, i32) {
    %c0_i32 = arith.constant 0 : i32
    %c0_i32_0 = arith.constant 0 : i32
    %c0_i32_1 = arith.constant 0 : i32
    %c0_i32_2 = arith.constant 0 : i32
    return %arg0, %c0_i32, %c0_i32_0, %c0_i32_1 : i32, i32, i32, i32
  }
  func.func @transform_1(%arg0: i32) -> (i32, i32) {
    %c0_i32 = arith.constant 0 : i32
    %c0_i32_0 = arith.constant 0 : i32
    %c0_i32_1 = arith.constant 0 : i32
    return %c0_i32, %c0_i32_0 : i32, i32
  }
  func.func @transform_2(%arg0: i32) -> (i32, i32) {
    %c0_i32 = arith.constant 0 : i32
    %c0_i32_0 = arith.constant 0 : i32
    %c0_i32_1 = arith.constant 0 : i32
    return %c0_i32, %c0_i32_0 : i32, i32
  }
  func.func @transform_3(%arg0: i32) -> (i32, i32) {
    %c0_i32 = arith.constant 0 : i32
    %c0_i32_0 = arith.constant 0 : i32
    %c0_i32_1 = arith.constant 0 : i32
    return %c0_i32, %c0_i32_0 : i32, i32
  }
  func.func @transform_4(%arg0: i32) -> (i32, i32) {
    %c0_i32 = arith.constant 0 : i32
    %c0_i32_0 = arith.constant 0 : i32
    %c0_i32_1 = arith.constant 0 : i32
    return %c0_i32, %c0_i32_0 : i32, i32
  }
  func.func @transform_5(%arg0: i32) -> (i32, i32) {
    %c0_i32 = arith.constant 0 : i32
    %c0_i32_0 = arith.constant 0 : i32
    return %arg0, %c0_i32 : i32, i32
  }
  func.func @transform_6(%arg0: i32) -> (i32, i32, i32) {
    %c0_i32 = arith.constant 0 : i32
    %c0_i32_0 = arith.constant 0 : i32
    %c0_i32_1 = arith.constant 0 : i32
    return %arg0, %c0_i32, %c0_i32_0 : i32, i32, i32
  }
}

module attributes {stable_mosaic.version = 11 : i64} {
  func.func @_conv_block_kernel(%arg0: i32, %arg1: memref<1x8x8x128xf32, #tpu.memory_space<vmem>>, %arg2: memref<1x128xf32, #tpu.memory_space<vmem>>, %arg3: memref<1x128xf32, #tpu.memory_space<vmem>>, %arg4: memref<1152x128xbf16, #tpu.memory_space<vmem>>, %arg5: memref<1x128xf32, #tpu.memory_space<vmem>>, %arg6: memref<128x128xf32, #tpu.memory_space<vmem>>, %arg7: memref<1x2x128xf32, #tpu.memory_space<vmem>>, %arg8: memref<1x18x10x128xbf16, #tpu.memory_space<vmem>>) attributes {dimension_semantics = [#tpu.dimension_semantics<parallel>], iteration_bounds = array<i64: 2>, scalar_prefetch = 0 : i64, scratch_operands = 1 : i64, tpu.core_type = #tpu.core_type<tc>, window_params = [{transform_indices = @transform_0, window_bounds = array<i64: 1, 8, 8, 128>}, {pipeline_mode = #tpu.pipeline_mode<synchronous>, transform_indices = @transform_1, window_bounds = array<i64: 1, 128>}, {pipeline_mode = #tpu.pipeline_mode<synchronous>, transform_indices = @transform_2, window_bounds = array<i64: 1, 128>}, {pipeline_mode = #tpu.pipeline_mode<synchronous>, transform_indices = @transform_3, window_bounds = array<i64: 1152, 128>}, {pipeline_mode = #tpu.pipeline_mode<synchronous>, transform_indices = @transform_4, window_bounds = array<i64: 1, 128>}, {transform_indices = @transform_5, window_bounds = array<i64: 128, 128>}, {transform_indices = @transform_6, window_bounds = array<i64: 1, 2, 128>}]} {
    %c0 = arith.constant 0 : index
    %c0_0 = arith.constant 0 : index
    %c0_1 = arith.constant 0 : index
    %c0_2 = arith.constant 0 : index
    %0 = vector.load %arg1[%c0, %c0_0, %c0_1, %c0_2] : memref<1x8x8x128xf32, #tpu.memory_space<vmem>>, vector<1x8x8x128xf32>
    %c0_3 = arith.constant 0 : index
    %c0_4 = arith.constant 0 : index
    %1 = vector.load %arg2[%c0_3, %c0_4] : memref<1x128xf32, #tpu.memory_space<vmem>>, vector<1x128xf32>
    %2 = vector.shape_cast %1 : vector<1x128xf32> to vector<1x1x1x128xf32>
    %3 = vector.broadcast %2 : vector<1x1x1x128xf32> to vector<1x8x8x128xf32>
    %4 = arith.mulf %0, %3 : vector<1x8x8x128xf32>
    %c0_5 = arith.constant 0 : index
    %c0_6 = arith.constant 0 : index
    %5 = vector.load %arg3[%c0_5, %c0_6] : memref<1x128xf32, #tpu.memory_space<vmem>>, vector<1x128xf32>
    %6 = vector.shape_cast %5 : vector<1x128xf32> to vector<1x1x1x128xf32>
    %7 = vector.broadcast %6 : vector<1x1x1x128xf32> to vector<1x8x8x128xf32>
    %8 = arith.addf %4, %7 : vector<1x8x8x128xf32>
    %cst = arith.constant 0.000000e+00 : f32
    %9 = vector.broadcast %cst : f32 to vector<1x8x8x128xf32>
    %10 = arith.cmpf ogt, %8, %9 : vector<1x8x8x128xf32>
    %cst_7 = arith.constant 2.000000e-01 : f32
    %11 = vector.broadcast %cst_7 : f32 to vector<1x8x8x128xf32>
    %12 = arith.mulf %11, %8 : vector<1x8x8x128xf32>
    %13 = arith.select %10, %8, %12 : vector<1x8x8x128xi1>, vector<1x8x8x128xf32>
    %14 = arith.truncf %13 : vector<1x8x8x128xf32> to vector<1x8x8x128xbf16>
    %15 = vector.shape_cast %14 : vector<1x8x8x128xbf16> to vector<1x8x1x8x128xbf16>
    %16 = vector.shape_cast %15 : vector<1x8x1x8x128xbf16> to vector<1x8x1x8x128xbf16>
    %17 = vector.broadcast %16 : vector<1x8x1x8x128xbf16> to vector<1x8x2x8x128xbf16>
    %18 = vector.shape_cast %17 : vector<1x8x2x8x128xbf16> to vector<1x16x8x128xbf16>
    %c0_i32 = arith.constant 0 : i32
    %19 = arith.cmpi eq, %arg0, %c0_i32 : i32
    %20 = arith.extui %19 : i1 to i32
    %c0_i32_8 = arith.constant 0 : i32
    %21 = arith.cmpi ne, %20, %c0_i32_8 : i32
    scf.if %21 {
      %cst_43 = arith.constant 0.000000e+00 : bf16
      %66 = vector.broadcast %cst_43 : bf16 to vector<1x18x10x128xbf16>
      %c0_44 = arith.constant 0 : index
      %c0_45 = arith.constant 0 : index
      %c0_46 = arith.constant 0 : index
      %c0_47 = arith.constant 0 : index
      %67 = vector.load %arg8[%c0_44, %c0_45, %c0_46, %c0_47] : memref<1x18x10x128xbf16, #tpu.memory_space<vmem>>, vector<1x18x10x128xbf16>
      tpu.vector_store %arg8[%c0_44, %c0_45, %c0_46, %c0_47], %66 {strides = array<i32>} : memref<1x18x10x128xbf16, #tpu.memory_space<vmem>>, vector<1x18x10x128xbf16>,
    } else {
    }
    %c0_9 = arith.constant 0 : index
    %c1 = arith.constant 1 : index
    %c1_10 = arith.constant 1 : index
    %c0_11 = arith.constant 0 : index
    %22 = vector.load %arg8[%c0_9, %c1, %c1_10, %c0_11] : memref<1x18x10x128xbf16, #tpu.memory_space<vmem>>, vector<1x16x8x128xbf16>
    tpu.vector_store %arg8[%c0_9, %c1, %c1_10, %c0_11], %18 {strides = array<i32>} : memref<1x18x10x128xbf16, #tpu.memory_space<vmem>>, vector<1x16x8x128xbf16>,
    %cst_12 = arith.constant 0.000000e+00 : f32
    %23 = vector.broadcast %cst_12 : f32 to vector<128x128xf32>
    %c0_13 = arith.constant 0 : index
    %c0_14 = arith.constant 0 : index
    %c0_15 = arith.constant 0 : index
    %c0_16 = arith.constant 0 : index
    %24 = vector.load %arg8[%c0_13, %c0_14, %c0_15, %c0_16] : memref<1x18x10x128xbf16, #tpu.memory_space<vmem>>, vector<1x16x10x128xbf16>
    %25 = vector.extract_strided_slice %24 {offsets = [0, 0, 0, 0], sizes = [1, 16, 8, 128], strides = [1, 1, 1, 1]} : vector<1x16x10x128xbf16> to vector<1x16x8x128xbf16>
    %26 = vector.extract_strided_slice %24 {offsets = [0, 0, 1, 0], sizes = [1, 16, 8, 128], strides = [1, 1, 1, 1]} : vector<1x16x10x128xbf16> to vector<1x16x8x128xbf16>
    %27 = vector.extract_strided_slice %24 {offsets = [0, 0, 2, 0], sizes = [1, 16, 8, 128], strides = [1, 1, 1, 1]} : vector<1x16x10x128xbf16> to vector<1x16x8x128xbf16>
    %28 = tpu.concatenate %25, %26, %27 in 3 : vector<1x16x8x128xbf16>, vector<1x16x8x128xbf16>, vector<1x16x8x128xbf16> -> vector<1x16x8x384xbf16>
    %29 = vector.shape_cast %28 : vector<1x16x8x384xbf16> to vector<128x384xbf16>
    %c0_17 = arith.constant 0 : index
    %c0_18 = arith.constant 0 : index
    %30 = vector.load %arg4[%c0_17, %c0_18] : memref<1152x128xbf16, #tpu.memory_space<vmem>>, vector<384x128xbf16>
    %cst_19 = arith.constant dense<0.000000e+00> : vector<128x128xf32>
    %31 = tpu.matmul %29, %30, %cst_19 {dimension_numbers = #tpu.dot_dimension_numbers<[1], [0], [0], [1], [0, 0, 1, 1], [], []>} : vector<128x384xbf16>, vector<384x128xbf16>, vector<128x128xf32> -> vector<128x128xf32>
    %32 = arith.addf %23, %31 : vector<128x128xf32>
    %c0_20 = arith.constant 0 : index
    %c1_21 = arith.constant 1 : index
    %c0_22 = arith.constant 0 : index
    %c0_23 = arith.constant 0 : index
    %33 = vector.load %arg8[%c0_20, %c1_21, %c0_22, %c0_23] : memref<1x18x10x128xbf16, #tpu.memory_space<vmem>>, vector<1x16x10x128xbf16>
    %34 = vector.extract_strided_slice %33 {offsets = [0, 0, 0, 0], sizes = [1, 16, 8, 128], strides = [1, 1, 1, 1]} : vector<1x16x10x128xbf16> to vector<1x16x8x128xbf16>
    %35 = vector.extract_strided_slice %33 {offsets = [0, 0, 1, 0], sizes = [1, 16, 8, 128], strides = [1, 1, 1, 1]} : vector<1x16x10x128xbf16> to vector<1x16x8x128xbf16>
    %36 = vector.extract_strided_slice %33 {offsets = [0, 0, 2, 0], sizes = [1, 16, 8, 128], strides = [1, 1, 1, 1]} : vector<1x16x10x128xbf16> to vector<1x16x8x128xbf16>
    %37 = tpu.concatenate %34, %35, %36 in 3 : vector<1x16x8x128xbf16>, vector<1x16x8x128xbf16>, vector<1x16x8x128xbf16> -> vector<1x16x8x384xbf16>
    %38 = vector.shape_cast %37 : vector<1x16x8x384xbf16> to vector<128x384xbf16>
    %c384 = arith.constant 384 : index
    %c0_24 = arith.constant 0 : index
    %39 = vector.load %arg4[%c384, %c0_24] : memref<1152x128xbf16, #tpu.memory_space<vmem>>, vector<384x128xbf16>
    %cst_25 = arith.constant dense<0.000000e+00> : vector<128x128xf32>
    %40 = tpu.matmul %38, %39, %cst_25 {dimension_numbers = #tpu.dot_dimension_numbers<[1], [0], [0], [1], [0, 0, 1, 1], [], []>} : vector<128x384xbf16>, vector<384x128xbf16>, vector<128x128xf32> -> vector<128x128xf32>
    %41 = arith.addf %32, %40 : vector<128x128xf32>
    %c0_26 = arith.constant 0 : index
    %c2 = arith.constant 2 : index
    %c0_27 = arith.constant 0 : index
    %c0_28 = arith.constant 0 : index
    %42 = vector.load %arg8[%c0_26, %c2, %c0_27, %c0_28] : memref<1x18x10x128xbf16, #tpu.memory_space<vmem>>, vector<1x16x10x128xbf16>
    %43 = vector.extract_strided_slice %42 {offsets = [0, 0, 0, 0], sizes = [1, 16, 8, 128], strides = [1, 1, 1, 1]} : vector<1x16x10x128xbf16> to vector<1x16x8x128xbf16>
    %44 = vector.extract_strided_slice %42 {offsets = [0, 0, 1, 0], sizes = [1, 16, 8, 128], strides = [1, 1, 1, 1]} : vector<1x16x10x128xbf16> to vector<1x16x8x128xbf16>
    %45 = vector.extract_strided_slice %42 {offsets = [0, 0, 2, 0], sizes = [1, 16, 8, 128], strides = [1, 1, 1, 1]} : vector<1x16x10x128xbf16> to vector<1x16x8x128xbf16>
    %46 = tpu.concatenate %43, %44, %45 in 3 : vector<1x16x8x128xbf16>, vector<1x16x8x128xbf16>, vector<1x16x8x128xbf16> -> vector<1x16x8x384xbf16>
    %47 = vector.shape_cast %46 : vector<1x16x8x384xbf16> to vector<128x384xbf16>
    %c768 = arith.constant 768 : index
    %c0_29 = arith.constant 0 : index
    %48 = vector.load %arg4[%c768, %c0_29] : memref<1152x128xbf16, #tpu.memory_space<vmem>>, vector<384x128xbf16>
    %cst_30 = arith.constant dense<0.000000e+00> : vector<128x128xf32>
    %49 = tpu.matmul %47, %48, %cst_30 {dimension_numbers = #tpu.dot_dimension_numbers<[1], [0], [0], [1], [0, 0, 1, 1], [], []>} : vector<128x384xbf16>, vector<384x128xbf16>, vector<128x128xf32> -> vector<128x128xf32>
    %50 = arith.addf %41, %49 : vector<128x128xf32>
    %c0_31 = arith.constant 0 : index
    %c0_32 = arith.constant 0 : index
    %51 = vector.load %arg5[%c0_31, %c0_32] : memref<1x128xf32, #tpu.memory_space<vmem>>, vector<1x128xf32>
    %52 = vector.broadcast %51 : vector<1x128xf32> to vector<128x128xf32>
    %53 = arith.addf %50, %52 : vector<128x128xf32>
    %cst_33 = arith.constant dense<0.000000e+00> : vector<128xf32>
    %54 = vector.multi_reduction <add>, %53, %cst_33 [0] : vector<128x128xf32> to vector<128xf32>
    %55 = vector.shape_cast %54 : vector<128xf32> to vector<1x128xf32>
    %c0_34 = arith.constant 0 : index
    %c0_35 = arith.constant 0 : index
    %c0_36 = arith.constant 0 : index
    %56 = vector.load %arg7[%c0_34, %c0_35, %c0_36] : memref<1x2x128xf32, #tpu.memory_space<vmem>>, vector<1x1x128xf32>
    %57 = vector.shape_cast %56 : vector<1x1x128xf32> to vector<1x128xf32>
    %58 = vector.shape_cast %55 : vector<1x128xf32> to vector<1x1x128xf32>
    tpu.vector_store %arg7[%c0_34, %c0_35, %c0_36], %58 {strides = array<i32>} : memref<1x2x128xf32, #tpu.memory_space<vmem>>, vector<1x1x128xf32>,
    %59 = arith.mulf %53, %53 : vector<128x128xf32>
    %cst_37 = arith.constant dense<0.000000e+00> : vector<128xf32>
    %60 = vector.multi_reduction <add>, %59, %cst_37 [0] : vector<128x128xf32> to vector<128xf32>
    %61 = vector.shape_cast %60 : vector<128xf32> to vector<1x128xf32>
    %c0_38 = arith.constant 0 : index
    %c1_39 = arith.constant 1 : index
    %c0_40 = arith.constant 0 : index
    %62 = vector.load %arg7[%c0_38, %c1_39, %c0_40] : memref<1x2x128xf32, #tpu.memory_space<vmem>>, vector<1x1x128xf32>
    %63 = vector.shape_cast %62 : vector<1x1x128xf32> to vector<1x128xf32>
    %64 = vector.shape_cast %61 : vector<1x128xf32> to vector<1x1x128xf32>
    tpu.vector_store %arg7[%c0_38, %c1_39, %c0_40], %64 {strides = array<i32>} : memref<1x2x128xf32, #tpu.memory_space<vmem>>, vector<1x1x128xf32>,
    %c0_41 = arith.constant 0 : index
    %c0_42 = arith.constant 0 : index
    %65 = vector.load %arg6[%c0_41, %c0_42] : memref<128x128xf32, #tpu.memory_space<vmem>>, vector<128x128xf32>
    tpu.vector_store %arg6[%c0_41, %c0_42], %53 {strides = array<i32>} : memref<128x128xf32, #tpu.memory_space<vmem>>, vector<128x128xf32>,
    return
  }
  func.func @transform_0(%arg0: i32) -> (i32, i32, i32, i32) {
    %c0_i32 = arith.constant 0 : i32
    %c0_i32_0 = arith.constant 0 : i32
    %c0_i32_1 = arith.constant 0 : i32
    %c0_i32_2 = arith.constant 0 : i32
    return %arg0, %c0_i32, %c0_i32_0, %c0_i32_1 : i32, i32, i32, i32
  }
  func.func @transform_1(%arg0: i32) -> (i32, i32) {
    %c0_i32 = arith.constant 0 : i32
    %c0_i32_0 = arith.constant 0 : i32
    %c0_i32_1 = arith.constant 0 : i32
    return %c0_i32, %c0_i32_0 : i32, i32
  }
  func.func @transform_2(%arg0: i32) -> (i32, i32) {
    %c0_i32 = arith.constant 0 : i32
    %c0_i32_0 = arith.constant 0 : i32
    %c0_i32_1 = arith.constant 0 : i32
    return %c0_i32, %c0_i32_0 : i32, i32
  }
  func.func @transform_3(%arg0: i32) -> (i32, i32) {
    %c0_i32 = arith.constant 0 : i32
    %c0_i32_0 = arith.constant 0 : i32
    %c0_i32_1 = arith.constant 0 : i32
    return %c0_i32, %c0_i32_0 : i32, i32
  }
  func.func @transform_4(%arg0: i32) -> (i32, i32) {
    %c0_i32 = arith.constant 0 : i32
    %c0_i32_0 = arith.constant 0 : i32
    %c0_i32_1 = arith.constant 0 : i32
    return %c0_i32, %c0_i32_0 : i32, i32
  }
  func.func @transform_5(%arg0: i32) -> (i32, i32) {
    %c0_i32 = arith.constant 0 : i32
    %c0_i32_0 = arith.constant 0 : i32
    return %arg0, %c0_i32 : i32, i32
  }
  func.func @transform_6(%arg0: i32) -> (i32, i32, i32) {
    %c0_i32 = arith.constant 0 : i32
    %c0_i32_0 = arith.constant 0 : i32
    %c0_i32_1 = arith.constant 0 : i32
    return %arg0, %c0_i32, %c0_i32_0 : i32, i32, i32
  }
}

module attributes {stable_mosaic.version = 11 : i64} {
  func.func @_conv_block_kernel(%arg0: i32, %arg1: memref<1x16x16x64xf32, #tpu.memory_space<vmem>>, %arg2: memref<1x64xf32, #tpu.memory_space<vmem>>, %arg3: memref<1x64xf32, #tpu.memory_space<vmem>>, %arg4: memref<576x128xbf16, #tpu.memory_space<vmem>>, %arg5: memref<1x128xf32, #tpu.memory_space<vmem>>, %arg6: memref<256x128xf32, #tpu.memory_space<vmem>>, %arg7: memref<1x18x18x64xbf16, #tpu.memory_space<vmem>>) attributes {dimension_semantics = [#tpu.dimension_semantics<parallel>], iteration_bounds = array<i64: 2>, scalar_prefetch = 0 : i64, scratch_operands = 1 : i64, tpu.core_type = #tpu.core_type<tc>, window_params = [{transform_indices = @transform_0, window_bounds = array<i64: 1, 16, 16, 64>}, {pipeline_mode = #tpu.pipeline_mode<synchronous>, transform_indices = @transform_1, window_bounds = array<i64: 1, 64>}, {pipeline_mode = #tpu.pipeline_mode<synchronous>, transform_indices = @transform_2, window_bounds = array<i64: 1, 64>}, {pipeline_mode = #tpu.pipeline_mode<synchronous>, transform_indices = @transform_3, window_bounds = array<i64: 576, 128>}, {pipeline_mode = #tpu.pipeline_mode<synchronous>, transform_indices = @transform_4, window_bounds = array<i64: 1, 128>}, {transform_indices = @transform_5, window_bounds = array<i64: 256, 128>}]} {
    %c0 = arith.constant 0 : index
    %c0_0 = arith.constant 0 : index
    %c0_1 = arith.constant 0 : index
    %c0_2 = arith.constant 0 : index
    %0 = vector.load %arg1[%c0, %c0_0, %c0_1, %c0_2] : memref<1x16x16x64xf32, #tpu.memory_space<vmem>>, vector<1x16x16x64xf32>
    %c0_3 = arith.constant 0 : index
    %c0_4 = arith.constant 0 : index
    %1 = vector.load %arg2[%c0_3, %c0_4] : memref<1x64xf32, #tpu.memory_space<vmem>>, vector<1x64xf32>
    %2 = vector.shape_cast %1 : vector<1x64xf32> to vector<1x1x1x64xf32>
    %3 = vector.broadcast %2 : vector<1x1x1x64xf32> to vector<1x16x16x64xf32>
    %4 = arith.mulf %0, %3 : vector<1x16x16x64xf32>
    %c0_5 = arith.constant 0 : index
    %c0_6 = arith.constant 0 : index
    %5 = vector.load %arg3[%c0_5, %c0_6] : memref<1x64xf32, #tpu.memory_space<vmem>>, vector<1x64xf32>
    %6 = vector.shape_cast %5 : vector<1x64xf32> to vector<1x1x1x64xf32>
    %7 = vector.broadcast %6 : vector<1x1x1x64xf32> to vector<1x16x16x64xf32>
    %8 = arith.addf %4, %7 : vector<1x16x16x64xf32>
    %cst = arith.constant 0.000000e+00 : f32
    %9 = vector.broadcast %cst : f32 to vector<1x16x16x64xf32>
    %10 = arith.cmpf ogt, %8, %9 : vector<1x16x16x64xf32>
    %cst_7 = arith.constant 2.000000e-01 : f32
    %11 = vector.broadcast %cst_7 : f32 to vector<1x16x16x64xf32>
    %12 = arith.mulf %11, %8 : vector<1x16x16x64xf32>
    %13 = arith.select %10, %8, %12 : vector<1x16x16x64xi1>, vector<1x16x16x64xf32>
    %14 = arith.truncf %13 : vector<1x16x16x64xf32> to vector<1x16x16x64xbf16>
    %c0_i32 = arith.constant 0 : i32
    %15 = arith.cmpi eq, %arg0, %c0_i32 : i32
    %16 = arith.extui %15 : i1 to i32
    %c0_i32_8 = arith.constant 0 : i32
    %17 = arith.cmpi ne, %16, %c0_i32_8 : i32
    scf.if %17 {
      %cst_35 = arith.constant 0.000000e+00 : bf16
      %52 = vector.broadcast %cst_35 : bf16 to vector<1x18x18x64xbf16>
      %c0_36 = arith.constant 0 : index
      %c0_37 = arith.constant 0 : index
      %c0_38 = arith.constant 0 : index
      %c0_39 = arith.constant 0 : index
      %53 = vector.load %arg7[%c0_36, %c0_37, %c0_38, %c0_39] : memref<1x18x18x64xbf16, #tpu.memory_space<vmem>>, vector<1x18x18x64xbf16>
      tpu.vector_store %arg7[%c0_36, %c0_37, %c0_38, %c0_39], %52 {strides = array<i32>} : memref<1x18x18x64xbf16, #tpu.memory_space<vmem>>, vector<1x18x18x64xbf16>,
    } else {
    }
    %c0_9 = arith.constant 0 : index
    %c1 = arith.constant 1 : index
    %c1_10 = arith.constant 1 : index
    %c0_11 = arith.constant 0 : index
    %18 = vector.load %arg7[%c0_9, %c1, %c1_10, %c0_11] : memref<1x18x18x64xbf16, #tpu.memory_space<vmem>>, vector<1x16x16x64xbf16>
    tpu.vector_store %arg7[%c0_9, %c1, %c1_10, %c0_11], %14 {strides = array<i32>} : memref<1x18x18x64xbf16, #tpu.memory_space<vmem>>, vector<1x16x16x64xbf16>,
    %cst_12 = arith.constant 0.000000e+00 : f32
    %19 = vector.broadcast %cst_12 : f32 to vector<256x128xf32>
    %c0_13 = arith.constant 0 : index
    %c0_14 = arith.constant 0 : index
    %c0_15 = arith.constant 0 : index
    %c0_16 = arith.constant 0 : index
    %20 = vector.load %arg7[%c0_13, %c0_14, %c0_15, %c0_16] : memref<1x18x18x64xbf16, #tpu.memory_space<vmem>>, vector<1x16x18x64xbf16>
    %21 = vector.extract_strided_slice %20 {offsets = [0, 0, 0, 0], sizes = [1, 16, 16, 64], strides = [1, 1, 1, 1]} : vector<1x16x18x64xbf16> to vector<1x16x16x64xbf16>
    %22 = vector.extract_strided_slice %20 {offsets = [0, 0, 1, 0], sizes = [1, 16, 16, 64], strides = [1, 1, 1, 1]} : vector<1x16x18x64xbf16> to vector<1x16x16x64xbf16>
    %23 = vector.extract_strided_slice %20 {offsets = [0, 0, 2, 0], sizes = [1, 16, 16, 64], strides = [1, 1, 1, 1]} : vector<1x16x18x64xbf16> to vector<1x16x16x64xbf16>
    %24 = tpu.concatenate %21, %22, %23 in 3 : vector<1x16x16x64xbf16>, vector<1x16x16x64xbf16>, vector<1x16x16x64xbf16> -> vector<1x16x16x192xbf16>
    %25 = vector.shape_cast %24 : vector<1x16x16x192xbf16> to vector<256x192xbf16>
    %c0_17 = arith.constant 0 : index
    %c0_18 = arith.constant 0 : index
    %26 = vector.load %arg4[%c0_17, %c0_18] : memref<576x128xbf16, #tpu.memory_space<vmem>>, vector<192x128xbf16>
    %cst_19 = arith.constant dense<0.000000e+00> : vector<256x128xf32>
    %27 = tpu.matmul %25, %26, %cst_19 {dimension_numbers = #tpu.dot_dimension_numbers<[1], [0], [0], [1], [0, 0, 1, 1], [], []>} : vector<256x192xbf16>, vector<192x128xbf16>, vector<256x128xf32> -> vector<256x128xf32>
    %28 = arith.addf %19, %27 : vector<256x128xf32>
    %c0_20 = arith.constant 0 : index
    %c1_21 = arith.constant 1 : index
    %c0_22 = arith.constant 0 : index
    %c0_23 = arith.constant 0 : index
    %29 = vector.load %arg7[%c0_20, %c1_21, %c0_22, %c0_23] : memref<1x18x18x64xbf16, #tpu.memory_space<vmem>>, vector<1x16x18x64xbf16>
    %30 = vector.extract_strided_slice %29 {offsets = [0, 0, 0, 0], sizes = [1, 16, 16, 64], strides = [1, 1, 1, 1]} : vector<1x16x18x64xbf16> to vector<1x16x16x64xbf16>
    %31 = vector.extract_strided_slice %29 {offsets = [0, 0, 1, 0], sizes = [1, 16, 16, 64], strides = [1, 1, 1, 1]} : vector<1x16x18x64xbf16> to vector<1x16x16x64xbf16>
    %32 = vector.extract_strided_slice %29 {offsets = [0, 0, 2, 0], sizes = [1, 16, 16, 64], strides = [1, 1, 1, 1]} : vector<1x16x18x64xbf16> to vector<1x16x16x64xbf16>
    %33 = tpu.concatenate %30, %31, %32 in 3 : vector<1x16x16x64xbf16>, vector<1x16x16x64xbf16>, vector<1x16x16x64xbf16> -> vector<1x16x16x192xbf16>
    %34 = vector.shape_cast %33 : vector<1x16x16x192xbf16> to vector<256x192xbf16>
    %c192 = arith.constant 192 : index
    %c0_24 = arith.constant 0 : index
    %35 = vector.load %arg4[%c192, %c0_24] : memref<576x128xbf16, #tpu.memory_space<vmem>>, vector<192x128xbf16>
    %cst_25 = arith.constant dense<0.000000e+00> : vector<256x128xf32>
    %36 = tpu.matmul %34, %35, %cst_25 {dimension_numbers = #tpu.dot_dimension_numbers<[1], [0], [0], [1], [0, 0, 1, 1], [], []>} : vector<256x192xbf16>, vector<192x128xbf16>, vector<256x128xf32> -> vector<256x128xf32>
    %37 = arith.addf %28, %36 : vector<256x128xf32>
    %c0_26 = arith.constant 0 : index
    %c2 = arith.constant 2 : index
    %c0_27 = arith.constant 0 : index
    %c0_28 = arith.constant 0 : index
    %38 = vector.load %arg7[%c0_26, %c2, %c0_27, %c0_28] : memref<1x18x18x64xbf16, #tpu.memory_space<vmem>>, vector<1x16x18x64xbf16>
    %39 = vector.extract_strided_slice %38 {offsets = [0, 0, 0, 0], sizes = [1, 16, 16, 64], strides = [1, 1, 1, 1]} : vector<1x16x18x64xbf16> to vector<1x16x16x64xbf16>
    %40 = vector.extract_strided_slice %38 {offsets = [0, 0, 1, 0], sizes = [1, 16, 16, 64], strides = [1, 1, 1, 1]} : vector<1x16x18x64xbf16> to vector<1x16x16x64xbf16>
    %41 = vector.extract_strided_slice %38 {offsets = [0, 0, 2, 0], sizes = [1, 16, 16, 64], strides = [1, 1, 1, 1]} : vector<1x16x18x64xbf16> to vector<1x16x16x64xbf16>
    %42 = tpu.concatenate %39, %40, %41 in 3 : vector<1x16x16x64xbf16>, vector<1x16x16x64xbf16>, vector<1x16x16x64xbf16> -> vector<1x16x16x192xbf16>
    %43 = vector.shape_cast %42 : vector<1x16x16x192xbf16> to vector<256x192xbf16>
    %c384 = arith.constant 384 : index
    %c0_29 = arith.constant 0 : index
    %44 = vector.load %arg4[%c384, %c0_29] : memref<576x128xbf16, #tpu.memory_space<vmem>>, vector<192x128xbf16>
    %cst_30 = arith.constant dense<0.000000e+00> : vector<256x128xf32>
    %45 = tpu.matmul %43, %44, %cst_30 {dimension_numbers = #tpu.dot_dimension_numbers<[1], [0], [0], [1], [0, 0, 1, 1], [], []>} : vector<256x192xbf16>, vector<192x128xbf16>, vector<256x128xf32> -> vector<256x128xf32>
    %46 = arith.addf %37, %45 : vector<256x128xf32>
    %c0_31 = arith.constant 0 : index
    %c0_32 = arith.constant 0 : index
    %47 = vector.load %arg5[%c0_31, %c0_32] : memref<1x128xf32, #tpu.memory_space<vmem>>, vector<1x128xf32>
    %48 = vector.broadcast %47 : vector<1x128xf32> to vector<256x128xf32>
    %49 = arith.addf %46, %48 : vector<256x128xf32>
    %50 = math.tanh %49 : vector<256x128xf32>
    %c0_33 = arith.constant 0 : index
    %c0_34 = arith.constant 0 : index
    %51 = vector.load %arg6[%c0_33, %c0_34] : memref<256x128xf32, #tpu.memory_space<vmem>>, vector<256x128xf32>
    tpu.vector_store %arg6[%c0_33, %c0_34], %50 {strides = array<i32>} : memref<256x128xf32, #tpu.memory_space<vmem>>, vector<256x128xf32>,
    return
  }
  func.func @transform_0(%arg0: i32) -> (i32, i32, i32, i32) {
    %c0_i32 = arith.constant 0 : i32
    %c0_i32_0 = arith.constant 0 : i32
    %c0_i32_1 = arith.constant 0 : i32
    %c0_i32_2 = arith.constant 0 : i32
    return %arg0, %c0_i32, %c0_i32_0, %c0_i32_1 : i32, i32, i32, i32
  }
  func.func @transform_1(%arg0: i32) -> (i32, i32) {
    %c0_i32 = arith.constant 0 : i32
    %c0_i32_0 = arith.constant 0 : i32
    %c0_i32_1 = arith.constant 0 : i32
    return %c0_i32, %c0_i32_0 : i32, i32
  }
  func.func @transform_2(%arg0: i32) -> (i32, i32) {
    %c0_i32 = arith.constant 0 : i32
    %c0_i32_0 = arith.constant 0 : i32
    %c0_i32_1 = arith.constant 0 : i32
    return %c0_i32, %c0_i32_0 : i32, i32
  }
  func.func @transform_3(%arg0: i32) -> (i32, i32) {
    %c0_i32 = arith.constant 0 : i32
    %c0_i32_0 = arith.constant 0 : i32
    %c0_i32_1 = arith.constant 0 : i32
    return %c0_i32, %c0_i32_0 : i32, i32
  }
  func.func @transform_4(%arg0: i32) -> (i32, i32) {
    %c0_i32 = arith.constant 0 : i32
    %c0_i32_0 = arith.constant 0 : i32
    %c0_i32_1 = arith.constant 0 : i32
    return %c0_i32, %c0_i32_0 : i32, i32
  }
  func.func @transform_5(%arg0: i32) -> (i32, i32) {
    %c0_i32 = arith.constant 0 : i32
    %c0_i32_0 = arith.constant 0 : i32
    return %arg0, %c0_i32 : i32, i32
  }
}

</mosaic_0001>

<llo_original>
// kernel: mul.10
$region0: #{mul.10}
  #allocation0 [shape = 's32[1]{0}', space=sflag, size = 0x4, scoped, tag = 'scoped memory for mul.10']
  %s0 = inlined_call_operand.vmem [shape: f32[2,32], index: 0, kind: input, shape index: {}]
  %s1 = inlined_call_operand.vmem [shape: f32[2,32], index: 1, kind: input, shape index: {}]
  %s2 = inlined_call_operand.vmem [shape: f32[2,32], index: 2, kind: output, shape index: {}]
  %v3 = vld [vmem:[%s0] sm:$0x3]
  %v4 = vld [vmem:[%s1] sm:$0x3]
  %5 = xla_tuple %v3, %v4
  %6 = xla_tuple %5
  %v7 = vmul.f32 %v3, %v4
  %8 = xla_tuple %v7
  %9 = vst [vmem:[%s2] sm:$0x3] %v7

// kernel: generator_forward.4
$region0: #{generator_forward.4}
  #allocation0 [shape = 'u32[]', space=smem, size = 0x4, offset = 0x4, fixed_abs, tag = 'smem constant byte address 0x4 - core index']
  #allocation1 [shape = 'u32[144,128]{1,0:T(1,128)}', space=vmem, size = 0x12000, scoped, tag = 'internal scratch']
  %s0 = inlined_call_operand.vmem [shape: f32[2,32], index: 0, kind: input, shape index: {}]
  %s1 = inlined_call_operand.hbm [shape: bf16[32,2048], index: 1, kind: input, shape index: {}]
  %s2 = inlined_call_operand.vmem [shape: f32[1,2048], index: 2, kind: input, shape index: {}]
  %s3 = inlined_call_operand.vmem [shape: f32[2,2048], index: 3, kind: output, shape index: {0}]
  %s4 = inlined_call_operand.vmem [shape: f32[2,128], index: 4, kind: output, shape index: {1}]
  %5 = xla_tuple %s3, %s4
  %s6 = sld [smem:[#allocation0]]
  $region34: #{generator_forward.4} parent=0
    _
  %s8 = ssub.s32 1, %s6
  %s9 = scalar_select 0, %s8, %s6
  $region1: #{generator_forward.4} parent=0
    #allocation2 [shape = 'u8[131072]{0}', space=vmem, size = 0x20000, scoped, tag = 'input window, operand 1, single buffered']
    #allocation3 [shape = 's32[1]{0}', space=sflag, size = 0x4, scoped, tag = 'scoped memory for generator_forward.4']
    %10 = vsyncpa [#allocation3], 0
    // Predicated region
    $region2: #{generator_forward.4} parent=1 // pred_check
      _
    $region3: #{generator_forward.4} parent=1 // pred_check_branch
      %12 = sbr.rel (0) target = $region5
    $region4: #{generator_forward.4} parent=1 // pred_region
      _
    $region5: #{generator_forward.4} parent=1 // pred_fallthru
      _
    // Predicated region
    $region6: #{generator_forward.4} parent=1 // pred_check
      _
    $region7: #{generator_forward.4} parent=1 // pred_check_branch
      %14 = sbr.rel (0) target = $region9
    $region8: #{generator_forward.4} parent=1 // pred_region
      %s16 = ssub.s32 4096, 4096
      %17 = vsyncadd [#allocation3], %s16
      %s18 = sshll.u32 [#allocation2], 4
      %s19 = int_to_ptr.vmem [resolvable:$true] %s18
      %24 = dma.hbm_to_vmem [thread:$0]  %s1, 4096, %s19, [#allocation3], 1024, 1024, 64
    $region9: #{generator_forward.4} parent=1 // pred_fallthru
      _
    // Predicated region
    $region10: #{generator_forward.4} parent=1 // pred_check
      _
    $region11: #{generator_forward.4} parent=1 // pred_check_branch
      %26 = sbr.rel (0) target = $region13
    $region12: #{generator_forward.4} parent=1 // pred_region
      _
    $region13: #{generator_forward.4} parent=1 // pred_fallthru
      _
    // Predicated region
    $region14: #{generator_forward.4} parent=1 // pred_check
      _
    $region15: #{generator_forward.4} parent=1 // pred_check_branch
      %28 = sbr.rel (0) target = $region17
    $region16: #{generator_forward.4} parent=1 // pred_region
      %29 = dma.done [#allocation3], 4096
    $region17: #{generator_forward.4} parent=1 // pred_fallthru
      _
    %v31 = vld [vmem:[%s0] sm:$0x3]
    %v32 = vpack.c.bf16 %v31, %v31
    %v33 = vld [vmem:[#allocation2] sm:$0xff]
    %v34 = vld [vmem:[#allocation2 + $0x8] sm:$0xff]
    %v35 = vld [vmem:[#allocation2 + $0x10] sm:$0xff]
    %v36 = vld [vmem:[#allocation2 + $0x18] sm:$0xff]
    %v37 = vld [vmem:[#allocation2 + $0x20] sm:$0xff]
    %v38 = vld [vmem:[#allocation2 + $0x28] sm:$0xff]
    %v39 = vld [vmem:[#allocation2 + $0x30] sm:$0xff]
    %v40 = vld [vmem:[#allocation2 + $0x38] sm:$0xff]
    %v41 = vld [vmem:[#allocation2 + $0x40] sm:$0xff]
    %v42 = vld [vmem:[#allocation2 + $0x48] sm:$0xff]
    %v43 = vld [vmem:[#allocation2 + $0x50] sm:$0xff]
    %v44 = vld [vmem:[#allocation2 + $0x58] sm:$0xff]
    %v45 = vld [vmem:[#allocation2 + $0x60] sm:$0xff]
    %v46 = vld [vmem:[#allocation2 + $0x68] sm:$0xff]
    %v47 = vld [vmem:[#allocation2 + $0x70] sm:$0xff]
    %v48 = vld [vmem:[#allocation2 + $0x78] sm:$0xff]
    %v49 = vld [vmem:[#allocation2 + $0x80] sm:$0xff]
    %v50 = vld [vmem:[#allocation2 + $0x88] sm:$0xff]
    %v51 = vld [vmem:[#allocation2 + $0x90] sm:$0xff]
    %v52 = vld [vmem:[#allocation2 + $0x98] sm:$0xff]
    %v53 = vld [vmem:[#allocation2 + $0xa0] sm:$0xff]
    %v54 = vld [vmem:[#allocation2 + $0xa8] sm:$0xff]
    %v55 = vld [vmem:[#allocation2 + $0xb0] sm:$0xff]
    %v56 = vld [vmem:[#allocation2 + $0xb8] sm:$0xff]
    %v57 = vld [vmem:[#allocation2 + $0xc0] sm:$0xff]
    %v58 = vld [vmem:[#allocation2 + $0xc8] sm:$0xff]
    %v59 = vld [vmem:[#allocation2 + $0xd0] sm:$0xff]
    %v60 = vld [vmem:[#allocation2 + $0xd8] sm:$0xff]
    %v61 = vld [vmem:[#allocation2 + $0xe0] sm:$0xff]
    %v62 = vld [vmem:[#allocation2 + $0xe8] sm:$0xff]
    %v63 = vld [vmem:[#allocation2 + $0xf0] sm:$0xff]
    %v64 = vld [vmem:[#allocation2 + $0xf8] sm:$0xff]
    %v65 = vld [vmem:[%s2] sm:$0xff]
    %v66 = vld [vmem:[%s2 + $0x8] sm:$0xff]
    %v69 = vlaneseq
    %v70 = vshrl.u32 %v69, 7
    %v71 = vsub.s32 0, %v70
    %v72 = vrot.slane %v65, %v71
    %v73 = vlaneseq
    %v74 = vshrl.u32 %v73, 7
    %v75 = vsub.s32 1, %v74
    %v76 = vrot.slane %v65, %v75
    %v77 = vlaneseq
    %v78 = vshrl.u32 %v77, 7
    %v79 = vsub.s32 2, %v78
    %v80 = vrot.slane %v65, %v79
    %v81 = vlaneseq
    %v82 = vshrl.u32 %v81, 7
    %v83 = vsub.s32 3, %v82
    %v84 = vrot.slane %v65, %v83
    %v85 = vlaneseq
    %v86 = vshrl.u32 %v85, 7
    %v87 = vsub.s32 4, %v86
    %v88 = vrot.slane %v65, %v87
    %v89 = vlaneseq
    %v90 = vshrl.u32 %v89, 7
    %v91 = vsub.s32 5, %v90
    %v92 = vrot.slane %v65, %v91
    %v93 = vlaneseq
    %v94 = vshrl.u32 %v93, 7
    %v95 = vsub.s32 6, %v94
    %v96 = vrot.slane %v65, %v95
    %v97 = vlaneseq
    %v98 = vshrl.u32 %v97, 7
    %v99 = vsub.s32 7, %v98
    %v100 = vrot.slane %v65, %v99
    %v101 = vlaneseq
    %v102 = vshrl.u32 %v101, 7
    %v103 = vsub.s32 0, %v102
    %v104 = vrot.slane %v66, %v103
    %v105 = vlaneseq
    %v106 = vshrl.u32 %v105, 7
    %v107 = vsub.s32 1, %v106
    %v108 = vrot.slane %v66, %v107
    %v109 = vlaneseq
    %v110 = vshrl.u32 %v109, 7
    %v111 = vsub.s32 2, %v110
    %v112 = vrot.slane %v66, %v111
    %v113 = vlaneseq
    %v114 = vshrl.u32 %v113, 7
    %v115 = vsub.s32 3, %v114
    %v116 = vrot.slane %v66, %v115
    %v117 = vlaneseq
    %v118 = vshrl.u32 %v117, 7
    %v119 = vsub.s32 4, %v118
    %v120 = vrot.slane %v66, %v119
    %v121 = vlaneseq
    %v122 = vshrl.u32 %v121, 7
    %v123 = vsub.s32 5, %v122
    %v124 = vrot.slane %v66, %v123
    %v125 = vlaneseq
    %v126 = vshrl.u32 %v125, 7
    %v127 = vsub.s32 6, %v126
    %v128 = vrot.slane %v66, %v127
    %v129 = vlaneseq
    %v130 = vshrl.u32 %v129, 7
    %v131 = vsub.s32 7, %v130
    %v132 = vrot.slane %v66, %v131
    %v181 = vunpack.c.l.b16 %v33
    %v182 = vunpack.c.h.b16 %v33
    %v183 = vunpack.c.l.b16 %v34
    %v184 = vunpack.c.h.b16 %v34
    %v185 = vunpack.c.l.b16 %v35
    %v186 = vunpack.c.h.b16 %v35
    %v187 = vunpack.c.l.b16 %v36
    %v188 = vunpack.c.h.b16 %v36
    %v189 = vunpack.c.l.b16 %v37
    %v190 = vunpack.c.h.b16 %v37
    %v191 = vunpack.c.l.b16 %v38
    %v192 = vunpack.c.h.b16 %v38
    %v193 = vunpack.c.l.b16 %v39
    %v194 = vunpack.c.h.b16 %v39
    %v195 = vunpack.c.l.b16 %v40
    %v196 = vunpack.c.h.b16 %v40
    %v197 = vunpack.c.l.b16 %v41
    %v198 = vunpack.c.h.b16 %v41
    %v199 = vunpack.c.l.b16 %v42
    %v200 = vunpack.c.h.b16 %v42
    %v201 = vunpack.c.l.b16 %v43
    %v202 = vunpack.c.h.b16 %v43
    %v203 = vunpack.c.l.b16 %v44
    %v204 = vunpack.c.h.b16 %v44
    %v205 = vunpack.c.l.b16 %v45
    %v206 = vunpack.c.h.b16 %v45
    %v207 = vunpack.c.l.b16 %v46
    %v208 = vunpack.c.h.b16 %v46
    %v209 = vunpack.c.l.b16 %v47
    %v210 = vunpack.c.h.b16 %v47
    %v211 = vunpack.c.l.b16 %v48
    %v212 = vunpack.c.h.b16 %v48
    %v213 = vunpack.c.l.b16 %v49
    %v214 = vunpack.c.h.b16 %v49
    %v215 = vunpack.c.l.b16 %v50
    %v216 = vunpack.c.h.b16 %v50
    %v217 = vunpack.c.l.b16 %v51
    %v218 = vunpack.c.h.b16 %v51
    %v219 = vunpack.c.l.b16 %v52
    %v220 = vunpack.c.h.b16 %v52
    %v221 = vunpack.c.l.b16 %v53
    %v222 = vunpack.c.h.b16 %v53
    %v223 = vunpack.c.l.b16 %v54
    %v224 = vunpack.c.h.b16 %v54
    %v225 = vunpack.c.l.b16 %v55
    %v226 = vunpack.c.h.b16 %v55
    %v227 = vunpack.c.l.b16 %v56
    %v228 = vunpack.c.h.b16 %v56
    %v229 = vunpack.c.l.b16 %v57
    %v230 = vunpack.c.h.b16 %v57
    %v231 = vunpack.c.l.b16 %v58
    %v232 = vunpack.c.h.b16 %v58
    %v233 = vunpack.c.l.b16 %v59
    %v234 = vunpack.c.h.b16 %v59
    %v235 = vunpack.c.l.b16 %v60
    %v236 = vunpack.c.h.b16 %v60
    %v237 = vunpack.c.l.b16 %v61
    %v238 = vunpack.c.h.b16 %v61
    %v239 = vunpack.c.l.b16 %v62
    %v240 = vunpack.c.h.b16 %v62
    %v241 = vunpack.c.l.b16 %v63
    %v242 = vunpack.c.h.b16 %v63
    %v243 = vunpack.c.l.b16 %v64
    %v244 = vunpack.c.h.b16 %v64
    %v245 = vpack.c.b16 %v197, %v181
    %v246 = vpack.c.b16 %v198, %v182
    %v247 = vpack.c.b16 %v199, %v183
    %v248 = vpack.c.b16 %v200, %v184
    %v249 = vpack.c.b16 %v201, %v185
    %v250 = vpack.c.b16 %v202, %v186
    %v251 = vpack.c.b16 %v203, %v187
    %v252 = vpack.c.b16 %v204, %v188
    %v253 = vpack.c.b16 %v205, %v189
    %v254 = vpack.c.b16 %v206, %v190
    %v255 = vpack.c.b16 %v207, %v191
    %v256 = vpack.c.b16 %v208, %v192
    %v257 = vpack.c.b16 %v209, %v193
    %v258 = vpack.c.b16 %v210, %v194
    %v259 = vpack.c.b16 %v211, %v195
    %v260 = vpack.c.b16 %v212, %v196
    %v261 = vpack.c.b16 %v229, %v213
    %v262 = vpack.c.b16 %v230, %v214
    %v263 = vpack.c.b16 %v231, %v215
    %v264 = vpack.c.b16 %v232, %v216
    %v265 = vpack.c.b16 %v233, %v217
    %v266 = vpack.c.b16 %v234, %v218
    %v267 = vpack.c.b16 %v235, %v219
    %v268 = vpack.c.b16 %v236, %v220
    %v269 = vpack.c.b16 %v237, %v221
    %v270 = vpack.c.b16 %v238, %v222
    %v271 = vpack.c.b16 %v239, %v223
    %v272 = vpack.c.b16 %v240, %v224
    %v273 = vpack.c.b16 %v241, %v225
    %v274 = vpack.c.b16 %v242, %v226
    %v275 = vpack.c.b16 %v243, %v227
    %v276 = vpack.c.b16 %v244, %v228
    %vm309 = vcmask 261120
    %v311 = vsel %vm309, %v32, 0
    %313 = vmatprep.subr.bf16.mxu0 0
    %314 = vmatpush1.bf16.msra.mxu0 0
    %315 = vmatprep.subr.bf16.mxu0 0
    %316 = vmatpush1.bf16.msra.mxu0 0
    %317 = vmatprep.subr.bf16.mxu0 0
    %318 = vmatpush1.bf16.msra.mxu0 0
    %319 = vmatprep.subr.bf16.mxu0 0
    %320 = vmatpush1.bf16.msra.mxu0 0
    %321 = vmatprep.subr.bf16.mxu0 0
    %322 = vmatpush1.bf16.msra.mxu0 0
    %323 = vmatprep.subr.bf16.mxu0 0
    %324 = vmatpush1.bf16.msra.mxu0 0
    %325 = vmatprep.subr.bf16.mxu0 %v262
    %326 = vmatpush1.bf16.msra.mxu0 %v261
    %327 = vmatprep.subr.bf16.mxu0 %v246
    %328 = vmatpush1.bf16.msra.mxu0 %v245
    %329 = vmatprep.subr.bf16.mxu0 0
    %330 = vmatpush2.bf16.msra.mxu0 0
    %331 = vmatprep.subr.bf16.mxu0 0
    %332 = vmatpush2.bf16.msra.mxu0 0
    %333 = vmatprep.subr.bf16.mxu0 0
    %334 = vmatpush2.bf16.msra.mxu0 0
    %335 = vmatprep.subr.bf16.mxu0 0
    %336 = vmatpush2.bf16.msra.mxu0 0
    %337 = vmatprep.subr.bf16.mxu0 0
    %338 = vmatpush2.bf16.msra.mxu0 0
    %339 = vmatprep.subr.bf16.mxu0 0
    %340 = vmatpush2.bf16.msra.mxu0 0
    %341 = vmatprep.subr.bf16.mxu0 0
    %342 = vmatpush2.bf16.msra.mxu0 0
    %343 = vmatprep.subr.bf16.mxu0 0
    %344 = vmatpush2.bf16.msra.mxu0 0
    %345 = vmatprep.mubr.bf16.mxu0 0
    %346 = vmatmul.mubr.bf16.gmra.mxu0 %v311
    %v347 = vpop.f32.mrf.mxu0
    %v348 = vadd.f32 %v72, %v347
    %v349 = vpop.f32.mrf.mxu0
    %v350 = vadd.f32 %v76, %v349
    %v351 = vpop.f32.mrf.mxu0
    %v352 = vpop.f32.mrf.mxu0
    %353 = vdwg.mxu0
    %354 = vmatprep.subr.bf16.mxu0 0
    %355 = vmatpush1.bf16.msra.mxu0 0
    %356 = vmatprep.subr.bf16.mxu0 0
    %357 = vmatpush1.bf16.msra.mxu0 0
    %358 = vmatprep.subr.bf16.mxu0 0
    %359 = vmatpush1.bf16.msra.mxu0 0
    %360 = vmatprep.subr.bf16.mxu0 0
    %361 = vmatpush1.bf16.msra.mxu0 0
    %362 = vmatprep.subr.bf16.mxu0 0
    %363 = vmatpush1.bf16.msra.mxu0 0
    %364 = vmatprep.subr.bf16.mxu0 0
    %365 = vmatpush1.bf16.msra.mxu0 0
    %366 = vmatprep.subr.bf16.mxu0 %v264
    %367 = vmatpush1.bf16.msra.mxu0 %v263
    %368 = vmatprep.subr.bf16.mxu0 %v248
    %369 = vmatpush1.bf16.msra.mxu0 %v247
    %370 = vmatprep.subr.bf16.mxu0 0
    %371 = vmatpush2.bf16.msra.mxu0 0
    %372 = vmatprep.subr.bf16.mxu0 0
    %373 = vmatpush2.bf16.msra.mxu0 0
    %374 = vmatprep.subr.bf16.mxu0 0
    %375 = vmatpush2.bf16.msra.mxu0 0
    %376 = vmatprep.subr.bf16.mxu0 0
    %377 = vmatpush2.bf16.msra.mxu0 0
    %378 = vmatprep.subr.bf16.mxu0 0
    %379 = vmatpush2.bf16.msra.mxu0 0
    %380 = vmatprep.subr.bf16.mxu0 0
    %381 = vmatpush2.bf16.msra.mxu0 0
    %382 = vmatprep.subr.bf16.mxu0 0
    %383 = vmatpush2.bf16.msra.mxu0 0
    %384 = vmatprep.subr.bf16.mxu0 0
    %385 = vmatpush2.bf16.msra.mxu0 0
    %386 = vmatprep.mubr.bf16.mxu0 0
    %387 = vmatmul.mubr.bf16.gmra.mxu0 %v311
    %v388 = vpop.f32.mrf.mxu0
    %v389 = vadd.f32 %v80, %v388
    %v390 = vpop.f32.mrf.mxu0
    %v391 = vadd.f32 %v84, %v390
    %v392 = vpop.f32.mrf.mxu0
    %v393 = vpop.f32.mrf.mxu0
    %394 = vdwg.mxu0
    %395 = vmatprep.subr.bf16.mxu0 0
    %396 = vmatpush1.bf16.msra.mxu0 0
    %397 = vmatprep.subr.bf16.mxu0 0
    %398 = vmatpush1.bf16.msra.mxu0 0
    %399 = vmatprep.subr.bf16.mxu0 0
    %400 = vmatpush1.bf16.msra.mxu0 0
    %401 = vmatprep.subr.bf16.mxu0 0
    %402 = vmatpush1.bf16.msra.mxu0 0
    %403 = vmatprep.subr.bf16.mxu0 0
    %404 = vmatpush1.bf16.msra.mxu0 0
    %405 = vmatprep.subr.bf16.mxu0 0
    %406 = vmatpush1.bf16.msra.mxu0 0
    %407 = vmatprep.subr.bf16.mxu0 %v266
    %408 = vmatpush1.bf16.msra.mxu0 %v265
    %409 = vmatprep.subr.bf16.mxu0 %v250
    %410 = vmatpush1.bf16.msra.mxu0 %v249
    %411 = vmatprep.subr.bf16.mxu0 0
    %412 = vmatpush2.bf16.msra.mxu0 0
    %413 = vmatprep.subr.bf16.mxu0 0
    %414 = vmatpush2.bf16.msra.mxu0 0
    %415 = vmatprep.subr.bf16.mxu0 0
    %416 = vmatpush2.bf16.msra.mxu0 0
    %417 = vmatprep.subr.bf16.mxu0 0
    %418 = vmatpush2.bf16.msra.mxu0 0
    %419 = vmatprep.subr.bf16.mxu0 0
    %420 = vmatpush2.bf16.msra.mxu0 0
    %421 = vmatprep.subr.bf16.mxu0 0
    %422 = vmatpush2.bf16.msra.mxu0 0
    %423 = vmatprep.subr.bf16.mxu0 0
    %424 = vmatpush2.bf16.msra.mxu0 0
    %425 = vmatprep.subr.bf16.mxu0 0
    %426 = vmatpush2.bf16.msra.mxu0 0
    %427 = vmatprep.mubr.bf16.mxu0 0
    %428 = vmatmul.mubr.bf16.gmra.mxu0 %v311
    %v429 = vpop.f32.mrf.mxu0
    %v430 = vadd.f32 %v88, %v429
    %v431 = vpop.f32.mrf.mxu0
    %v432 = vadd.f32 %v92, %v431
    %v433 = vpop.f32.mrf.mxu0
    %v434 = vpop.f32.mrf.mxu0
    %435 = vdwg.mxu0
    %436 = vmatprep.subr.bf16.mxu0 0
    %437 = vmatpush1.bf16.msra.mxu0 0
    %438 = vmatprep.subr.bf16.mxu0 0
    %439 = vmatpush1.bf16.msra.mxu0 0
    %440 = vmatprep.subr.bf16.mxu0 0
    %441 = vmatpush1.bf16.msra.mxu0 0
    %442 = vmatprep.subr.bf16.mxu0 0
    %443 = vmatpush1.bf16.msra.mxu0 0
    %444 = vmatprep.subr.bf16.mxu0 0
    %445 = vmatpush1.bf16.msra.mxu0 0
    %446 = vmatprep.subr.bf16.mxu0 0
    %447 = vmatpush1.bf16.msra.mxu0 0
    %448 = vmatprep.subr.bf16.mxu0 %v268
    %449 = vmatpush1.bf16.msra.mxu0 %v267
    %450 = vmatprep.subr.bf16.mxu0 %v252
    %451 = vmatpush1.bf16.msra.mxu0 %v251
    %452 = vmatprep.subr.bf16.mxu0 0
    %453 = vmatpush2.bf16.msra.mxu0 0
    %454 = vmatprep.subr.bf16.mxu0 0
    %455 = vmatpush2.bf16.msra.mxu0 0
    %456 = vmatprep.subr.bf16.mxu0 0
    %457 = vmatpush2.bf16.msra.mxu0 0
    %458 = vmatprep.subr.bf16.mxu0 0
    %459 = vmatpush2.bf16.msra.mxu0 0
    %460 = vmatprep.subr.bf16.mxu0 0
    %461 = vmatpush2.bf16.msra.mxu0 0
    %462 = vmatprep.subr.bf16.mxu0 0
    %463 = vmatpush2.bf16.msra.mxu0 0
    %464 = vmatprep.subr.bf16.mxu0 0
    %465 = vmatpush2.bf16.msra.mxu0 0
    %466 = vmatprep.subr.bf16.mxu0 0
    %467 = vmatpush2.bf16.msra.mxu0 0
    %468 = vmatprep.mubr.bf16.mxu0 0
    %469 = vmatmul.mubr.bf16.gmra.mxu0 %v311
    %v470 = vpop.f32.mrf.mxu0
    %v471 = vadd.f32 %v96, %v470
    %v472 = vpop.f32.mrf.mxu0
    %v473 = vadd.f32 %v100, %v472
    %v474 = vpop.f32.mrf.mxu0
    %v475 = vpop.f32.mrf.mxu0
    %476 = vdwg.mxu0
    %477 = vmatprep.subr.bf16.mxu0 0
    %478 = vmatpush1.bf16.msra.mxu0 0
    %479 = vmatprep.subr.bf16.mxu0 0
    %480 = vmatpush1.bf16.msra.mxu0 0
    %481 = vmatprep.subr.bf16.mxu0 0
    %482 = vmatpush1.bf16.msra.mxu0 0
    %483 = vmatprep.subr.bf16.mxu0 0
    %484 = vmatpush1.bf16.msra.mxu0 0
    %485 = vmatprep.subr.bf16.mxu0 0
    %486 = vmatpush1.bf16.msra.mxu0 0
    %487 = vmatprep.subr.bf16.mxu0 0
    %488 = vmatpush1.bf16.msra.mxu0 0
    %489 = vmatprep.subr.bf16.mxu0 %v270
    %490 = vmatpush1.bf16.msra.mxu0 %v269
    %491 = vmatprep.subr.bf16.mxu0 %v254
    %492 = vmatpush1.bf16.msra.mxu0 %v253
    %493 = vmatprep.subr.bf16.mxu0 0
    %494 = vmatpush2.bf16.msra.mxu0 0
    %495 = vmatprep.subr.bf16.mxu0 0
    %496 = vmatpush2.bf16.msra.mxu0 0
    %497 = vmatprep.subr.bf16.mxu0 0
    %498 = vmatpush2.bf16.msra.mxu0 0
    %499 = vmatprep.subr.bf16.mxu0 0
    %500 = vmatpush2.bf16.msra.mxu0 0
    %501 = vmatprep.subr.bf16.mxu0 0
    %502 = vmatpush2.bf16.msra.mxu0 0
    %503 = vmatprep.subr.bf16.mxu0 0
    %504 = vmatpush2.bf16.msra.mxu0 0
    %505 = vmatprep.subr.bf16.mxu0 0
    %506 = vmatpush2.bf16.msra.mxu0 0
    %507 = vmatprep.subr.bf16.mxu0 0
    %508 = vmatpush2.bf16.msra.mxu0 0
    %509 = vmatprep.mubr.bf16.mxu0 0
    %510 = vmatmul.mubr.bf16.gmra.mxu0 %v311
    %v511 = vpop.f32.mrf.mxu0
    %v512 = vadd.f32 %v104, %v511
    %v513 = vpop.f32.mrf.mxu0
    %v514 = vadd.f32 %v108, %v513
    %v515 = vpop.f32.mrf.mxu0
    %v516 = vpop.f32.mrf.mxu0
    %517 = vdwg.mxu0
    %518 = vmatprep.subr.bf16.mxu0 0
    %519 = vmatpush1.bf16.msra.mxu0 0
    %520 = vmatprep.subr.bf16.mxu0 0
    %521 = vmatpush1.bf16.msra.mxu0 0
    %522 = vmatprep.subr.bf16.mxu0 0
    %523 = vmatpush1.bf16.msra.mxu0 0
    %524 = vmatprep.subr.bf16.mxu0 0
    %525 = vmatpush1.bf16.msra.mxu0 0
    %526 = vmatprep.subr.bf16.mxu0 0
    %527 = vmatpush1.bf16.msra.mxu0 0
    %528 = vmatprep.subr.bf16.mxu0 0
    %529 = vmatpush1.bf16.msra.mxu0 0
    %530 = vmatprep.subr.bf16.mxu0 %v272
    %531 = vmatpush1.bf16.msra.mxu0 %v271
    %532 = vmatprep.subr.bf16.mxu0 %v256
    %533 = vmatpush1.bf16.msra.mxu0 %v255
    %534 = vmatprep.subr.bf16.mxu0 0
    %535 = vmatpush2.bf16.msra.mxu0 0
    %536 = vmatprep.subr.bf16.mxu0 0
    %537 = vmatpush2.bf16.msra.mxu0 0
    %538 = vmatprep.subr.bf16.mxu0 0
    %539 = vmatpush2.bf16.msra.mxu0 0
    %540 = vmatprep.subr.bf16.mxu0 0
    %541 = vmatpush2.bf16.msra.mxu0 0
    %542 = vmatprep.subr.bf16.mxu0 0
    %543 = vmatpush2.bf16.msra.mxu0 0
    %544 = vmatprep.subr.bf16.mxu0 0
    %545 = vmatpush2.bf16.msra.mxu0 0
    %546 = vmatprep.subr.bf16.mxu0 0
    %547 = vmatpush2.bf16.msra.mxu0 0
    %548 = vmatprep.subr.bf16.mxu0 0
    %549 = vmatpush2.bf16.msra.mxu0 0
    %550 = vmatprep.mubr.bf16.mxu0 0
    %551 = vmatmul.mubr.bf16.gmra.mxu0 %v311
    %v552 = vpop.f32.mrf.mxu0
    %v553 = vadd.f32 %v112, %v552
    %v554 = vpop.f32.mrf.mxu0
    %v555 = vadd.f32 %v116, %v554
    %v556 = vpop.f32.mrf.mxu0
    %v557 = vpop.f32.mrf.mxu0
    %558 = vdwg.mxu0
    %559 = vmatprep.subr.bf16.mxu0 0
    %560 = vmatpush1.bf16.msra.mxu0 0
    %561 = vmatprep.subr.bf16.mxu0 0
    %562 = vmatpush1.bf16.msra.mxu0 0
    %563 = vmatprep.subr.bf16.mxu0 0
    %564 = vmatpush1.bf16.msra.mxu0 0
    %565 = vmatprep.subr.bf16.mxu0 0
    %566 = vmatpush1.bf16.msra.mxu0 0
    %567 = vmatprep.subr.bf16.mxu0 0
    %568 = vmatpush1.bf16.msra.mxu0 0
    %569 = vmatprep.subr.bf16.mxu0 0
    %570 = vmatpush1.bf16.msra.mxu0 0
    %571 = vmatprep.subr.bf16.mxu0 %v274
    %572 = vmatpush1.bf16.msra.mxu0 %v273
    %573 = vmatprep.subr.bf16.mxu0 %v258
    %574 = vmatpush1.bf16.msra.mxu0 %v257
    %575 = vmatprep.subr.bf16.mxu0 0
    %576 = vmatpush2.bf16.msra.mxu0 0
    %577 = vmatprep.subr.bf16.mxu0 0
    %578 = vmatpush2.bf16.msra.mxu0 0
    %579 = vmatprep.subr.bf16.mxu0 0
    %580 = vmatpush2.bf16.msra.mxu0 0
    %581 = vmatprep.subr.bf16.mxu0 0
    %582 = vmatpush2.bf16.msra.mxu0 0
    %583 = vmatprep.subr.bf16.mxu0 0
    %584 = vmatpush2.bf16.msra.mxu0 0
    %585 = vmatprep.subr.bf16.mxu0 0
    %586 = vmatpush2.bf16.msra.mxu0 0
    %587 = vmatprep.subr.bf16.mxu0 0
    %588 = vmatpush2.bf16.msra.mxu0 0
    %589 = vmatprep.subr.bf16.mxu0 0
    %590 = vmatpush2.bf16.msra.mxu0 0
    %591 = vmatprep.mubr.bf16.mxu0 0
    %592 = vmatmul.mubr.bf16.gmra.mxu0 %v311
    %v593 = vpop.f32.mrf.mxu0
    %v594 = vadd.f32 %v120, %v593
    %v595 = vpop.f32.mrf.mxu0
    %v596 = vadd.f32 %v124, %v595
    %v597 = vpop.f32.mrf.mxu0
    %v598 = vpop.f32.mrf.mxu0
    %599 = vdwg.mxu0
    %600 = vmatprep.subr.bf16.mxu0 0
    %601 = vmatpush1.bf16.msra.mxu0 0
    %602 = vmatprep.subr.bf16.mxu0 0
    %603 = vmatpush1.bf16.msra.mxu0 0
    %604 = vmatprep.subr.bf16.mxu0 0
    %605 = vmatpush1.bf16.msra.mxu0 0
    %606 = vmatprep.subr.bf16.mxu0 0
    %607 = vmatpush1.bf16.msra.mxu0 0
    %608 = vmatprep.subr.bf16.mxu0 0
    %609 = vmatpush1.bf16.msra.mxu0 0
    %610 = vmatprep.subr.bf16.mxu0 0
    %611 = vmatpush1.bf16.msra.mxu0 0
    %612 = vmatprep.subr.bf16.mxu0 %v276
    %613 = vmatpush1.bf16.msra.mxu0 %v275
    %614 = vmatprep.subr.bf16.mxu0 %v260
    %615 = vmatpush1.bf16.msra.mxu0 %v259
    %616 = vmatprep.subr.bf16.mxu0 0
    %617 = vmatpush2.bf16.msra.mxu0 0
    %618 = vmatprep.subr.bf16.mxu0 0
    %619 = vmatpush2.bf16.msra.mxu0 0
    %620 = vmatprep.subr.bf16.mxu0 0
    %621 = vmatpush2.bf16.msra.mxu0 0
    %622 = vmatprep.subr.bf16.mxu0 0
    %623 = vmatpush2.bf16.msra.mxu0 0
    %624 = vmatprep.subr.bf16.mxu0 0
    %625 = vmatpush2.bf16.msra.mxu0 0
    %626 = vmatprep.subr.bf16.mxu0 0
    %627 = vmatpush2.bf16.msra.mxu0 0
    %628 = vmatprep.subr.bf16.mxu0 0
    %629 = vmatpush2.bf16.msra.mxu0 0
    %630 = vmatprep.subr.bf16.mxu0 0
    %631 = vmatpush2.bf16.msra.mxu0 0
    %632 = vmatprep.mubr.bf16.mxu0 0
    %633 = vmatmul.mubr.bf16.gmra.mxu0 %v311
    %v634 = vpop.f32.mrf.mxu0
    %v635 = vadd.f32 %v128, %v634
    %v636 = vpop.f32.mrf.mxu0
    %v637 = vadd.f32 %v132, %v636
    %v638 = vpop.f32.mrf.mxu0
    %v639 = vpop.f32.mrf.mxu0
    %640 = vdwg.mxu0
    %v657 = vcombine.low %v348, %v350
    %v658 = vcombine.low %v389, %v391
    %v660 = vunpack.c.l.s4 1983009808
    %v661 = vunpack.c.0.s8 %v660
    %v662 = vlaneseq
    %v663 = vshrl.u32 %v662, 7
    %v664 = vsub.s32 %v661, %v663
    %v665 = vrot.slane %v657, %v664
    %v667 = vunpack.c.l.s4 1983009808
    %v668 = vunpack.c.0.s8 %v667
    %v669 = vlaneseq
    %v670 = vshrl.u32 %v669, 7
    %v671 = vsub.s32 %v668, %v670
    %v672 = vrot.slane %v658, %v671
    %v673 = vcombine.low %v665, %v672
    %v674 = vcombine.low %v430, %v432
    %v675 = vcombine.low %v471, %v473
    %v677 = vunpack.c.l.s4 1983009808
    %v678 = vunpack.c.0.s8 %v677
    %v679 = vlaneseq
    %v680 = vshrl.u32 %v679, 7
    %v681 = vsub.s32 %v678, %v680
    %v682 = vrot.slane %v674, %v681
    %v684 = vunpack.c.l.s4 1983009808
    %v685 = vunpack.c.0.s8 %v684
    %v686 = vlaneseq
    %v687 = vshrl.u32 %v686, 7
    %v688 = vsub.s32 %v685, %v687
    %v689 = vrot.slane %v675, %v688
    %v690 = vcombine.low %v682, %v689
    %v691 = vcombine.low %v512, %v514
    %v692 = vcombine.low %v553, %v555
    %v694 = vunpack.c.l.s4 1983009808
    %v695 = vunpack.c.0.s8 %v694
    %v696 = vlaneseq
    %v697 = vshrl.u32 %v696, 7
    %v698 = vsub.s32 %v695, %v697
    %v699 = vrot.slane %v691, %v698
    %v701 = vunpack.c.l.s4 1983009808
    %v702 = vunpack.c.0.s8 %v701
    %v703 = vlaneseq
    %v704 = vshrl.u32 %v703, 7
    %v705 = vsub.s32 %v702, %v704
    %v706 = vrot.slane %v692, %v705
    %v707 = vcombine.low %v699, %v706
    %v708 = vcombine.low %v594, %v596
    %v709 = vcombine.low %v635, %v637
    %v711 = vunpack.c.l.s4 1983009808
    %v712 = vunpack.c.0.s8 %v711
    %v713 = vlaneseq
    %v714 = vshrl.u32 %v713, 7
    %v715 = vsub.s32 %v712, %v714
    %v716 = vrot.slane %v708, %v715
    %v718 = vunpack.c.l.s4 1983009808
    %v719 = vunpack.c.0.s8 %v718
    %v720 = vlaneseq
    %v721 = vshrl.u32 %v720, 7
    %v722 = vsub.s32 %v719, %v721
    %v723 = vrot.slane %v709, %v722
    %v724 = vcombine.low %v716, %v723
    %729 = vst [vmem:[%s3] sm:$0xff] %v673
    %730 = vst [vmem:[%s3 + $0x8] sm:$0xff] %v690
    %731 = vst [vmem:[%s3 + $0x10] sm:$0xff] %v707
    %732 = vst [vmem:[%s3 + $0x18] sm:$0xff] %v724
    %v734 = vunpack.c.l.s4 1966171168
    %v735 = vunpack.c.0.s8 %v734
    %v736 = vlaneseq
    %v737 = vshrl.u32 %v736, 7
    %v738 = vsub.s32 %v735, %v737
    %v739 = vrot.slane %v657, %v738
    %v741 = vunpack.c.l.s4 1966171168
    %v742 = vunpack.c.0.s8 %v741
    %v743 = vlaneseq
    %v744 = vshrl.u32 %v743, 7
    %v745 = vsub.s32 %v742, %v744
    %v746 = vrot.slane %v658, %v745
    %v748 = vunpack.c.l.s4 1966171168
    %v749 = vunpack.c.0.s8 %v748
    %v750 = vlaneseq
    %v751 = vshrl.u32 %v750, 7
    %v752 = vsub.s32 %v749, %v751
    %v753 = vrot.slane %v674, %v752
    %v755 = vunpack.c.l.s4 1966171168
    %v756 = vunpack.c.0.s8 %v755
    %v757 = vlaneseq
    %v758 = vshrl.u32 %v757, 7
    %v759 = vsub.s32 %v756, %v758
    %v760 = vrot.slane %v675, %v759
    %v761 = vcombine.low %v739, %v746
    %v762 = vcombine.high %v739, %v746
    %v763 = vcombine.low %v753, %v760
    %v764 = vcombine.high %v753, %v760
    %v766 = vunpack.c.l.s4 1966171168
    %v767 = vunpack.c.0.s8 %v766
    %v768 = vlaneseq
    %v769 = vshrl.u32 %v768, 7
    %v770 = vsub.s32 %v767, %v769
    %v771 = vrot.slane %v761, %v770
    %v773 = vunpack.c.l.s4 1966171168
    %v774 = vunpack.c.0.s8 %v773
    %v775 = vlaneseq
    %v776 = vshrl.u32 %v775, 7
    %v777 = vsub.s32 %v774, %v776
    %v778 = vrot.slane %v762, %v777
    %v780 = vunpack.c.l.s4 1966171168
    %v781 = vunpack.c.0.s8 %v780
    %v782 = vlaneseq
    %v783 = vshrl.u32 %v782, 7
    %v784 = vsub.s32 %v781, %v783
    %v785 = vrot.slane %v763, %v784
    %v787 = vunpack.c.l.s4 1966171168
    %v788 = vunpack.c.0.s8 %v787
    %v789 = vlaneseq
    %v790 = vshrl.u32 %v789, 7
    %v791 = vsub.s32 %v788, %v790
    %v792 = vrot.slane %v764, %v791
    %v793 = vcombine.low %v771, %v785
    %v794 = vcombine.low %v778, %v792
    %v796 = vunpack.c.l.s4 1966171168
    %v797 = vunpack.c.0.s8 %v796
    %v798 = vlaneseq
    %v799 = vshrl.u32 %v798, 7
    %v800 = vsub.s32 %v797, %v799
    %v801 = vrot.slane %v691, %v800
    %v803 = vunpack.c.l.s4 1966171168
    %v804 = vunpack.c.0.s8 %v803
    %v805 = vlaneseq
    %v806 = vshrl.u32 %v805, 7
    %v807 = vsub.s32 %v804, %v806
    %v808 = vrot.slane %v692, %v807
    %v810 = vunpack.c.l.s4 1966171168
    %v811 = vunpack.c.0.s8 %v810
    %v812 = vlaneseq
    %v813 = vshrl.u32 %v812, 7
    %v814 = vsub.s32 %v811, %v813
    %v815 = vrot.slane %v708, %v814
    %v817 = vunpack.c.l.s4 1966171168
    %v818 = vunpack.c.0.s8 %v817
    %v819 = vlaneseq
    %v820 = vshrl.u32 %v819, 7
    %v821 = vsub.s32 %v818, %v820
    %v822 = vrot.slane %v709, %v821
    %v823 = vcombine.low %v801, %v808
    %v824 = vcombine.high %v801, %v808
    %v825 = vcombine.low %v815, %v822
    %v826 = vcombine.high %v815, %v822
    %v828 = vunpack.c.l.s4 1966171168
    %v829 = vunpack.c.0.s8 %v828
    %v830 = vlaneseq
    %v831 = vshrl.u32 %v830, 7
    %v832 = vsub.s32 %v829, %v831
    %v833 = vrot.slane %v823, %v832
    %v835 = vunpack.c.l.s4 1966171168
    %v836 = vunpack.c.0.s8 %v835
    %v837 = vlaneseq
    %v838 = vshrl.u32 %v837, 7
    %v839 = vsub.s32 %v836, %v838
    %v840 = vrot.slane %v824, %v839
    %v842 = vunpack.c.l.s4 1966171168
    %v843 = vunpack.c.0.s8 %v842
    %v844 = vlaneseq
    %v845 = vshrl.u32 %v844, 7
    %v846 = vsub.s32 %v843, %v845
    %v847 = vrot.slane %v825, %v846
    %v849 = vunpack.c.l.s4 1966171168
    %v850 = vunpack.c.0.s8 %v849
    %v851 = vlaneseq
    %v852 = vshrl.u32 %v851, 7
    %v853 = vsub.s32 %v850, %v852
    %v854 = vrot.slane %v826, %v853
    %v855 = vcombine.low %v833, %v847
    %v856 = vcombine.low %v840, %v854
    %v861 = vadd.f32 %v793, %v855
    %v862 = vadd.f32 %v861, %v794
    %v863 = vadd.f32 %v862, %v856
    %v864 = vrot.slane %v863, 4
    %v865 = vadd.f32 %v863, %v864
    %v866 = vrot.slane %v865, 2
    %v867 = vadd.f32 %v865, %v866
    %v868 = vrot.slane %v867, 1
    %v869 = vadd.f32 %v867, %v868
    %870 = vst [vmem:[%s4] sm:$0x1] %v869
    %v871 = vmul.f32 %v793, %v793
    %v872 = vmul.f32 %v855, %v855
    %v873 = vmul.f32 %v794, %v794
    %v874 = vmul.f32 %v856, %v856
    %v875 = vadd.f32 %v871, %v872
    %v876 = vadd.f32 %v875, %v873
    %v877 = vadd.f32 %v876, %v874
    %v878 = vrot.slane %v877, 4
    %v879 = vadd.f32 %v877, %v878
    %v880 = vrot.slane %v879, 2
    %v881 = vadd.f32 %v879, %v880
    %v882 = vrot.slane %v881, 1
    %v883 = vadd.f32 %v881, %v882
    %884 = vst [vmem:[%s4 + $0x1] sm:$0x1] %v883
    // Predicated region
    $region18: #{generator_forward.4} parent=1 // pred_check
      _
    $region19: #{generator_forward.4} parent=1 // pred_check_branch
      %886 = sbr.rel (0) target = $region21
    $region20: #{generator_forward.4} parent=1 // pred_region
      _
    $region21: #{generator_forward.4} parent=1 // pred_fallthru
      _
    // Predicated region
    $region22: #{generator_forward.4} parent=1 // pred_check
      _
    $region23: #{generator_forward.4} parent=1 // pred_check_branch
      %888 = sbr.rel (0) target = $region25
    $region24: #{generator_forward.4} parent=1 // pred_region
      _
    $region25: #{generator_forward.4} parent=1 // pred_fallthru
      _
    // Predicated region
    $region26: #{generator_forward.4} parent=1 // pred_check
      _
    $region27: #{generator_forward.4} parent=1 // pred_check_branch
      %890 = sbr.rel (0) target = $region29
    $region28: #{generator_forward.4} parent=1 // pred_region
      _
    $region29: #{generator_forward.4} parent=1 // pred_fallthru
      _
    // Predicated region
    $region30: #{generator_forward.4} parent=1 // pred_check
      _
    $region31: #{generator_forward.4} parent=1 // pred_check_branch
      %892 = sbr.rel (0) target = $region33
    $region32: #{generator_forward.4} parent=1 // pred_region
      _
    $region33: #{generator_forward.4} parent=1 // pred_fallthru
      _
    %893 = vsyncpa [#allocation3], 1

// kernel: generator_forward.5
$region0: #{generator_forward.5}
  #allocation0 [shape = 'u32[]', space=smem, size = 0x4, offset = 0x4, fixed_abs, tag = 'smem constant byte address 0x4 - core index']
  #allocation1 [shape = 'u32[144,128]{1,0:T(1,128)}', space=vmem, size = 0x12000, scoped, tag = 'internal scratch']
  #allocation2 [shape = 'bf16[1,10,6,128]{3,2,1,0:T(8,128)(2,1)}', space=vmem, size = 0x5000, scoped, tag = 'scratch operand']
  %s0 = inlined_call_operand.vmem [shape: f32[2,4,4,128], index: 0, kind: input, shape index: {}]
  %s1 = inlined_call_operand.vmem [shape: f32[1,128], index: 1, kind: input, shape index: {}]
  %s2 = inlined_call_operand.vmem [shape: f32[1,128], index: 2, kind: input, shape index: {}]
  %s3 = inlined_call_operand.hbm [shape: bf16[1152,256], index: 3, kind: input, shape index: {}]
  %s4 = inlined_call_operand.vmem [shape: f32[1,256], index: 4, kind: input, shape index: {}]
  %s5 = inlined_call_operand.vmem [shape: f32[64,256], index: 5, kind: output, shape index: {0}]
  %s6 = inlined_call_operand.vmem [shape: f32[2,2,256], index: 6, kind: output, shape index: {1}]
  %7 = xla_tuple %s5, %s6
  %s8 = sld [smem:[#allocation0]]
  $region69: #{generator_forward.5} parent=0
    _
  %s10 = ssub.s32 1, %s8
  %s11 = scalar_select 0, %s10, %s8
  $region1: #{generator_forward.5} parent=0
    #allocation3 [shape = 'u8[589824]{0}', space=vmem, size = 0x90000, scoped, tag = 'input window, operand 3, single buffered']
    #allocation4 [shape = 's32[2]{0}', space=sflag, size = 0x8, scoped, tag = 'scoped memory for generator_forward.5']
    %12 = vsyncpa [#allocation4], 0
    loop: start=0, step=1, limit=4
    $region2: #{generator_forward.5} parent=1 // loop_pre_header
      _
    $region3: #{generator_forward.5} parent=1 // loop_header
      %s14 = sphi 0, %s18
      %p15 = scmp.ge.s32.totalorder %s14, 4
      %s24 = sphi 0, %s26
      %s27 = sphi 0, %s24
      %s28 = sphi 0, %s27
      %s44 = sphi 0, %s28
      %s48 = sphi 0, %s48
      %s50 = sphi 0, %s48
      %s51 = sphi 0, %s50
      %s65 = sphi 0, %s51
      %s69 = sphi 0, %s69
      %s71 = sphi 0, %s69
      %s72 = sphi 0, %s71
      %s86 = sphi 0, %s72
      %s90 = sphi 0, %s90
      %s92 = sphi 0, %s90
      %s93 = sphi 0, %s92
      %s107 = sphi 0, %s93
      %s111 = sphi 0, %s111
      %s113 = sphi 0, %s111
      %s114 = sphi 0, %s113
      %s128 = sphi 0, %s114
      %s134 = sphi 0, %s136
      %s137 = sphi 0, %s134
      %s138 = sphi 0, %s137
      %s154 = sphi 0, %s138
      %s160 = sphi 0, %s162
      %s163 = sphi 0, %s160
      %s164 = sphi 0, %s163
      %s180 = sphi 0, %s164
    $region4: #{generator_forward.5} parent=1 // loop_header_branch
      %17 = sbr.rel (%p15) target = $region8
    $region5: #{generator_forward.5} parent=1 // loop_body
      %s19 = ssub.s32 %s14, 1
      %s20 = ssub.s32 %s14, 2
      %s21 = sadd.s32 %s14, 1
      %s22 = ssub.s32 %s14, %s21
      %p23 = scmp.eq.s32.totalorder %s22, 0
      %s25 = sadd.s32 %s24, 1
      %s26 = scalar_select %p23, %s24, %s25
      %p29 = pneg %p23
      %p30 = scmp.eq.s32.totalorder %s14, 1
      %p31 = por %p29, %p30
      %p32 = scmp.ne.s32.totalorder %s24, %s27
      %p33 = scmp.eq.s32.totalorder %s14, 0
      %p34 = por %p32, %p33
      %p35 = scmp.ne.s32.totalorder %s24, %s27
      %p36 = scmp.eq.s32.totalorder %s19, 1
      %p37 = por %p35, %p36
      %p38 = scmp.ne.s32.totalorder %s27, %s28
      %p39 = scmp.eq.s32.totalorder %s19, 0
      %p40 = por %p38, %p39
      %p41 = scmp.ne.s32.totalorder %s27, %s28
      %p42 = scmp.eq.s32.totalorder %s20, 1
      %p43 = por %p41, %p42
      %p45 = scmp.ne.s32.totalorder %s28, %s44
      %p46 = scmp.eq.s32.totalorder %s20, 0
      %p47 = por %p45, %p46
      %s49 = sadd.s32 %s48, 1
      %p52 = scmp.eq.s32.totalorder %s14, 1
      %p53 = scmp.ne.s32.totalorder %s48, %s50
      %p54 = scmp.eq.s32.totalorder %s14, 0
      %p55 = por %p53, %p54
      %p56 = scmp.ne.s32.totalorder %s48, %s50
      %p57 = scmp.eq.s32.totalorder %s19, 1
      %p58 = por %p56, %p57
      %p59 = scmp.ne.s32.totalorder %s50, %s51
      %p60 = scmp.eq.s32.totalorder %s19, 0
      %p61 = por %p59, %p60
      %p62 = scmp.ne.s32.totalorder %s50, %s51
      %p63 = scmp.eq.s32.totalorder %s20, 1
      %p64 = por %p62, %p63
      %p66 = scmp.ne.s32.totalorder %s51, %s65
      %p67 = scmp.eq.s32.totalorder %s20, 0
      %p68 = por %p66, %p67
      %s70 = sadd.s32 %s69, 1
      %p73 = scmp.eq.s32.totalorder %s14, 1
      %p74 = scmp.ne.s32.totalorder %s69, %s71
      %p75 = scmp.eq.s32.totalorder %s14, 0
      %p76 = por %p74, %p75
      %p77 = scmp.ne.s32.totalorder %s69, %s71
      %p78 = scmp.eq.s32.totalorder %s19, 1
      %p79 = por %p77, %p78
      %p80 = scmp.ne.s32.totalorder %s71, %s72
      %p81 = scmp.eq.s32.totalorder %s19, 0
      %p82 = por %p80, %p81
      %p83 = scmp.ne.s32.totalorder %s71, %s72
      %p84 = scmp.eq.s32.totalorder %s20, 1
      %p85 = por %p83, %p84
      %p87 = scmp.ne.s32.totalorder %s72, %s86
      %p88 = scmp.eq.s32.totalorder %s20, 0
      %p89 = por %p87, %p88
      %s91 = sadd.s32 %s90, 1
      %p94 = scmp.eq.s32.totalorder %s14, 1
      %p95 = scmp.ne.s32.totalorder %s90, %s92
      %p96 = scmp.eq.s32.totalorder %s14, 0
      %p97 = por %p95, %p96
      %p98 = scmp.ne.s32.totalorder %s90, %s92
      %p99 = scmp.eq.s32.totalorder %s19, 1
      %p100 = por %p98, %p99
      %p101 = scmp.ne.s32.totalorder %s92, %s93
      %p102 = scmp.eq.s32.totalorder %s19, 0
      %p103 = por %p101, %p102
      %p104 = scmp.ne.s32.totalorder %s92, %s93
      %p105 = scmp.eq.s32.totalorder %s20, 1
      %p106 = por %p104, %p105
      %p108 = scmp.ne.s32.totalorder %s93, %s107
      %p109 = scmp.eq.s32.totalorder %s20, 0
      %p110 = por %p108, %p109
      %s112 = sadd.s32 %s111, 1
      %p115 = scmp.eq.s32.totalorder %s14, 1
      %p116 = scmp.ne.s32.totalorder %s111, %s113
      %p117 = scmp.eq.s32.totalorder %s14, 0
      %p118 = por %p116, %p117
      %p119 = scmp.ne.s32.totalorder %s111, %s113
      %p120 = scmp.eq.s32.totalorder %s19, 1
      %p121 = por %p119, %p120
      %p122 = scmp.ne.s32.totalorder %s113, %s114
      %p123 = scmp.eq.s32.totalorder %s19, 0
      %p124 = por %p122, %p123
      %p125 = scmp.ne.s32.totalorder %s113, %s114
      %p126 = scmp.eq.s32.totalorder %s20, 1
      %p127 = por %p125, %p126
      %p129 = scmp.ne.s32.totalorder %s114, %s128
      %p130 = scmp.eq.s32.totalorder %s20, 0
      %p131 = por %p129, %p130
      %s132 = ssub.s32 %s14, %s21
      %p133 = scmp.eq.s32.totalorder %s132, 0
      %s135 = sadd.s32 %s134, 1
      %s136 = scalar_select %p133, %s134, %s135
      %p139 = pneg %p133
      %p140 = scmp.eq.s32.totalorder %s14, 1
      %p141 = por %p139, %p140
      %p142 = scmp.ne.s32.totalorder %s134, %s137
      %p143 = scmp.eq.s32.totalorder %s14, 0
      %p144 = por %p142, %p143
      %p145 = scmp.ne.s32.totalorder %s134, %s137
      %p146 = scmp.eq.s32.totalorder %s19, 1
      %p147 = por %p145, %p146
      %p148 = scmp.ne.s32.totalorder %s137, %s138
      %p149 = scmp.eq.s32.totalorder %s19, 0
      %p150 = por %p148, %p149
      %p151 = scmp.ne.s32.totalorder %s137, %s138
      %p152 = scmp.eq.s32.totalorder %s20, 1
      %p153 = por %p151, %p152
      %p155 = scmp.ne.s32.totalorder %s138, %s154
      %p156 = scmp.eq.s32.totalorder %s20, 0
      %p157 = por %p155, %p156
      %s158 = ssub.s32 %s14, %s21
      %p159 = scmp.eq.s32.totalorder %s158, 0
      %s161 = sadd.s32 %s160, 1
      %s162 = scalar_select %p159, %s160, %s161
      %p165 = pneg %p159
      %p166 = scmp.eq.s32.totalorder %s14, 1
      %p167 = por %p165, %p166
      %p168 = scmp.ne.s32.totalorder %s160, %s163
      %p169 = scmp.eq.s32.totalorder %s14, 0
      %p170 = por %p168, %p169
      %p171 = scmp.ne.s32.totalorder %s160, %s163
      %p172 = scmp.eq.s32.totalorder %s19, 1
      %p173 = por %p171, %p172
      %p174 = scmp.ne.s32.totalorder %s163, %s164
      %p175 = scmp.eq.s32.totalorder %s19, 0
      %p176 = por %p174, %p175
      %p177 = scmp.ne.s32.totalorder %s163, %s164
      %p178 = scmp.eq.s32.totalorder %s20, 1
      %p179 = por %p177, %p178
      %p181 = scmp.ne.s32.totalorder %s164, %s180
      %p182 = scmp.eq.s32.totalorder %s20, 0
      %p183 = por %p181, %p182
      %p184 = scmp.le.s32.totalorder 1, %s14
      %p185 = scmp.lt.s32.totalorder %s14, 3
      %p186 = pnand %p184, %p185
      %p187 = pneg %p186
      // Predicated region
      $region9: #{generator_forward.5} parent=5 // pred_check
        _
      $region10: #{generator_forward.5} parent=5 // pred_check_branch
        %189 = sbr.rel (%p186) target = $region12
      $region11: #{generator_forward.5} parent=5 // pred_region
        %s190 = ssub.s32 %s14, 1
        // Predicated region
        $region13: #{generator_forward.5} parent=11 // pred_check
          %p191 = pneg %p61
        $region14: #{generator_forward.5} parent=11 // pred_check_branch
          %193 = sbr.rel (%p191) target = $region16
        $region15: #{generator_forward.5} parent=11 // pred_region
          _
        $region16: #{generator_forward.5} parent=11 // pred_fallthru
          _
        // Predicated region
        $region17: #{generator_forward.5} parent=11 // pred_check
          %p194 = pneg %p82
        $region18: #{generator_forward.5} parent=11 // pred_check_branch
          %196 = sbr.rel (%p194) target = $region20
        $region19: #{generator_forward.5} parent=11 // pred_region
          _
        $region20: #{generator_forward.5} parent=11 // pred_fallthru
          _
        // Predicated region
        $region21: #{generator_forward.5} parent=11 // pred_check
          %p197 = pneg %p103
        $region22: #{generator_forward.5} parent=11 // pred_check_branch
          %199 = sbr.rel (%p197) target = $region24
        $region23: #{generator_forward.5} parent=11 // pred_region
          %s201 = ssub.s32 18432, 18432
          %202 = vsyncadd [#allocation4], %s201
          %s203 = sshll.u32 [#allocation3], 4
          %s204 = int_to_ptr.vmem [resolvable:$true] %s203
          %209 = dma.hbm_to_vmem [thread:$0]  %s3, 18432, %s204, [#allocation4], 128, 128, 8
        $region24: #{generator_forward.5} parent=11 // pred_fallthru
          _
        // Predicated region
        $region25: #{generator_forward.5} parent=11 // pred_check
          %p210 = pneg %p124
        $region26: #{generator_forward.5} parent=11 // pred_check_branch
          %212 = sbr.rel (%p210) target = $region28
        $region27: #{generator_forward.5} parent=11 // pred_region
          _
        $region28: #{generator_forward.5} parent=11 // pred_fallthru
          _
      $region12: #{generator_forward.5} parent=5 // pred_fallthru
        _
      %p213 = scmp.lt.s32.totalorder %s14, 2
      // Predicated region
      $region29: #{generator_forward.5} parent=5 // pred_check
        %p214 = pneg %p213
      $region30: #{generator_forward.5} parent=5 // pred_check_branch
        %216 = sbr.rel (%p214) target = $region32
      $region31: #{generator_forward.5} parent=5 // pred_region
        // Predicated region
        $region33: #{generator_forward.5} parent=31 // pred_check
          %p217 = pneg %p34
        $region34: #{generator_forward.5} parent=31 // pred_check_branch
          %219 = sbr.rel (%p217) target = $region36
        $region35: #{generator_forward.5} parent=31 // pred_region
          %p220 = scmp.lt.s32.totalorder %s14, 1
          %s221 = scalar_select %p220, %s14, 1
          %s222 = smul.addr %s221, 4
          %s223 = smul.addr %s222, 4
          %s224 = scalar_lea.vmem %s0, %s223
        $region36: #{generator_forward.5} parent=31 // pred_fallthru
          _
      $region32: #{generator_forward.5} parent=5 // pred_fallthru
        _
      %p225 = scmp.le.s32.totalorder 1, %s14
      %p226 = scmp.lt.s32.totalorder %s14, 3
      %p227 = pnand %p225, %p226
      %p228 = pneg %p227
      // Predicated region
      $region37: #{generator_forward.5} parent=5 // pred_check
        _
      $region38: #{generator_forward.5} parent=5 // pred_check_branch
        %230 = sbr.rel (%p227) target = $region40
      $region39: #{generator_forward.5} parent=5 // pred_region
        %s231 = ssub.s32 %s14, 1
        // Predicated region
        $region41: #{generator_forward.5} parent=39 // pred_check
          %p232 = pneg %p103
        $region42: #{generator_forward.5} parent=39 // pred_check_branch
          %234 = sbr.rel (%p232) target = $region44
        $region43: #{generator_forward.5} parent=39 // pred_region
          %235 = dma.done [#allocation4], 18432
        $region44: #{generator_forward.5} parent=39 // pred_fallthru
          _
        %p236 = scmp.lt.s32.totalorder %s19, 1
        %s237 = scalar_select %p236, %s19, 1
        %s238 = smul.addr %s237, 4
        %s239 = smul.addr %s238, 4
        %s240 = scalar_lea.vmem %s0, %s239
        %p241 = pneg %p40
        %p242 = pneg %p37
        %p243 = pneg %p61
        %p244 = pneg %p58
        %p245 = pneg %p82
        %p246 = pneg %p79
        %p247 = pneg %p103
        %p248 = pneg %p100
        %p249 = pneg %p124
        %p250 = pneg %p121
        %p251 = pneg %p150
        %p252 = pneg %p147
        %s253 = smul.u32 4, %s19
        %p254 = scmp.lt.s32.totalorder %s253, 7
        %s255 = scalar_select %p254, %s253, 7
        %s256 = smul.addr %s255, 2
        %s257 = smul.addr %s256, 8
        %s258 = scalar_lea.vmem %s5, %s257
        %p259 = pneg %p176
        %p260 = pneg %p173
        %p261 = scmp.lt.s32.totalorder %s19, 1
        %s262 = scalar_select %p261, %s19, 1
        %s263 = smul.addr %s262, 2
        %s264 = smul.addr %s263, 2
        %s265 = scalar_lea.vmem %s6, %s264
        %p266 = scmp.lt.s32.totalorder %s19, 1
        %s267 = scalar_select %p266, %s19, 1
        %s268 = smul.addr %s267, 4
        %s269 = smul.addr %s268, 4
        %s270 = scalar_lea.vmem %s0, %s269
        %s271 = smul.u32 4, %s19
        %p272 = scmp.lt.s32.totalorder %s271, 7
        %s273 = scalar_select %p272, %s271, 7
        %s274 = smul.addr %s273, 2
        %s275 = smul.addr %s274, 8
        %s276 = scalar_lea.vmem %s5, %s275
        %s277 = smul.u32 4, %s19
        %p278 = scmp.lt.s32.totalorder %s19, 1
        %s279 = scalar_select %p278, %s19, 1
        %s280 = smul.addr %s279, 2
        %s281 = smul.addr %s280, 2
        %s282 = scalar_lea.vmem %s6, %s281
        %v284 = vld [vmem:[%s270] sm:$0xf]
        %v285 = vld [vmem:[%s270 + $0x4] sm:$0xf]
        %v286 = vld [vmem:[%s270 + $0x8] sm:$0xf]
        %v287 = vld [vmem:[%s270 + $0xc] sm:$0xf]
        %v288 = vld [vmem:[%s1] sm:$0x1]
        %v290 = vlaneseq
        %v291 = vshrl.u32 %v290, 7
        %v292 = vsub.s32 0, %v291
        %v293 = vrot.slane %v288, %v292
        %v295 = vmul.f32 %v284, %v293
        %v296 = vmul.f32 %v285, %v293
        %v297 = vmul.f32 %v286, %v293
        %v298 = vmul.f32 %v287, %v293
        %v299 = vld [vmem:[%s2] sm:$0x1]
        %v301 = vlaneseq
        %v302 = vshrl.u32 %v301, 7
        %v303 = vsub.s32 0, %v302
        %v304 = vrot.slane %v299, %v303
        %v306 = vadd.f32 %v295, %v304
        %v307 = vadd.f32 %v296, %v304
        %v308 = vadd.f32 %v297, %v304
        %v309 = vadd.f32 %v298, %v304
        %v310 = vpack.c.bf16 %v306, %v306
        %v311 = vpack.c.bf16 %v307, %v307
        %v312 = vpack.c.bf16 %v308, %v308
        %v313 = vpack.c.bf16 %v309, %v309
        %p314 = scmp.eq.s32.totalorder %s19, 0
        // Predicated region
        $region45: #{generator_forward.5} parent=39 // pred_check
          %p315 = pneg %p314
        $region46: #{generator_forward.5} parent=39 // pred_check_branch
          %317 = sbr.rel (%p315) target = $region48
        $region47: #{generator_forward.5} parent=39 // pred_region
          %318 = vst [vmem:[#allocation2] sm:$0x7] 0
          %319 = vst [vmem:[#allocation2 + $0x4] sm:$0x7] 0
          %320 = vst [vmem:[#allocation2 + $0x8] sm:$0x7] 0
          %321 = vst [vmem:[#allocation2 + $0xc] sm:$0x7] 0
          %322 = vst [vmem:[#allocation2 + $0x10] sm:$0x7] 0
          %323 = vst [vmem:[#allocation2 + $0x14] sm:$0x7] 0
          %324 = vst [vmem:[#allocation2 + $0x18] sm:$0x7] 0
          %325 = vst [vmem:[#allocation2 + $0x1c] sm:$0x7] 0
          %326 = vst [vmem:[#allocation2 + $0x20] sm:$0x7] 0
          %327 = vst [vmem:[#allocation2 + $0x24] sm:$0x7] 0
        $region48: #{generator_forward.5} parent=39 // pred_fallthru
          _
        %v332 = vunpack.c.l.b16 %v310
        %v333 = vunpack.c.l.b16 %v311
        %v334 = vunpack.c.l.b16 %v312
        %v335 = vunpack.c.l.b16 %v313
        %v336 = vpack.c.b16 %v332, %v332
        %v337 = vpack.c.b16 %v333, %v333
        %v338 = vpack.c.b16 %v334, %v334
        %v339 = vpack.c.b16 %v335, %v335
        %v341 = vshrl.u32 %v336, 16
        %v343 = vrot.slane %v341, 7
        %v344 = vshll.u32 %v336, 16
        %v346 = vor.u32 %v343, %v344
        %v348 = vshrl.u32 %v337, 16
        %v350 = vrot.slane %v348, 7
        %v351 = vshll.u32 %v337, 16
        %v353 = vor.u32 %v350, %v351
        %v355 = vshrl.u32 %v338, 16
        %v357 = vrot.slane %v355, 7
        %v358 = vshll.u32 %v338, 16
        %v360 = vor.u32 %v357, %v358
        %v362 = vshrl.u32 %v339, 16
        %v364 = vrot.slane %v362, 7
        %v365 = vshll.u32 %v339, 16
        %v367 = vor.u32 %v364, %v365
        %s372 = scalar_lea.vmem [#allocation2], 4
        %vm373 = vcmask 1042432
        %vm374 = vsmask.f32 2306
        %vm375 = vmand %vm373, %vm374
        %v376 = vld [vmem:[%s372] sm:$0x7]
        %v377 = vsel %vm375, %v346, %v376
        %378 = vst [vmem:[%s372] sm:$0x7] %v377
        %v379 = vld [vmem:[%s372 + $0x4] sm:$0x7]
        %v380 = vsel %vm375, %v346, %v379
        %381 = vst [vmem:[%s372 + $0x4] sm:$0x7] %v380
        %v382 = vld [vmem:[%s372 + $0x8] sm:$0x7]
        %v383 = vsel %vm375, %v353, %v382
        %384 = vst [vmem:[%s372 + $0x8] sm:$0x7] %v383
        %v385 = vld [vmem:[%s372 + $0xc] sm:$0x7]
        %v386 = vsel %vm375, %v353, %v385
        %387 = vst [vmem:[%s372 + $0xc] sm:$0x7] %v386
        %v388 = vld [vmem:[%s372 + $0x10] sm:$0x7]
        %v389 = vsel %vm375, %v360, %v388
        %390 = vst [vmem:[%s372 + $0x10] sm:$0x7] %v389
        %v391 = vld [vmem:[%s372 + $0x14] sm:$0x7]
        %v392 = vsel %vm375, %v360, %v391
        %393 = vst [vmem:[%s372 + $0x14] sm:$0x7] %v392
        %v394 = vld [vmem:[%s372 + $0x18] sm:$0x7]
        %v395 = vsel %vm375, %v367, %v394
        %396 = vst [vmem:[%s372 + $0x18] sm:$0x7] %v395
        %v397 = vld [vmem:[%s372 + $0x1c] sm:$0x7]
        %v398 = vsel %vm375, %v367, %v397
        %399 = vst [vmem:[%s372 + $0x1c] sm:$0x7] %v398
        %v400 = vld [vmem:[#allocation2] sm:$0x7]
        %v401 = vld [vmem:[#allocation2 + $0x4] sm:$0x7]
        %v402 = vld [vmem:[#allocation2 + $0x8] sm:$0x7]
        %v403 = vld [vmem:[#allocation2 + $0xc] sm:$0x7]
        %v404 = vld [vmem:[#allocation2 + $0x10] sm:$0x7]
        %v405 = vld [vmem:[#allocation2 + $0x14] sm:$0x7]
        %v406 = vld [vmem:[#allocation2 + $0x18] sm:$0x7]
        %v407 = vld [vmem:[#allocation2 + $0x1c] sm:$0x7]
        %v416 = vunpack.c.l.b16 %v400
        %v417 = vunpack.c.l.b16 %v401
        %v418 = vunpack.c.l.b16 %v402
        %v419 = vunpack.c.l.b16 %v403
        %v420 = vunpack.c.l.b16 %v404
        %v421 = vunpack.c.l.b16 %v405
        %v422 = vunpack.c.l.b16 %v406
        %v423 = vunpack.c.l.b16 %v407
        %v424 = vpack.c.b16 %v416, %v416
        %v425 = vpack.c.b16 %v417, %v417
        %v426 = vpack.c.b16 %v418, %v418
        %v427 = vpack.c.b16 %v419, %v419
        %v428 = vpack.c.b16 %v420, %v420
        %v429 = vpack.c.b16 %v421, %v421
        %v430 = vpack.c.b16 %v422, %v422
        %v431 = vpack.c.b16 %v423, %v423
        %v433 = vshrl.u32 %v424, 16
        %v435 = vshll.u32 %v424, 16
        %v437 = vrot.slane %v435, 1
        %v438 = vor.u32 %v433, %v437
        %v440 = vshrl.u32 %v425, 16
        %v442 = vshll.u32 %v425, 16
        %v444 = vrot.slane %v442, 1
        %v445 = vor.u32 %v440, %v444
        %v447 = vshrl.u32 %v426, 16
        %v449 = vshll.u32 %v426, 16
        %v451 = vrot.slane %v449, 1
        %v452 = vor.u32 %v447, %v451
        %v454 = vshrl.u32 %v427, 16
        %v456 = vshll.u32 %v427, 16
        %v458 = vrot.slane %v456, 1
        %v459 = vor.u32 %v454, %v458
        %v461 = vshrl.u32 %v428, 16
        %v463 = vshll.u32 %v428, 16
        %v465 = vrot.slane %v463, 1
        %v466 = vor.u32 %v461, %v465
        %v468 = vshrl.u32 %v429, 16
        %v470 = vshll.u32 %v429, 16
        %v472 = vrot.slane %v470, 1
        %v473 = vor.u32 %v468, %v472
        %v475 = vshrl.u32 %v430, 16
        %v477 = vshll.u32 %v430, 16
        %v479 = vrot.slane %v477, 1
        %v480 = vor.u32 %v475, %v479
        %v482 = vshrl.u32 %v431, 16
        %v484 = vshll.u32 %v431, 16
        %v486 = vrot.slane %v484, 1
        %v487 = vor.u32 %v482, %v486
        %v488 = vrot.slane %v424, 1
        %v489 = vrot.slane %v425, 1
        %v490 = vrot.slane %v426, 1
        %v491 = vrot.slane %v427, 1
        %v492 = vrot.slane %v428, 1
        %v493 = vrot.slane %v429, 1
        %v494 = vrot.slane %v430, 1
        %v495 = vrot.slane %v431, 1
        %v496 = vcombine.low %v400, %v438
        %v498 = vunpack.c.l.s4 1983009808
        %v499 = vunpack.c.0.s8 %v498
        %v500 = vlaneseq
        %v501 = vshrl.u32 %v500, 7
        %v502 = vsub.s32 %v499, %v501
        %v503 = vrot.slane %v496, %v502
        %v505 = vunpack.c.l.s4 1983009808
        %v506 = vunpack.c.0.s8 %v505
        %v507 = vlaneseq
        %v508 = vshrl.u32 %v507, 7
        %v509 = vsub.s32 %v506, %v508
        %v510 = vrot.slane %v488, %v509
        %v511 = vcombine.low %v503, %v510
        %v512 = vcombine.low %v401, %v445
        %v514 = vunpack.c.l.s4 1983009808
        %v515 = vunpack.c.0.s8 %v514
        %v516 = vlaneseq
        %v517 = vshrl.u32 %v516, 7
        %v518 = vsub.s32 %v515, %v517
        %v519 = vrot.slane %v512, %v518
        %v521 = vunpack.c.l.s4 1983009808
        %v522 = vunpack.c.0.s8 %v521
        %v523 = vlaneseq
        %v524 = vshrl.u32 %v523, 7
        %v525 = vsub.s32 %v522, %v524
        %v526 = vrot.slane %v489, %v525
        %v527 = vcombine.low %v519, %v526
        %v528 = vcombine.low %v402, %v452
        %v530 = vunpack.c.l.s4 1983009808
        %v531 = vunpack.c.0.s8 %v530
        %v532 = vlaneseq
        %v533 = vshrl.u32 %v532, 7
        %v534 = vsub.s32 %v531, %v533
        %v535 = vrot.slane %v528, %v534
        %v537 = vunpack.c.l.s4 1983009808
        %v538 = vunpack.c.0.s8 %v537
        %v539 = vlaneseq
        %v540 = vshrl.u32 %v539, 7
        %v541 = vsub.s32 %v538, %v540
        %v542 = vrot.slane %v490, %v541
        %v543 = vcombine.low %v535, %v542
        %v544 = vcombine.low %v403, %v459
        %v546 = vunpack.c.l.s4 1983009808
        %v547 = vunpack.c.0.s8 %v546
        %v548 = vlaneseq
        %v549 = vshrl.u32 %v548, 7
        %v550 = vsub.s32 %v547, %v549
        %v551 = vrot.slane %v544, %v550
        %v553 = vunpack.c.l.s4 1983009808
        %v554 = vunpack.c.0.s8 %v553
        %v555 = vlaneseq
        %v556 = vshrl.u32 %v555, 7
        %v557 = vsub.s32 %v554, %v556
        %v558 = vrot.slane %v491, %v557
        %v559 = vcombine.low %v551, %v558
        %v560 = vcombine.low %v404, %v466
        %v562 = vunpack.c.l.s4 1983009808
        %v563 = vunpack.c.0.s8 %v562
        %v564 = vlaneseq
        %v565 = vshrl.u32 %v564, 7
        %v566 = vsub.s32 %v563, %v565
        %v567 = vrot.slane %v560, %v566
        %v569 = vunpack.c.l.s4 1983009808
        %v570 = vunpack.c.0.s8 %v569
        %v571 = vlaneseq
        %v572 = vshrl.u32 %v571, 7
        %v573 = vsub.s32 %v570, %v572
        %v574 = vrot.slane %v492, %v573
        %v575 = vcombine.low %v567, %v574
        %v576 = vcombine.low %v405, %v473
        %v578 = vunpack.c.l.s4 1983009808
        %v579 = vunpack.c.0.s8 %v578
        %v580 = vlaneseq
        %v581 = vshrl.u32 %v580, 7
        %v582 = vsub.s32 %v579, %v581
        %v583 = vrot.slane %v576, %v582
        %v585 = vunpack.c.l.s4 1983009808
        %v586 = vunpack.c.0.s8 %v585
        %v587 = vlaneseq
        %v588 = vshrl.u32 %v587, 7
        %v589 = vsub.s32 %v586, %v588
        %v590 = vrot.slane %v493, %v589
        %v591 = vcombine.low %v583, %v590
        %v592 = vcombine.low %v406, %v480
        %v594 = vunpack.c.l.s4 1983009808
        %v595 = vunpack.c.0.s8 %v594
        %v596 = vlaneseq
        %v597 = vshrl.u32 %v596, 7
        %v598 = vsub.s32 %v595, %v597
        %v599 = vrot.slane %v592, %v598
        %v601 = vunpack.c.l.s4 1983009808
        %v602 = vunpack.c.0.s8 %v601
        %v603 = vlaneseq
        %v604 = vshrl.u32 %v603, 7
        %v605 = vsub.s32 %v602, %v604
        %v606 = vrot.slane %v494, %v605
        %v607 = vcombine.low %v599, %v606
        %v608 = vcombine.low %v407, %v487
        %v610 = vunpack.c.l.s4 1983009808
        %v611 = vunpack.c.0.s8 %v610
        %v612 = vlaneseq
        %v613 = vshrl.u32 %v612, 7
        %v614 = vsub.s32 %v611, %v613
        %v615 = vrot.slane %v608, %v614
        %v617 = vunpack.c.l.s4 1983009808
        %v618 = vunpack.c.0.s8 %v617
        %v619 = vlaneseq
        %v620 = vshrl.u32 %v619, 7
        %v621 = vsub.s32 %v618, %v620
        %v622 = vrot.slane %v495, %v621
        %v623 = vcombine.low %v615, %v622
        %v624 = vld [vmem:[#allocation3] sm:$0xff]
        %v625 = vld [vmem:[#allocation3 + $0x8] sm:$0xff]
        %v626 = vld [vmem:[#allocation3 + $0x10] sm:$0xff]
        %v627 = vld [vmem:[#allocation3 + $0x18] sm:$0xff]
        %v628 = vld [vmem:[#allocation3 + $0x20] sm:$0xff]
        %v629 = vld [vmem:[#allocation3 + $0x28] sm:$0xff]
        %v630 = vld [vmem:[#allocation3 + $0x30] sm:$0xff]
        %v631 = vld [vmem:[#allocation3 + $0x38] sm:$0xff]
        %v632 = vld [vmem:[#allocation3 + $0x40] sm:$0xff]
        %v633 = vld [vmem:[#allocation3 + $0x48] sm:$0xff]
        %v634 = vld [vmem:[#allocation3 + $0x50] sm:$0xff]
        %v635 = vld [vmem:[#allocation3 + $0x58] sm:$0xff]
        %v636 = vld [vmem:[#allocation3 + $0x60] sm:$0xff]
        %v637 = vld [vmem:[#allocation3 + $0x68] sm:$0xff]
        %v638 = vld [vmem:[#allocation3 + $0x70] sm:$0xff]
        %v639 = vld [vmem:[#allocation3 + $0x78] sm:$0xff]
        %v640 = vld [vmem:[#allocation3 + $0x80] sm:$0xff]
        %v641 = vld [vmem:[#allocation3 + $0x88] sm:$0xff]
        %v642 = vld [vmem:[#allocation3 + $0x90] sm:$0xff]
        %v643 = vld [vmem:[#allocation3 + $0x98] sm:$0xff]
        %v644 = vld [vmem:[#allocation3 + $0xa0] sm:$0xff]
        %v645 = vld [vmem:[#allocation3 + $0xa8] sm:$0xff]
        %v646 = vld [vmem:[#allocation3 + $0xb0] sm:$0xff]
        %v647 = vld [vmem:[#allocation3 + $0xb8] sm:$0xff]
        %v648 = vld [vmem:[#allocation3 + $0xc0] sm:$0xff]
        %v649 = vld [vmem:[#allocation3 + $0xc8] sm:$0xff]
        %v650 = vld [vmem:[#allocation3 + $0xd0] sm:$0xff]
        %v651 = vld [vmem:[#allocation3 + $0xd8] sm:$0xff]
        %v652 = vld [vmem:[#allocation3 + $0xe0] sm:$0xff]
        %v653 = vld [vmem:[#allocation3 + $0xe8] sm:$0xff]
        %v654 = vld [vmem:[#allocation3 + $0xf0] sm:$0xff]
        %v655 = vld [vmem:[#allocation3 + $0xf8] sm:$0xff]
        %v656 = vld [vmem:[#allocation3 + $0x100] sm:$0xff]
        %v657 = vld [vmem:[#allocation3 + $0x108] sm:$0xff]
        %v658 = vld [vmem:[#allocation3 + $0x110] sm:$0xff]
        %v659 = vld [vmem:[#allocation3 + $0x118] sm:$0xff]
        %v660 = vld [vmem:[#allocation3 + $0x120] sm:$0xff]
        %v661 = vld [vmem:[#allocation3 + $0x128] sm:$0xff]
        %v662 = vld [vmem:[#allocation3 + $0x130] sm:$0xff]
        %v663 = vld [vmem:[#allocation3 + $0x138] sm:$0xff]
        %v664 = vld [vmem:[#allocation3 + $0x140] sm:$0xff]
        %v665 = vld [vmem:[#allocation3 + $0x148] sm:$0xff]
        %v666 = vld [vmem:[#allocation3 + $0x150] sm:$0xff]
        %v667 = vld [vmem:[#allocation3 + $0x158] sm:$0xff]
        %v668 = vld [vmem:[#allocation3 + $0x160] sm:$0xff]
        %v669 = vld [vmem:[#allocation3 + $0x168] sm:$0xff]
        %v670 = vld [vmem:[#allocation3 + $0x170] sm:$0xff]
        %v671 = vld [vmem:[#allocation3 + $0x178] sm:$0xff]
        %v672 = vld [vmem:[%s372] sm:$0x7]
        %v673 = vld [vmem:[%s372 + $0x4] sm:$0x7]
        %v674 = vld [vmem:[%s372 + $0x8] sm:$0x7]
        %v675 = vld [vmem:[%s372 + $0xc] sm:$0x7]
        %v676 = vld [vmem:[%s372 + $0x10] sm:$0x7]
        %v677 = vld [vmem:[%s372 + $0x14] sm:$0x7]
        %v678 = vld [vmem:[%s372 + $0x18] sm:$0x7]
        %v679 = vld [vmem:[%s372 + $0x1c] sm:$0x7]
        %v688 = vunpack.c.l.b16 %v672
        %v689 = vunpack.c.l.b16 %v673
        %v690 = vunpack.c.l.b16 %v674
        %v691 = vunpack.c.l.b16 %v675
        %v692 = vunpack.c.l.b16 %v676
        %v693 = vunpack.c.l.b16 %v677
        %v694 = vunpack.c.l.b16 %v678
        %v695 = vunpack.c.l.b16 %v679
        %v696 = vpack.c.b16 %v688, %v688
        %v697 = vpack.c.b16 %v689, %v689
        %v698 = vpack.c.b16 %v690, %v690
        %v699 = vpack.c.b16 %v691, %v691
        %v700 = vpack.c.b16 %v692, %v692
        %v701 = vpack.c.b16 %v693, %v693
        %v702 = vpack.c.b16 %v694, %v694
        %v703 = vpack.c.b16 %v695, %v695
        %v705 = vshrl.u32 %v696, 16
        %v707 = vshll.u32 %v696, 16
        %v709 = vrot.slane %v707, 1
        %v710 = vor.u32 %v705, %v709
        %v712 = vshrl.u32 %v697, 16
        %v714 = vshll.u32 %v697, 16
        %v716 = vrot.slane %v714, 1
        %v717 = vor.u32 %v712, %v716
        %v719 = vshrl.u32 %v698, 16
        %v721 = vshll.u32 %v698, 16
        %v723 = vrot.slane %v721, 1
        %v724 = vor.u32 %v719, %v723
        %v726 = vshrl.u32 %v699, 16
        %v728 = vshll.u32 %v699, 16
        %v730 = vrot.slane %v728, 1
        %v731 = vor.u32 %v726, %v730
        %v733 = vshrl.u32 %v700, 16
        %v735 = vshll.u32 %v700, 16
        %v737 = vrot.slane %v735, 1
        %v738 = vor.u32 %v733, %v737
        %v740 = vshrl.u32 %v701, 16
        %v742 = vshll.u32 %v701, 16
        %v744 = vrot.slane %v742, 1
        %v745 = vor.u32 %v740, %v744
        %v747 = vshrl.u32 %v702, 16
        %v749 = vshll.u32 %v702, 16
        %v751 = vrot.slane %v749, 1
        %v752 = vor.u32 %v747, %v751
        %v754 = vshrl.u32 %v703, 16
        %v756 = vshll.u32 %v703, 16
        %v758 = vrot.slane %v756, 1
        %v759 = vor.u32 %v754, %v758
        %v760 = vrot.slane %v696, 1
        %v761 = vrot.slane %v697, 1
        %v762 = vrot.slane %v698, 1
        %v763 = vrot.slane %v699, 1
        %v764 = vrot.slane %v700, 1
        %v765 = vrot.slane %v701, 1
        %v766 = vrot.slane %v702, 1
        %v767 = vrot.slane %v703, 1
        %v768 = vcombine.low %v672, %v710
        %v770 = vunpack.c.l.s4 1983009808
        %v771 = vunpack.c.0.s8 %v770
        %v772 = vlaneseq
        %v773 = vshrl.u32 %v772, 7
        %v774 = vsub.s32 %v771, %v773
        %v775 = vrot.slane %v768, %v774
        %v777 = vunpack.c.l.s4 1983009808
        %v778 = vunpack.c.0.s8 %v777
        %v779 = vlaneseq
        %v780 = vshrl.u32 %v779, 7
        %v781 = vsub.s32 %v778, %v780
        %v782 = vrot.slane %v760, %v781
        %v783 = vcombine.low %v775, %v782
        %v784 = vcombine.low %v673, %v717
        %v786 = vunpack.c.l.s4 1983009808
        %v787 = vunpack.c.0.s8 %v786
        %v788 = vlaneseq
        %v789 = vshrl.u32 %v788, 7
        %v790 = vsub.s32 %v787, %v789
        %v791 = vrot.slane %v784, %v790
        %v793 = vunpack.c.l.s4 1983009808
        %v794 = vunpack.c.0.s8 %v793
        %v795 = vlaneseq
        %v796 = vshrl.u32 %v795, 7
        %v797 = vsub.s32 %v794, %v796
        %v798 = vrot.slane %v761, %v797
        %v799 = vcombine.low %v791, %v798
        %v800 = vcombine.low %v674, %v724
        %v802 = vunpack.c.l.s4 1983009808
        %v803 = vunpack.c.0.s8 %v802
        %v804 = vlaneseq
        %v805 = vshrl.u32 %v804, 7
        %v806 = vsub.s32 %v803, %v805
        %v807 = vrot.slane %v800, %v806
        %v809 = vunpack.c.l.s4 1983009808
        %v810 = vunpack.c.0.s8 %v809
        %v811 = vlaneseq
        %v812 = vshrl.u32 %v811, 7
        %v813 = vsub.s32 %v810, %v812
        %v814 = vrot.slane %v762, %v813
        %v815 = vcombine.low %v807, %v814
        %v816 = vcombine.low %v675, %v731
        %v818 = vunpack.c.l.s4 1983009808
        %v819 = vunpack.c.0.s8 %v818
        %v820 = vlaneseq
        %v821 = vshrl.u32 %v820, 7
        %v822 = vsub.s32 %v819, %v821
        %v823 = vrot.slane %v816, %v822
        %v825 = vunpack.c.l.s4 1983009808
        %v826 = vunpack.c.0.s8 %v825
        %v827 = vlaneseq
        %v828 = vshrl.u32 %v827, 7
        %v829 = vsub.s32 %v826, %v828
        %v830 = vrot.slane %v763, %v829
        %v831 = vcombine.low %v823, %v830
        %v832 = vcombine.low %v676, %v738
        %v834 = vunpack.c.l.s4 1983009808
        %v835 = vunpack.c.0.s8 %v834
        %v836 = vlaneseq
        %v837 = vshrl.u32 %v836, 7
        %v838 = vsub.s32 %v835, %v837
        %v839 = vrot.slane %v832, %v838
        %v841 = vunpack.c.l.s4 1983009808
        %v842 = vunpack.c.0.s8 %v841
        %v843 = vlaneseq
        %v844 = vshrl.u32 %v843, 7
        %v845 = vsub.s32 %v842, %v844
        %v846 = vrot.slane %v764, %v845
        %v847 = vcombine.low %v839, %v846
        %v848 = vcombine.low %v677, %v745
        %v850 = vunpack.c.l.s4 1983009808
        %v851 = vunpack.c.0.s8 %v850
        %v852 = vlaneseq
        %v853 = vshrl.u32 %v852, 7
        %v854 = vsub.s32 %v851, %v853
        %v855 = vrot.slane %v848, %v854
        %v857 = vunpack.c.l.s4 1983009808
        %v858 = vunpack.c.0.s8 %v857
        %v859 = vlaneseq
        %v860 = vshrl.u32 %v859, 7
        %v861 = vsub.s32 %v858, %v860
        %v862 = vrot.slane %v765, %v861
        %v863 = vcombine.low %v855, %v862
        %v864 = vcombine.low %v678, %v752
        %v866 = vunpack.c.l.s4 1983009808
        %v867 = vunpack.c.0.s8 %v866
        %v868 = vlaneseq
        %v869 = vshrl.u32 %v868, 7
        %v870 = vsub.s32 %v867, %v869
        %v871 = vrot.slane %v864, %v870
        %v873 = vunpack.c.l.s4 1983009808
        %v874 = vunpack.c.0.s8 %v873
        %v875 = vlaneseq
        %v876 = vshrl.u32 %v875, 7
        %v877 = vsub.s32 %v874, %v876
        %v878 = vrot.slane %v766, %v877
        %v879 = vcombine.low %v871, %v878
        %v880 = vcombine.low %v679, %v759
        %v882 = vunpack.c.l.s4 1983009808
        %v883 = vunpack.c.0.s8 %v882
        %v884 = vlaneseq
        %v885 = vshrl.u32 %v884, 7
        %v886 = vsub.s32 %v883, %v885
        %v887 = vrot.slane %v880, %v886
        %v889 = vunpack.c.l.s4 1983009808
        %v890 = vunpack.c.0.s8 %v889
        %v891 = vlaneseq
        %v892 = vshrl.u32 %v891, 7
        %v893 = vsub.s32 %v890, %v892
        %v894 = vrot.slane %v767, %v893
        %v895 = vcombine.low %v887, %v894
        %v896 = vld [vmem:[#allocation3 + $0x180] sm:$0xff]
        %v897 = vld [vmem:[#allocation3 + $0x188] sm:$0xff]
        %v898 = vld [vmem:[#allocation3 + $0x190] sm:$0xff]
        %v899 = vld [vmem:[#allocation3 + $0x198] sm:$0xff]
        %v900 = vld [vmem:[#allocation3 + $0x1a0] sm:$0xff]
        %v901 = vld [vmem:[#allocation3 + $0x1a8] sm:$0xff]
        %v902 = vld [vmem:[#allocation3 + $0x1b0] sm:$0xff]
        %v903 = vld [vmem:[#allocation3 + $0x1b8] sm:$0xff]
        %v904 = vld [vmem:[#allocation3 + $0x1c0] sm:$0xff]
        %v905 = vld [vmem:[#allocation3 + $0x1c8] sm:$0xff]
        %v906 = vld [vmem:[#allocation3 + $0x1d0] sm:$0xff]
        %v907 = vld [vmem:[#allocation3 + $0x1d8] sm:$0xff]
        %v908 = vld [vmem:[#allocation3 + $0x1e0] sm:$0xff]
        %v909 = vld [vmem:[#allocation3 + $0x1e8] sm:$0xff]
        %v910 = vld [vmem:[#allocation3 + $0x1f0] sm:$0xff]
        %v911 = vld [vmem:[#allocation3 + $0x1f8] sm:$0xff]
        %v912 = vld [vmem:[#allocation3 + $0x200] sm:$0xff]
        %v913 = vld [vmem:[#allocation3 + $0x208] sm:$0xff]
        %v914 = vld [vmem:[#allocation3 + $0x210] sm:$0xff]
        %v915 = vld [vmem:[#allocation3 + $0x218] sm:$0xff]
        %v916 = vld [vmem:[#allocation3 + $0x220] sm:$0xff]
        %v917 = vld [vmem:[#allocation3 + $0x228] sm:$0xff]
        %v918 = vld [vmem:[#allocation3 + $0x230] sm:$0xff]
        %v919 = vld [vmem:[#allocation3 + $0x238] sm:$0xff]
        %v920 = vld [vmem:[#allocation3 + $0x240] sm:$0xff]
        %v921 = vld [vmem:[#allocation3 + $0x248] sm:$0xff]
        %v922 = vld [vmem:[#allocation3 + $0x250] sm:$0xff]
        %v923 = vld [vmem:[#allocation3 + $0x258] sm:$0xff]
        %v924 = vld [vmem:[#allocation3 + $0x260] sm:$0xff]
        %v925 = vld [vmem:[#allocation3 + $0x268] sm:$0xff]
        %v926 = vld [vmem:[#allocation3 + $0x270] sm:$0xff]
        %v927 = vld [vmem:[#allocation3 + $0x278] sm:$0xff]
        %v928 = vld [vmem:[#allocation3 + $0x280] sm:$0xff]
        %v929 = vld [vmem:[#allocation3 + $0x288] sm:$0xff]
        %v930 = vld [vmem:[#allocation3 + $0x290] sm:$0xff]
        %v931 = vld [vmem:[#allocation3 + $0x298] sm:$0xff]
        %v932 = vld [vmem:[#allocation3 + $0x2a0] sm:$0xff]
        %v933 = vld [vmem:[#allocation3 + $0x2a8] sm:$0xff]
        %v934 = vld [vmem:[#allocation3 + $0x2b0] sm:$0xff]
        %v935 = vld [vmem:[#allocation3 + $0x2b8] sm:$0xff]
        %v936 = vld [vmem:[#allocation3 + $0x2c0] sm:$0xff]
        %v937 = vld [vmem:[#allocation3 + $0x2c8] sm:$0xff]
        %v938 = vld [vmem:[#allocation3 + $0x2d0] sm:$0xff]
        %v939 = vld [vmem:[#allocation3 + $0x2d8] sm:$0xff]
        %v940 = vld [vmem:[#allocation3 + $0x2e0] sm:$0xff]
        %v941 = vld [vmem:[#allocation3 + $0x2e8] sm:$0xff]
        %v942 = vld [vmem:[#allocation3 + $0x2f0] sm:$0xff]
        %v943 = vld [vmem:[#allocation3 + $0x2f8] sm:$0xff]
        %v944 = vcombine.low %v783, %v799
        %v945 = vcombine.high %v783, %v799
        %v946 = vcombine.low %v815, %v831
        %v947 = vcombine.high %v815, %v831
        %v949 = vunpack.c.l.s4 1983009808
        %v950 = vunpack.c.0.s8 %v949
        %v951 = vlaneseq
        %v952 = vshrl.u32 %v951, 7
        %v953 = vsub.s32 %v950, %v952
        %v954 = vrot.slane %v944, %v953
        %v956 = vunpack.c.l.s4 1983009808
        %v957 = vunpack.c.0.s8 %v956
        %v958 = vlaneseq
        %v959 = vshrl.u32 %v958, 7
        %v960 = vsub.s32 %v957, %v959
        %v961 = vrot.slane %v945, %v960
        %v963 = vunpack.c.l.s4 1983009808
        %v964 = vunpack.c.0.s8 %v963
        %v965 = vlaneseq
        %v966 = vshrl.u32 %v965, 7
        %v967 = vsub.s32 %v964, %v966
        %v968 = vrot.slane %v946, %v967
        %v970 = vunpack.c.l.s4 1983009808
        %v971 = vunpack.c.0.s8 %v970
        %v972 = vlaneseq
        %v973 = vshrl.u32 %v972, 7
        %v974 = vsub.s32 %v971, %v973
        %v975 = vrot.slane %v947, %v974
        %v976 = vcombine.low %v954, %v968
        %v977 = vcombine.high %v954, %v968
        %v978 = vcombine.low %v961, %v975
        %v979 = vcombine.low %v847, %v863
        %v980 = vcombine.high %v847, %v863
        %v981 = vcombine.low %v879, %v895
        %v982 = vcombine.high %v879, %v895
        %v984 = vunpack.c.l.s4 1983009808
        %v985 = vunpack.c.0.s8 %v984
        %v986 = vlaneseq
        %v987 = vshrl.u32 %v986, 7
        %v988 = vsub.s32 %v985, %v987
        %v989 = vrot.slane %v979, %v988
        %v991 = vunpack.c.l.s4 1983009808
        %v992 = vunpack.c.0.s8 %v991
        %v993 = vlaneseq
        %v994 = vshrl.u32 %v993, 7
        %v995 = vsub.s32 %v992, %v994
        %v996 = vrot.slane %v980, %v995
        %v998 = vunpack.c.l.s4 1983009808
        %v999 = vunpack.c.0.s8 %v998
        %v1000 = vlaneseq
        %v1001 = vshrl.u32 %v1000, 7
        %v1002 = vsub.s32 %v999, %v1001
        %v1003 = vrot.slane %v981, %v1002
        %v1005 = vunpack.c.l.s4 1983009808
        %v1006 = vunpack.c.0.s8 %v1005
        %v1007 = vlaneseq
        %v1008 = vshrl.u32 %v1007, 7
        %v1009 = vsub.s32 %v1006, %v1008
        %v1010 = vrot.slane %v982, %v1009
        %v1011 = vcombine.low %v989, %v1003
        %v1012 = vcombine.high %v989, %v1003
        %v1013 = vcombine.low %v996, %v1010
        %v1068 = vunpack.c.l.b16 %v896
        %v1069 = vunpack.c.h.b16 %v896
        %v1070 = vunpack.c.l.b16 %v897
        %v1071 = vunpack.c.h.b16 %v897
        %v1072 = vunpack.c.l.b16 %v898
        %v1073 = vunpack.c.h.b16 %v898
        %v1074 = vunpack.c.l.b16 %v899
        %v1075 = vunpack.c.h.b16 %v899
        %v1076 = vunpack.c.l.b16 %v900
        %v1077 = vunpack.c.h.b16 %v900
        %v1078 = vunpack.c.l.b16 %v901
        %v1079 = vunpack.c.h.b16 %v901
        %v1080 = vunpack.c.l.b16 %v902
        %v1081 = vunpack.c.h.b16 %v902
        %v1082 = vunpack.c.l.b16 %v903
        %v1083 = vunpack.c.h.b16 %v903
        %v1084 = vunpack.c.l.b16 %v904
        %v1085 = vunpack.c.h.b16 %v904
        %v1086 = vunpack.c.l.b16 %v905
        %v1087 = vunpack.c.h.b16 %v905
        %v1088 = vunpack.c.l.b16 %v906
        %v1089 = vunpack.c.h.b16 %v906
        %v1090 = vunpack.c.l.b16 %v907
        %v1091 = vunpack.c.h.b16 %v907
        %v1092 = vunpack.c.l.b16 %v908
        %v1093 = vunpack.c.h.b16 %v908
        %v1094 = vunpack.c.l.b16 %v909
        %v1095 = vunpack.c.h.b16 %v909
        %v1096 = vunpack.c.l.b16 %v910
        %v1097 = vunpack.c.h.b16 %v910
        %v1098 = vunpack.c.l.b16 %v911
        %v1099 = vunpack.c.h.b16 %v911
        %v1100 = vunpack.c.l.b16 %v912
        %v1101 = vunpack.c.h.b16 %v912
        %v1102 = vunpack.c.l.b16 %v913
        %v1103 = vunpack.c.h.b16 %v913
        %v1104 = vunpack.c.l.b16 %v914
        %v1105 = vunpack.c.h.b16 %v914
        %v1106 = vunpack.c.l.b16 %v915
        %v1107 = vunpack.c.h.b16 %v915
        %v1108 = vunpack.c.l.b16 %v916
        %v1109 = vunpack.c.h.b16 %v916
        %v1110 = vunpack.c.l.b16 %v917
        %v1111 = vunpack.c.h.b16 %v917
        %v1112 = vunpack.c.l.b16 %v918
        %v1113 = vunpack.c.h.b16 %v918
        %v1114 = vunpack.c.l.b16 %v919
        %v1115 = vunpack.c.h.b16 %v919
        %v1116 = vunpack.c.l.b16 %v920
        %v1117 = vunpack.c.h.b16 %v920
        %v1118 = vunpack.c.l.b16 %v921
        %v1119 = vunpack.c.h.b16 %v921
        %v1120 = vunpack.c.l.b16 %v922
        %v1121 = vunpack.c.h.b16 %v922
        %v1122 = vunpack.c.l.b16 %v923
        %v1123 = vunpack.c.h.b16 %v923
        %v1124 = vunpack.c.l.b16 %v924
        %v1125 = vunpack.c.h.b16 %v924
        %v1126 = vunpack.c.l.b16 %v925
        %v1127 = vunpack.c.h.b16 %v925
        %v1128 = vunpack.c.l.b16 %v926
        %v1129 = vunpack.c.h.b16 %v926
        %v1130 = vunpack.c.l.b16 %v927
        %v1131 = vunpack.c.h.b16 %v927
        %v1132 = vunpack.c.l.b16 %v928
        %v1133 = vunpack.c.h.b16 %v928
        %v1134 = vunpack.c.l.b16 %v929
        %v1135 = vunpack.c.h.b16 %v929
        %v1136 = vunpack.c.l.b16 %v930
        %v1137 = vunpack.c.h.b16 %v930
        %v1138 = vunpack.c.l.b16 %v931
        %v1139 = vunpack.c.h.b16 %v931
        %v1140 = vunpack.c.l.b16 %v932
        %v1141 = vunpack.c.h.b16 %v932
        %v1142 = vunpack.c.l.b16 %v933
        %v1143 = vunpack.c.h.b16 %v933
        %v1144 = vunpack.c.l.b16 %v934
        %v1145 = vunpack.c.h.b16 %v934
        %v1146 = vunpack.c.l.b16 %v935
        %v1147 = vunpack.c.h.b16 %v935
        %v1148 = vunpack.c.l.b16 %v936
        %v1149 = vunpack.c.h.b16 %v936
        %v1150 = vunpack.c.l.b16 %v937
        %v1151 = vunpack.c.h.b16 %v937
        %v1152 = vunpack.c.l.b16 %v938
        %v1153 = vunpack.c.h.b16 %v938
        %v1154 = vunpack.c.l.b16 %v939
        %v1155 = vunpack.c.h.b16 %v939
        %v1156 = vunpack.c.l.b16 %v940
        %v1157 = vunpack.c.h.b16 %v940
        %v1158 = vunpack.c.l.b16 %v941
        %v1159 = vunpack.c.h.b16 %v941
        %v1160 = vunpack.c.l.b16 %v942
        %v1161 = vunpack.c.h.b16 %v942
        %v1162 = vunpack.c.l.b16 %v943
        %v1163 = vunpack.c.h.b16 %v943
        %v1164 = vpack.c.b16 %v1070, %v1068
        %v1165 = vpack.c.b16 %v1071, %v1069
        %v1166 = vpack.c.b16 %v1074, %v1072
        %v1167 = vpack.c.b16 %v1075, %v1073
        %v1168 = vpack.c.b16 %v1078, %v1076
        %v1169 = vpack.c.b16 %v1079, %v1077
        %v1170 = vpack.c.b16 %v1082, %v1080
        %v1171 = vpack.c.b16 %v1083, %v1081
        %v1172 = vpack.c.b16 %v1086, %v1084
        %v1173 = vpack.c.b16 %v1087, %v1085
        %v1174 = vpack.c.b16 %v1090, %v1088
        %v1175 = vpack.c.b16 %v1091, %v1089
        %v1176 = vpack.c.b16 %v1094, %v1092
        %v1177 = vpack.c.b16 %v1095, %v1093
        %v1178 = vpack.c.b16 %v1098, %v1096
        %v1179 = vpack.c.b16 %v1099, %v1097
        %v1180 = vpack.c.b16 %v1102, %v1100
        %v1181 = vpack.c.b16 %v1103, %v1101
        %v1182 = vpack.c.b16 %v1106, %v1104
        %v1183 = vpack.c.b16 %v1107, %v1105
        %v1184 = vpack.c.b16 %v1110, %v1108
        %v1185 = vpack.c.b16 %v1111, %v1109
        %v1186 = vpack.c.b16 %v1114, %v1112
        %v1187 = vpack.c.b16 %v1115, %v1113
        %v1188 = vpack.c.b16 %v1118, %v1116
        %v1189 = vpack.c.b16 %v1119, %v1117
        %v1190 = vpack.c.b16 %v1122, %v1120
        %v1191 = vpack.c.b16 %v1123, %v1121
        %v1192 = vpack.c.b16 %v1126, %v1124
        %v1193 = vpack.c.b16 %v1127, %v1125
        %v1194 = vpack.c.b16 %v1130, %v1128
        %v1195 = vpack.c.b16 %v1131, %v1129
        %v1196 = vpack.c.b16 %v1134, %v1132
        %v1197 = vpack.c.b16 %v1135, %v1133
        %v1198 = vpack.c.b16 %v1138, %v1136
        %v1199 = vpack.c.b16 %v1139, %v1137
        %v1200 = vpack.c.b16 %v1142, %v1140
        %v1201 = vpack.c.b16 %v1143, %v1141
        %v1202 = vpack.c.b16 %v1146, %v1144
        %v1203 = vpack.c.b16 %v1147, %v1145
        %v1204 = vpack.c.b16 %v1150, %v1148
        %v1205 = vpack.c.b16 %v1151, %v1149
        %v1206 = vpack.c.b16 %v1154, %v1152
        %v1207 = vpack.c.b16 %v1155, %v1153
        %v1208 = vpack.c.b16 %v1158, %v1156
        %v1209 = vpack.c.b16 %v1159, %v1157
        %v1210 = vpack.c.b16 %v1162, %v1160
        %v1211 = vpack.c.b16 %v1163, %v1161
        %1260 = vmatprep.subr.bf16.mxu0 %v1179
        %1261 = vmatpush1.bf16.msra.mxu0 %v1178
        %1262 = vmatprep.subr.bf16.mxu0 %v1177
        %1263 = vmatpush1.bf16.msra.mxu0 %v1176
        %1264 = vmatprep.subr.bf16.mxu0 %v1175
        %1265 = vmatpush1.bf16.msra.mxu0 %v1174
        %1266 = vmatprep.subr.bf16.mxu0 %v1173
        %1267 = vmatpush1.bf16.msra.mxu0 %v1172
        %1268 = vmatprep.subr.bf16.mxu0 %v1171
        %1269 = vmatpush1.bf16.msra.mxu0 %v1170
        %1270 = vmatprep.subr.bf16.mxu0 %v1169
        %1271 = vmatpush1.bf16.msra.mxu0 %v1168
        %1272 = vmatprep.subr.bf16.mxu0 %v1167
        %1273 = vmatpush1.bf16.msra.mxu0 %v1166
        %1274 = vmatprep.subr.bf16.mxu0 %v1165
        %1275 = vmatpush1.bf16.msra.mxu0 %v1164
        %1276 = vmatprep.subr.bf16.mxu0 %v1195
        %1277 = vmatpush2.bf16.msra.mxu0 %v1194
        %1278 = vmatprep.subr.bf16.mxu0 %v1193
        %1279 = vmatpush2.bf16.msra.mxu0 %v1192
        %1280 = vmatprep.subr.bf16.mxu0 %v1191
        %1281 = vmatpush2.bf16.msra.mxu0 %v1190
        %1282 = vmatprep.subr.bf16.mxu0 %v1189
        %1283 = vmatpush2.bf16.msra.mxu0 %v1188
        %1284 = vmatprep.subr.bf16.mxu0 %v1187
        %1285 = vmatpush2.bf16.msra.mxu0 %v1186
        %1286 = vmatprep.subr.bf16.mxu0 %v1185
        %1287 = vmatpush2.bf16.msra.mxu0 %v1184
        %1288 = vmatprep.subr.bf16.mxu0 %v1183
        %1289 = vmatpush2.bf16.msra.mxu0 %v1182
        %1290 = vmatprep.subr.bf16.mxu0 %v1181
        %1291 = vmatpush2.bf16.msra.mxu0 %v1180
        %1292 = vmatprep.mubr.bf16.mxu0 %v977
        %1293 = vmatmul.mubr.bf16.gmra.mxu0 %v976
        %v1294 = vpop.f32.mrf.mxu0
        %v1295 = vadd.f32 0.0, %v1294
        %v1296 = vpop.f32.mrf.mxu0
        %v1297 = vadd.f32 0.0, %v1296
        %v1298 = vpop.f32.mrf.mxu0
        %v1299 = vadd.f32 0.0, %v1298
        %v1300 = vpop.f32.mrf.mxu0
        %v1301 = vadd.f32 0.0, %v1300
        %1302 = vmatprep.mubr.bf16.mxu0 %v1012
        %1303 = vmatmul.mubr.bf16.gmra.mxu0 %v1011
        %v1304 = vpop.f32.mrf.mxu0
        %v1305 = vadd.f32 0.0, %v1304
        %v1306 = vpop.f32.mrf.mxu0
        %v1307 = vadd.f32 0.0, %v1306
        %v1308 = vpop.f32.mrf.mxu0
        %v1309 = vadd.f32 0.0, %v1308
        %v1310 = vpop.f32.mrf.mxu0
        %v1311 = vadd.f32 0.0, %v1310
        %1312 = vdwg.mxu0
        %1313 = vmatprep.subr.bf16.mxu0 %v1211
        %1314 = vmatpush1.bf16.msra.mxu0 %v1210
        %1315 = vmatprep.subr.bf16.mxu0 %v1209
        %1316 = vmatpush1.bf16.msra.mxu0 %v1208
        %1317 = vmatprep.subr.bf16.mxu0 %v1207
        %1318 = vmatpush1.bf16.msra.mxu0 %v1206
        %1319 = vmatprep.subr.bf16.mxu0 %v1205
        %1320 = vmatpush1.bf16.msra.mxu0 %v1204
        %1321 = vmatprep.subr.bf16.mxu0 %v1203
        %1322 = vmatpush1.bf16.msra.mxu0 %v1202
        %1323 = vmatprep.subr.bf16.mxu0 %v1201
        %1324 = vmatpush1.bf16.msra.mxu0 %v1200
        %1325 = vmatprep.subr.bf16.mxu0 %v1199
        %1326 = vmatpush1.bf16.msra.mxu0 %v1198
        %1327 = vmatprep.subr.bf16.mxu0 %v1197
        %1328 = vmatpush1.bf16.msra.mxu0 %v1196
        %1329 = vmatprep.subr.bf16.mxu0 0
        %1330 = vmatpush2.bf16.msra.mxu0 0
        %1331 = vmatprep.subr.bf16.mxu0 0
        %1332 = vmatpush2.bf16.msra.mxu0 0
        %1333 = vmatprep.subr.bf16.mxu0 0
        %1334 = vmatpush2.bf16.msra.mxu0 0
        %1335 = vmatprep.subr.bf16.mxu0 0
        %1336 = vmatpush2.bf16.msra.mxu0 0
        %1337 = vmatprep.subr.bf16.mxu0 0
        %1338 = vmatpush2.bf16.msra.mxu0 0
        %1339 = vmatprep.subr.bf16.mxu0 0
        %1340 = vmatpush2.bf16.msra.mxu0 0
        %1341 = vmatprep.subr.bf16.mxu0 0
        %1342 = vmatpush2.bf16.msra.mxu0 0
        %1343 = vmatprep.subr.bf16.mxu0 0
        %1344 = vmatpush2.bf16.msra.mxu0 0
        %1345 = vmatprep.mubr.bf16.mxu0 0
        %1346 = vmatmul.mubr.bf16.gmra.mxu0 %v978
        %v1347 = vpop.f32.mrf.mxu0
        %v1348 = vadd.f32 %v1295, %v1347
        %v1349 = vpop.f32.mrf.mxu0
        %v1350 = vadd.f32 %v1297, %v1349
        %v1351 = vpop.f32.mrf.mxu0
        %v1352 = vadd.f32 %v1299, %v1351
        %v1353 = vpop.f32.mrf.mxu0
        %v1354 = vadd.f32 %v1301, %v1353
        %1355 = vmatprep.mubr.bf16.mxu0 0
        %1356 = vmatmul.mubr.bf16.gmra.mxu0 %v1013
        %v1357 = vpop.f32.mrf.mxu0
        %v1358 = vadd.f32 %v1305, %v1357
        %v1359 = vpop.f32.mrf.mxu0
        %v1360 = vadd.f32 %v1307, %v1359
        %v1361 = vpop.f32.mrf.mxu0
        %v1362 = vadd.f32 %v1309, %v1361
        %v1363 = vpop.f32.mrf.mxu0
        %v1364 = vadd.f32 %v1311, %v1363
        %1365 = vdwg.mxu0
        %v1366 = vcombine.low %v511, %v527
        %v1367 = vcombine.high %v511, %v527
        %v1368 = vcombine.low %v543, %v559
        %v1369 = vcombine.high %v543, %v559
        %v1371 = vunpack.c.l.s4 1983009808
        %v1372 = vunpack.c.0.s8 %v1371
        %v1373 = vlaneseq
        %v1374 = vshrl.u32 %v1373, 7
        %v1375 = vsub.s32 %v1372, %v1374
        %v1376 = vrot.slane %v1366, %v1375
        %v1378 = vunpack.c.l.s4 1983009808
        %v1379 = vunpack.c.0.s8 %v1378
        %v1380 = vlaneseq
        %v1381 = vshrl.u32 %v1380, 7
        %v1382 = vsub.s32 %v1379, %v1381
        %v1383 = vrot.slane %v1367, %v1382
        %v1385 = vunpack.c.l.s4 1983009808
        %v1386 = vunpack.c.0.s8 %v1385
        %v1387 = vlaneseq
        %v1388 = vshrl.u32 %v1387, 7
        %v1389 = vsub.s32 %v1386, %v1388
        %v1390 = vrot.slane %v1368, %v1389
        %v1392 = vunpack.c.l.s4 1983009808
        %v1393 = vunpack.c.0.s8 %v1392
        %v1394 = vlaneseq
        %v1395 = vshrl.u32 %v1394, 7
        %v1396 = vsub.s32 %v1393, %v1395
        %v1397 = vrot.slane %v1369, %v1396
        %v1398 = vcombine.low %v1376, %v1390
        %v1399 = vcombine.high %v1376, %v1390
        %v1400 = vcombine.low %v1383, %v1397
        %v1401 = vcombine.low %v575, %v591
        %v1402 = vcombine.high %v575, %v591
        %v1403 = vcombine.low %v607, %v623
        %v1404 = vcombine.high %v607, %v623
        %v1406 = vunpack.c.l.s4 1983009808
        %v1407 = vunpack.c.0.s8 %v1406
        %v1408 = vlaneseq
        %v1409 = vshrl.u32 %v1408, 7
        %v1410 = vsub.s32 %v1407, %v1409
        %v1411 = vrot.slane %v1401, %v1410
        %v1413 = vunpack.c.l.s4 1983009808
        %v1414 = vunpack.c.0.s8 %v1413
        %v1415 = vlaneseq
        %v1416 = vshrl.u32 %v1415, 7
        %v1417 = vsub.s32 %v1414, %v1416
        %v1418 = vrot.slane %v1402, %v1417
        %v1420 = vunpack.c.l.s4 1983009808
        %v1421 = vunpack.c.0.s8 %v1420
        %v1422 = vlaneseq
        %v1423 = vshrl.u32 %v1422, 7
        %v1424 = vsub.s32 %v1421, %v1423
        %v1425 = vrot.slane %v1403, %v1424
        %v1427 = vunpack.c.l.s4 1983009808
        %v1428 = vunpack.c.0.s8 %v1427
        %v1429 = vlaneseq
        %v1430 = vshrl.u32 %v1429, 7
        %v1431 = vsub.s32 %v1428, %v1430
        %v1432 = vrot.slane %v1404, %v1431
        %v1433 = vcombine.low %v1411, %v1425
        %v1434 = vcombine.high %v1411, %v1425
        %v1435 = vcombine.low %v1418, %v1432
        %v1490 = vunpack.c.l.b16 %v624
        %v1491 = vunpack.c.h.b16 %v624
        %v1492 = vunpack.c.l.b16 %v625
        %v1493 = vunpack.c.h.b16 %v625
        %v1494 = vunpack.c.l.b16 %v626
        %v1495 = vunpack.c.h.b16 %v626
        %v1496 = vunpack.c.l.b16 %v627
        %v1497 = vunpack.c.h.b16 %v627
        %v1498 = vunpack.c.l.b16 %v628
        %v1499 = vunpack.c.h.b16 %v628
        %v1500 = vunpack.c.l.b16 %v629
        %v1501 = vunpack.c.h.b16 %v629
        %v1502 = vunpack.c.l.b16 %v630
        %v1503 = vunpack.c.h.b16 %v630
        %v1504 = vunpack.c.l.b16 %v631
        %v1505 = vunpack.c.h.b16 %v631
        %v1506 = vunpack.c.l.b16 %v632
        %v1507 = vunpack.c.h.b16 %v632
        %v1508 = vunpack.c.l.b16 %v633
        %v1509 = vunpack.c.h.b16 %v633
        %v1510 = vunpack.c.l.b16 %v634
        %v1511 = vunpack.c.h.b16 %v634
        %v1512 = vunpack.c.l.b16 %v635
        %v1513 = vunpack.c.h.b16 %v635
        %v1514 = vunpack.c.l.b16 %v636
        %v1515 = vunpack.c.h.b16 %v636
        %v1516 = vunpack.c.l.b16 %v637
        %v1517 = vunpack.c.h.b16 %v637
        %v1518 = vunpack.c.l.b16 %v638
        %v1519 = vunpack.c.h.b16 %v638
        %v1520 = vunpack.c.l.b16 %v639
        %v1521 = vunpack.c.h.b16 %v639
        %v1522 = vunpack.c.l.b16 %v640
        %v1523 = vunpack.c.h.b16 %v640
        %v1524 = vunpack.c.l.b16 %v641
        %v1525 = vunpack.c.h.b16 %v641
        %v1526 = vunpack.c.l.b16 %v642
        %v1527 = vunpack.c.h.b16 %v642
        %v1528 = vunpack.c.l.b16 %v643
        %v1529 = vunpack.c.h.b16 %v643
        %v1530 = vunpack.c.l.b16 %v644
        %v1531 = vunpack.c.h.b16 %v644
        %v1532 = vunpack.c.l.b16 %v645
        %v1533 = vunpack.c.h.b16 %v645
        %v1534 = vunpack.c.l.b16 %v646
        %v1535 = vunpack.c.h.b16 %v646
        %v1536 = vunpack.c.l.b16 %v647
        %v1537 = vunpack.c.h.b16 %v647
        %v1538 = vunpack.c.l.b16 %v648
        %v1539 = vunpack.c.h.b16 %v648
        %v1540 = vunpack.c.l.b16 %v649
        %v1541 = vunpack.c.h.b16 %v649
        %v1542 = vunpack.c.l.b16 %v650
        %v1543 = vunpack.c.h.b16 %v650
        %v1544 = vunpack.c.l.b16 %v651
        %v1545 = vunpack.c.h.b16 %v651
        %v1546 = vunpack.c.l.b16 %v652
        %v1547 = vunpack.c.h.b16 %v652
        %v1548 = vunpack.c.l.b16 %v653
        %v1549 = vunpack.c.h.b16 %v653
        %v1550 = vunpack.c.l.b16 %v654
        %v1551 = vunpack.c.h.b16 %v654
        %v1552 = vunpack.c.l.b16 %v655
        %v1553 = vunpack.c.h.b16 %v655
        %v1554 = vunpack.c.l.b16 %v656
        %v1555 = vunpack.c.h.b16 %v656
        %v1556 = vunpack.c.l.b16 %v657
        %v1557 = vunpack.c.h.b16 %v657
        %v1558 = vunpack.c.l.b16 %v658
        %v1559 = vunpack.c.h.b16 %v658
        %v1560 = vunpack.c.l.b16 %v659
        %v1561 = vunpack.c.h.b16 %v659
        %v1562 = vunpack.c.l.b16 %v660
        %v1563 = vunpack.c.h.b16 %v660
        %v1564 = vunpack.c.l.b16 %v661
        %v1565 = vunpack.c.h.b16 %v661
        %v1566 = vunpack.c.l.b16 %v662
        %v1567 = vunpack.c.h.b16 %v662
        %v1568 = vunpack.c.l.b16 %v663
        %v1569 = vunpack.c.h.b16 %v663
        %v1570 = vunpack.c.l.b16 %v664
        %v1571 = vunpack.c.h.b16 %v664
        %v1572 = vunpack.c.l.b16 %v665
        %v1573 = vunpack.c.h.b16 %v665
        %v1574 = vunpack.c.l.b16 %v666
        %v1575 = vunpack.c.h.b16 %v666
        %v1576 = vunpack.c.l.b16 %v667
        %v1577 = vunpack.c.h.b16 %v667
        %v1578 = vunpack.c.l.b16 %v668
        %v1579 = vunpack.c.h.b16 %v668
        %v1580 = vunpack.c.l.b16 %v669
        %v1581 = vunpack.c.h.b16 %v669
        %v1582 = vunpack.c.l.b16 %v670
        %v1583 = vunpack.c.h.b16 %v670
        %v1584 = vunpack.c.l.b16 %v671
        %v1585 = vunpack.c.h.b16 %v671
        %v1586 = vpack.c.b16 %v1492, %v1490
        %v1587 = vpack.c.b16 %v1493, %v1491
        %v1588 = vpack.c.b16 %v1496, %v1494
        %v1589 = vpack.c.b16 %v1497, %v1495
        %v1590 = vpack.c.b16 %v1500, %v1498
        %v1591 = vpack.c.b16 %v1501, %v1499
        %v1592 = vpack.c.b16 %v1504, %v1502
        %v1593 = vpack.c.b16 %v1505, %v1503
        %v1594 = vpack.c.b16 %v1508, %v1506
        %v1595 = vpack.c.b16 %v1509, %v1507
        %v1596 = vpack.c.b16 %v1512, %v1510
        %v1597 = vpack.c.b16 %v1513, %v1511
        %v1598 = vpack.c.b16 %v1516, %v1514
        %v1599 = vpack.c.b16 %v1517, %v1515
        %v1600 = vpack.c.b16 %v1520, %v1518
        %v1601 = vpack.c.b16 %v1521, %v1519
        %v1602 = vpack.c.b16 %v1524, %v1522
        %v1603 = vpack.c.b16 %v1525, %v1523
        %v1604 = vpack.c.b16 %v1528, %v1526
        %v1605 = vpack.c.b16 %v1529, %v1527
        %v1606 = vpack.c.b16 %v1532, %v1530
        %v1607 = vpack.c.b16 %v1533, %v1531
        %v1608 = vpack.c.b16 %v1536, %v1534
        %v1609 = vpack.c.b16 %v1537, %v1535
        %v1610 = vpack.c.b16 %v1540, %v1538
        %v1611 = vpack.c.b16 %v1541, %v1539
        %v1612 = vpack.c.b16 %v1544, %v1542
        %v1613 = vpack.c.b16 %v1545, %v1543
        %v1614 = vpack.c.b16 %v1548, %v1546
        %v1615 = vpack.c.b16 %v1549, %v1547
        %v1616 = vpack.c.b16 %v1552, %v1550
        %v1617 = vpack.c.b16 %v1553, %v1551
        %v1618 = vpack.c.b16 %v1556, %v1554
        %v1619 = vpack.c.b16 %v1557, %v1555
        %v1620 = vpack.c.b16 %v1560, %v1558
        %v1621 = vpack.c.b16 %v1561, %v1559
        %v1622 = vpack.c.b16 %v1564, %v1562
        %v1623 = vpack.c.b16 %v1565, %v1563
        %v1624 = vpack.c.b16 %v1568, %v1566
        %v1625 = vpack.c.b16 %v1569, %v1567
        %v1626 = vpack.c.b16 %v1572, %v1570
        %v1627 = vpack.c.b16 %v1573, %v1571
        %v1628 = vpack.c.b16 %v1576, %v1574
        %v1629 = vpack.c.b16 %v1577, %v1575
        %v1630 = vpack.c.b16 %v1580, %v1578
        %v1631 = vpack.c.b16 %v1581, %v1579
        %v1632 = vpack.c.b16 %v1584, %v1582
        %v1633 = vpack.c.b16 %v1585, %v1583
        %1682 = vmatprep.subr.bf16.mxu0 %v1601
        %1683 = vmatpush1.bf16.msra.mxu0 %v1600
        %1684 = vmatprep.subr.bf16.mxu0 %v1599
        %1685 = vmatpush1.bf16.msra.mxu0 %v1598
        %1686 = vmatprep.subr.bf16.mxu0 %v1597
        %1687 = vmatpush1.bf16.msra.mxu0 %v1596
        %1688 = vmatprep.subr.bf16.mxu0 %v1595
        %1689 = vmatpush1.bf16.msra.mxu0 %v1594
        %1690 = vmatprep.subr.bf16.mxu0 %v1593
        %1691 = vmatpush1.bf16.msra.mxu0 %v1592
        %1692 = vmatprep.subr.bf16.mxu0 %v1591
        %1693 = vmatpush1.bf16.msra.mxu0 %v1590
        %1694 = vmatprep.subr.bf16.mxu0 %v1589
        %1695 = vmatpush1.bf16.msra.mxu0 %v1588
        %1696 = vmatprep.subr.bf16.mxu0 %v1587
        %1697 = vmatpush1.bf16.msra.mxu0 %v1586
        %1698 = vmatprep.subr.bf16.mxu0 %v1617
        %1699 = vmatpush2.bf16.msra.mxu0 %v1616
        %1700 = vmatprep.subr.bf16.mxu0 %v1615
        %1701 = vmatpush2.bf16.msra.mxu0 %v1614
        %1702 = vmatprep.subr.bf16.mxu0 %v1613
        %1703 = vmatpush2.bf16.msra.mxu0 %v1612
        %1704 = vmatprep.subr.bf16.mxu0 %v1611
        %1705 = vmatpush2.bf16.msra.mxu0 %v1610
        %1706 = vmatprep.subr.bf16.mxu0 %v1609
        %1707 = vmatpush2.bf16.msra.mxu0 %v1608
        %1708 = vmatprep.subr.bf16.mxu0 %v1607
        %1709 = vmatpush2.bf16.msra.mxu0 %v1606
        %1710 = vmatprep.subr.bf16.mxu0 %v1605
        %1711 = vmatpush2.bf16.msra.mxu0 %v1604
        %1712 = vmatprep.subr.bf16.mxu0 %v1603
        %1713 = vmatpush2.bf16.msra.mxu0 %v1602
        %1714 = vmatprep.mubr.bf16.mxu0 %v1399
        %1715 = vmatmul.mubr.bf16.gmra.mxu0 %v1398
        %v1716 = vpop.f32.mrf.mxu0
        %v1717 = vadd.f32 %v1348, %v1716
        %v1718 = vpop.f32.mrf.mxu0
        %v1719 = vadd.f32 %v1350, %v1718
        %v1720 = vpop.f32.mrf.mxu0
        %v1721 = vadd.f32 %v1352, %v1720
        %v1722 = vpop.f32.mrf.mxu0
        %v1723 = vadd.f32 %v1354, %v1722
        %1724 = vmatprep.mubr.bf16.mxu0 %v1434
        %1725 = vmatmul.mubr.bf16.gmra.mxu0 %v1433
        %v1726 = vpop.f32.mrf.mxu0
        %v1727 = vadd.f32 %v1358, %v1726
        %v1728 = vpop.f32.mrf.mxu0
        %v1729 = vadd.f32 %v1360, %v1728
        %v1730 = vpop.f32.mrf.mxu0
        %v1731 = vadd.f32 %v1362, %v1730
        %v1732 = vpop.f32.mrf.mxu0
        %v1733 = vadd.f32 %v1364, %v1732
        %1734 = vdwg.mxu0
        %1735 = vmatprep.subr.bf16.mxu0 %v1633
        %1736 = vmatpush1.bf16.msra.mxu0 %v1632
        %1737 = vmatprep.subr.bf16.mxu0 %v1631
        %1738 = vmatpush1.bf16.msra.mxu0 %v1630
        %1739 = vmatprep.subr.bf16.mxu0 %v1629
        %1740 = vmatpush1.bf16.msra.mxu0 %v1628
        %1741 = vmatprep.subr.bf16.mxu0 %v1627
        %1742 = vmatpush1.bf16.msra.mxu0 %v1626
        %1743 = vmatprep.subr.bf16.mxu0 %v1625
        %1744 = vmatpush1.bf16.msra.mxu0 %v1624
        %1745 = vmatprep.subr.bf16.mxu0 %v1623
        %1746 = vmatpush1.bf16.msra.mxu0 %v1622
        %1747 = vmatprep.subr.bf16.mxu0 %v1621
        %1748 = vmatpush1.bf16.msra.mxu0 %v1620
        %1749 = vmatprep.subr.bf16.mxu0 %v1619
        %1750 = vmatpush1.bf16.msra.mxu0 %v1618
        %1751 = vmatprep.subr.bf16.mxu0 0
        %1752 = vmatpush2.bf16.msra.mxu0 0
        %1753 = vmatprep.subr.bf16.mxu0 0
        %1754 = vmatpush2.bf16.msra.mxu0 0
        %1755 = vmatprep.subr.bf16.mxu0 0
        %1756 = vmatpush2.bf16.msra.mxu0 0
        %1757 = vmatprep.subr.bf16.mxu0 0
        %1758 = vmatpush2.bf16.msra.mxu0 0
        %1759 = vmatprep.subr.bf16.mxu0 0
        %1760 = vmatpush2.bf16.msra.mxu0 0
        %1761 = vmatprep.subr.bf16.mxu0 0
        %1762 = vmatpush2.bf16.msra.mxu0 0
        %1763 = vmatprep.subr.bf16.mxu0 0
        %1764 = vmatpush2.bf16.msra.mxu0 0
        %1765 = vmatprep.subr.bf16.mxu0 0
        %1766 = vmatpush2.bf16.msra.mxu0 0
        %1767 = vmatprep.mubr.bf16.mxu0 0
        %1768 = vmatmul.mubr.bf16.gmra.mxu0 %v1400
        %v1769 = vpop.f32.mrf.mxu0
        %v1770 = vadd.f32 %v1717, %v1769
        %v1771 = vpop.f32.mrf.mxu0
        %v1772 = vadd.f32 %v1719, %v1771
        %v1773 = vpop.f32.mrf.mxu0
        %v1774 = vadd.f32 %v1721, %v1773
        %v1775 = vpop.f32.mrf.mxu0
        %v1776 = vadd.f32 %v1723, %v1775
        %1777 = vmatprep.mubr.bf16.mxu0 0
        %1778 = vmatmul.mubr.bf16.gmra.mxu0 %v1435
        %v1779 = vpop.f32.mrf.mxu0
        %v1780 = vadd.f32 %v1727, %v1779
        %v1781 = vpop.f32.mrf.mxu0
        %v1782 = vadd.f32 %v1729, %v1781
        %v1783 = vpop.f32.mrf.mxu0
        %v1784 = vadd.f32 %v1731, %v1783
        %v1785 = vpop.f32.mrf.mxu0
        %v1786 = vadd.f32 %v1733, %v1785
        %1787 = vdwg.mxu0
        %s1788 = scalar_lea.vmem [#allocation2], 8
        %v1789 = vld [vmem:[%s1788] sm:$0x7]
        %v1790 = vld [vmem:[%s1788 + $0x4] sm:$0x7]
        %v1791 = vld [vmem:[%s1788 + $0x8] sm:$0x7]
        %v1792 = vld [vmem:[%s1788 + $0xc] sm:$0x7]
        %v1793 = vld [vmem:[%s1788 + $0x10] sm:$0x7]
        %v1794 = vld [vmem:[%s1788 + $0x14] sm:$0x7]
        %v1795 = vld [vmem:[%s1788 + $0x18] sm:$0x7]
        %v1796 = vld [vmem:[%s1788 + $0x1c] sm:$0x7]
        %v1805 = vunpack.c.l.b16 %v1789
        %v1806 = vunpack.c.l.b16 %v1790
        %v1807 = vunpack.c.l.b16 %v1791
        %v1808 = vunpack.c.l.b16 %v1792
        %v1809 = vunpack.c.l.b16 %v1793
        %v1810 = vunpack.c.l.b16 %v1794
        %v1811 = vunpack.c.l.b16 %v1795
        %v1812 = vunpack.c.l.b16 %v1796
        %v1813 = vpack.c.b16 %v1805, %v1805
        %v1814 = vpack.c.b16 %v1806, %v1806
        %v1815 = vpack.c.b16 %v1807, %v1807
        %v1816 = vpack.c.b16 %v1808, %v1808
        %v1817 = vpack.c.b16 %v1809, %v1809
        %v1818 = vpack.c.b16 %v1810, %v1810
        %v1819 = vpack.c.b16 %v1811, %v1811
        %v1820 = vpack.c.b16 %v1812, %v1812
        %v1822 = vshrl.u32 %v1813, 16
        %v1824 = vshll.u32 %v1813, 16
        %v1826 = vrot.slane %v1824, 1
        %v1827 = vor.u32 %v1822, %v1826
        %v1829 = vshrl.u32 %v1814, 16
        %v1831 = vshll.u32 %v1814, 16
        %v1833 = vrot.slane %v1831, 1
        %v1834 = vor.u32 %v1829, %v1833
        %v1836 = vshrl.u32 %v1815, 16
        %v1838 = vshll.u32 %v1815, 16
        %v1840 = vrot.slane %v1838, 1
        %v1841 = vor.u32 %v1836, %v1840
        %v1843 = vshrl.u32 %v1816, 16
        %v1845 = vshll.u32 %v1816, 16
        %v1847 = vrot.slane %v1845, 1
        %v1848 = vor.u32 %v1843, %v1847
        %v1850 = vshrl.u32 %v1817, 16
        %v1852 = vshll.u32 %v1817, 16
        %v1854 = vrot.slane %v1852, 1
        %v1855 = vor.u32 %v1850, %v1854
        %v1857 = vshrl.u32 %v1818, 16
        %v1859 = vshll.u32 %v1818, 16
        %v1861 = vrot.slane %v1859, 1
        %v1862 = vor.u32 %v1857, %v1861
        %v1864 = vshrl.u32 %v1819, 16
        %v1866 = vshll.u32 %v1819, 16
        %v1868 = vrot.slane %v1866, 1
        %v1869 = vor.u32 %v1864, %v1868
        %v1871 = vshrl.u32 %v1820, 16
        %v1873 = vshll.u32 %v1820, 16
        %v1875 = vrot.slane %v1873, 1
        %v1876 = vor.u32 %v1871, %v1875
        %v1877 = vrot.slane %v1813, 1
        %v1878 = vrot.slane %v1814, 1
        %v1879 = vrot.slane %v1815, 1
        %v1880 = vrot.slane %v1816, 1
        %v1881 = vrot.slane %v1817, 1
        %v1882 = vrot.slane %v1818, 1
        %v1883 = vrot.slane %v1819, 1
        %v1884 = vrot.slane %v1820, 1
        %v1885 = vcombine.low %v1789, %v1827
        %v1887 = vunpack.c.l.s4 1983009808
        %v1888 = vunpack.c.0.s8 %v1887
        %v1889 = vlaneseq
        %v1890 = vshrl.u32 %v1889, 7
        %v1891 = vsub.s32 %v1888, %v1890
        %v1892 = vrot.slane %v1885, %v1891
        %v1894 = vunpack.c.l.s4 1983009808
        %v1895 = vunpack.c.0.s8 %v1894
        %v1896 = vlaneseq
        %v1897 = vshrl.u32 %v1896, 7
        %v1898 = vsub.s32 %v1895, %v1897
        %v1899 = vrot.slane %v1877, %v1898
        %v1900 = vcombine.low %v1892, %v1899
        %v1901 = vcombine.low %v1790, %v1834
        %v1903 = vunpack.c.l.s4 1983009808
        %v1904 = vunpack.c.0.s8 %v1903
        %v1905 = vlaneseq
        %v1906 = vshrl.u32 %v1905, 7
        %v1907 = vsub.s32 %v1904, %v1906
        %v1908 = vrot.slane %v1901, %v1907
        %v1910 = vunpack.c.l.s4 1983009808
        %v1911 = vunpack.c.0.s8 %v1910
        %v1912 = vlaneseq
        %v1913 = vshrl.u32 %v1912, 7
        %v1914 = vsub.s32 %v1911, %v1913
        %v1915 = vrot.slane %v1878, %v1914
        %v1916 = vcombine.low %v1908, %v1915
        %v1917 = vcombine.low %v1791, %v1841
        %v1919 = vunpack.c.l.s4 1983009808
        %v1920 = vunpack.c.0.s8 %v1919
        %v1921 = vlaneseq
        %v1922 = vshrl.u32 %v1921, 7
        %v1923 = vsub.s32 %v1920, %v1922
        %v1924 = vrot.slane %v1917, %v1923
        %v1926 = vunpack.c.l.s4 1983009808
        %v1927 = vunpack.c.0.s8 %v1926
        %v1928 = vlaneseq
        %v1929 = vshrl.u32 %v1928, 7
        %v1930 = vsub.s32 %v1927, %v1929
        %v1931 = vrot.slane %v1879, %v1930
        %v1932 = vcombine.low %v1924, %v1931
        %v1933 = vcombine.low %v1792, %v1848
        %v1935 = vunpack.c.l.s4 1983009808
        %v1936 = vunpack.c.0.s8 %v1935
        %v1937 = vlaneseq
        %v1938 = vshrl.u32 %v1937, 7
        %v1939 = vsub.s32 %v1936, %v1938
        %v1940 = vrot.slane %v1933, %v1939
        %v1942 = vunpack.c.l.s4 1983009808
        %v1943 = vunpack.c.0.s8 %v1942
        %v1944 = vlaneseq
        %v1945 = vshrl.u32 %v1944, 7
        %v1946 = vsub.s32 %v1943, %v1945
        %v1947 = vrot.slane %v1880, %v1946
        %v1948 = vcombine.low %v1940, %v1947
        %v1949 = vcombine.low %v1793, %v1855
        %v1951 = vunpack.c.l.s4 1983009808
        %v1952 = vunpack.c.0.s8 %v1951
        %v1953 = vlaneseq
        %v1954 = vshrl.u32 %v1953, 7
        %v1955 = vsub.s32 %v1952, %v1954
        %v1956 = vrot.slane %v1949, %v1955
        %v1958 = vunpack.c.l.s4 1983009808
        %v1959 = vunpack.c.0.s8 %v1958
        %v1960 = vlaneseq
        %v1961 = vshrl.u32 %v1960, 7
        %v1962 = vsub.s32 %v1959, %v1961
        %v1963 = vrot.slane %v1881, %v1962
        %v1964 = vcombine.low %v1956, %v1963
        %v1965 = vcombine.low %v1794, %v1862
        %v1967 = vunpack.c.l.s4 1983009808
        %v1968 = vunpack.c.0.s8 %v1967
        %v1969 = vlaneseq
        %v1970 = vshrl.u32 %v1969, 7
        %v1971 = vsub.s32 %v1968, %v1970
        %v1972 = vrot.slane %v1965, %v1971
        %v1974 = vunpack.c.l.s4 1983009808
        %v1975 = vunpack.c.0.s8 %v1974
        %v1976 = vlaneseq
        %v1977 = vshrl.u32 %v1976, 7
        %v1978 = vsub.s32 %v1975, %v1977
        %v1979 = vrot.slane %v1882, %v1978
        %v1980 = vcombine.low %v1972, %v1979
        %v1981 = vcombine.low %v1795, %v1869
        %v1983 = vunpack.c.l.s4 1983009808
        %v1984 = vunpack.c.0.s8 %v1983
        %v1985 = vlaneseq
        %v1986 = vshrl.u32 %v1985, 7
        %v1987 = vsub.s32 %v1984, %v1986
        %v1988 = vrot.slane %v1981, %v1987
        %v1990 = vunpack.c.l.s4 1983009808
        %v1991 = vunpack.c.0.s8 %v1990
        %v1992 = vlaneseq
        %v1993 = vshrl.u32 %v1992, 7
        %v1994 = vsub.s32 %v1991, %v1993
        %v1995 = vrot.slane %v1883, %v1994
        %v1996 = vcombine.low %v1988, %v1995
        %v1997 = vcombine.low %v1796, %v1876
        %v1999 = vunpack.c.l.s4 1983009808
        %v2000 = vunpack.c.0.s8 %v1999
        %v2001 = vlaneseq
        %v2002 = vshrl.u32 %v2001, 7
        %v2003 = vsub.s32 %v2000, %v2002
        %v2004 = vrot.slane %v1997, %v2003
        %v2006 = vunpack.c.l.s4 1983009808
        %v2007 = vunpack.c.0.s8 %v2006
        %v2008 = vlaneseq
        %v2009 = vshrl.u32 %v2008, 7
        %v2010 = vsub.s32 %v2007, %v2009
        %v2011 = vrot.slane %v1884, %v2010
        %v2012 = vcombine.low %v2004, %v2011
        %v2013 = vld [vmem:[#allocation3 + $0x300] sm:$0xff]
        %v2014 = vld [vmem:[#allocation3 + $0x308] sm:$0xff]
        %v2015 = vld [vmem:[#allocation3 + $0x310] sm:$0xff]
        %v2016 = vld [vmem:[#allocation3 + $0x318] sm:$0xff]
        %v2017 = vld [vmem:[#allocation3 + $0x320] sm:$0xff]
        %v2018 = vld [vmem:[#allocation3 + $0x328] sm:$0xff]
        %v2019 = vld [vmem:[#allocation3 + $0x330] sm:$0xff]
        %v2020 = vld [vmem:[#allocation3 + $0x338] sm:$0xff]
        %v2021 = vld [vmem:[#allocation3 + $0x340] sm:$0xff]
        %v2022 = vld [vmem:[#allocation3 + $0x348] sm:$0xff]
        %v2023 = vld [vmem:[#allocation3 + $0x350] sm:$0xff]
        %v2024 = vld [vmem:[#allocation3 + $0x358] sm:$0xff]
        %v2025 = vld [vmem:[#allocation3 + $0x360] sm:$0xff]
        %v2026 = vld [vmem:[#allocation3 + $0x368] sm:$0xff]
        %v2027 = vld [vmem:[#allocation3 + $0x370] sm:$0xff]
        %v2028 = vld [vmem:[#allocation3 + $0x378] sm:$0xff]
        %v2029 = vld [vmem:[#allocation3 + $0x380] sm:$0xff]
        %v2030 = vld [vmem:[#allocation3 + $0x388] sm:$0xff]
        %v2031 = vld [vmem:[#allocation3 + $0x390] sm:$0xff]
        %v2032 = vld [vmem:[#allocation3 + $0x398] sm:$0xff]
        %v2033 = vld [vmem:[#allocation3 + $0x3a0] sm:$0xff]
        %v2034 = vld [vmem:[#allocation3 + $0x3a8] sm:$0xff]
        %v2035 = vld [vmem:[#allocation3 + $0x3b0] sm:$0xff]
        %v2036 = vld [vmem:[#allocation3 + $0x3b8] sm:$0xff]
        %v2037 = vld [vmem:[#allocation3 + $0x3c0] sm:$0xff]
        %v2038 = vld [vmem:[#allocation3 + $0x3c8] sm:$0xff]
        %v2039 = vld [vmem:[#allocation3 + $0x3d0] sm:$0xff]
        %v2040 = vld [vmem:[#allocation3 + $0x3d8] sm:$0xff]
        %v2041 = vld [vmem:[#allocation3 + $0x3e0] sm:$0xff]
        %v2042 = vld [vmem:[#allocation3 + $0x3e8] sm:$0xff]
        %v2043 = vld [vmem:[#allocation3 + $0x3f0] sm:$0xff]
        %v2044 = vld [vmem:[#allocation3 + $0x3f8] sm:$0xff]
        %v2045 = vld [vmem:[#allocation3 + $0x400] sm:$0xff]
        %v2046 = vld [vmem:[#allocation3 + $0x408] sm:$0xff]
        %v2047 = vld [vmem:[#allocation3 + $0x410] sm:$0xff]
        %v2048 = vld [vmem:[#allocation3 + $0x418] sm:$0xff]
        %v2049 = vld [vmem:[#allocation3 + $0x420] sm:$0xff]
        %v2050 = vld [vmem:[#allocation3 + $0x428] sm:$0xff]
        %v2051 = vld [vmem:[#allocation3 + $0x430] sm:$0xff]
        %v2052 = vld [vmem:[#allocation3 + $0x438] sm:$0xff]
        %v2053 = vld [vmem:[#allocation3 + $0x440] sm:$0xff]
        %v2054 = vld [vmem:[#allocation3 + $0x448] sm:$0xff]
        %v2055 = vld [vmem:[#allocation3 + $0x450] sm:$0xff]
        %v2056 = vld [vmem:[#allocation3 + $0x458] sm:$0xff]
        %v2057 = vld [vmem:[#allocation3 + $0x460] sm:$0xff]
        %v2058 = vld [vmem:[#allocation3 + $0x468] sm:$0xff]
        %v2059 = vld [vmem:[#allocation3 + $0x470] sm:$0xff]
        %v2060 = vld [vmem:[#allocation3 + $0x478] sm:$0xff]
        %v2061 = vcombine.low %v1900, %v1916
        %v2062 = vcombine.high %v1900, %v1916
        %v2063 = vcombine.low %v1932, %v1948
        %v2064 = vcombine.high %v1932, %v1948
        %v2066 = vunpack.c.l.s4 1983009808
        %v2067 = vunpack.c.0.s8 %v2066
        %v2068 = vlaneseq
        %v2069 = vshrl.u32 %v2068, 7
        %v2070 = vsub.s32 %v2067, %v2069
        %v2071 = vrot.slane %v2061, %v2070
        %v2073 = vunpack.c.l.s4 1983009808
        %v2074 = vunpack.c.0.s8 %v2073
        %v2075 = vlaneseq
        %v2076 = vshrl.u32 %v2075, 7
        %v2077 = vsub.s32 %v2074, %v2076
        %v2078 = vrot.slane %v2062, %v2077
        %v2080 = vunpack.c.l.s4 1983009808
        %v2081 = vunpack.c.0.s8 %v2080
        %v2082 = vlaneseq
        %v2083 = vshrl.u32 %v2082, 7
        %v2084 = vsub.s32 %v2081, %v2083
        %v2085 = vrot.slane %v2063, %v2084
        %v2087 = vunpack.c.l.s4 1983009808
        %v2088 = vunpack.c.0.s8 %v2087
        %v2089 = vlaneseq
        %v2090 = vshrl.u32 %v2089, 7
        %v2091 = vsub.s32 %v2088, %v2090
        %v2092 = vrot.slane %v2064, %v2091
        %v2093 = vcombine.low %v2071, %v2085
        %v2094 = vcombine.high %v2071, %v2085
        %v2095 = vcombine.low %v2078, %v2092
        %v2096 = vcombine.low %v1964, %v1980
        %v2097 = vcombine.high %v1964, %v1980
        %v2098 = vcombine.low %v1996, %v2012
        %v2099 = vcombine.high %v1996, %v2012
        %v2101 = vunpack.c.l.s4 1983009808
        %v2102 = vunpack.c.0.s8 %v2101
        %v2103 = vlaneseq
        %v2104 = vshrl.u32 %v2103, 7
        %v2105 = vsub.s32 %v2102, %v2104
        %v2106 = vrot.slane %v2096, %v2105
        %v2108 = vunpack.c.l.s4 1983009808
        %v2109 = vunpack.c.0.s8 %v2108
        %v2110 = vlaneseq
        %v2111 = vshrl.u32 %v2110, 7
        %v2112 = vsub.s32 %v2109, %v2111
        %v2113 = vrot.slane %v2097, %v2112
        %v2115 = vunpack.c.l.s4 1983009808
        %v2116 = vunpack.c.0.s8 %v2115
        %v2117 = vlaneseq
        %v2118 = vshrl.u32 %v2117, 7
        %v2119 = vsub.s32 %v2116, %v2118
        %v2120 = vrot.slane %v2098, %v2119
        %v2122 = vunpack.c.l.s4 1983009808
        %v2123 = vunpack.c.0.s8 %v2122
        %v2124 = vlaneseq
        %v2125 = vshrl.u32 %v2124, 7
        %v2126 = vsub.s32 %v2123, %v2125
        %v2127 = vrot.slane %v2099, %v2126
        %v2128 = vcombine.low %v2106, %v2120
        %v2129 = vcombine.high %v2106, %v2120
        %v2130 = vcombine.low %v2113, %v2127
        %v2185 = vunpack.c.l.b16 %v2013
        %v2186 = vunpack.c.h.b16 %v2013
        %v2187 = vunpack.c.l.b16 %v2014
        %v2188 = vunpack.c.h.b16 %v2014
        %v2189 = vunpack.c.l.b16 %v2015
        %v2190 = vunpack.c.h.b16 %v2015
        %v2191 = vunpack.c.l.b16 %v2016
        %v2192 = vunpack.c.h.b16 %v2016
        %v2193 = vunpack.c.l.b16 %v2017
        %v2194 = vunpack.c.h.b16 %v2017
        %v2195 = vunpack.c.l.b16 %v2018
        %v2196 = vunpack.c.h.b16 %v2018
        %v2197 = vunpack.c.l.b16 %v2019
        %v2198 = vunpack.c.h.b16 %v2019
        %v2199 = vunpack.c.l.b16 %v2020
        %v2200 = vunpack.c.h.b16 %v2020
        %v2201 = vunpack.c.l.b16 %v2021
        %v2202 = vunpack.c.h.b16 %v2021
        %v2203 = vunpack.c.l.b16 %v2022
        %v2204 = vunpack.c.h.b16 %v2022
        %v2205 = vunpack.c.l.b16 %v2023
        %v2206 = vunpack.c.h.b16 %v2023
        %v2207 = vunpack.c.l.b16 %v2024
        %v2208 = vunpack.c.h.b16 %v2024
        %v2209 = vunpack.c.l.b16 %v2025
        %v2210 = vunpack.c.h.b16 %v2025
        %v2211 = vunpack.c.l.b16 %v2026
        %v2212 = vunpack.c.h.b16 %v2026
        %v2213 = vunpack.c.l.b16 %v2027
        %v2214 = vunpack.c.h.b16 %v2027
        %v2215 = vunpack.c.l.b16 %v2028
        %v2216 = vunpack.c.h.b16 %v2028
        %v2217 = vunpack.c.l.b16 %v2029
        %v2218 = vunpack.c.h.b16 %v2029
        %v2219 = vunpack.c.l.b16 %v2030
        %v2220 = vunpack.c.h.b16 %v2030
        %v2221 = vunpack.c.l.b16 %v2031
        %v2222 = vunpack.c.h.b16 %v2031
        %v2223 = vunpack.c.l.b16 %v2032
        %v2224 = vunpack.c.h.b16 %v2032
        %v2225 = vunpack.c.l.b16 %v2033
        %v2226 = vunpack.c.h.b16 %v2033
        %v2227 = vunpack.c.l.b16 %v2034
        %v2228 = vunpack.c.h.b16 %v2034
        %v2229 = vunpack.c.l.b16 %v2035
        %v2230 = vunpack.c.h.b16 %v2035
        %v2231 = vunpack.c.l.b16 %v2036
        %v2232 = vunpack.c.h.b16 %v2036
        %v2233 = vunpack.c.l.b16 %v2037
        %v2234 = vunpack.c.h.b16 %v2037
        %v2235 = vunpack.c.l.b16 %v2038
        %v2236 = vunpack.c.h.b16 %v2038
        %v2237 = vunpack.c.l.b16 %v2039
        %v2238 = vunpack.c.h.b16 %v2039
        %v2239 = vunpack.c.l.b16 %v2040
        %v2240 = vunpack.c.h.b16 %v2040
        %v2241 = vunpack.c.l.b16 %v2041
        %v2242 = vunpack.c.h.b16 %v2041
        %v2243 = vunpack.c.l.b16 %v2042
        %v2244 = vunpack.c.h.b16 %v2042
        %v2245 = vunpack.c.l.b16 %v2043
        %v2246 = vunpack.c.h.b16 %v2043
        %v2247 = vunpack.c.l.b16 %v2044
        %v2248 = vunpack.c.h.b16 %v2044
        %v2249 = vunpack.c.l.b16 %v2045
        %v2250 = vunpack.c.h.b16 %v2045
        %v2251 = vunpack.c.l.b16 %v2046
        %v2252 = vunpack.c.h.b16 %v2046
        %v2253 = vunpack.c.l.b16 %v2047
        %v2254 = vunpack.c.h.b16 %v2047
        %v2255 = vunpack.c.l.b16 %v2048
        %v2256 = vunpack.c.h.b16 %v2048
        %v2257 = vunpack.c.l.b16 %v2049
        %v2258 = vunpack.c.h.b16 %v2049
        %v2259 = vunpack.c.l.b16 %v2050
        %v2260 = vunpack.c.h.b16 %v2050
        %v2261 = vunpack.c.l.b16 %v2051
        %v2262 = vunpack.c.h.b16 %v2051
        %v2263 = vunpack.c.l.b16 %v2052
        %v2264 = vunpack.c.h.b16 %v2052
        %v2265 = vunpack.c.l.b16 %v2053
        %v2266 = vunpack.c.h.b16 %v2053
        %v2267 = vunpack.c.l.b16 %v2054
        %v2268 = vunpack.c.h.b16 %v2054
        %v2269 = vunpack.c.l.b16 %v2055
        %v2270 = vunpack.c.h.b16 %v2055
        %v2271 = vunpack.c.l.b16 %v2056
        %v2272 = vunpack.c.h.b16 %v2056
        %v2273 = vunpack.c.l.b16 %v2057
        %v2274 = vunpack.c.h.b16 %v2057
        %v2275 = vunpack.c.l.b16 %v2058
        %v2276 = vunpack.c.h.b16 %v2058
        %v2277 = vunpack.c.l.b16 %v2059
        %v2278 = vunpack.c.h.b16 %v2059
        %v2279 = vunpack.c.l.b16 %v2060
        %v2280 = vunpack.c.h.b16 %v2060
        %v2281 = vpack.c.b16 %v2187, %v2185
        %v2282 = vpack.c.b16 %v2188, %v2186
        %v2283 = vpack.c.b16 %v2191, %v2189
        %v2284 = vpack.c.b16 %v2192, %v2190
        %v2285 = vpack.c.b16 %v2195, %v2193
        %v2286 = vpack.c.b16 %v2196, %v2194
        %v2287 = vpack.c.b16 %v2199, %v2197
        %v2288 = vpack.c.b16 %v2200, %v2198
        %v2289 = vpack.c.b16 %v2203, %v2201
        %v2290 = vpack.c.b16 %v2204, %v2202
        %v2291 = vpack.c.b16 %v2207, %v2205
        %v2292 = vpack.c.b16 %v2208, %v2206
        %v2293 = vpack.c.b16 %v2211, %v2209
        %v2294 = vpack.c.b16 %v2212, %v2210
        %v2295 = vpack.c.b16 %v2215, %v2213
        %v2296 = vpack.c.b16 %v2216, %v2214
        %v2297 = vpack.c.b16 %v2219, %v2217
        %v2298 = vpack.c.b16 %v2220, %v2218
        %v2299 = vpack.c.b16 %v2223, %v2221
        %v2300 = vpack.c.b16 %v2224, %v2222
        %v2301 = vpack.c.b16 %v2227, %v2225
        %v2302 = vpack.c.b16 %v2228, %v2226
        %v2303 = vpack.c.b16 %v2231, %v2229
        %v2304 = vpack.c.b16 %v2232, %v2230
        %v2305 = vpack.c.b16 %v2235, %v2233
        %v2306 = vpack.c.b16 %v2236, %v2234
        %v2307 = vpack.c.b16 %v2239, %v2237
        %v2308 = vpack.c.b16 %v2240, %v2238
        %v2309 = vpack.c.b16 %v2243, %v2241
        %v2310 = vpack.c.b16 %v2244, %v2242
        %v2311 = vpack.c.b16 %v2247, %v2245
        %v2312 = vpack.c.b16 %v2248, %v2246
        %v2313 = vpack.c.b16 %v2251, %v2249
        %v2314 = vpack.c.b16 %v2252, %v2250
        %v2315 = vpack.c.b16 %v2255, %v2253
        %v2316 = vpack.c.b16 %v2256, %v2254
        %v2317 = vpack.c.b16 %v2259, %v2257
        %v2318 = vpack.c.b16 %v2260, %v2258
        %v2319 = vpack.c.b16 %v2263, %v2261
        %v2320 = vpack.c.b16 %v2264, %v2262
        %v2321 = vpack.c.b16 %v2267, %v2265
        %v2322 = vpack.c.b16 %v2268, %v2266
        %v2323 = vpack.c.b16 %v2271, %v2269
        %v2324 = vpack.c.b16 %v2272, %v2270
        %v2325 = vpack.c.b16 %v2275, %v2273
        %v2326 = vpack.c.b16 %v2276, %v2274
        %v2327 = vpack.c.b16 %v2279, %v2277
        %v2328 = vpack.c.b16 %v2280, %v2278
        %2377 = vmatprep.subr.bf16.mxu0 %v2296
        %2378 = vmatpush1.bf16.msra.mxu0 %v2295
        %2379 = vmatprep.subr.bf16.mxu0 %v2294
        %2380 = vmatpush1.bf16.msra.mxu0 %v2293
        %2381 = vmatprep.subr.bf16.mxu0 %v2292
        %2382 = vmatpush1.bf16.msra.mxu0 %v2291
        %2383 = vmatprep.subr.bf16.mxu0 %v2290
        %2384 = vmatpush1.bf16.msra.mxu0 %v2289
        %2385 = vmatprep.subr.bf16.mxu0 %v2288
        %2386 = vmatpush1.bf16.msra.mxu0 %v2287
        %2387 = vmatprep.subr.bf16.mxu0 %v2286
        %2388 = vmatpush1.bf16.msra.mxu0 %v2285
        %2389 = vmatprep.subr.bf16.mxu0 %v2284
        %2390 = vmatpush1.bf16.msra.mxu0 %v2283
        %2391 = vmatprep.subr.bf16.mxu0 %v2282
        %2392 = vmatpush1.bf16.msra.mxu0 %v2281
        %2393 = vmatprep.subr.bf16.mxu0 %v2312
        %2394 = vmatpush2.bf16.msra.mxu0 %v2311
        %2395 = vmatprep.subr.bf16.mxu0 %v2310
        %2396 = vmatpush2.bf16.msra.mxu0 %v2309
        %2397 = vmatprep.subr.bf16.mxu0 %v2308
        %2398 = vmatpush2.bf16.msra.mxu0 %v2307
        %2399 = vmatprep.subr.bf16.mxu0 %v2306
        %2400 = vmatpush2.bf16.msra.mxu0 %v2305
        %2401 = vmatprep.subr.bf16.mxu0 %v2304
        %2402 = vmatpush2.bf16.msra.mxu0 %v2303
        %2403 = vmatprep.subr.bf16.mxu0 %v2302
        %2404 = vmatpush2.bf16.msra.mxu0 %v2301
        %2405 = vmatprep.subr.bf16.mxu0 %v2300
        %2406 = vmatpush2.bf16.msra.mxu0 %v2299
        %2407 = vmatprep.subr.bf16.mxu0 %v2298
        %2408 = vmatpush2.bf16.msra.mxu0 %v2297
        %2409 = vmatprep.mubr.bf16.mxu0 %v2094
        %2410 = vmatmul.mubr.bf16.gmra.mxu0 %v2093
        %v2411 = vpop.f32.mrf.mxu0
        %v2412 = vadd.f32 0.0, %v2411
        %v2413 = vpop.f32.mrf.mxu0
        %v2414 = vadd.f32 0.0, %v2413
        %v2415 = vpop.f32.mrf.mxu0
        %v2416 = vadd.f32 0.0, %v2415
        %v2417 = vpop.f32.mrf.mxu0
        %v2418 = vadd.f32 0.0, %v2417
        %2419 = vmatprep.mubr.bf16.mxu0 %v2129
        %2420 = vmatmul.mubr.bf16.gmra.mxu0 %v2128
        %v2421 = vpop.f32.mrf.mxu0
        %v2422 = vadd.f32 0.0, %v2421
        %v2423 = vpop.f32.mrf.mxu0
        %v2424 = vadd.f32 0.0, %v2423
        %v2425 = vpop.f32.mrf.mxu0
        %v2426 = vadd.f32 0.0, %v2425
        %v2427 = vpop.f32.mrf.mxu0
        %v2428 = vadd.f32 0.0, %v2427
        %2429 = vdwg.mxu0
        %2430 = vmatprep.subr.bf16.mxu0 %v2328
        %2431 = vmatpush1.bf16.msra.mxu0 %v2327
        %2432 = vmatprep.subr.bf16.mxu0 %v2326
        %2433 = vmatpush1.bf16.msra.mxu0 %v2325
        %2434 = vmatprep.subr.bf16.mxu0 %v2324
        %2435 = vmatpush1.bf16.msra.mxu0 %v2323
        %2436 = vmatprep.subr.bf16.mxu0 %v2322
        %2437 = vmatpush1.bf16.msra.mxu0 %v2321
        %2438 = vmatprep.subr.bf16.mxu0 %v2320
        %2439 = vmatpush1.bf16.msra.mxu0 %v2319
        %2440 = vmatprep.subr.bf16.mxu0 %v2318
        %2441 = vmatpush1.bf16.msra.mxu0 %v2317
        %2442 = vmatprep.subr.bf16.mxu0 %v2316
        %2443 = vmatpush1.bf16.msra.mxu0 %v2315
        %2444 = vmatprep.subr.bf16.mxu0 %v2314
        %2445 = vmatpush1.bf16.msra.mxu0 %v2313
        %2446 = vmatprep.subr.bf16.mxu0 0
        %2447 = vmatpush2.bf16.msra.mxu0 0
        %2448 = vmatprep.subr.bf16.mxu0 0
        %2449 = vmatpush2.bf16.msra.mxu0 0
        %2450 = vmatprep.subr.bf16.mxu0 0
        %2451 = vmatpush2.bf16.msra.mxu0 0
        %2452 = vmatprep.subr.bf16.mxu0 0
        %2453 = vmatpush2.bf16.msra.mxu0 0
        %2454 = vmatprep.subr.bf16.mxu0 0
        %2455 = vmatpush2.bf16.msra.mxu0 0
        %2456 = vmatprep.subr.bf16.mxu0 0
        %2457 = vmatpush2.bf16.msra.mxu0 0
        %2458 = vmatprep.subr.bf16.mxu0 0
        %2459 = vmatpush2.bf16.msra.mxu0 0
        %2460 = vmatprep.subr.bf16.mxu0 0
        %2461 = vmatpush2.bf16.msra.mxu0 0
        %2462 = vmatprep.mubr.bf16.mxu0 0
        %2463 = vmatmul.mubr.bf16.gmra.mxu0 %v2095
        %v2464 = vpop.f32.mrf.mxu0
        %v2465 = vadd.f32 %v2412, %v2464
        %v2466 = vpop.f32.mrf.mxu0
        %v2467 = vadd.f32 %v2414, %v2466
        %v2468 = vpop.f32.mrf.mxu0
        %v2469 = vadd.f32 %v2416, %v2468
        %v2470 = vpop.f32.mrf.mxu0
        %v2471 = vadd.f32 %v2418, %v2470
        %2472 = vmatprep.mubr.bf16.mxu0 0
        %2473 = vmatmul.mubr.bf16.gmra.mxu0 %v2130
        %v2474 = vpop.f32.mrf.mxu0
        %v2475 = vadd.f32 %v2422, %v2474
        %v2476 = vpop.f32.mrf.mxu0
        %v2477 = vadd.f32 %v2424, %v2476
        %v2478 = vpop.f32.mrf.mxu0
        %v2479 = vadd.f32 %v2426, %v2478
        %v2480 = vpop.f32.mrf.mxu0
        %v2481 = vadd.f32 %v2428, %v2480
        %2482 = vdwg.mxu0
        %v2483 = vadd.f32 %v1770, %v2465
        %v2484 = vadd.f32 %v1772, %v2467
        %v2485 = vadd.f32 %v1774, %v2469
        %v2486 = vadd.f32 %v1776, %v2471
        %v2487 = vadd.f32 %v1780, %v2475
        %v2488 = vadd.f32 %v1782, %v2477
        %v2489 = vadd.f32 %v1784, %v2479
        %v2490 = vadd.f32 %v1786, %v2481
        %v2491 = vld [vmem:[%s4] sm:$0x3]
        %v2493 = vlaneseq
        %v2494 = vshrl.u32 %v2493, 7
        %v2495 = vsub.s32 0, %v2494
        %v2496 = vrot.slane %v2491, %v2495
        %v2497 = vlaneseq
        %v2498 = vshrl.u32 %v2497, 7
        %v2499 = vsub.s32 1, %v2498
        %v2500 = vrot.slane %v2491, %v2499
        %v2503 = vadd.f32 %v2483, %v2496
        %v2504 = vadd.f32 %v2484, %v2500
        %v2505 = vadd.f32 %v2485, %v2496
        %v2506 = vadd.f32 %v2486, %v2500
        %v2507 = vadd.f32 %v2487, %v2496
        %v2508 = vadd.f32 %v2488, %v2500
        %v2509 = vadd.f32 %v2489, %v2496
        %v2510 = vadd.f32 %v2490, %v2500
        %v2511 = vadd.f32 %v2503, %v2505
        %v2512 = vadd.f32 %v2511, %v2507
        %v2513 = vadd.f32 %v2512, %v2509
        %v2514 = vrot.slane %v2513, 4
        %v2515 = vadd.f32 %v2513, %v2514
        %v2516 = vrot.slane %v2515, 2
        %v2517 = vadd.f32 %v2515, %v2516
        %v2518 = vrot.slane %v2517, 1
        %v2519 = vadd.f32 %v2517, %v2518
        %v2520 = vadd.f32 %v2504, %v2506
        %v2521 = vadd.f32 %v2520, %v2508
        %v2522 = vadd.f32 %v2521, %v2510
        %v2523 = vrot.slane %v2522, 4
        %v2524 = vadd.f32 %v2522, %v2523
        %v2525 = vrot.slane %v2524, 2
        %v2526 = vadd.f32 %v2524, %v2525
        %v2527 = vrot.slane %v2526, 1
        %v2528 = vadd.f32 %v2526, %v2527
        %v2531 = vcombine.low %v2519, %v2528
        %v2533 = vunpack.c.l.s4 1966171168
        %v2534 = vunpack.c.0.s8 %v2533
        %v2535 = vlaneseq
        %v2536 = vshrl.u32 %v2535, 7
        %v2537 = vsub.s32 %v2534, %v2536
        %v2538 = vrot.slane %v2531, %v2537
        %v2540 = vunpack.c.l.s4 1966171168
        %v2541 = vunpack.c.0.s8 %v2540
        %v2542 = vlaneseq
        %v2543 = vshrl.u32 %v2542, 7
        %v2544 = vsub.s32 %v2541, %v2543
        %v2545 = vrot.slane %v2538, %v2544
        %v2547 = vlaneseq
        %vm2548 = vcmp.ge.s32.totalorder %v2547, 0
        %vm2549 = vcmp.lt.s32.totalorder %v2547, 256
        %vm2550 = vmand %vm2548, %vm2549
        %2551 = vst.msk [vmem:[%s282] ss:$2 sm:$0x3] %vm2550, %v2545
        %v2552 = vmul.f32 %v2503, %v2503
        %v2553 = vmul.f32 %v2504, %v2504
        %v2554 = vmul.f32 %v2505, %v2505
        %v2555 = vmul.f32 %v2506, %v2506
        %v2556 = vmul.f32 %v2507, %v2507
        %v2557 = vmul.f32 %v2508, %v2508
        %v2558 = vmul.f32 %v2509, %v2509
        %v2559 = vmul.f32 %v2510, %v2510
        %v2560 = vadd.f32 %v2552, %v2554
        %v2561 = vadd.f32 %v2560, %v2556
        %v2562 = vadd.f32 %v2561, %v2558
        %v2563 = vrot.slane %v2562, 4
        %v2564 = vadd.f32 %v2562, %v2563
        %v2565 = vrot.slane %v2564, 2
        %v2566 = vadd.f32 %v2564, %v2565
        %v2567 = vrot.slane %v2566, 1
        %v2568 = vadd.f32 %v2566, %v2567
        %v2569 = vadd.f32 %v2553, %v2555
        %v2570 = vadd.f32 %v2569, %v2557
        %v2571 = vadd.f32 %v2570, %v2559
        %v2572 = vrot.slane %v2571, 4
        %v2573 = vadd.f32 %v2571, %v2572
        %v2574 = vrot.slane %v2573, 2
        %v2575 = vadd.f32 %v2573, %v2574
        %v2576 = vrot.slane %v2575, 1
        %v2577 = vadd.f32 %v2575, %v2576
        %v2580 = vcombine.low %v2568, %v2577
        %v2582 = vunpack.c.l.s4 1966171168
        %v2583 = vunpack.c.0.s8 %v2582
        %v2584 = vlaneseq
        %v2585 = vshrl.u32 %v2584, 7
        %v2586 = vsub.s32 %v2583, %v2585
        %v2587 = vrot.slane %v2580, %v2586
        %v2589 = vunpack.c.l.s4 1966171168
        %v2590 = vunpack.c.0.s8 %v2589
        %v2591 = vlaneseq
        %v2592 = vshrl.u32 %v2591, 7
        %v2593 = vsub.s32 %v2590, %v2592
        %v2594 = vrot.slane %v2587, %v2593
        %s2596 = scalar_lea.vmem %s282, 1
        %2597 = vst.msk [vmem:[%s2596] ss:$2 sm:$0x3] %vm2550, %v2594
        %2598 = vst [vmem:[%s276] sm:$0xff] %v2503
        %2599 = vst [vmem:[%s276 + $0x8] sm:$0xff] %v2504
        %2600 = vst [vmem:[%s276 + $0x10] sm:$0xff] %v2505
        %2601 = vst [vmem:[%s276 + $0x18] sm:$0xff] %v2506
        %2602 = vst [vmem:[%s276 + $0x20] sm:$0xff] %v2507
        %2603 = vst [vmem:[%s276 + $0x28] sm:$0xff] %v2508
        %2604 = vst [vmem:[%s276 + $0x30] sm:$0xff] %v2509
        %2605 = vst [vmem:[%s276 + $0x38] sm:$0xff] %v2510
        %s2606 = smul.u32 4, %s19
        %p2607 = scmp.lt.s32.totalorder %s2606, 7
        %s2608 = scalar_select %p2607, %s2606, 7
        %s2609 = smul.addr %s2608, 2
        %s2610 = smul.addr %s2609, 8
        %s2611 = scalar_lea.vmem %s5, %s2610
        %p2612 = scmp.lt.s32.totalorder %s19, 1
        %s2613 = scalar_select %p2612, %s19, 1
        %s2614 = smul.addr %s2613, 2
        %s2615 = smul.addr %s2614, 2
        %s2616 = scalar_lea.vmem %s6, %s2615
        // Predicated region
        $region49: #{generator_forward.5} parent=39 // pred_check
          %p2617 = pneg %p147
        $region50: #{generator_forward.5} parent=39 // pred_check_branch
          %2619 = sbr.rel (%p2617) target = $region52
        $region51: #{generator_forward.5} parent=39 // pred_region
          %s2620 = smul.u32 4, %s19
        $region52: #{generator_forward.5} parent=39 // pred_fallthru
          _
        // Predicated region
        $region53: #{generator_forward.5} parent=39 // pred_check
          %p2621 = pneg %p173
        $region54: #{generator_forward.5} parent=39 // pred_check_branch
          %2623 = sbr.rel (%p2621) target = $region56
        $region55: #{generator_forward.5} parent=39 // pred_region
          _
        $region56: #{generator_forward.5} parent=39 // pred_fallthru
          _
      $region40: #{generator_forward.5} parent=5 // pred_fallthru
        _
      %p2624 = scmp.le.s32.totalorder 2, %s14
      // Predicated region
      $region57: #{generator_forward.5} parent=5 // pred_check
        %p2625 = pneg %p2624
      $region58: #{generator_forward.5} parent=5 // pred_check_branch
        %2627 = sbr.rel (%p2625) target = $region60
      $region59: #{generator_forward.5} parent=5 // pred_region
        %s2628 = ssub.s32 %s14, 2
        // Predicated region
        $region61: #{generator_forward.5} parent=59 // pred_check
          %p2629 = pneg %p153
        $region62: #{generator_forward.5} parent=59 // pred_check_branch
          %2631 = sbr.rel (%p2629) target = $region64
        $region63: #{generator_forward.5} parent=59 // pred_region
          %s2632 = smul.u32 4, %s20
          %p2633 = scmp.lt.s32.totalorder %s2632, 7
          %s2634 = scalar_select %p2633, %s2632, 7
          %s2635 = smul.addr %s2634, 2
          %s2636 = smul.addr %s2635, 8
          %s2637 = scalar_lea.vmem %s5, %s2636
        $region64: #{generator_forward.5} parent=59 // pred_fallthru
          _
        // Predicated region
        $region65: #{generator_forward.5} parent=59 // pred_check
          %p2638 = pneg %p179
        $region66: #{generator_forward.5} parent=59 // pred_check_branch
          %2640 = sbr.rel (%p2638) target = $region68
        $region67: #{generator_forward.5} parent=59 // pred_region
          %p2641 = scmp.lt.s32.totalorder %s20, 1
          %s2642 = scalar_select %p2641, %s20, 1
          %s2643 = smul.addr %s2642, 2
          %s2644 = smul.addr %s2643, 2
          %s2645 = scalar_lea.vmem %s6, %s2644
        $region68: #{generator_forward.5} parent=59 // pred_fallthru
          _
      $region60: #{generator_forward.5} parent=5 // pred_fallthru
        _
    $region6: #{generator_forward.5} parent=1 // loop_footer
      %s18 = sadd.s32 1, %s14
    $region7: #{generator_forward.5} parent=1 // loop_footer_branch
      %13 = sbr.rel target = $region3
    $region8: #{generator_forward.5} parent=1 // loop_exit
      _
    %2646 = vsyncpa [#allocation4], 1
    %s2647 = scalar_lea.sflag [#allocation4], 1
    %2648 = vsyncpa %s2647, 1

// kernel: generator_forward.6
$region0: #{generator_forward.6}
  #allocation0 [shape = 'u32[]', space=smem, size = 0x4, offset = 0x4, fixed_abs, tag = 'smem constant byte address 0x4 - core index']
  #allocation1 [shape = 'u32[144,128]{1,0:T(1,128)}', space=vmem, size = 0x12000, scoped, tag = 'internal scratch']
  #allocation2 [shape = 'bf16[1,18,10,128]{3,2,1,0:T(8,128)(2,1)}', space=vmem, size = 0x12000, scoped, tag = 'scratch operand']
  %s0 = inlined_call_operand.vmem [shape: f32[2,8,8,128], index: 0, kind: input, shape index: {}]
  %s1 = inlined_call_operand.vmem [shape: f32[1,128], index: 1, kind: input, shape index: {}]
  %s2 = inlined_call_operand.vmem [shape: f32[1,128], index: 2, kind: input, shape index: {}]
  %s3 = inlined_call_operand.vmem [shape: bf16[1152,128], index: 3, kind: input, shape index: {}]
  %s4 = inlined_call_operand.vmem [shape: f32[1,128], index: 4, kind: input, shape index: {}]
  %s5 = inlined_call_operand.vmem [shape: f32[256,128], index: 5, kind: output, shape index: {0}]
  %s6 = inlined_call_operand.vmem [shape: f32[2,2,128], index: 6, kind: output, shape index: {1}]
  %7 = xla_tuple %s5, %s6
  %s8 = sld [smem:[#allocation0]]
  $region65: #{generator_forward.6} parent=0
    _
  %s10 = ssub.s32 1, %s8
  %s11 = scalar_select 0, %s10, %s8
  loop: start=0, step=1, limit=4
  $region2: #{generator_forward.6} parent=0 // loop_pre_header
    _
  $region3: #{generator_forward.6} parent=0 // loop_header
    %s13 = sphi 0, %s17
    %p14 = scmp.ge.s32.totalorder %s13, 4
    %s23 = sphi 0, %s25
    %s26 = sphi 0, %s23
    %s27 = sphi 0, %s26
    %s43 = sphi 0, %s27
    %s47 = sphi 0, %s47
    %s49 = sphi 0, %s47
    %s50 = sphi 0, %s49
    %s64 = sphi 0, %s50
    %s68 = sphi 0, %s68
    %s70 = sphi 0, %s68
    %s71 = sphi 0, %s70
    %s85 = sphi 0, %s71
    %s89 = sphi 0, %s89
    %s91 = sphi 0, %s89
    %s92 = sphi 0, %s91
    %s106 = sphi 0, %s92
    %s110 = sphi 0, %s110
    %s112 = sphi 0, %s110
    %s113 = sphi 0, %s112
    %s127 = sphi 0, %s113
    %s133 = sphi 0, %s135
    %s136 = sphi 0, %s133
    %s137 = sphi 0, %s136
    %s153 = sphi 0, %s137
    %s159 = sphi 0, %s161
    %s162 = sphi 0, %s159
    %s163 = sphi 0, %s162
    %s179 = sphi 0, %s163
  $region4: #{generator_forward.6} parent=0 // loop_header_branch
    %16 = sbr.rel (%p14) target = $region8
  $region5: #{generator_forward.6} parent=0 // loop_body
    %s18 = ssub.s32 %s13, 1
    %s19 = ssub.s32 %s13, 2
    %s20 = sadd.s32 %s13, 1
    %s21 = ssub.s32 %s13, %s20
    %p22 = scmp.eq.s32.totalorder %s21, 0
    %s24 = sadd.s32 %s23, 1
    %s25 = scalar_select %p22, %s23, %s24
    %p28 = pneg %p22
    %p29 = scmp.eq.s32.totalorder %s13, 1
    %p30 = por %p28, %p29
    %p31 = scmp.ne.s32.totalorder %s23, %s26
    %p32 = scmp.eq.s32.totalorder %s13, 0
    %p33 = por %p31, %p32
    %p34 = scmp.ne.s32.totalorder %s23, %s26
    %p35 = scmp.eq.s32.totalorder %s18, 1
    %p36 = por %p34, %p35
    %p37 = scmp.ne.s32.totalorder %s26, %s27
    %p38 = scmp.eq.s32.totalorder %s18, 0
    %p39 = por %p37, %p38
    %p40 = scmp.ne.s32.totalorder %s26, %s27
    %p41 = scmp.eq.s32.totalorder %s19, 1
    %p42 = por %p40, %p41
    %p44 = scmp.ne.s32.totalorder %s27, %s43
    %p45 = scmp.eq.s32.totalorder %s19, 0
    %p46 = por %p44, %p45
    %s48 = sadd.s32 %s47, 1
    %p51 = scmp.eq.s32.totalorder %s13, 1
    %p52 = scmp.ne.s32.totalorder %s47, %s49
    %p53 = scmp.eq.s32.totalorder %s13, 0
    %p54 = por %p52, %p53
    %p55 = scmp.ne.s32.totalorder %s47, %s49
    %p56 = scmp.eq.s32.totalorder %s18, 1
    %p57 = por %p55, %p56
    %p58 = scmp.ne.s32.totalorder %s49, %s50
    %p59 = scmp.eq.s32.totalorder %s18, 0
    %p60 = por %p58, %p59
    %p61 = scmp.ne.s32.totalorder %s49, %s50
    %p62 = scmp.eq.s32.totalorder %s19, 1
    %p63 = por %p61, %p62
    %p65 = scmp.ne.s32.totalorder %s50, %s64
    %p66 = scmp.eq.s32.totalorder %s19, 0
    %p67 = por %p65, %p66
    %s69 = sadd.s32 %s68, 1
    %p72 = scmp.eq.s32.totalorder %s13, 1
    %p73 = scmp.ne.s32.totalorder %s68, %s70
    %p74 = scmp.eq.s32.totalorder %s13, 0
    %p75 = por %p73, %p74
    %p76 = scmp.ne.s32.totalorder %s68, %s70
    %p77 = scmp.eq.s32.totalorder %s18, 1
    %p78 = por %p76, %p77
    %p79 = scmp.ne.s32.totalorder %s70, %s71
    %p80 = scmp.eq.s32.totalorder %s18, 0
    %p81 = por %p79, %p80
    %p82 = scmp.ne.s32.totalorder %s70, %s71
    %p83 = scmp.eq.s32.totalorder %s19, 1
    %p84 = por %p82, %p83
    %p86 = scmp.ne.s32.totalorder %s71, %s85
    %p87 = scmp.eq.s32.totalorder %s19, 0
    %p88 = por %p86, %p87
    %s90 = sadd.s32 %s89, 1
    %p93 = scmp.eq.s32.totalorder %s13, 1
    %p94 = scmp.ne.s32.totalorder %s89, %s91
    %p95 = scmp.eq.s32.totalorder %s13, 0
    %p96 = por %p94, %p95
    %p97 = scmp.ne.s32.totalorder %s89, %s91
    %p98 = scmp.eq.s32.totalorder %s18, 1
    %p99 = por %p97, %p98
    %p100 = scmp.ne.s32.totalorder %s91, %s92
    %p101 = scmp.eq.s32.totalorder %s18, 0
    %p102 = por %p100, %p101
    %p103 = scmp.ne.s32.totalorder %s91, %s92
    %p104 = scmp.eq.s32.totalorder %s19, 1
    %p105 = por %p103, %p104
    %p107 = scmp.ne.s32.totalorder %s92, %s106
    %p108 = scmp.eq.s32.totalorder %s19, 0
    %p109 = por %p107, %p108
    %s111 = sadd.s32 %s110, 1
    %p114 = scmp.eq.s32.totalorder %s13, 1
    %p115 = scmp.ne.s32.totalorder %s110, %s112
    %p116 = scmp.eq.s32.totalorder %s13, 0
    %p117 = por %p115, %p116
    %p118 = scmp.ne.s32.totalorder %s110, %s112
    %p119 = scmp.eq.s32.totalorder %s18, 1
    %p120 = por %p118, %p119
    %p121 = scmp.ne.s32.totalorder %s112, %s113
    %p122 = scmp.eq.s32.totalorder %s18, 0
    %p123 = por %p121, %p122
    %p124 = scmp.ne.s32.totalorder %s112, %s113
    %p125 = scmp.eq.s32.totalorder %s19, 1
    %p126 = por %p124, %p125
    %p128 = scmp.ne.s32.totalorder %s113, %s127
    %p129 = scmp.eq.s32.totalorder %s19, 0
    %p130 = por %p128, %p129
    %s131 = ssub.s32 %s13, %s20
    %p132 = scmp.eq.s32.totalorder %s131, 0
    %s134 = sadd.s32 %s133, 1
    %s135 = scalar_select %p132, %s133, %s134
    %p138 = pneg %p132
    %p139 = scmp.eq.s32.totalorder %s13, 1
    %p140 = por %p138, %p139
    %p141 = scmp.ne.s32.totalorder %s133, %s136
    %p142 = scmp.eq.s32.totalorder %s13, 0
    %p143 = por %p141, %p142
    %p144 = scmp.ne.s32.totalorder %s133, %s136
    %p145 = scmp.eq.s32.totalorder %s18, 1
    %p146 = por %p144, %p145
    %p147 = scmp.ne.s32.totalorder %s136, %s137
    %p148 = scmp.eq.s32.totalorder %s18, 0
    %p149 = por %p147, %p148
    %p150 = scmp.ne.s32.totalorder %s136, %s137
    %p151 = scmp.eq.s32.totalorder %s19, 1
    %p152 = por %p150, %p151
    %p154 = scmp.ne.s32.totalorder %s137, %s153
    %p155 = scmp.eq.s32.totalorder %s19, 0
    %p156 = por %p154, %p155
    %s157 = ssub.s32 %s13, %s20
    %p158 = scmp.eq.s32.totalorder %s157, 0
    %s160 = sadd.s32 %s159, 1
    %s161 = scalar_select %p158, %s159, %s160
    %p164 = pneg %p158
    %p165 = scmp.eq.s32.totalorder %s13, 1
    %p166 = por %p164, %p165
    %p167 = scmp.ne.s32.totalorder %s159, %s162
    %p168 = scmp.eq.s32.totalorder %s13, 0
    %p169 = por %p167, %p168
    %p170 = scmp.ne.s32.totalorder %s159, %s162
    %p171 = scmp.eq.s32.totalorder %s18, 1
    %p172 = por %p170, %p171
    %p173 = scmp.ne.s32.totalorder %s162, %s163
    %p174 = scmp.eq.s32.totalorder %s18, 0
    %p175 = por %p173, %p174
    %p176 = scmp.ne.s32.totalorder %s162, %s163
    %p177 = scmp.eq.s32.totalorder %s19, 1
    %p178 = por %p176, %p177
    %p180 = scmp.ne.s32.totalorder %s163, %s179
    %p181 = scmp.eq.s32.totalorder %s19, 0
    %p182 = por %p180, %p181
    %p183 = scmp.le.s32.totalorder 1, %s13
    %p184 = scmp.lt.s32.totalorder %s13, 3
    %p185 = pnand %p183, %p184
    %p186 = pneg %p185
    // Predicated region
    $region9: #{generator_forward.6} parent=5 // pred_check
      _
    $region10: #{generator_forward.6} parent=5 // pred_check_branch
      %188 = sbr.rel (%p185) target = $region12
    $region11: #{generator_forward.6} parent=5 // pred_region
      %s189 = ssub.s32 %s13, 1
      // Predicated region
      $region13: #{generator_forward.6} parent=11 // pred_check
        %p190 = pneg %p60
      $region14: #{generator_forward.6} parent=11 // pred_check_branch
        %192 = sbr.rel (%p190) target = $region16
      $region15: #{generator_forward.6} parent=11 // pred_region
        _
      $region16: #{generator_forward.6} parent=11 // pred_fallthru
        _
      // Predicated region
      $region17: #{generator_forward.6} parent=11 // pred_check
        %p193 = pneg %p81
      $region18: #{generator_forward.6} parent=11 // pred_check_branch
        %195 = sbr.rel (%p193) target = $region20
      $region19: #{generator_forward.6} parent=11 // pred_region
        _
      $region20: #{generator_forward.6} parent=11 // pred_fallthru
        _
      // Predicated region
      $region21: #{generator_forward.6} parent=11 // pred_check
        %p196 = pneg %p102
      $region22: #{generator_forward.6} parent=11 // pred_check_branch
        %198 = sbr.rel (%p196) target = $region24
      $region23: #{generator_forward.6} parent=11 // pred_region
        _
      $region24: #{generator_forward.6} parent=11 // pred_fallthru
        _
      // Predicated region
      $region25: #{generator_forward.6} parent=11 // pred_check
        %p199 = pneg %p123
      $region26: #{generator_forward.6} parent=11 // pred_check_branch
        %201 = sbr.rel (%p199) target = $region28
      $region27: #{generator_forward.6} parent=11 // pred_region
        _
      $region28: #{generator_forward.6} parent=11 // pred_fallthru
        _
    $region12: #{generator_forward.6} parent=5 // pred_fallthru
      _
    %p202 = scmp.lt.s32.totalorder %s13, 2
    // Predicated region
    $region29: #{generator_forward.6} parent=5 // pred_check
      %p203 = pneg %p202
    $region30: #{generator_forward.6} parent=5 // pred_check_branch
      %205 = sbr.rel (%p203) target = $region32
    $region31: #{generator_forward.6} parent=5 // pred_region
      // Predicated region
      $region33: #{generator_forward.6} parent=31 // pred_check
        %p206 = pneg %p33
      $region34: #{generator_forward.6} parent=31 // pred_check_branch
        %208 = sbr.rel (%p206) target = $region36
      $region35: #{generator_forward.6} parent=31 // pred_region
        %p209 = scmp.lt.s32.totalorder %s13, 1
        %s210 = scalar_select %p209, %s13, 1
        %s211 = smul.addr %s210, 8
        %s212 = smul.addr %s211, 8
        %s213 = scalar_lea.vmem %s0, %s212
      $region36: #{generator_forward.6} parent=31 // pred_fallthru
        _
    $region32: #{generator_forward.6} parent=5 // pred_fallthru
      _
    %p214 = scmp.le.s32.totalorder 1, %s13
    %p215 = scmp.lt.s32.totalorder %s13, 3
    %p216 = pnand %p214, %p215
    %p217 = pneg %p216
    // Predicated region
    $region37: #{generator_forward.6} parent=5 // pred_check
      _
    $region38: #{generator_forward.6} parent=5 // pred_check_branch
      %219 = sbr.rel (%p216) target = $region40
    $region39: #{generator_forward.6} parent=5 // pred_region
      %s220 = ssub.s32 %s13, 1
      %p221 = scmp.lt.s32.totalorder %s18, 1
      %s222 = scalar_select %p221, %s18, 1
      %s223 = smul.addr %s222, 8
      %s224 = smul.addr %s223, 8
      %s225 = scalar_lea.vmem %s0, %s224
      %p226 = pneg %p39
      %p227 = pneg %p36
      %p228 = pneg %p60
      %p229 = pneg %p57
      %p230 = pneg %p81
      %p231 = pneg %p78
      %p232 = pneg %p102
      %p233 = pneg %p99
      %p234 = pneg %p123
      %p235 = pneg %p120
      %p236 = pneg %p149
      %p237 = pneg %p146
      %s238 = smul.u32 16, %s18
      %p239 = scmp.lt.s32.totalorder %s238, 31
      %s240 = scalar_select %p239, %s238, 31
      %s241 = smul.addr %s240, 8
      %s242 = scalar_lea.vmem %s5, %s241
      %p243 = pneg %p175
      %p244 = pneg %p172
      %p245 = scmp.lt.s32.totalorder %s18, 1
      %s246 = scalar_select %p245, %s18, 1
      %s247 = smul.addr %s246, 2
      %s248 = scalar_lea.vmem %s6, %s247
      %p249 = scmp.lt.s32.totalorder %s18, 1
      %s250 = scalar_select %p249, %s18, 1
      %s251 = smul.addr %s250, 8
      %s252 = smul.addr %s251, 8
      %s253 = scalar_lea.vmem %s0, %s252
      %s254 = smul.u32 16, %s18
      %p255 = scmp.lt.s32.totalorder %s254, 31
      %s256 = scalar_select %p255, %s254, 31
      %s257 = smul.addr %s256, 8
      %s258 = scalar_lea.vmem %s5, %s257
      %s259 = smul.u32 16, %s18
      %p260 = scmp.lt.s32.totalorder %s18, 1
      %s261 = scalar_select %p260, %s18, 1
      %s262 = smul.addr %s261, 2
      %s263 = scalar_lea.vmem %s6, %s262
      %v265 = vld [vmem:[%s253] sm:$0xff]
      %v266 = vld [vmem:[%s253 + $0x8] sm:$0xff]
      %v267 = vld [vmem:[%s253 + $0x10] sm:$0xff]
      %v268 = vld [vmem:[%s253 + $0x18] sm:$0xff]
      %v269 = vld [vmem:[%s253 + $0x20] sm:$0xff]
      %v270 = vld [vmem:[%s253 + $0x28] sm:$0xff]
      %v271 = vld [vmem:[%s253 + $0x30] sm:$0xff]
      %v272 = vld [vmem:[%s253 + $0x38] sm:$0xff]
      %v273 = vld [vmem:[%s1] sm:$0x1]
      %v275 = vlaneseq
      %v276 = vshrl.u32 %v275, 7
      %v277 = vsub.s32 0, %v276
      %v278 = vrot.slane %v273, %v277
      %v280 = vmul.f32 %v265, %v278
      %v281 = vmul.f32 %v266, %v278
      %v282 = vmul.f32 %v267, %v278
      %v283 = vmul.f32 %v268, %v278
      %v284 = vmul.f32 %v269, %v278
      %v285 = vmul.f32 %v270, %v278
      %v286 = vmul.f32 %v271, %v278
      %v287 = vmul.f32 %v272, %v278
      %v288 = vld [vmem:[%s2] sm:$0x1]
      %v290 = vlaneseq
      %v291 = vshrl.u32 %v290, 7
      %v292 = vsub.s32 0, %v291
      %v293 = vrot.slane %v288, %v292
      %v295 = vadd.f32 %v280, %v293
      %v296 = vadd.f32 %v281, %v293
      %v297 = vadd.f32 %v282, %v293
      %v298 = vadd.f32 %v283, %v293
      %v299 = vadd.f32 %v284, %v293
      %v300 = vadd.f32 %v285, %v293
      %v301 = vadd.f32 %v286, %v293
      %v302 = vadd.f32 %v287, %v293
      %vm303 = vcmp.gt.f32.partialorder %v295, 0.0
      %vm304 = vcmp.gt.f32.partialorder %v296, 0.0
      %vm305 = vcmp.gt.f32.partialorder %v297, 0.0
      %vm306 = vcmp.gt.f32.partialorder %v298, 0.0
      %vm307 = vcmp.gt.f32.partialorder %v299, 0.0
      %vm308 = vcmp.gt.f32.partialorder %v300, 0.0
      %vm309 = vcmp.gt.f32.partialorder %v301, 0.0
      %vm310 = vcmp.gt.f32.partialorder %v302, 0.0
      %v311 = vmul.f32 %v295, 0.2
      %v312 = vmul.f32 %v296, 0.2
      %v313 = vmul.f32 %v297, 0.2
      %v314 = vmul.f32 %v298, 0.2
      %v315 = vmul.f32 %v299, 0.2
      %v316 = vmul.f32 %v300, 0.2
      %v317 = vmul.f32 %v301, 0.2
      %v318 = vmul.f32 %v302, 0.2
      %v319 = vsel %vm303, %v295, %v311
      %v320 = vsel %vm304, %v296, %v312
      %v321 = vsel %vm305, %v297, %v313
      %v322 = vsel %vm306, %v298, %v314
      %v323 = vsel %vm307, %v299, %v315
      %v324 = vsel %vm308, %v300, %v316
      %v325 = vsel %vm309, %v301, %v317
      %v326 = vsel %vm310, %v302, %v318
      %v327 = vpack.c.bf16 %v319, %v319
      %v328 = vpack.c.bf16 %v320, %v320
      %v329 = vpack.c.bf16 %v321, %v321
      %v330 = vpack.c.bf16 %v322, %v322
      %v331 = vpack.c.bf16 %v323, %v323
      %v332 = vpack.c.bf16 %v324, %v324
      %v333 = vpack.c.bf16 %v325, %v325
      %v334 = vpack.c.bf16 %v326, %v326
      %p335 = scmp.eq.s32.totalorder %s18, 0
      // Predicated region
      $region41: #{generator_forward.6} parent=39 // pred_check
        %p336 = pneg %p335
      $region42: #{generator_forward.6} parent=39 // pred_check_branch
        %338 = sbr.rel (%p336) target = $region44
      $region43: #{generator_forward.6} parent=39 // pred_region
        %339 = vst [vmem:[#allocation2] sm:$0xf] 0
        %340 = vst [vmem:[#allocation2 + $0x4] sm:$0x1] 0
        %341 = vst [vmem:[#allocation2 + $0x8] sm:$0xf] 0
        %342 = vst [vmem:[#allocation2 + $0xc] sm:$0x1] 0
        %343 = vst [vmem:[#allocation2 + $0x10] sm:$0xf] 0
        %344 = vst [vmem:[#allocation2 + $0x14] sm:$0x1] 0
        %345 = vst [vmem:[#allocation2 + $0x18] sm:$0xf] 0
        %346 = vst [vmem:[#allocation2 + $0x1c] sm:$0x1] 0
        %347 = vst [vmem:[#allocation2 + $0x20] sm:$0xf] 0
        %348 = vst [vmem:[#allocation2 + $0x24] sm:$0x1] 0
        %349 = vst [vmem:[#allocation2 + $0x28] sm:$0xf] 0
        %350 = vst [vmem:[#allocation2 + $0x2c] sm:$0x1] 0
        %351 = vst [vmem:[#allocation2 + $0x30] sm:$0xf] 0
        %352 = vst [vmem:[#allocation2 + $0x34] sm:$0x1] 0
        %353 = vst [vmem:[#allocation2 + $0x38] sm:$0xf] 0
        %354 = vst [vmem:[#allocation2 + $0x3c] sm:$0x1] 0
        %355 = vst [vmem:[#allocation2 + $0x40] sm:$0xf] 0
        %356 = vst [vmem:[#allocation2 + $0x44] sm:$0x1] 0
        %357 = vst [vmem:[#allocation2 + $0x48] sm:$0xf] 0
        %358 = vst [vmem:[#allocation2 + $0x4c] sm:$0x1] 0
        %359 = vst [vmem:[#allocation2 + $0x50] sm:$0xf] 0
        %360 = vst [vmem:[#allocation2 + $0x54] sm:$0x1] 0
        %361 = vst [vmem:[#allocation2 + $0x58] sm:$0xf] 0
        %362 = vst [vmem:[#allocation2 + $0x5c] sm:$0x1] 0
        %363 = vst [vmem:[#allocation2 + $0x60] sm:$0xf] 0
        %364 = vst [vmem:[#allocation2 + $0x64] sm:$0x1] 0
        %365 = vst [vmem:[#allocation2 + $0x68] sm:$0xf] 0
        %366 = vst [vmem:[#allocation2 + $0x6c] sm:$0x1] 0
        %367 = vst [vmem:[#allocation2 + $0x70] sm:$0xf] 0
        %368 = vst [vmem:[#allocation2 + $0x74] sm:$0x1] 0
        %369 = vst [vmem:[#allocation2 + $0x78] sm:$0xf] 0
        %370 = vst [vmem:[#allocation2 + $0x7c] sm:$0x1] 0
        %371 = vst [vmem:[#allocation2 + $0x80] sm:$0xf] 0
        %372 = vst [vmem:[#allocation2 + $0x84] sm:$0x1] 0
        %373 = vst [vmem:[#allocation2 + $0x88] sm:$0xf] 0
        %374 = vst [vmem:[#allocation2 + $0x8c] sm:$0x1] 0
      $region44: #{generator_forward.6} parent=39 // pred_fallthru
        _
      %v383 = vunpack.c.l.b16 %v327
      %v384 = vunpack.c.l.b16 %v328
      %v385 = vunpack.c.l.b16 %v329
      %v386 = vunpack.c.l.b16 %v330
      %v387 = vunpack.c.l.b16 %v331
      %v388 = vunpack.c.l.b16 %v332
      %v389 = vunpack.c.l.b16 %v333
      %v390 = vunpack.c.l.b16 %v334
      %v391 = vpack.c.b16 %v383, %v383
      %v392 = vpack.c.b16 %v384, %v384
      %v393 = vpack.c.b16 %v385, %v385
      %v394 = vpack.c.b16 %v386, %v386
      %v395 = vpack.c.b16 %v387, %v387
      %v396 = vpack.c.b16 %v388, %v388
      %v397 = vpack.c.b16 %v389, %v389
      %v398 = vpack.c.b16 %v390, %v390
      %v400 = vshrl.u32 %v391, 16
      %v402 = vrot.slane %v400, 7
      %v403 = vshll.u32 %v391, 16
      %v405 = vor.u32 %v402, %v403
      %v406 = vrot.slane %v402, 4
      %v408 = vshrl.u32 %v392, 16
      %v410 = vrot.slane %v408, 7
      %v411 = vshll.u32 %v392, 16
      %v413 = vor.u32 %v410, %v411
      %v414 = vrot.slane %v410, 4
      %v416 = vshrl.u32 %v393, 16
      %v418 = vrot.slane %v416, 7
      %v419 = vshll.u32 %v393, 16
      %v421 = vor.u32 %v418, %v419
      %v422 = vrot.slane %v418, 4
      %v424 = vshrl.u32 %v394, 16
      %v426 = vrot.slane %v424, 7
      %v427 = vshll.u32 %v394, 16
      %v429 = vor.u32 %v426, %v427
      %v430 = vrot.slane %v426, 4
      %v432 = vshrl.u32 %v395, 16
      %v434 = vrot.slane %v432, 7
      %v435 = vshll.u32 %v395, 16
      %v437 = vor.u32 %v434, %v435
      %v438 = vrot.slane %v434, 4
      %v440 = vshrl.u32 %v396, 16
      %v442 = vrot.slane %v440, 7
      %v443 = vshll.u32 %v396, 16
      %v445 = vor.u32 %v442, %v443
      %v446 = vrot.slane %v442, 4
      %v448 = vshrl.u32 %v397, 16
      %v450 = vrot.slane %v448, 7
      %v451 = vshll.u32 %v397, 16
      %v453 = vor.u32 %v450, %v451
      %v454 = vrot.slane %v450, 4
      %v456 = vshrl.u32 %v398, 16
      %v458 = vrot.slane %v456, 7
      %v459 = vshll.u32 %v398, 16
      %v461 = vor.u32 %v458, %v459
      %v462 = vrot.slane %v458, 4
      %s479 = scalar_lea.vmem [#allocation2], 8
      %vm480 = vcmask 1043456
      %vm481 = vsmask.f32 7938
      %vm482 = vmand %vm480, %vm481
      %v483 = vld [vmem:[%s479] sm:$0xf]
      %v484 = vsel %vm482, %v405, %v483
      %485 = vst [vmem:[%s479] sm:$0xf] %v484
      %vm486 = vcmask 1040384
      %vm487 = vsmask.f32 256
      %vm488 = vmand %vm486, %vm487
      %v489 = vld [vmem:[%s479 + $0x4] sm:$0x1]
      %v490 = vsel %vm488, %v406, %v489
      %491 = vst [vmem:[%s479 + $0x4] sm:$0x1] %v490
      %v492 = vld [vmem:[%s479 + $0x8] sm:$0xf]
      %v493 = vsel %vm482, %v405, %v492
      %494 = vst [vmem:[%s479 + $0x8] sm:$0xf] %v493
      %v495 = vld [vmem:[%s479 + $0xc] sm:$0x1]
      %v496 = vsel %vm488, %v406, %v495
      %497 = vst [vmem:[%s479 + $0xc] sm:$0x1] %v496
      %v498 = vld [vmem:[%s479 + $0x10] sm:$0xf]
      %v499 = vsel %vm482, %v413, %v498
      %500 = vst [vmem:[%s479 + $0x10] sm:$0xf] %v499
      %v501 = vld [vmem:[%s479 + $0x14] sm:$0x1]
      %v502 = vsel %vm488, %v414, %v501
      %503 = vst [vmem:[%s479 + $0x14] sm:$0x1] %v502
      %v504 = vld [vmem:[%s479 + $0x18] sm:$0xf]
      %v505 = vsel %vm482, %v413, %v504
      %506 = vst [vmem:[%s479 + $0x18] sm:$0xf] %v505
      %v507 = vld [vmem:[%s479 + $0x1c] sm:$0x1]
      %v508 = vsel %vm488, %v414, %v507
      %509 = vst [vmem:[%s479 + $0x1c] sm:$0x1] %v508
      %v510 = vld [vmem:[%s479 + $0x20] sm:$0xf]
      %v511 = vsel %vm482, %v421, %v510
      %512 = vst [vmem:[%s479 + $0x20] sm:$0xf] %v511
      %v513 = vld [vmem:[%s479 + $0x24] sm:$0x1]
      %v514 = vsel %vm488, %v422, %v513
      %515 = vst [vmem:[%s479 + $0x24] sm:$0x1] %v514
      %v516 = vld [vmem:[%s479 + $0x28] sm:$0xf]
      %v517 = vsel %vm482, %v421, %v516
      %518 = vst [vmem:[%s479 + $0x28] sm:$0xf] %v517
      %v519 = vld [vmem:[%s479 + $0x2c] sm:$0x1]
      %v520 = vsel %vm488, %v422, %v519
      %521 = vst [vmem:[%s479 + $0x2c] sm:$0x1] %v520
      %v522 = vld [vmem:[%s479 + $0x30] sm:$0xf]
      %v523 = vsel %vm482, %v429, %v522
      %524 = vst [vmem:[%s479 + $0x30] sm:$0xf] %v523
      %v525 = vld [vmem:[%s479 + $0x34] sm:$0x1]
      %v526 = vsel %vm488, %v430, %v525
      %527 = vst [vmem:[%s479 + $0x34] sm:$0x1] %v526
      %v528 = vld [vmem:[%s479 + $0x38] sm:$0xf]
      %v529 = vsel %vm482, %v429, %v528
      %530 = vst [vmem:[%s479 + $0x38] sm:$0xf] %v529
      %v531 = vld [vmem:[%s479 + $0x3c] sm:$0x1]
      %v532 = vsel %vm488, %v430, %v531
      %533 = vst [vmem:[%s479 + $0x3c] sm:$0x1] %v532
      %v534 = vld [vmem:[%s479 + $0x40] sm:$0xf]
      %v535 = vsel %vm482, %v437, %v534
      %536 = vst [vmem:[%s479 + $0x40] sm:$0xf] %v535
      %v537 = vld [vmem:[%s479 + $0x44] sm:$0x1]
      %v538 = vsel %vm488, %v438, %v537
      %539 = vst [vmem:[%s479 + $0x44] sm:$0x1] %v538
      %v540 = vld [vmem:[%s479 + $0x48] sm:$0xf]
      %v541 = vsel %vm482, %v437, %v540
      %542 = vst [vmem:[%s479 + $0x48] sm:$0xf] %v541
      %v543 = vld [vmem:[%s479 + $0x4c] sm:$0x1]
      %v544 = vsel %vm488, %v438, %v543
      %545 = vst [vmem:[%s479 + $0x4c] sm:$0x1] %v544
      %v546 = vld [vmem:[%s479 + $0x50] sm:$0xf]
      %v547 = vsel %vm482, %v445, %v546
      %548 = vst [vmem:[%s479 + $0x50] sm:$0xf] %v547
      %v549 = vld [vmem:[%s479 + $0x54] sm:$0x1]
      %v550 = vsel %vm488, %v446, %v549
      %551 = vst [vmem:[%s479 + $0x54] sm:$0x1] %v550
      %v552 = vld [vmem:[%s479 + $0x58] sm:$0xf]
      %v553 = vsel %vm482, %v445, %v552
      %554 = vst [vmem:[%s479 + $0x58] sm:$0xf] %v553
      %v555 = vld [vmem:[%s479 + $0x5c] sm:$0x1]
      %v556 = vsel %vm488, %v446, %v555
      %557 = vst [vmem:[%s479 + $0x5c] sm:$0x1] %v556
      %v558 = vld [vmem:[%s479 + $0x60] sm:$0xf]
      %v559 = vsel %vm482, %v453, %v558
      %560 = vst [vmem:[%s479 + $0x60] sm:$0xf] %v559
      %v561 = vld [vmem:[%s479 + $0x64] sm:$0x1]
      %v562 = vsel %vm488, %v454, %v561
      %563 = vst [vmem:[%s479 + $0x64] sm:$0x1] %v562
      %v564 = vld [vmem:[%s479 + $0x68] sm:$0xf]
      %v565 = vsel %vm482, %v453, %v564
      %566 = vst [vmem:[%s479 + $0x68] sm:$0xf] %v565
      %v567 = vld [vmem:[%s479 + $0x6c] sm:$0x1]
      %v568 = vsel %vm488, %v454, %v567
      %569 = vst [vmem:[%s479 + $0x6c] sm:$0x1] %v568
      %v570 = vld [vmem:[%s479 + $0x70] sm:$0xf]
      %v571 = vsel %vm482, %v461, %v570
      %572 = vst [vmem:[%s479 + $0x70] sm:$0xf] %v571
      %v573 = vld [vmem:[%s479 + $0x74] sm:$0x1]
      %v574 = vsel %vm488, %v462, %v573
      %575 = vst [vmem:[%s479 + $0x74] sm:$0x1] %v574
      %v576 = vld [vmem:[%s479 + $0x78] sm:$0xf]
      %v577 = vsel %vm482, %v461, %v576
      %578 = vst [vmem:[%s479 + $0x78] sm:$0xf] %v577
      %v579 = vld [vmem:[%s479 + $0x7c] sm:$0x1]
      %v580 = vsel %vm488, %v462, %v579
      %581 = vst [vmem:[%s479 + $0x7c] sm:$0x1] %v580
      %v582 = vld [vmem:[#allocation2] sm:$0xf]
      %v583 = vld [vmem:[#allocation2 + $0x4] sm:$0x1]
      %v584 = vld [vmem:[#allocation2 + $0x8] sm:$0xf]
      %v585 = vld [vmem:[#allocation2 + $0xc] sm:$0x1]
      %v586 = vld [vmem:[#allocation2 + $0x10] sm:$0xf]
      %v587 = vld [vmem:[#allocation2 + $0x14] sm:$0x1]
      %v588 = vld [vmem:[#allocation2 + $0x18] sm:$0xf]
      %v589 = vld [vmem:[#allocation2 + $0x1c] sm:$0x1]
      %v590 = vld [vmem:[#allocation2 + $0x20] sm:$0xf]
      %v591 = vld [vmem:[#allocation2 + $0x24] sm:$0x1]
      %v592 = vld [vmem:[#allocation2 + $0x28] sm:$0xf]
      %v593 = vld [vmem:[#allocation2 + $0x2c] sm:$0x1]
      %v594 = vld [vmem:[#allocation2 + $0x30] sm:$0xf]
      %v595 = vld [vmem:[#allocation2 + $0x34] sm:$0x1]
      %v596 = vld [vmem:[#allocation2 + $0x38] sm:$0xf]
      %v597 = vld [vmem:[#allocation2 + $0x3c] sm:$0x1]
      %v598 = vld [vmem:[#allocation2 + $0x40] sm:$0xf]
      %v599 = vld [vmem:[#allocation2 + $0x44] sm:$0x1]
      %v600 = vld [vmem:[#allocation2 + $0x48] sm:$0xf]
      %v601 = vld [vmem:[#allocation2 + $0x4c] sm:$0x1]
      %v602 = vld [vmem:[#allocation2 + $0x50] sm:$0xf]
      %v603 = vld [vmem:[#allocation2 + $0x54] sm:$0x1]
      %v604 = vld [vmem:[#allocation2 + $0x58] sm:$0xf]
      %v605 = vld [vmem:[#allocation2 + $0x5c] sm:$0x1]
      %v606 = vld [vmem:[#allocation2 + $0x60] sm:$0xf]
      %v607 = vld [vmem:[#allocation2 + $0x64] sm:$0x1]
      %v608 = vld [vmem:[#allocation2 + $0x68] sm:$0xf]
      %v609 = vld [vmem:[#allocation2 + $0x6c] sm:$0x1]
      %v610 = vld [vmem:[#allocation2 + $0x70] sm:$0xf]
      %v611 = vld [vmem:[#allocation2 + $0x74] sm:$0x1]
      %v612 = vld [vmem:[#allocation2 + $0x78] sm:$0xf]
      %v613 = vld [vmem:[#allocation2 + $0x7c] sm:$0x1]
      %v646 = vunpack.c.l.b16 %v582
      %v647 = vunpack.c.l.b16 %v583
      %v648 = vunpack.c.l.b16 %v584
      %v649 = vunpack.c.l.b16 %v585
      %v650 = vunpack.c.l.b16 %v586
      %v651 = vunpack.c.l.b16 %v587
      %v652 = vunpack.c.l.b16 %v588
      %v653 = vunpack.c.l.b16 %v589
      %v654 = vunpack.c.l.b16 %v590
      %v655 = vunpack.c.l.b16 %v591
      %v656 = vunpack.c.l.b16 %v592
      %v657 = vunpack.c.l.b16 %v593
      %v658 = vunpack.c.l.b16 %v594
      %v659 = vunpack.c.l.b16 %v595
      %v660 = vunpack.c.l.b16 %v596
      %v661 = vunpack.c.l.b16 %v597
      %v662 = vunpack.c.l.b16 %v598
      %v663 = vunpack.c.l.b16 %v599
      %v664 = vunpack.c.l.b16 %v600
      %v665 = vunpack.c.l.b16 %v601
      %v666 = vunpack.c.l.b16 %v602
      %v667 = vunpack.c.l.b16 %v603
      %v668 = vunpack.c.l.b16 %v604
      %v669 = vunpack.c.l.b16 %v605
      %v670 = vunpack.c.l.b16 %v606
      %v671 = vunpack.c.l.b16 %v607
      %v672 = vunpack.c.l.b16 %v608
      %v673 = vunpack.c.l.b16 %v609
      %v674 = vunpack.c.l.b16 %v610
      %v675 = vunpack.c.l.b16 %v611
      %v676 = vunpack.c.l.b16 %v612
      %v677 = vunpack.c.l.b16 %v613
      %v678 = vpack.c.b16 %v647, %v646
      %v679 = vpack.c.b16 %v649, %v648
      %v680 = vpack.c.b16 %v651, %v650
      %v681 = vpack.c.b16 %v653, %v652
      %v682 = vpack.c.b16 %v655, %v654
      %v683 = vpack.c.b16 %v657, %v656
      %v684 = vpack.c.b16 %v659, %v658
      %v685 = vpack.c.b16 %v661, %v660
      %v686 = vpack.c.b16 %v663, %v662
      %v687 = vpack.c.b16 %v665, %v664
      %v688 = vpack.c.b16 %v667, %v666
      %v689 = vpack.c.b16 %v669, %v668
      %v690 = vpack.c.b16 %v671, %v670
      %v691 = vpack.c.b16 %v673, %v672
      %v692 = vpack.c.b16 %v675, %v674
      %v693 = vpack.c.b16 %v677, %v676
      %v695 = vshrl.u32 %v678, 16
      %v697 = vshll.u32 %v678, 16
      %v699 = vrot.slane %v697, 1
      %v700 = vor.u32 %v695, %v699
      %v702 = vshrl.u32 %v679, 16
      %v704 = vshll.u32 %v679, 16
      %v706 = vrot.slane %v704, 1
      %v707 = vor.u32 %v702, %v706
      %v709 = vshrl.u32 %v680, 16
      %v711 = vshll.u32 %v680, 16
      %v713 = vrot.slane %v711, 1
      %v714 = vor.u32 %v709, %v713
      %v716 = vshrl.u32 %v681, 16
      %v718 = vshll.u32 %v681, 16
      %v720 = vrot.slane %v718, 1
      %v721 = vor.u32 %v716, %v720
      %v723 = vshrl.u32 %v682, 16
      %v725 = vshll.u32 %v682, 16
      %v727 = vrot.slane %v725, 1
      %v728 = vor.u32 %v723, %v727
      %v730 = vshrl.u32 %v683, 16
      %v732 = vshll.u32 %v683, 16
      %v734 = vrot.slane %v732, 1
      %v735 = vor.u32 %v730, %v734
      %v737 = vshrl.u32 %v684, 16
      %v739 = vshll.u32 %v684, 16
      %v741 = vrot.slane %v739, 1
      %v742 = vor.u32 %v737, %v741
      %v744 = vshrl.u32 %v685, 16
      %v746 = vshll.u32 %v685, 16
      %v748 = vrot.slane %v746, 1
      %v749 = vor.u32 %v744, %v748
      %v751 = vshrl.u32 %v686, 16
      %v753 = vshll.u32 %v686, 16
      %v755 = vrot.slane %v753, 1
      %v756 = vor.u32 %v751, %v755
      %v758 = vshrl.u32 %v687, 16
      %v760 = vshll.u32 %v687, 16
      %v762 = vrot.slane %v760, 1
      %v763 = vor.u32 %v758, %v762
      %v765 = vshrl.u32 %v688, 16
      %v767 = vshll.u32 %v688, 16
      %v769 = vrot.slane %v767, 1
      %v770 = vor.u32 %v765, %v769
      %v772 = vshrl.u32 %v689, 16
      %v774 = vshll.u32 %v689, 16
      %v776 = vrot.slane %v774, 1
      %v777 = vor.u32 %v772, %v776
      %v779 = vshrl.u32 %v690, 16
      %v781 = vshll.u32 %v690, 16
      %v783 = vrot.slane %v781, 1
      %v784 = vor.u32 %v779, %v783
      %v786 = vshrl.u32 %v691, 16
      %v788 = vshll.u32 %v691, 16
      %v790 = vrot.slane %v788, 1
      %v791 = vor.u32 %v786, %v790
      %v793 = vshrl.u32 %v692, 16
      %v795 = vshll.u32 %v692, 16
      %v797 = vrot.slane %v795, 1
      %v798 = vor.u32 %v793, %v797
      %v800 = vshrl.u32 %v693, 16
      %v802 = vshll.u32 %v693, 16
      %v804 = vrot.slane %v802, 1
      %v805 = vor.u32 %v800, %v804
      %v806 = vrot.slane %v678, 1
      %v807 = vrot.slane %v679, 1
      %v808 = vrot.slane %v680, 1
      %v809 = vrot.slane %v681, 1
      %v810 = vrot.slane %v682, 1
      %v811 = vrot.slane %v683, 1
      %v812 = vrot.slane %v684, 1
      %v813 = vrot.slane %v685, 1
      %v814 = vrot.slane %v686, 1
      %v815 = vrot.slane %v687, 1
      %v816 = vrot.slane %v688, 1
      %v817 = vrot.slane %v689, 1
      %v818 = vrot.slane %v690, 1
      %v819 = vrot.slane %v691, 1
      %v820 = vrot.slane %v692, 1
      %v821 = vrot.slane %v693, 1
      %v822 = vunpack.c.l.b16 %v700
      %v823 = vunpack.c.l.b16 %v806
      %v824 = vunpack.c.l.b16 %v707
      %v825 = vunpack.c.l.b16 %v807
      %v826 = vunpack.c.l.b16 %v714
      %v827 = vunpack.c.l.b16 %v808
      %v828 = vunpack.c.l.b16 %v721
      %v829 = vunpack.c.l.b16 %v809
      %v830 = vunpack.c.l.b16 %v728
      %v831 = vunpack.c.l.b16 %v810
      %v832 = vunpack.c.l.b16 %v735
      %v833 = vunpack.c.l.b16 %v811
      %v834 = vunpack.c.l.b16 %v742
      %v835 = vunpack.c.l.b16 %v812
      %v836 = vunpack.c.l.b16 %v749
      %v837 = vunpack.c.l.b16 %v813
      %v838 = vunpack.c.l.b16 %v756
      %v839 = vunpack.c.l.b16 %v814
      %v840 = vunpack.c.l.b16 %v763
      %v841 = vunpack.c.l.b16 %v815
      %v842 = vunpack.c.l.b16 %v770
      %v843 = vunpack.c.l.b16 %v816
      %v844 = vunpack.c.l.b16 %v777
      %v845 = vunpack.c.l.b16 %v817
      %v846 = vunpack.c.l.b16 %v784
      %v847 = vunpack.c.l.b16 %v818
      %v848 = vunpack.c.l.b16 %v791
      %v849 = vunpack.c.l.b16 %v819
      %v850 = vunpack.c.l.b16 %v798
      %v851 = vunpack.c.l.b16 %v820
      %v852 = vunpack.c.l.b16 %v805
      %v853 = vunpack.c.l.b16 %v821
      %v854 = vld [vmem:[%s3] sm:$0xf]
      %v855 = vld [vmem:[%s3 + $0x4] sm:$0xf]
      %v856 = vld [vmem:[%s3 + $0x8] sm:$0xf]
      %v857 = vld [vmem:[%s3 + $0xc] sm:$0xf]
      %v858 = vld [vmem:[%s3 + $0x10] sm:$0xf]
      %v859 = vld [vmem:[%s3 + $0x14] sm:$0xf]
      %v860 = vld [vmem:[%s3 + $0x18] sm:$0xf]
      %v861 = vld [vmem:[%s3 + $0x1c] sm:$0xf]
      %v862 = vld [vmem:[%s3 + $0x20] sm:$0xf]
      %v863 = vld [vmem:[%s3 + $0x24] sm:$0xf]
      %v864 = vld [vmem:[%s3 + $0x28] sm:$0xf]
      %v865 = vld [vmem:[%s3 + $0x2c] sm:$0xf]
      %v866 = vld [vmem:[%s3 + $0x30] sm:$0xf]
      %v867 = vld [vmem:[%s3 + $0x34] sm:$0xf]
      %v868 = vld [vmem:[%s3 + $0x38] sm:$0xf]
      %v869 = vld [vmem:[%s3 + $0x3c] sm:$0xf]
      %v870 = vld [vmem:[%s3 + $0x40] sm:$0xf]
      %v871 = vld [vmem:[%s3 + $0x44] sm:$0xf]
      %v872 = vld [vmem:[%s3 + $0x48] sm:$0xf]
      %v873 = vld [vmem:[%s3 + $0x4c] sm:$0xf]
      %v874 = vld [vmem:[%s3 + $0x50] sm:$0xf]
      %v875 = vld [vmem:[%s3 + $0x54] sm:$0xf]
      %v876 = vld [vmem:[%s3 + $0x58] sm:$0xf]
      %v877 = vld [vmem:[%s3 + $0x5c] sm:$0xf]
      %v878 = vld [vmem:[%s3 + $0x60] sm:$0xf]
      %v879 = vld [vmem:[%s3 + $0x64] sm:$0xf]
      %v880 = vld [vmem:[%s3 + $0x68] sm:$0xf]
      %v881 = vld [vmem:[%s3 + $0x6c] sm:$0xf]
      %v882 = vld [vmem:[%s3 + $0x70] sm:$0xf]
      %v883 = vld [vmem:[%s3 + $0x74] sm:$0xf]
      %v884 = vld [vmem:[%s3 + $0x78] sm:$0xf]
      %v885 = vld [vmem:[%s3 + $0x7c] sm:$0xf]
      %v886 = vld [vmem:[%s3 + $0x80] sm:$0xf]
      %v887 = vld [vmem:[%s3 + $0x84] sm:$0xf]
      %v888 = vld [vmem:[%s3 + $0x88] sm:$0xf]
      %v889 = vld [vmem:[%s3 + $0x8c] sm:$0xf]
      %v890 = vld [vmem:[%s3 + $0x90] sm:$0xf]
      %v891 = vld [vmem:[%s3 + $0x94] sm:$0xf]
      %v892 = vld [vmem:[%s3 + $0x98] sm:$0xf]
      %v893 = vld [vmem:[%s3 + $0x9c] sm:$0xf]
      %v894 = vld [vmem:[%s3 + $0xa0] sm:$0xf]
      %v895 = vld [vmem:[%s3 + $0xa4] sm:$0xf]
      %v896 = vld [vmem:[%s3 + $0xa8] sm:$0xf]
      %v897 = vld [vmem:[%s3 + $0xac] sm:$0xf]
      %v898 = vld [vmem:[%s3 + $0xb0] sm:$0xf]
      %v899 = vld [vmem:[%s3 + $0xb4] sm:$0xf]
      %v900 = vld [vmem:[%s3 + $0xb8] sm:$0xf]
      %v901 = vld [vmem:[%s3 + $0xbc] sm:$0xf]
      %v902 = vld [vmem:[%s479] sm:$0xf]
      %v903 = vld [vmem:[%s479 + $0x4] sm:$0x1]
      %v904 = vld [vmem:[%s479 + $0x8] sm:$0xf]
      %v905 = vld [vmem:[%s479 + $0xc] sm:$0x1]
      %v906 = vld [vmem:[%s479 + $0x10] sm:$0xf]
      %v907 = vld [vmem:[%s479 + $0x14] sm:$0x1]
      %v908 = vld [vmem:[%s479 + $0x18] sm:$0xf]
      %v909 = vld [vmem:[%s479 + $0x1c] sm:$0x1]
      %v910 = vld [vmem:[%s479 + $0x20] sm:$0xf]
      %v911 = vld [vmem:[%s479 + $0x24] sm:$0x1]
      %v912 = vld [vmem:[%s479 + $0x28] sm:$0xf]
      %v913 = vld [vmem:[%s479 + $0x2c] sm:$0x1]
      %v914 = vld [vmem:[%s479 + $0x30] sm:$0xf]
      %v915 = vld [vmem:[%s479 + $0x34] sm:$0x1]
      %v916 = vld [vmem:[%s479 + $0x38] sm:$0xf]
      %v917 = vld [vmem:[%s479 + $0x3c] sm:$0x1]
      %v918 = vld [vmem:[%s479 + $0x40] sm:$0xf]
      %v919 = vld [vmem:[%s479 + $0x44] sm:$0x1]
      %v920 = vld [vmem:[%s479 + $0x48] sm:$0xf]
      %v921 = vld [vmem:[%s479 + $0x4c] sm:$0x1]
      %v922 = vld [vmem:[%s479 + $0x50] sm:$0xf]
      %v923 = vld [vmem:[%s479 + $0x54] sm:$0x1]
      %v924 = vld [vmem:[%s479 + $0x58] sm:$0xf]
      %v925 = vld [vmem:[%s479 + $0x5c] sm:$0x1]
      %v926 = vld [vmem:[%s479 + $0x60] sm:$0xf]
      %v927 = vld [vmem:[%s479 + $0x64] sm:$0x1]
      %v928 = vld [vmem:[%s479 + $0x68] sm:$0xf]
      %v929 = vld [vmem:[%s479 + $0x6c] sm:$0x1]
      %v930 = vld [vmem:[%s479 + $0x70] sm:$0xf]
      %v931 = vld [vmem:[%s479 + $0x74] sm:$0x1]
      %v932 = vld [vmem:[%s479 + $0x78] sm:$0xf]
      %v933 = vld [vmem:[%s479 + $0x7c] sm:$0x1]
      %v966 = vunpack.c.l.b16 %v902
      %v967 = vunpack.c.l.b16 %v903
      %v968 = vunpack.c.l.b16 %v904
      %v969 = vunpack.c.l.b16 %v905
      %v970 = vunpack.c.l.b16 %v906
      %v971 = vunpack.c.l.b16 %v907
      %v972 = vunpack.c.l.b16 %v908
      %v973 = vunpack.c.l.b16 %v909
      %v974 = vunpack.c.l.b16 %v910
      %v975 = vunpack.c.l.b16 %v911
      %v976 = vunpack.c.l.b16 %v912
      %v977 = vunpack.c.l.b16 %v913
      %v978 = vunpack.c.l.b16 %v914
      %v979 = vunpack.c.l.b16 %v915
      %v980 = vunpack.c.l.b16 %v916
      %v981 = vunpack.c.l.b16 %v917
      %v982 = vunpack.c.l.b16 %v918
      %v983 = vunpack.c.l.b16 %v919
      %v984 = vunpack.c.l.b16 %v920
      %v985 = vunpack.c.l.b16 %v921
      %v986 = vunpack.c.l.b16 %v922
      %v987 = vunpack.c.l.b16 %v923
      %v988 = vunpack.c.l.b16 %v924
      %v989 = vunpack.c.l.b16 %v925
      %v990 = vunpack.c.l.b16 %v926
      %v991 = vunpack.c.l.b16 %v927
      %v992 = vunpack.c.l.b16 %v928
      %v993 = vunpack.c.l.b16 %v929
      %v994 = vunpack.c.l.b16 %v930
      %v995 = vunpack.c.l.b16 %v931
      %v996 = vunpack.c.l.b16 %v932
      %v997 = vunpack.c.l.b16 %v933
      %v998 = vpack.c.b16 %v967, %v966
      %v999 = vpack.c.b16 %v969, %v968
      %v1000 = vpack.c.b16 %v971, %v970
      %v1001 = vpack.c.b16 %v973, %v972
      %v1002 = vpack.c.b16 %v975, %v974
      %v1003 = vpack.c.b16 %v977, %v976
      %v1004 = vpack.c.b16 %v979, %v978
      %v1005 = vpack.c.b16 %v981, %v980
      %v1006 = vpack.c.b16 %v983, %v982
      %v1007 = vpack.c.b16 %v985, %v984
      %v1008 = vpack.c.b16 %v987, %v986
      %v1009 = vpack.c.b16 %v989, %v988
      %v1010 = vpack.c.b16 %v991, %v990
      %v1011 = vpack.c.b16 %v993, %v992
      %v1012 = vpack.c.b16 %v995, %v994
      %v1013 = vpack.c.b16 %v997, %v996
      %v1015 = vshrl.u32 %v998, 16
      %v1017 = vshll.u32 %v998, 16
      %v1019 = vrot.slane %v1017, 1
      %v1020 = vor.u32 %v1015, %v1019
      %v1022 = vshrl.u32 %v999, 16
      %v1024 = vshll.u32 %v999, 16
      %v1026 = vrot.slane %v1024, 1
      %v1027 = vor.u32 %v1022, %v1026
      %v1029 = vshrl.u32 %v1000, 16
      %v1031 = vshll.u32 %v1000, 16
      %v1033 = vrot.slane %v1031, 1
      %v1034 = vor.u32 %v1029, %v1033
      %v1036 = vshrl.u32 %v1001, 16
      %v1038 = vshll.u32 %v1001, 16
      %v1040 = vrot.slane %v1038, 1
      %v1041 = vor.u32 %v1036, %v1040
      %v1043 = vshrl.u32 %v1002, 16
      %v1045 = vshll.u32 %v1002, 16
      %v1047 = vrot.slane %v1045, 1
      %v1048 = vor.u32 %v1043, %v1047
      %v1050 = vshrl.u32 %v1003, 16
      %v1052 = vshll.u32 %v1003, 16
      %v1054 = vrot.slane %v1052, 1
      %v1055 = vor.u32 %v1050, %v1054
      %v1057 = vshrl.u32 %v1004, 16
      %v1059 = vshll.u32 %v1004, 16
      %v1061 = vrot.slane %v1059, 1
      %v1062 = vor.u32 %v1057, %v1061
      %v1064 = vshrl.u32 %v1005, 16
      %v1066 = vshll.u32 %v1005, 16
      %v1068 = vrot.slane %v1066, 1
      %v1069 = vor.u32 %v1064, %v1068
      %v1071 = vshrl.u32 %v1006, 16
      %v1073 = vshll.u32 %v1006, 16
      %v1075 = vrot.slane %v1073, 1
      %v1076 = vor.u32 %v1071, %v1075
      %v1078 = vshrl.u32 %v1007, 16
      %v1080 = vshll.u32 %v1007, 16
      %v1082 = vrot.slane %v1080, 1
      %v1083 = vor.u32 %v1078, %v1082
      %v1085 = vshrl.u32 %v1008, 16
      %v1087 = vshll.u32 %v1008, 16
      %v1089 = vrot.slane %v1087, 1
      %v1090 = vor.u32 %v1085, %v1089
      %v1092 = vshrl.u32 %v1009, 16
      %v1094 = vshll.u32 %v1009, 16
      %v1096 = vrot.slane %v1094, 1
      %v1097 = vor.u32 %v1092, %v1096
      %v1099 = vshrl.u32 %v1010, 16
      %v1101 = vshll.u32 %v1010, 16
      %v1103 = vrot.slane %v1101, 1
      %v1104 = vor.u32 %v1099, %v1103
      %v1106 = vshrl.u32 %v1011, 16
      %v1108 = vshll.u32 %v1011, 16
      %v1110 = vrot.slane %v1108, 1
      %v1111 = vor.u32 %v1106, %v1110
      %v1113 = vshrl.u32 %v1012, 16
      %v1115 = vshll.u32 %v1012, 16
      %v1117 = vrot.slane %v1115, 1
      %v1118 = vor.u32 %v1113, %v1117
      %v1120 = vshrl.u32 %v1013, 16
      %v1122 = vshll.u32 %v1013, 16
      %v1124 = vrot.slane %v1122, 1
      %v1125 = vor.u32 %v1120, %v1124
      %v1126 = vrot.slane %v998, 1
      %v1127 = vrot.slane %v999, 1
      %v1128 = vrot.slane %v1000, 1
      %v1129 = vrot.slane %v1001, 1
      %v1130 = vrot.slane %v1002, 1
      %v1131 = vrot.slane %v1003, 1
      %v1132 = vrot.slane %v1004, 1
      %v1133 = vrot.slane %v1005, 1
      %v1134 = vrot.slane %v1006, 1
      %v1135 = vrot.slane %v1007, 1
      %v1136 = vrot.slane %v1008, 1
      %v1137 = vrot.slane %v1009, 1
      %v1138 = vrot.slane %v1010, 1
      %v1139 = vrot.slane %v1011, 1
      %v1140 = vrot.slane %v1012, 1
      %v1141 = vrot.slane %v1013, 1
      %v1142 = vunpack.c.l.b16 %v1020
      %v1143 = vunpack.c.l.b16 %v1126
      %v1144 = vunpack.c.l.b16 %v1027
      %v1145 = vunpack.c.l.b16 %v1127
      %v1146 = vunpack.c.l.b16 %v1034
      %v1147 = vunpack.c.l.b16 %v1128
      %v1148 = vunpack.c.l.b16 %v1041
      %v1149 = vunpack.c.l.b16 %v1129
      %v1150 = vunpack.c.l.b16 %v1048
      %v1151 = vunpack.c.l.b16 %v1130
      %v1152 = vunpack.c.l.b16 %v1055
      %v1153 = vunpack.c.l.b16 %v1131
      %v1154 = vunpack.c.l.b16 %v1062
      %v1155 = vunpack.c.l.b16 %v1132
      %v1156 = vunpack.c.l.b16 %v1069
      %v1157 = vunpack.c.l.b16 %v1133
      %v1158 = vunpack.c.l.b16 %v1076
      %v1159 = vunpack.c.l.b16 %v1134
      %v1160 = vunpack.c.l.b16 %v1083
      %v1161 = vunpack.c.l.b16 %v1135
      %v1162 = vunpack.c.l.b16 %v1090
      %v1163 = vunpack.c.l.b16 %v1136
      %v1164 = vunpack.c.l.b16 %v1097
      %v1165 = vunpack.c.l.b16 %v1137
      %v1166 = vunpack.c.l.b16 %v1104
      %v1167 = vunpack.c.l.b16 %v1138
      %v1168 = vunpack.c.l.b16 %v1111
      %v1169 = vunpack.c.l.b16 %v1139
      %v1170 = vunpack.c.l.b16 %v1118
      %v1171 = vunpack.c.l.b16 %v1140
      %v1172 = vunpack.c.l.b16 %v1125
      %v1173 = vunpack.c.l.b16 %v1141
      %v1174 = vld [vmem:[%s3 + $0xc0] sm:$0xf]
      %v1175 = vld [vmem:[%s3 + $0xc4] sm:$0xf]
      %v1176 = vld [vmem:[%s3 + $0xc8] sm:$0xf]
      %v1177 = vld [vmem:[%s3 + $0xcc] sm:$0xf]
      %v1178 = vld [vmem:[%s3 + $0xd0] sm:$0xf]
      %v1179 = vld [vmem:[%s3 + $0xd4] sm:$0xf]
      %v1180 = vld [vmem:[%s3 + $0xd8] sm:$0xf]
      %v1181 = vld [vmem:[%s3 + $0xdc] sm:$0xf]
      %v1182 = vld [vmem:[%s3 + $0xe0] sm:$0xf]
      %v1183 = vld [vmem:[%s3 + $0xe4] sm:$0xf]
      %v1184 = vld [vmem:[%s3 + $0xe8] sm:$0xf]
      %v1185 = vld [vmem:[%s3 + $0xec] sm:$0xf]
      %v1186 = vld [vmem:[%s3 + $0xf0] sm:$0xf]
      %v1187 = vld [vmem:[%s3 + $0xf4] sm:$0xf]
      %v1188 = vld [vmem:[%s3 + $0xf8] sm:$0xf]
      %v1189 = vld [vmem:[%s3 + $0xfc] sm:$0xf]
      %v1190 = vld [vmem:[%s3 + $0x100] sm:$0xf]
      %v1191 = vld [vmem:[%s3 + $0x104] sm:$0xf]
      %v1192 = vld [vmem:[%s3 + $0x108] sm:$0xf]
      %v1193 = vld [vmem:[%s3 + $0x10c] sm:$0xf]
      %v1194 = vld [vmem:[%s3 + $0x110] sm:$0xf]
      %v1195 = vld [vmem:[%s3 + $0x114] sm:$0xf]
      %v1196 = vld [vmem:[%s3 + $0x118] sm:$0xf]
      %v1197 = vld [vmem:[%s3 + $0x11c] sm:$0xf]
      %v1198 = vld [vmem:[%s3 + $0x120] sm:$0xf]
      %v1199 = vld [vmem:[%s3 + $0x124] sm:$0xf]
      %v1200 = vld [vmem:[%s3 + $0x128] sm:$0xf]
      %v1201 = vld [vmem:[%s3 + $0x12c] sm:$0xf]
      %v1202 = vld [vmem:[%s3 + $0x130] sm:$0xf]
      %v1203 = vld [vmem:[%s3 + $0x134] sm:$0xf]
      %v1204 = vld [vmem:[%s3 + $0x138] sm:$0xf]
      %v1205 = vld [vmem:[%s3 + $0x13c] sm:$0xf]
      %v1206 = vld [vmem:[%s3 + $0x140] sm:$0xf]
      %v1207 = vld [vmem:[%s3 + $0x144] sm:$0xf]
      %v1208 = vld [vmem:[%s3 + $0x148] sm:$0xf]
      %v1209 = vld [vmem:[%s3 + $0x14c] sm:$0xf]
      %v1210 = vld [vmem:[%s3 + $0x150] sm:$0xf]
      %v1211 = vld [vmem:[%s3 + $0x154] sm:$0xf]
      %v1212 = vld [vmem:[%s3 + $0x158] sm:$0xf]
      %v1213 = vld [vmem:[%s3 + $0x15c] sm:$0xf]
      %v1214 = vld [vmem:[%s3 + $0x160] sm:$0xf]
      %v1215 = vld [vmem:[%s3 + $0x164] sm:$0xf]
      %v1216 = vld [vmem:[%s3 + $0x168] sm:$0xf]
      %v1217 = vld [vmem:[%s3 + $0x16c] sm:$0xf]
      %v1218 = vld [vmem:[%s3 + $0x170] sm:$0xf]
      %v1219 = vld [vmem:[%s3 + $0x174] sm:$0xf]
      %v1220 = vld [vmem:[%s3 + $0x178] sm:$0xf]
      %v1221 = vld [vmem:[%s3 + $0x17c] sm:$0xf]
      %v1222 = vpack.c.b16 %v968, %v966
      %v1223 = vpack.c.b16 %v1144, %v1142
      %v1224 = vpack.c.b16 %v1145, %v1143
      %v1225 = vpack.c.b16 %v972, %v970
      %v1226 = vpack.c.b16 %v1148, %v1146
      %v1227 = vpack.c.b16 %v1149, %v1147
      %v1228 = vpack.c.b16 %v976, %v974
      %v1229 = vpack.c.b16 %v1152, %v1150
      %v1230 = vpack.c.b16 %v1153, %v1151
      %v1231 = vpack.c.b16 %v980, %v978
      %v1232 = vpack.c.b16 %v1156, %v1154
      %v1233 = vpack.c.b16 %v1157, %v1155
      %v1234 = vpack.c.b16 %v984, %v982
      %v1235 = vpack.c.b16 %v1160, %v1158
      %v1236 = vpack.c.b16 %v1161, %v1159
      %v1237 = vpack.c.b16 %v988, %v986
      %v1238 = vpack.c.b16 %v1164, %v1162
      %v1239 = vpack.c.b16 %v1165, %v1163
      %v1240 = vpack.c.b16 %v992, %v990
      %v1241 = vpack.c.b16 %v1168, %v1166
      %v1242 = vpack.c.b16 %v1169, %v1167
      %v1243 = vpack.c.b16 %v996, %v994
      %v1244 = vpack.c.b16 %v1172, %v1170
      %v1245 = vpack.c.b16 %v1173, %v1171
      %v1318 = vunpack.c.l.b16 %v1174
      %v1319 = vunpack.c.l.b16 %v1175
      %v1320 = vunpack.c.l.b16 %v1176
      %v1321 = vunpack.c.l.b16 %v1177
      %v1322 = vunpack.c.l.b16 %v1178
      %v1323 = vunpack.c.l.b16 %v1179
      %v1324 = vunpack.c.l.b16 %v1180
      %v1325 = vunpack.c.l.b16 %v1181
      %v1326 = vunpack.c.l.b16 %v1182
      %v1327 = vunpack.c.l.b16 %v1183
      %v1328 = vunpack.c.l.b16 %v1184
      %v1329 = vunpack.c.l.b16 %v1185
      %v1330 = vunpack.c.l.b16 %v1186
      %v1331 = vunpack.c.l.b16 %v1187
      %v1332 = vunpack.c.l.b16 %v1188
      %v1333 = vunpack.c.l.b16 %v1189
      %v1334 = vunpack.c.l.b16 %v1190
      %v1335 = vunpack.c.l.b16 %v1191
      %v1336 = vunpack.c.l.b16 %v1192
      %v1337 = vunpack.c.l.b16 %v1193
      %v1338 = vunpack.c.l.b16 %v1194
      %v1339 = vunpack.c.l.b16 %v1195
      %v1340 = vunpack.c.l.b16 %v1196
      %v1341 = vunpack.c.l.b16 %v1197
      %v1342 = vunpack.c.l.b16 %v1198
      %v1343 = vunpack.c.l.b16 %v1199
      %v1344 = vunpack.c.l.b16 %v1200
      %v1345 = vunpack.c.l.b16 %v1201
      %v1346 = vunpack.c.l.b16 %v1202
      %v1347 = vunpack.c.l.b16 %v1203
      %v1348 = vunpack.c.l.b16 %v1204
      %v1349 = vunpack.c.l.b16 %v1205
      %v1350 = vunpack.c.l.b16 %v1206
      %v1351 = vunpack.c.l.b16 %v1207
      %v1352 = vunpack.c.l.b16 %v1208
      %v1353 = vunpack.c.l.b16 %v1209
      %v1354 = vunpack.c.l.b16 %v1210
      %v1355 = vunpack.c.l.b16 %v1211
      %v1356 = vunpack.c.l.b16 %v1212
      %v1357 = vunpack.c.l.b16 %v1213
      %v1358 = vunpack.c.l.b16 %v1214
      %v1359 = vunpack.c.l.b16 %v1215
      %v1360 = vunpack.c.l.b16 %v1216
      %v1361 = vunpack.c.l.b16 %v1217
      %v1362 = vunpack.c.l.b16 %v1218
      %v1363 = vunpack.c.l.b16 %v1219
      %v1364 = vunpack.c.l.b16 %v1220
      %v1365 = vunpack.c.l.b16 %v1221
      %v1366 = vpack.c.b16 %v1319, %v1318
      %v1367 = vpack.c.b16 %v1321, %v1320
      %v1368 = vpack.c.b16 %v1323, %v1322
      %v1369 = vpack.c.b16 %v1325, %v1324
      %v1370 = vpack.c.b16 %v1327, %v1326
      %v1371 = vpack.c.b16 %v1329, %v1328
      %v1372 = vpack.c.b16 %v1331, %v1330
      %v1373 = vpack.c.b16 %v1333, %v1332
      %v1374 = vpack.c.b16 %v1335, %v1334
      %v1375 = vpack.c.b16 %v1337, %v1336
      %v1376 = vpack.c.b16 %v1339, %v1338
      %v1377 = vpack.c.b16 %v1341, %v1340
      %v1378 = vpack.c.b16 %v1343, %v1342
      %v1379 = vpack.c.b16 %v1345, %v1344
      %v1380 = vpack.c.b16 %v1347, %v1346
      %v1381 = vpack.c.b16 %v1349, %v1348
      %v1382 = vpack.c.b16 %v1351, %v1350
      %v1383 = vpack.c.b16 %v1353, %v1352
      %v1384 = vpack.c.b16 %v1355, %v1354
      %v1385 = vpack.c.b16 %v1357, %v1356
      %v1386 = vpack.c.b16 %v1359, %v1358
      %v1387 = vpack.c.b16 %v1361, %v1360
      %v1388 = vpack.c.b16 %v1363, %v1362
      %v1389 = vpack.c.b16 %v1365, %v1364
      %1414 = vmatprep.subr.bf16.mxu0 0
      %1415 = vmatpush1.bf16.msra.mxu0 %v1373
      %1416 = vmatprep.subr.bf16.mxu0 0
      %1417 = vmatpush1.bf16.msra.mxu0 %v1372
      %1418 = vmatprep.subr.bf16.mxu0 0
      %1419 = vmatpush1.bf16.msra.mxu0 %v1371
      %1420 = vmatprep.subr.bf16.mxu0 0
      %1421 = vmatpush1.bf16.msra.mxu0 %v1370
      %1422 = vmatprep.subr.bf16.mxu0 0
      %1423 = vmatpush1.bf16.msra.mxu0 %v1369
      %1424 = vmatprep.subr.bf16.mxu0 0
      %1425 = vmatpush1.bf16.msra.mxu0 %v1368
      %1426 = vmatprep.subr.bf16.mxu0 0
      %1427 = vmatpush1.bf16.msra.mxu0 %v1367
      %1428 = vmatprep.subr.bf16.mxu0 0
      %1429 = vmatpush1.bf16.msra.mxu0 %v1366
      %1430 = vmatprep.subr.bf16.mxu0 0
      %1431 = vmatpush2.bf16.msra.mxu0 %v1381
      %1432 = vmatprep.subr.bf16.mxu0 0
      %1433 = vmatpush2.bf16.msra.mxu0 %v1380
      %1434 = vmatprep.subr.bf16.mxu0 0
      %1435 = vmatpush2.bf16.msra.mxu0 %v1379
      %1436 = vmatprep.subr.bf16.mxu0 0
      %1437 = vmatpush2.bf16.msra.mxu0 %v1378
      %1438 = vmatprep.subr.bf16.mxu0 0
      %1439 = vmatpush2.bf16.msra.mxu0 %v1377
      %1440 = vmatprep.subr.bf16.mxu0 0
      %1441 = vmatpush2.bf16.msra.mxu0 %v1376
      %1442 = vmatprep.subr.bf16.mxu0 0
      %1443 = vmatpush2.bf16.msra.mxu0 %v1375
      %1444 = vmatprep.subr.bf16.mxu0 0
      %1445 = vmatpush2.bf16.msra.mxu0 %v1374
      %1446 = vmatprep.mubr.bf16.mxu0 %v1223
      %1447 = vmatmul.mubr.bf16.gmra.mxu0 %v1222
      %v1448 = vpop.f32.mrf.mxu0
      %v1449 = vadd.f32 0.0, %v1448
      %v1450 = vpop.f32.mrf.mxu0
      %v1451 = vpop.f32.mrf.mxu0
      %v1452 = vadd.f32 0.0, %v1451
      %v1453 = vpop.f32.mrf.mxu0
      %1454 = vmatprep.mubr.bf16.mxu0 %v1226
      %1455 = vmatmul.mubr.bf16.gmra.mxu0 %v1225
      %v1456 = vpop.f32.mrf.mxu0
      %v1457 = vadd.f32 0.0, %v1456
      %v1458 = vpop.f32.mrf.mxu0
      %v1459 = vpop.f32.mrf.mxu0
      %v1460 = vadd.f32 0.0, %v1459
      %v1461 = vpop.f32.mrf.mxu0
      %1462 = vmatprep.mubr.bf16.mxu0 %v1229
      %1463 = vmatmul.mubr.bf16.gmra.mxu0 %v1228
      %v1464 = vpop.f32.mrf.mxu0
      %v1465 = vadd.f32 0.0, %v1464
      %v1466 = vpop.f32.mrf.mxu0
      %v1467 = vpop.f32.mrf.mxu0
      %v1468 = vadd.f32 0.0, %v1467
      %v1469 = vpop.f32.mrf.mxu0
      %1470 = vmatprep.mubr.bf16.mxu0 %v1232
      %1471 = vmatmul.mubr.bf16.gmra.mxu0 %v1231
      %v1472 = vpop.f32.mrf.mxu0
      %v1473 = vadd.f32 0.0, %v1472
      %v1474 = vpop.f32.mrf.mxu0
      %v1475 = vpop.f32.mrf.mxu0
      %v1476 = vadd.f32 0.0, %v1475
      %v1477 = vpop.f32.mrf.mxu0
      %1478 = vmatprep.mubr.bf16.mxu0 %v1235
      %1479 = vmatmul.mubr.bf16.gmra.mxu0 %v1234
      %v1480 = vpop.f32.mrf.mxu0
      %v1481 = vadd.f32 0.0, %v1480
      %v1482 = vpop.f32.mrf.mxu0
      %v1483 = vpop.f32.mrf.mxu0
      %v1484 = vadd.f32 0.0, %v1483
      %v1485 = vpop.f32.mrf.mxu0
      %1486 = vmatprep.mubr.bf16.mxu0 %v1238
      %1487 = vmatmul.mubr.bf16.gmra.mxu0 %v1237
      %v1488 = vpop.f32.mrf.mxu0
      %v1489 = vadd.f32 0.0, %v1488
      %v1490 = vpop.f32.mrf.mxu0
      %v1491 = vpop.f32.mrf.mxu0
      %v1492 = vadd.f32 0.0, %v1491
      %v1493 = vpop.f32.mrf.mxu0
      %1494 = vmatprep.mubr.bf16.mxu0 %v1241
      %1495 = vmatmul.mubr.bf16.gmra.mxu0 %v1240
      %v1496 = vpop.f32.mrf.mxu0
      %v1497 = vadd.f32 0.0, %v1496
      %v1498 = vpop.f32.mrf.mxu0
      %v1499 = vpop.f32.mrf.mxu0
      %v1500 = vadd.f32 0.0, %v1499
      %v1501 = vpop.f32.mrf.mxu0
      %1502 = vmatprep.mubr.bf16.mxu0 %v1244
      %1503 = vmatmul.mubr.bf16.gmra.mxu0 %v1243
      %v1504 = vpop.f32.mrf.mxu0
      %v1505 = vadd.f32 0.0, %v1504
      %v1506 = vpop.f32.mrf.mxu0
      %v1507 = vpop.f32.mrf.mxu0
      %v1508 = vadd.f32 0.0, %v1507
      %v1509 = vpop.f32.mrf.mxu0
      %1510 = vdwg.mxu0
      %1511 = vmatprep.subr.bf16.mxu0 0
      %1512 = vmatpush1.bf16.msra.mxu0 %v1389
      %1513 = vmatprep.subr.bf16.mxu0 0
      %1514 = vmatpush1.bf16.msra.mxu0 %v1388
      %1515 = vmatprep.subr.bf16.mxu0 0
      %1516 = vmatpush1.bf16.msra.mxu0 %v1387
      %1517 = vmatprep.subr.bf16.mxu0 0
      %1518 = vmatpush1.bf16.msra.mxu0 %v1386
      %1519 = vmatprep.subr.bf16.mxu0 0
      %1520 = vmatpush1.bf16.msra.mxu0 %v1385
      %1521 = vmatprep.subr.bf16.mxu0 0
      %1522 = vmatpush1.bf16.msra.mxu0 %v1384
      %1523 = vmatprep.subr.bf16.mxu0 0
      %1524 = vmatpush1.bf16.msra.mxu0 %v1383
      %1525 = vmatprep.subr.bf16.mxu0 0
      %1526 = vmatpush1.bf16.msra.mxu0 %v1382
      %1527 = vmatprep.subr.bf16.mxu0 0
      %1528 = vmatpush2.bf16.msra.mxu0 0
      %1529 = vmatprep.subr.bf16.mxu0 0
      %1530 = vmatpush2.bf16.msra.mxu0 0
      %1531 = vmatprep.subr.bf16.mxu0 0
      %1532 = vmatpush2.bf16.msra.mxu0 0
      %1533 = vmatprep.subr.bf16.mxu0 0
      %1534 = vmatpush2.bf16.msra.mxu0 0
      %1535 = vmatprep.subr.bf16.mxu0 0
      %1536 = vmatpush2.bf16.msra.mxu0 0
      %1537 = vmatprep.subr.bf16.mxu0 0
      %1538 = vmatpush2.bf16.msra.mxu0 0
      %1539 = vmatprep.subr.bf16.mxu0 0
      %1540 = vmatpush2.bf16.msra.mxu0 0
      %1541 = vmatprep.subr.bf16.mxu0 0
      %1542 = vmatpush2.bf16.msra.mxu0 0
      %1543 = vmatprep.mubr.bf16.mxu0 0
      %1544 = vmatmul.mubr.bf16.gmra.mxu0 %v1224
      %v1545 = vpop.f32.mrf.mxu0
      %v1546 = vadd.f32 %v1449, %v1545
      %v1547 = vpop.f32.mrf.mxu0
      %v1548 = vpop.f32.mrf.mxu0
      %v1549 = vadd.f32 %v1452, %v1548
      %v1550 = vpop.f32.mrf.mxu0
      %1551 = vmatprep.mubr.bf16.mxu0 0
      %1552 = vmatmul.mubr.bf16.gmra.mxu0 %v1227
      %v1553 = vpop.f32.mrf.mxu0
      %v1554 = vadd.f32 %v1457, %v1553
      %v1555 = vpop.f32.mrf.mxu0
      %v1556 = vpop.f32.mrf.mxu0
      %v1557 = vadd.f32 %v1460, %v1556
      %v1558 = vpop.f32.mrf.mxu0
      %1559 = vmatprep.mubr.bf16.mxu0 0
      %1560 = vmatmul.mubr.bf16.gmra.mxu0 %v1230
      %v1561 = vpop.f32.mrf.mxu0
      %v1562 = vadd.f32 %v1465, %v1561
      %v1563 = vpop.f32.mrf.mxu0
      %v1564 = vpop.f32.mrf.mxu0
      %v1565 = vadd.f32 %v1468, %v1564
      %v1566 = vpop.f32.mrf.mxu0
      %1567 = vmatprep.mubr.bf16.mxu0 0
      %1568 = vmatmul.mubr.bf16.gmra.mxu0 %v1233
      %v1569 = vpop.f32.mrf.mxu0
      %v1570 = vadd.f32 %v1473, %v1569
      %v1571 = vpop.f32.mrf.mxu0
      %v1572 = vpop.f32.mrf.mxu0
      %v1573 = vadd.f32 %v1476, %v1572
      %v1574 = vpop.f32.mrf.mxu0
      %1575 = vmatprep.mubr.bf16.mxu0 0
      %1576 = vmatmul.mubr.bf16.gmra.mxu0 %v1236
      %v1577 = vpop.f32.mrf.mxu0
      %v1578 = vadd.f32 %v1481, %v1577
      %v1579 = vpop.f32.mrf.mxu0
      %v1580 = vpop.f32.mrf.mxu0
      %v1581 = vadd.f32 %v1484, %v1580
      %v1582 = vpop.f32.mrf.mxu0
      %1583 = vmatprep.mubr.bf16.mxu0 0
      %1584 = vmatmul.mubr.bf16.gmra.mxu0 %v1239
      %v1585 = vpop.f32.mrf.mxu0
      %v1586 = vadd.f32 %v1489, %v1585
      %v1587 = vpop.f32.mrf.mxu0
      %v1588 = vpop.f32.mrf.mxu0
      %v1589 = vadd.f32 %v1492, %v1588
      %v1590 = vpop.f32.mrf.mxu0
      %1591 = vmatprep.mubr.bf16.mxu0 0
      %1592 = vmatmul.mubr.bf16.gmra.mxu0 %v1242
      %v1593 = vpop.f32.mrf.mxu0
      %v1594 = vadd.f32 %v1497, %v1593
      %v1595 = vpop.f32.mrf.mxu0
      %v1596 = vpop.f32.mrf.mxu0
      %v1597 = vadd.f32 %v1500, %v1596
      %v1598 = vpop.f32.mrf.mxu0
      %1599 = vmatprep.mubr.bf16.mxu0 0
      %1600 = vmatmul.mubr.bf16.gmra.mxu0 %v1245
      %v1601 = vpop.f32.mrf.mxu0
      %v1602 = vadd.f32 %v1505, %v1601
      %v1603 = vpop.f32.mrf.mxu0
      %v1604 = vpop.f32.mrf.mxu0
      %v1605 = vadd.f32 %v1508, %v1604
      %v1606 = vpop.f32.mrf.mxu0
      %1607 = vdwg.mxu0
      %v1608 = vpack.c.b16 %v648, %v646
      %v1609 = vpack.c.b16 %v824, %v822
      %v1610 = vpack.c.b16 %v825, %v823
      %v1611 = vpack.c.b16 %v652, %v650
      %v1612 = vpack.c.b16 %v828, %v826
      %v1613 = vpack.c.b16 %v829, %v827
      %v1614 = vpack.c.b16 %v656, %v654
      %v1615 = vpack.c.b16 %v832, %v830
      %v1616 = vpack.c.b16 %v833, %v831
      %v1617 = vpack.c.b16 %v660, %v658
      %v1618 = vpack.c.b16 %v836, %v834
      %v1619 = vpack.c.b16 %v837, %v835
      %v1620 = vpack.c.b16 %v664, %v662
      %v1621 = vpack.c.b16 %v840, %v838
      %v1622 = vpack.c.b16 %v841, %v839
      %v1623 = vpack.c.b16 %v668, %v666
      %v1624 = vpack.c.b16 %v844, %v842
      %v1625 = vpack.c.b16 %v845, %v843
      %v1626 = vpack.c.b16 %v672, %v670
      %v1627 = vpack.c.b16 %v848, %v846
      %v1628 = vpack.c.b16 %v849, %v847
      %v1629 = vpack.c.b16 %v676, %v674
      %v1630 = vpack.c.b16 %v852, %v850
      %v1631 = vpack.c.b16 %v853, %v851
      %v1704 = vunpack.c.l.b16 %v854
      %v1705 = vunpack.c.l.b16 %v855
      %v1706 = vunpack.c.l.b16 %v856
      %v1707 = vunpack.c.l.b16 %v857
      %v1708 = vunpack.c.l.b16 %v858
      %v1709 = vunpack.c.l.b16 %v859
      %v1710 = vunpack.c.l.b16 %v860
      %v1711 = vunpack.c.l.b16 %v861
      %v1712 = vunpack.c.l.b16 %v862
      %v1713 = vunpack.c.l.b16 %v863
      %v1714 = vunpack.c.l.b16 %v864
      %v1715 = vunpack.c.l.b16 %v865
      %v1716 = vunpack.c.l.b16 %v866
      %v1717 = vunpack.c.l.b16 %v867
      %v1718 = vunpack.c.l.b16 %v868
      %v1719 = vunpack.c.l.b16 %v869
      %v1720 = vunpack.c.l.b16 %v870
      %v1721 = vunpack.c.l.b16 %v871
      %v1722 = vunpack.c.l.b16 %v872
      %v1723 = vunpack.c.l.b16 %v873
      %v1724 = vunpack.c.l.b16 %v874
      %v1725 = vunpack.c.l.b16 %v875
      %v1726 = vunpack.c.l.b16 %v876
      %v1727 = vunpack.c.l.b16 %v877
      %v1728 = vunpack.c.l.b16 %v878
      %v1729 = vunpack.c.l.b16 %v879
      %v1730 = vunpack.c.l.b16 %v880
      %v1731 = vunpack.c.l.b16 %v881
      %v1732 = vunpack.c.l.b16 %v882
      %v1733 = vunpack.c.l.b16 %v883
      %v1734 = vunpack.c.l.b16 %v884
      %v1735 = vunpack.c.l.b16 %v885
      %v1736 = vunpack.c.l.b16 %v886
      %v1737 = vunpack.c.l.b16 %v887
      %v1738 = vunpack.c.l.b16 %v888
      %v1739 = vunpack.c.l.b16 %v889
      %v1740 = vunpack.c.l.b16 %v890
      %v1741 = vunpack.c.l.b16 %v891
      %v1742 = vunpack.c.l.b16 %v892
      %v1743 = vunpack.c.l.b16 %v893
      %v1744 = vunpack.c.l.b16 %v894
      %v1745 = vunpack.c.l.b16 %v895
      %v1746 = vunpack.c.l.b16 %v896
      %v1747 = vunpack.c.l.b16 %v897
      %v1748 = vunpack.c.l.b16 %v898
      %v1749 = vunpack.c.l.b16 %v899
      %v1750 = vunpack.c.l.b16 %v900
      %v1751 = vunpack.c.l.b16 %v901
      %v1752 = vpack.c.b16 %v1705, %v1704
      %v1753 = vpack.c.b16 %v1707, %v1706
      %v1754 = vpack.c.b16 %v1709, %v1708
      %v1755 = vpack.c.b16 %v1711, %v1710
      %v1756 = vpack.c.b16 %v1713, %v1712
      %v1757 = vpack.c.b16 %v1715, %v1714
      %v1758 = vpack.c.b16 %v1717, %v1716
      %v1759 = vpack.c.b16 %v1719, %v1718
      %v1760 = vpack.c.b16 %v1721, %v1720
      %v1761 = vpack.c.b16 %v1723, %v1722
      %v1762 = vpack.c.b16 %v1725, %v1724
      %v1763 = vpack.c.b16 %v1727, %v1726
      %v1764 = vpack.c.b16 %v1729, %v1728
      %v1765 = vpack.c.b16 %v1731, %v1730
      %v1766 = vpack.c.b16 %v1733, %v1732
      %v1767 = vpack.c.b16 %v1735, %v1734
      %v1768 = vpack.c.b16 %v1737, %v1736
      %v1769 = vpack.c.b16 %v1739, %v1738
      %v1770 = vpack.c.b16 %v1741, %v1740
      %v1771 = vpack.c.b16 %v1743, %v1742
      %v1772 = vpack.c.b16 %v1745, %v1744
      %v1773 = vpack.c.b16 %v1747, %v1746
      %v1774 = vpack.c.b16 %v1749, %v1748
      %v1775 = vpack.c.b16 %v1751, %v1750
      %1800 = vmatprep.subr.bf16.mxu0 0
      %1801 = vmatpush1.bf16.msra.mxu0 %v1759
      %1802 = vmatprep.subr.bf16.mxu0 0
      %1803 = vmatpush1.bf16.msra.mxu0 %v1758
      %1804 = vmatprep.subr.bf16.mxu0 0
      %1805 = vmatpush1.bf16.msra.mxu0 %v1757
      %1806 = vmatprep.subr.bf16.mxu0 0
      %1807 = vmatpush1.bf16.msra.mxu0 %v1756
      %1808 = vmatprep.subr.bf16.mxu0 0
      %1809 = vmatpush1.bf16.msra.mxu0 %v1755
      %1810 = vmatprep.subr.bf16.mxu0 0
      %1811 = vmatpush1.bf16.msra.mxu0 %v1754
      %1812 = vmatprep.subr.bf16.mxu0 0
      %1813 = vmatpush1.bf16.msra.mxu0 %v1753
      %1814 = vmatprep.subr.bf16.mxu0 0
      %1815 = vmatpush1.bf16.msra.mxu0 %v1752
      %1816 = vmatprep.subr.bf16.mxu0 0
      %1817 = vmatpush2.bf16.msra.mxu0 %v1767
      %1818 = vmatprep.subr.bf16.mxu0 0
      %1819 = vmatpush2.bf16.msra.mxu0 %v1766
      %1820 = vmatprep.subr.bf16.mxu0 0
      %1821 = vmatpush2.bf16.msra.mxu0 %v1765
      %1822 = vmatprep.subr.bf16.mxu0 0
      %1823 = vmatpush2.bf16.msra.mxu0 %v1764
      %1824 = vmatprep.subr.bf16.mxu0 0
      %1825 = vmatpush2.bf16.msra.mxu0 %v1763
      %1826 = vmatprep.subr.bf16.mxu0 0
      %1827 = vmatpush2.bf16.msra.mxu0 %v1762
      %1828 = vmatprep.subr.bf16.mxu0 0
      %1829 = vmatpush2.bf16.msra.mxu0 %v1761
      %1830 = vmatprep.subr.bf16.mxu0 0
      %1831 = vmatpush2.bf16.msra.mxu0 %v1760
      %1832 = vmatprep.mubr.bf16.mxu0 %v1609
      %1833 = vmatmul.mubr.bf16.gmra.mxu0 %v1608
      %v1834 = vpop.f32.mrf.mxu0
      %v1835 = vadd.f32 %v1546, %v1834
      %v1836 = vpop.f32.mrf.mxu0
      %v1837 = vpop.f32.mrf.mxu0
      %v1838 = vadd.f32 %v1549, %v1837
      %v1839 = vpop.f32.mrf.mxu0
      %1840 = vmatprep.mubr.bf16.mxu0 %v1612
      %1841 = vmatmul.mubr.bf16.gmra.mxu0 %v1611
      %v1842 = vpop.f32.mrf.mxu0
      %v1843 = vadd.f32 %v1554, %v1842
      %v1844 = vpop.f32.mrf.mxu0
      %v1845 = vpop.f32.mrf.mxu0
      %v1846 = vadd.f32 %v1557, %v1845
      %v1847 = vpop.f32.mrf.mxu0
      %1848 = vmatprep.mubr.bf16.mxu0 %v1615
      %1849 = vmatmul.mubr.bf16.gmra.mxu0 %v1614
      %v1850 = vpop.f32.mrf.mxu0
      %v1851 = vadd.f32 %v1562, %v1850
      %v1852 = vpop.f32.mrf.mxu0
      %v1853 = vpop.f32.mrf.mxu0
      %v1854 = vadd.f32 %v1565, %v1853
      %v1855 = vpop.f32.mrf.mxu0
      %1856 = vmatprep.mubr.bf16.mxu0 %v1618
      %1857 = vmatmul.mubr.bf16.gmra.mxu0 %v1617
      %v1858 = vpop.f32.mrf.mxu0
      %v1859 = vadd.f32 %v1570, %v1858
      %v1860 = vpop.f32.mrf.mxu0
      %v1861 = vpop.f32.mrf.mxu0
      %v1862 = vadd.f32 %v1573, %v1861
      %v1863 = vpop.f32.mrf.mxu0
      %1864 = vmatprep.mubr.bf16.mxu0 %v1621
      %1865 = vmatmul.mubr.bf16.gmra.mxu0 %v1620
      %v1866 = vpop.f32.mrf.mxu0
      %v1867 = vadd.f32 %v1578, %v1866
      %v1868 = vpop.f32.mrf.mxu0
      %v1869 = vpop.f32.mrf.mxu0
      %v1870 = vadd.f32 %v1581, %v1869
      %v1871 = vpop.f32.mrf.mxu0
      %1872 = vmatprep.mubr.bf16.mxu0 %v1624
      %1873 = vmatmul.mubr.bf16.gmra.mxu0 %v1623
      %v1874 = vpop.f32.mrf.mxu0
      %v1875 = vadd.f32 %v1586, %v1874
      %v1876 = vpop.f32.mrf.mxu0
      %v1877 = vpop.f32.mrf.mxu0
      %v1878 = vadd.f32 %v1589, %v1877
      %v1879 = vpop.f32.mrf.mxu0
      %1880 = vmatprep.mubr.bf16.mxu0 %v1627
      %1881 = vmatmul.mubr.bf16.gmra.mxu0 %v1626
      %v1882 = vpop.f32.mrf.mxu0
      %v1883 = vadd.f32 %v1594, %v1882
      %v1884 = vpop.f32.mrf.mxu0
      %v1885 = vpop.f32.mrf.mxu0
      %v1886 = vadd.f32 %v1597, %v1885
      %v1887 = vpop.f32.mrf.mxu0
      %1888 = vmatprep.mubr.bf16.mxu0 %v1630
      %1889 = vmatmul.mubr.bf16.gmra.mxu0 %v1629
      %v1890 = vpop.f32.mrf.mxu0
      %v1891 = vadd.f32 %v1602, %v1890
      %v1892 = vpop.f32.mrf.mxu0
      %v1893 = vpop.f32.mrf.mxu0
      %v1894 = vadd.f32 %v1605, %v1893
      %v1895 = vpop.f32.mrf.mxu0
      %1896 = vdwg.mxu0
      %1897 = vmatprep.subr.bf16.mxu0 0
      %1898 = vmatpush1.bf16.msra.mxu0 %v1775
      %1899 = vmatprep.subr.bf16.mxu0 0
      %1900 = vmatpush1.bf16.msra.mxu0 %v1774
      %1901 = vmatprep.subr.bf16.mxu0 0
      %1902 = vmatpush1.bf16.msra.mxu0 %v1773
      %1903 = vmatprep.subr.bf16.mxu0 0
      %1904 = vmatpush1.bf16.msra.mxu0 %v1772
      %1905 = vmatprep.subr.bf16.mxu0 0
      %1906 = vmatpush1.bf16.msra.mxu0 %v1771
      %1907 = vmatprep.subr.bf16.mxu0 0
      %1908 = vmatpush1.bf16.msra.mxu0 %v1770
      %1909 = vmatprep.subr.bf16.mxu0 0
      %1910 = vmatpush1.bf16.msra.mxu0 %v1769
      %1911 = vmatprep.subr.bf16.mxu0 0
      %1912 = vmatpush1.bf16.msra.mxu0 %v1768
      %1913 = vmatprep.subr.bf16.mxu0 0
      %1914 = vmatpush2.bf16.msra.mxu0 0
      %1915 = vmatprep.subr.bf16.mxu0 0
      %1916 = vmatpush2.bf16.msra.mxu0 0
      %1917 = vmatprep.subr.bf16.mxu0 0
      %1918 = vmatpush2.bf16.msra.mxu0 0
      %1919 = vmatprep.subr.bf16.mxu0 0
      %1920 = vmatpush2.bf16.msra.mxu0 0
      %1921 = vmatprep.subr.bf16.mxu0 0
      %1922 = vmatpush2.bf16.msra.mxu0 0
      %1923 = vmatprep.subr.bf16.mxu0 0
      %1924 = vmatpush2.bf16.msra.mxu0 0
      %1925 = vmatprep.subr.bf16.mxu0 0
      %1926 = vmatpush2.bf16.msra.mxu0 0
      %1927 = vmatprep.subr.bf16.mxu0 0
      %1928 = vmatpush2.bf16.msra.mxu0 0
      %1929 = vmatprep.mubr.bf16.mxu0 0
      %1930 = vmatmul.mubr.bf16.gmra.mxu0 %v1610
      %v1931 = vpop.f32.mrf.mxu0
      %v1932 = vadd.f32 %v1835, %v1931
      %v1933 = vpop.f32.mrf.mxu0
      %v1934 = vpop.f32.mrf.mxu0
      %v1935 = vadd.f32 %v1838, %v1934
      %v1936 = vpop.f32.mrf.mxu0
      %1937 = vmatprep.mubr.bf16.mxu0 0
      %1938 = vmatmul.mubr.bf16.gmra.mxu0 %v1613
      %v1939 = vpop.f32.mrf.mxu0
      %v1940 = vadd.f32 %v1843, %v1939
      %v1941 = vpop.f32.mrf.mxu0
      %v1942 = vpop.f32.mrf.mxu0
      %v1943 = vadd.f32 %v1846, %v1942
      %v1944 = vpop.f32.mrf.mxu0
      %1945 = vmatprep.mubr.bf16.mxu0 0
      %1946 = vmatmul.mubr.bf16.gmra.mxu0 %v1616
      %v1947 = vpop.f32.mrf.mxu0
      %v1948 = vadd.f32 %v1851, %v1947
      %v1949 = vpop.f32.mrf.mxu0
      %v1950 = vpop.f32.mrf.mxu0
      %v1951 = vadd.f32 %v1854, %v1950
      %v1952 = vpop.f32.mrf.mxu0
      %1953 = vmatprep.mubr.bf16.mxu0 0
      %1954 = vmatmul.mubr.bf16.gmra.mxu0 %v1619
      %v1955 = vpop.f32.mrf.mxu0
      %v1956 = vadd.f32 %v1859, %v1955
      %v1957 = vpop.f32.mrf.mxu0
      %v1958 = vpop.f32.mrf.mxu0
      %v1959 = vadd.f32 %v1862, %v1958
      %v1960 = vpop.f32.mrf.mxu0
      %1961 = vmatprep.mubr.bf16.mxu0 0
      %1962 = vmatmul.mubr.bf16.gmra.mxu0 %v1622
      %v1963 = vpop.f32.mrf.mxu0
      %v1964 = vadd.f32 %v1867, %v1963
      %v1965 = vpop.f32.mrf.mxu0
      %v1966 = vpop.f32.mrf.mxu0
      %v1967 = vadd.f32 %v1870, %v1966
      %v1968 = vpop.f32.mrf.mxu0
      %1969 = vmatprep.mubr.bf16.mxu0 0
      %1970 = vmatmul.mubr.bf16.gmra.mxu0 %v1625
      %v1971 = vpop.f32.mrf.mxu0
      %v1972 = vadd.f32 %v1875, %v1971
      %v1973 = vpop.f32.mrf.mxu0
      %v1974 = vpop.f32.mrf.mxu0
      %v1975 = vadd.f32 %v1878, %v1974
      %v1976 = vpop.f32.mrf.mxu0
      %1977 = vmatprep.mubr.bf16.mxu0 0
      %1978 = vmatmul.mubr.bf16.gmra.mxu0 %v1628
      %v1979 = vpop.f32.mrf.mxu0
      %v1980 = vadd.f32 %v1883, %v1979
      %v1981 = vpop.f32.mrf.mxu0
      %v1982 = vpop.f32.mrf.mxu0
      %v1983 = vadd.f32 %v1886, %v1982
      %v1984 = vpop.f32.mrf.mxu0
      %1985 = vmatprep.mubr.bf16.mxu0 0
      %1986 = vmatmul.mubr.bf16.gmra.mxu0 %v1631
      %v1987 = vpop.f32.mrf.mxu0
      %v1988 = vadd.f32 %v1891, %v1987
      %v1989 = vpop.f32.mrf.mxu0
      %v1990 = vpop.f32.mrf.mxu0
      %v1991 = vadd.f32 %v1894, %v1990
      %v1992 = vpop.f32.mrf.mxu0
      %1993 = vdwg.mxu0
      %s1994 = scalar_lea.vmem [#allocation2], 16
      %v1995 = vld [vmem:[%s1994] sm:$0xf]
      %v1996 = vld [vmem:[%s1994 + $0x4] sm:$0x1]
      %v1997 = vld [vmem:[%s1994 + $0x8] sm:$0xf]
      %v1998 = vld [vmem:[%s1994 + $0xc] sm:$0x1]
      %v1999 = vld [vmem:[%s1994 + $0x10] sm:$0xf]
      %v2000 = vld [vmem:[%s1994 + $0x14] sm:$0x1]
      %v2001 = vld [vmem:[%s1994 + $0x18] sm:$0xf]
      %v2002 = vld [vmem:[%s1994 + $0x1c] sm:$0x1]
      %v2003 = vld [vmem:[%s1994 + $0x20] sm:$0xf]
      %v2004 = vld [vmem:[%s1994 + $0x24] sm:$0x1]
      %v2005 = vld [vmem:[%s1994 + $0x28] sm:$0xf]
      %v2006 = vld [vmem:[%s1994 + $0x2c] sm:$0x1]
      %v2007 = vld [vmem:[%s1994 + $0x30] sm:$0xf]
      %v2008 = vld [vmem:[%s1994 + $0x34] sm:$0x1]
      %v2009 = vld [vmem:[%s1994 + $0x38] sm:$0xf]
      %v2010 = vld [vmem:[%s1994 + $0x3c] sm:$0x1]
      %v2011 = vld [vmem:[%s1994 + $0x40] sm:$0xf]
      %v2012 = vld [vmem:[%s1994 + $0x44] sm:$0x1]
      %v2013 = vld [vmem:[%s1994 + $0x48] sm:$0xf]
      %v2014 = vld [vmem:[%s1994 + $0x4c] sm:$0x1]
      %v2015 = vld [vmem:[%s1994 + $0x50] sm:$0xf]
      %v2016 = vld [vmem:[%s1994 + $0x54] sm:$0x1]
      %v2017 = vld [vmem:[%s1994 + $0x58] sm:$0xf]
      %v2018 = vld [vmem:[%s1994 + $0x5c] sm:$0x1]
      %v2019 = vld [vmem:[%s1994 + $0x60] sm:$0xf]
      %v2020 = vld [vmem:[%s1994 + $0x64] sm:$0x1]
      %v2021 = vld [vmem:[%s1994 + $0x68] sm:$0xf]
      %v2022 = vld [vmem:[%s1994 + $0x6c] sm:$0x1]
      %v2023 = vld [vmem:[%s1994 + $0x70] sm:$0xf]
      %v2024 = vld [vmem:[%s1994 + $0x74] sm:$0x1]
      %v2025 = vld [vmem:[%s1994 + $0x78] sm:$0xf]
      %v2026 = vld [vmem:[%s1994 + $0x7c] sm:$0x1]
      %v2059 = vunpack.c.l.b16 %v1995
      %v2060 = vunpack.c.l.b16 %v1996
      %v2061 = vunpack.c.l.b16 %v1997
      %v2062 = vunpack.c.l.b16 %v1998
      %v2063 = vunpack.c.l.b16 %v1999
      %v2064 = vunpack.c.l.b16 %v2000
      %v2065 = vunpack.c.l.b16 %v2001
      %v2066 = vunpack.c.l.b16 %v2002
      %v2067 = vunpack.c.l.b16 %v2003
      %v2068 = vunpack.c.l.b16 %v2004
      %v2069 = vunpack.c.l.b16 %v2005
      %v2070 = vunpack.c.l.b16 %v2006
      %v2071 = vunpack.c.l.b16 %v2007
      %v2072 = vunpack.c.l.b16 %v2008
      %v2073 = vunpack.c.l.b16 %v2009
      %v2074 = vunpack.c.l.b16 %v2010
      %v2075 = vunpack.c.l.b16 %v2011
      %v2076 = vunpack.c.l.b16 %v2012
      %v2077 = vunpack.c.l.b16 %v2013
      %v2078 = vunpack.c.l.b16 %v2014
      %v2079 = vunpack.c.l.b16 %v2015
      %v2080 = vunpack.c.l.b16 %v2016
      %v2081 = vunpack.c.l.b16 %v2017
      %v2082 = vunpack.c.l.b16 %v2018
      %v2083 = vunpack.c.l.b16 %v2019
      %v2084 = vunpack.c.l.b16 %v2020
      %v2085 = vunpack.c.l.b16 %v2021
      %v2086 = vunpack.c.l.b16 %v2022
      %v2087 = vunpack.c.l.b16 %v2023
      %v2088 = vunpack.c.l.b16 %v2024
      %v2089 = vunpack.c.l.b16 %v2025
      %v2090 = vunpack.c.l.b16 %v2026
      %v2091 = vpack.c.b16 %v2060, %v2059
      %v2092 = vpack.c.b16 %v2062, %v2061
      %v2093 = vpack.c.b16 %v2064, %v2063
      %v2094 = vpack.c.b16 %v2066, %v2065
      %v2095 = vpack.c.b16 %v2068, %v2067
      %v2096 = vpack.c.b16 %v2070, %v2069
      %v2097 = vpack.c.b16 %v2072, %v2071
      %v2098 = vpack.c.b16 %v2074, %v2073
      %v2099 = vpack.c.b16 %v2076, %v2075
      %v2100 = vpack.c.b16 %v2078, %v2077
      %v2101 = vpack.c.b16 %v2080, %v2079
      %v2102 = vpack.c.b16 %v2082, %v2081
      %v2103 = vpack.c.b16 %v2084, %v2083
      %v2104 = vpack.c.b16 %v2086, %v2085
      %v2105 = vpack.c.b16 %v2088, %v2087
      %v2106 = vpack.c.b16 %v2090, %v2089
      %v2108 = vshrl.u32 %v2091, 16
      %v2110 = vshll.u32 %v2091, 16
      %v2112 = vrot.slane %v2110, 1
      %v2113 = vor.u32 %v2108, %v2112
      %v2115 = vshrl.u32 %v2092, 16
      %v2117 = vshll.u32 %v2092, 16
      %v2119 = vrot.slane %v2117, 1
      %v2120 = vor.u32 %v2115, %v2119
      %v2122 = vshrl.u32 %v2093, 16
      %v2124 = vshll.u32 %v2093, 16
      %v2126 = vrot.slane %v2124, 1
      %v2127 = vor.u32 %v2122, %v2126
      %v2129 = vshrl.u32 %v2094, 16
      %v2131 = vshll.u32 %v2094, 16
      %v2133 = vrot.slane %v2131, 1
      %v2134 = vor.u32 %v2129, %v2133
      %v2136 = vshrl.u32 %v2095, 16
      %v2138 = vshll.u32 %v2095, 16
      %v2140 = vrot.slane %v2138, 1
      %v2141 = vor.u32 %v2136, %v2140
      %v2143 = vshrl.u32 %v2096, 16
      %v2145 = vshll.u32 %v2096, 16
      %v2147 = vrot.slane %v2145, 1
      %v2148 = vor.u32 %v2143, %v2147
      %v2150 = vshrl.u32 %v2097, 16
      %v2152 = vshll.u32 %v2097, 16
      %v2154 = vrot.slane %v2152, 1
      %v2155 = vor.u32 %v2150, %v2154
      %v2157 = vshrl.u32 %v2098, 16
      %v2159 = vshll.u32 %v2098, 16
      %v2161 = vrot.slane %v2159, 1
      %v2162 = vor.u32 %v2157, %v2161
      %v2164 = vshrl.u32 %v2099, 16
      %v2166 = vshll.u32 %v2099, 16
      %v2168 = vrot.slane %v2166, 1
      %v2169 = vor.u32 %v2164, %v2168
      %v2171 = vshrl.u32 %v2100, 16
      %v2173 = vshll.u32 %v2100, 16
      %v2175 = vrot.slane %v2173, 1
      %v2176 = vor.u32 %v2171, %v2175
      %v2178 = vshrl.u32 %v2101, 16
      %v2180 = vshll.u32 %v2101, 16
      %v2182 = vrot.slane %v2180, 1
      %v2183 = vor.u32 %v2178, %v2182
      %v2185 = vshrl.u32 %v2102, 16
      %v2187 = vshll.u32 %v2102, 16
      %v2189 = vrot.slane %v2187, 1
      %v2190 = vor.u32 %v2185, %v2189
      %v2192 = vshrl.u32 %v2103, 16
      %v2194 = vshll.u32 %v2103, 16
      %v2196 = vrot.slane %v2194, 1
      %v2197 = vor.u32 %v2192, %v2196
      %v2199 = vshrl.u32 %v2104, 16
      %v2201 = vshll.u32 %v2104, 16
      %v2203 = vrot.slane %v2201, 1
      %v2204 = vor.u32 %v2199, %v2203
      %v2206 = vshrl.u32 %v2105, 16
      %v2208 = vshll.u32 %v2105, 16
      %v2210 = vrot.slane %v2208, 1
      %v2211 = vor.u32 %v2206, %v2210
      %v2213 = vshrl.u32 %v2106, 16
      %v2215 = vshll.u32 %v2106, 16
      %v2217 = vrot.slane %v2215, 1
      %v2218 = vor.u32 %v2213, %v2217
      %v2219 = vrot.slane %v2091, 1
      %v2220 = vrot.slane %v2092, 1
      %v2221 = vrot.slane %v2093, 1
      %v2222 = vrot.slane %v2094, 1
      %v2223 = vrot.slane %v2095, 1
      %v2224 = vrot.slane %v2096, 1
      %v2225 = vrot.slane %v2097, 1
      %v2226 = vrot.slane %v2098, 1
      %v2227 = vrot.slane %v2099, 1
      %v2228 = vrot.slane %v2100, 1
      %v2229 = vrot.slane %v2101, 1
      %v2230 = vrot.slane %v2102, 1
      %v2231 = vrot.slane %v2103, 1
      %v2232 = vrot.slane %v2104, 1
      %v2233 = vrot.slane %v2105, 1
      %v2234 = vrot.slane %v2106, 1
      %v2235 = vunpack.c.l.b16 %v2113
      %v2236 = vunpack.c.l.b16 %v2219
      %v2237 = vunpack.c.l.b16 %v2120
      %v2238 = vunpack.c.l.b16 %v2220
      %v2239 = vunpack.c.l.b16 %v2127
      %v2240 = vunpack.c.l.b16 %v2221
      %v2241 = vunpack.c.l.b16 %v2134
      %v2242 = vunpack.c.l.b16 %v2222
      %v2243 = vunpack.c.l.b16 %v2141
      %v2244 = vunpack.c.l.b16 %v2223
      %v2245 = vunpack.c.l.b16 %v2148
      %v2246 = vunpack.c.l.b16 %v2224
      %v2247 = vunpack.c.l.b16 %v2155
      %v2248 = vunpack.c.l.b16 %v2225
      %v2249 = vunpack.c.l.b16 %v2162
      %v2250 = vunpack.c.l.b16 %v2226
      %v2251 = vunpack.c.l.b16 %v2169
      %v2252 = vunpack.c.l.b16 %v2227
      %v2253 = vunpack.c.l.b16 %v2176
      %v2254 = vunpack.c.l.b16 %v2228
      %v2255 = vunpack.c.l.b16 %v2183
      %v2256 = vunpack.c.l.b16 %v2229
      %v2257 = vunpack.c.l.b16 %v2190
      %v2258 = vunpack.c.l.b16 %v2230
      %v2259 = vunpack.c.l.b16 %v2197
      %v2260 = vunpack.c.l.b16 %v2231
      %v2261 = vunpack.c.l.b16 %v2204
      %v2262 = vunpack.c.l.b16 %v2232
      %v2263 = vunpack.c.l.b16 %v2211
      %v2264 = vunpack.c.l.b16 %v2233
      %v2265 = vunpack.c.l.b16 %v2218
      %v2266 = vunpack.c.l.b16 %v2234
      %v2267 = vld [vmem:[%s3 + $0x180] sm:$0xf]
      %v2268 = vld [vmem:[%s3 + $0x184] sm:$0xf]
      %v2269 = vld [vmem:[%s3 + $0x188] sm:$0xf]
      %v2270 = vld [vmem:[%s3 + $0x18c] sm:$0xf]
      %v2271 = vld [vmem:[%s3 + $0x190] sm:$0xf]
      %v2272 = vld [vmem:[%s3 + $0x194] sm:$0xf]
      %v2273 = vld [vmem:[%s3 + $0x198] sm:$0xf]
      %v2274 = vld [vmem:[%s3 + $0x19c] sm:$0xf]
      %v2275 = vld [vmem:[%s3 + $0x1a0] sm:$0xf]
      %v2276 = vld [vmem:[%s3 + $0x1a4] sm:$0xf]
      %v2277 = vld [vmem:[%s3 + $0x1a8] sm:$0xf]
      %v2278 = vld [vmem:[%s3 + $0x1ac] sm:$0xf]
      %v2279 = vld [vmem:[%s3 + $0x1b0] sm:$0xf]
      %v2280 = vld [vmem:[%s3 + $0x1b4] sm:$0xf]
      %v2281 = vld [vmem:[%s3 + $0x1b8] sm:$0xf]
      %v2282 = vld [vmem:[%s3 + $0x1bc] sm:$0xf]
      %v2283 = vld [vmem:[%s3 + $0x1c0] sm:$0xf]
      %v2284 = vld [vmem:[%s3 + $0x1c4] sm:$0xf]
      %v2285 = vld [vmem:[%s3 + $0x1c8] sm:$0xf]
      %v2286 = vld [vmem:[%s3 + $0x1cc] sm:$0xf]
      %v2287 = vld [vmem:[%s3 + $0x1d0] sm:$0xf]
      %v2288 = vld [vmem:[%s3 + $0x1d4] sm:$0xf]
      %v2289 = vld [vmem:[%s3 + $0x1d8] sm:$0xf]
      %v2290 = vld [vmem:[%s3 + $0x1dc] sm:$0xf]
      %v2291 = vld [vmem:[%s3 + $0x1e0] sm:$0xf]
      %v2292 = vld [vmem:[%s3 + $0x1e4] sm:$0xf]
      %v2293 = vld [vmem:[%s3 + $0x1e8] sm:$0xf]
      %v2294 = vld [vmem:[%s3 + $0x1ec] sm:$0xf]
      %v2295 = vld [vmem:[%s3 + $0x1f0] sm:$0xf]
      %v2296 = vld [vmem:[%s3 + $0x1f4] sm:$0xf]
      %v2297 = vld [vmem:[%s3 + $0x1f8] sm:$0xf]
      %v2298 = vld [vmem:[%s3 + $0x1fc] sm:$0xf]
      %v2299 = vld [vmem:[%s3 + $0x200] sm:$0xf]
      %v2300 = vld [vmem:[%s3 + $0x204] sm:$0xf]
      %v2301 = vld [vmem:[%s3 + $0x208] sm:$0xf]
      %v2302 = vld [vmem:[%s3 + $0x20c] sm:$0xf]
      %v2303 = vld [vmem:[%s3 + $0x210] sm:$0xf]
      %v2304 = vld [vmem:[%s3 + $0x214] sm:$0xf]
      %v2305 = vld [vmem:[%s3 + $0x218] sm:$0xf]
      %v2306 = vld [vmem:[%s3 + $0x21c] sm:$0xf]
      %v2307 = vld [vmem:[%s3 + $0x220] sm:$0xf]
      %v2308 = vld [vmem:[%s3 + $0x224] sm:$0xf]
      %v2309 = vld [vmem:[%s3 + $0x228] sm:$0xf]
      %v2310 = vld [vmem:[%s3 + $0x22c] sm:$0xf]
      %v2311 = vld [vmem:[%s3 + $0x230] sm:$0xf]
      %v2312 = vld [vmem:[%s3 + $0x234] sm:$0xf]
      %v2313 = vld [vmem:[%s3 + $0x238] sm:$0xf]
      %v2314 = vld [vmem:[%s3 + $0x23c] sm:$0xf]
      %v2315 = vpack.c.b16 %v2061, %v2059
      %v2316 = vpack.c.b16 %v2237, %v2235
      %v2317 = vpack.c.b16 %v2238, %v2236
      %v2318 = vpack.c.b16 %v2065, %v2063
      %v2319 = vpack.c.b16 %v2241, %v2239
      %v2320 = vpack.c.b16 %v2242, %v2240
      %v2321 = vpack.c.b16 %v2069, %v2067
      %v2322 = vpack.c.b16 %v2245, %v2243
      %v2323 = vpack.c.b16 %v2246, %v2244
      %v2324 = vpack.c.b16 %v2073, %v2071
      %v2325 = vpack.c.b16 %v2249, %v2247
      %v2326 = vpack.c.b16 %v2250, %v2248
      %v2327 = vpack.c.b16 %v2077, %v2075
      %v2328 = vpack.c.b16 %v2253, %v2251
      %v2329 = vpack.c.b16 %v2254, %v2252
      %v2330 = vpack.c.b16 %v2081, %v2079
      %v2331 = vpack.c.b16 %v2257, %v2255
      %v2332 = vpack.c.b16 %v2258, %v2256
      %v2333 = vpack.c.b16 %v2085, %v2083
      %v2334 = vpack.c.b16 %v2261, %v2259
      %v2335 = vpack.c.b16 %v2262, %v2260
      %v2336 = vpack.c.b16 %v2089, %v2087
      %v2337 = vpack.c.b16 %v2265, %v2263
      %v2338 = vpack.c.b16 %v2266, %v2264
      %v2411 = vunpack.c.l.b16 %v2267
      %v2412 = vunpack.c.l.b16 %v2268
      %v2413 = vunpack.c.l.b16 %v2269
      %v2414 = vunpack.c.l.b16 %v2270
      %v2415 = vunpack.c.l.b16 %v2271
      %v2416 = vunpack.c.l.b16 %v2272
      %v2417 = vunpack.c.l.b16 %v2273
      %v2418 = vunpack.c.l.b16 %v2274
      %v2419 = vunpack.c.l.b16 %v2275
      %v2420 = vunpack.c.l.b16 %v2276
      %v2421 = vunpack.c.l.b16 %v2277
      %v2422 = vunpack.c.l.b16 %v2278
      %v2423 = vunpack.c.l.b16 %v2279
      %v2424 = vunpack.c.l.b16 %v2280
      %v2425 = vunpack.c.l.b16 %v2281
      %v2426 = vunpack.c.l.b16 %v2282
      %v2427 = vunpack.c.l.b16 %v2283
      %v2428 = vunpack.c.l.b16 %v2284
      %v2429 = vunpack.c.l.b16 %v2285
      %v2430 = vunpack.c.l.b16 %v2286
      %v2431 = vunpack.c.l.b16 %v2287
      %v2432 = vunpack.c.l.b16 %v2288
      %v2433 = vunpack.c.l.b16 %v2289
      %v2434 = vunpack.c.l.b16 %v2290
      %v2435 = vunpack.c.l.b16 %v2291
      %v2436 = vunpack.c.l.b16 %v2292
      %v2437 = vunpack.c.l.b16 %v2293
      %v2438 = vunpack.c.l.b16 %v2294
      %v2439 = vunpack.c.l.b16 %v2295
      %v2440 = vunpack.c.l.b16 %v2296
      %v2441 = vunpack.c.l.b16 %v2297
      %v2442 = vunpack.c.l.b16 %v2298
      %v2443 = vunpack.c.l.b16 %v2299
      %v2444 = vunpack.c.l.b16 %v2300
      %v2445 = vunpack.c.l.b16 %v2301
      %v2446 = vunpack.c.l.b16 %v2302
      %v2447 = vunpack.c.l.b16 %v2303
      %v2448 = vunpack.c.l.b16 %v2304
      %v2449 = vunpack.c.l.b16 %v2305
      %v2450 = vunpack.c.l.b16 %v2306
      %v2451 = vunpack.c.l.b16 %v2307
      %v2452 = vunpack.c.l.b16 %v2308
      %v2453 = vunpack.c.l.b16 %v2309
      %v2454 = vunpack.c.l.b16 %v2310
      %v2455 = vunpack.c.l.b16 %v2311
      %v2456 = vunpack.c.l.b16 %v2312
      %v2457 = vunpack.c.l.b16 %v2313
      %v2458 = vunpack.c.l.b16 %v2314
      %v2459 = vpack.c.b16 %v2412, %v2411
      %v2460 = vpack.c.b16 %v2414, %v2413
      %v2461 = vpack.c.b16 %v2416, %v2415
      %v2462 = vpack.c.b16 %v2418, %v2417
      %v2463 = vpack.c.b16 %v2420, %v2419
      %v2464 = vpack.c.b16 %v2422, %v2421
      %v2465 = vpack.c.b16 %v2424, %v2423
      %v2466 = vpack.c.b16 %v2426, %v2425
      %v2467 = vpack.c.b16 %v2428, %v2427
      %v2468 = vpack.c.b16 %v2430, %v2429
      %v2469 = vpack.c.b16 %v2432, %v2431
      %v2470 = vpack.c.b16 %v2434, %v2433
      %v2471 = vpack.c.b16 %v2436, %v2435
      %v2472 = vpack.c.b16 %v2438, %v2437
      %v2473 = vpack.c.b16 %v2440, %v2439
      %v2474 = vpack.c.b16 %v2442, %v2441
      %v2475 = vpack.c.b16 %v2444, %v2443
      %v2476 = vpack.c.b16 %v2446, %v2445
      %v2477 = vpack.c.b16 %v2448, %v2447
      %v2478 = vpack.c.b16 %v2450, %v2449
      %v2479 = vpack.c.b16 %v2452, %v2451
      %v2480 = vpack.c.b16 %v2454, %v2453
      %v2481 = vpack.c.b16 %v2456, %v2455
      %v2482 = vpack.c.b16 %v2458, %v2457
      %2507 = vmatprep.subr.bf16.mxu0 0
      %2508 = vmatpush1.bf16.msra.mxu0 %v2466
      %2509 = vmatprep.subr.bf16.mxu0 0
      %2510 = vmatpush1.bf16.msra.mxu0 %v2465
      %2511 = vmatprep.subr.bf16.mxu0 0
      %2512 = vmatpush1.bf16.msra.mxu0 %v2464
      %2513 = vmatprep.subr.bf16.mxu0 0
      %2514 = vmatpush1.bf16.msra.mxu0 %v2463
      %2515 = vmatprep.subr.bf16.mxu0 0
      %2516 = vmatpush1.bf16.msra.mxu0 %v2462
      %2517 = vmatprep.subr.bf16.mxu0 0
      %2518 = vmatpush1.bf16.msra.mxu0 %v2461
      %2519 = vmatprep.subr.bf16.mxu0 0
      %2520 = vmatpush1.bf16.msra.mxu0 %v2460
      %2521 = vmatprep.subr.bf16.mxu0 0
      %2522 = vmatpush1.bf16.msra.mxu0 %v2459
      %2523 = vmatprep.subr.bf16.mxu0 0
      %2524 = vmatpush2.bf16.msra.mxu0 %v2474
      %2525 = vmatprep.subr.bf16.mxu0 0
      %2526 = vmatpush2.bf16.msra.mxu0 %v2473
      %2527 = vmatprep.subr.bf16.mxu0 0
      %2528 = vmatpush2.bf16.msra.mxu0 %v2472
      %2529 = vmatprep.subr.bf16.mxu0 0
      %2530 = vmatpush2.bf16.msra.mxu0 %v2471
      %2531 = vmatprep.subr.bf16.mxu0 0
      %2532 = vmatpush2.bf16.msra.mxu0 %v2470
      %2533 = vmatprep.subr.bf16.mxu0 0
      %2534 = vmatpush2.bf16.msra.mxu0 %v2469
      %2535 = vmatprep.subr.bf16.mxu0 0
      %2536 = vmatpush2.bf16.msra.mxu0 %v2468
      %2537 = vmatprep.subr.bf16.mxu0 0
      %2538 = vmatpush2.bf16.msra.mxu0 %v2467
      %2539 = vmatprep.mubr.bf16.mxu0 %v2316
      %2540 = vmatmul.mubr.bf16.gmra.mxu0 %v2315
      %v2541 = vpop.f32.mrf.mxu0
      %v2542 = vadd.f32 0.0, %v2541
      %v2543 = vpop.f32.mrf.mxu0
      %v2544 = vpop.f32.mrf.mxu0
      %v2545 = vadd.f32 0.0, %v2544
      %v2546 = vpop.f32.mrf.mxu0
      %2547 = vmatprep.mubr.bf16.mxu0 %v2319
      %2548 = vmatmul.mubr.bf16.gmra.mxu0 %v2318
      %v2549 = vpop.f32.mrf.mxu0
      %v2550 = vadd.f32 0.0, %v2549
      %v2551 = vpop.f32.mrf.mxu0
      %v2552 = vpop.f32.mrf.mxu0
      %v2553 = vadd.f32 0.0, %v2552
      %v2554 = vpop.f32.mrf.mxu0
      %2555 = vmatprep.mubr.bf16.mxu0 %v2322
      %2556 = vmatmul.mubr.bf16.gmra.mxu0 %v2321
      %v2557 = vpop.f32.mrf.mxu0
      %v2558 = vadd.f32 0.0, %v2557
      %v2559 = vpop.f32.mrf.mxu0
      %v2560 = vpop.f32.mrf.mxu0
      %v2561 = vadd.f32 0.0, %v2560
      %v2562 = vpop.f32.mrf.mxu0
      %2563 = vmatprep.mubr.bf16.mxu0 %v2325
      %2564 = vmatmul.mubr.bf16.gmra.mxu0 %v2324
      %v2565 = vpop.f32.mrf.mxu0
      %v2566 = vadd.f32 0.0, %v2565
      %v2567 = vpop.f32.mrf.mxu0
      %v2568 = vpop.f32.mrf.mxu0
      %v2569 = vadd.f32 0.0, %v2568
      %v2570 = vpop.f32.mrf.mxu0
      %2571 = vmatprep.mubr.bf16.mxu0 %v2328
      %2572 = vmatmul.mubr.bf16.gmra.mxu0 %v2327
      %v2573 = vpop.f32.mrf.mxu0
      %v2574 = vadd.f32 0.0, %v2573
      %v2575 = vpop.f32.mrf.mxu0
      %v2576 = vpop.f32.mrf.mxu0
      %v2577 = vadd.f32 0.0, %v2576
      %v2578 = vpop.f32.mrf.mxu0
      %2579 = vmatprep.mubr.bf16.mxu0 %v2331
      %2580 = vmatmul.mubr.bf16.gmra.mxu0 %v2330
      %v2581 = vpop.f32.mrf.mxu0
      %v2582 = vadd.f32 0.0, %v2581
      %v2583 = vpop.f32.mrf.mxu0
      %v2584 = vpop.f32.mrf.mxu0
      %v2585 = vadd.f32 0.0, %v2584
      %v2586 = vpop.f32.mrf.mxu0
      %2587 = vmatprep.mubr.bf16.mxu0 %v2334
      %2588 = vmatmul.mubr.bf16.gmra.mxu0 %v2333
      %v2589 = vpop.f32.mrf.mxu0
      %v2590 = vadd.f32 0.0, %v2589
      %v2591 = vpop.f32.mrf.mxu0
      %v2592 = vpop.f32.mrf.mxu0
      %v2593 = vadd.f32 0.0, %v2592
      %v2594 = vpop.f32.mrf.mxu0
      %2595 = vmatprep.mubr.bf16.mxu0 %v2337
      %2596 = vmatmul.mubr.bf16.gmra.mxu0 %v2336
      %v2597 = vpop.f32.mrf.mxu0
      %v2598 = vadd.f32 0.0, %v2597
      %v2599 = vpop.f32.mrf.mxu0
      %v2600 = vpop.f32.mrf.mxu0
      %v2601 = vadd.f32 0.0, %v2600
      %v2602 = vpop.f32.mrf.mxu0
      %2603 = vdwg.mxu0
      %2604 = vmatprep.subr.bf16.mxu0 0
      %2605 = vmatpush1.bf16.msra.mxu0 %v2482
      %2606 = vmatprep.subr.bf16.mxu0 0
      %2607 = vmatpush1.bf16.msra.mxu0 %v2481
      %2608 = vmatprep.subr.bf16.mxu0 0
      %2609 = vmatpush1.bf16.msra.mxu0 %v2480
      %2610 = vmatprep.subr.bf16.mxu0 0
      %2611 = vmatpush1.bf16.msra.mxu0 %v2479
      %2612 = vmatprep.subr.bf16.mxu0 0
      %2613 = vmatpush1.bf16.msra.mxu0 %v2478
      %2614 = vmatprep.subr.bf16.mxu0 0
      %2615 = vmatpush1.bf16.msra.mxu0 %v2477
      %2616 = vmatprep.subr.bf16.mxu0 0
      %2617 = vmatpush1.bf16.msra.mxu0 %v2476
      %2618 = vmatprep.subr.bf16.mxu0 0
      %2619 = vmatpush1.bf16.msra.mxu0 %v2475
      %2620 = vmatprep.subr.bf16.mxu0 0
      %2621 = vmatpush2.bf16.msra.mxu0 0
      %2622 = vmatprep.subr.bf16.mxu0 0
      %2623 = vmatpush2.bf16.msra.mxu0 0
      %2624 = vmatprep.subr.bf16.mxu0 0
      %2625 = vmatpush2.bf16.msra.mxu0 0
      %2626 = vmatprep.subr.bf16.mxu0 0
      %2627 = vmatpush2.bf16.msra.mxu0 0
      %2628 = vmatprep.subr.bf16.mxu0 0
      %2629 = vmatpush2.bf16.msra.mxu0 0
      %2630 = vmatprep.subr.bf16.mxu0 0
      %2631 = vmatpush2.bf16.msra.mxu0 0
      %2632 = vmatprep.subr.bf16.mxu0 0
      %2633 = vmatpush2.bf16.msra.mxu0 0
      %2634 = vmatprep.subr.bf16.mxu0 0
      %2635 = vmatpush2.bf16.msra.mxu0 0
      %2636 = vmatprep.mubr.bf16.mxu0 0
      %2637 = vmatmul.mubr.bf16.gmra.mxu0 %v2317
      %v2638 = vpop.f32.mrf.mxu0
      %v2639 = vadd.f32 %v2542, %v2638
      %v2640 = vpop.f32.mrf.mxu0
      %v2641 = vpop.f32.mrf.mxu0
      %v2642 = vadd.f32 %v2545, %v2641
      %v2643 = vpop.f32.mrf.mxu0
      %2644 = vmatprep.mubr.bf16.mxu0 0
      %2645 = vmatmul.mubr.bf16.gmra.mxu0 %v2320
      %v2646 = vpop.f32.mrf.mxu0
      %v2647 = vadd.f32 %v2550, %v2646
      %v2648 = vpop.f32.mrf.mxu0
      %v2649 = vpop.f32.mrf.mxu0
      %v2650 = vadd.f32 %v2553, %v2649
      %v2651 = vpop.f32.mrf.mxu0
      %2652 = vmatprep.mubr.bf16.mxu0 0
      %2653 = vmatmul.mubr.bf16.gmra.mxu0 %v2323
      %v2654 = vpop.f32.mrf.mxu0
      %v2655 = vadd.f32 %v2558, %v2654
      %v2656 = vpop.f32.mrf.mxu0
      %v2657 = vpop.f32.mrf.mxu0
      %v2658 = vadd.f32 %v2561, %v2657
      %v2659 = vpop.f32.mrf.mxu0
      %2660 = vmatprep.mubr.bf16.mxu0 0
      %2661 = vmatmul.mubr.bf16.gmra.mxu0 %v2326
      %v2662 = vpop.f32.mrf.mxu0
      %v2663 = vadd.f32 %v2566, %v2662
      %v2664 = vpop.f32.mrf.mxu0
      %v2665 = vpop.f32.mrf.mxu0
      %v2666 = vadd.f32 %v2569, %v2665
      %v2667 = vpop.f32.mrf.mxu0
      %2668 = vmatprep.mubr.bf16.mxu0 0
      %2669 = vmatmul.mubr.bf16.gmra.mxu0 %v2329
      %v2670 = vpop.f32.mrf.mxu0
      %v2671 = vadd.f32 %v2574, %v2670
      %v2672 = vpop.f32.mrf.mxu0
      %v2673 = vpop.f32.mrf.mxu0
      %v2674 = vadd.f32 %v2577, %v2673
      %v2675 = vpop.f32.mrf.mxu0
      %2676 = vmatprep.mubr.bf16.mxu0 0
      %2677 = vmatmul.mubr.bf16.gmra.mxu0 %v2332
      %v2678 = vpop.f32.mrf.mxu0
      %v2679 = vadd.f32 %v2582, %v2678
      %v2680 = vpop.f32.mrf.mxu0
      %v2681 = vpop.f32.mrf.mxu0
      %v2682 = vadd.f32 %v2585, %v2681
      %v2683 = vpop.f32.mrf.mxu0
      %2684 = vmatprep.mubr.bf16.mxu0 0
      %2685 = vmatmul.mubr.bf16.gmra.mxu0 %v2335
      %v2686 = vpop.f32.mrf.mxu0
      %v2687 = vadd.f32 %v2590, %v2686
      %v2688 = vpop.f32.mrf.mxu0
      %v2689 = vpop.f32.mrf.mxu0
      %v2690 = vadd.f32 %v2593, %v2689
      %v2691 = vpop.f32.mrf.mxu0
      %2692 = vmatprep.mubr.bf16.mxu0 0
      %2693 = vmatmul.mubr.bf16.gmra.mxu0 %v2338
      %v2694 = vpop.f32.mrf.mxu0
      %v2695 = vadd.f32 %v2598, %v2694
      %v2696 = vpop.f32.mrf.mxu0
      %v2697 = vpop.f32.mrf.mxu0
      %v2698 = vadd.f32 %v2601, %v2697
      %v2699 = vpop.f32.mrf.mxu0
      %2700 = vdwg.mxu0
      %v2701 = vadd.f32 %v1932, %v2639
      %v2702 = vadd.f32 %v1935, %v2642
      %v2703 = vadd.f32 %v1940, %v2647
      %v2704 = vadd.f32 %v1943, %v2650
      %v2705 = vadd.f32 %v1948, %v2655
      %v2706 = vadd.f32 %v1951, %v2658
      %v2707 = vadd.f32 %v1956, %v2663
      %v2708 = vadd.f32 %v1959, %v2666
      %v2709 = vadd.f32 %v1964, %v2671
      %v2710 = vadd.f32 %v1967, %v2674
      %v2711 = vadd.f32 %v1972, %v2679
      %v2712 = vadd.f32 %v1975, %v2682
      %v2713 = vadd.f32 %v1980, %v2687
      %v2714 = vadd.f32 %v1983, %v2690
      %v2715 = vadd.f32 %v1988, %v2695
      %v2716 = vadd.f32 %v1991, %v2698
      %v2717 = vld [vmem:[%s4] sm:$0x1]
      %v2719 = vlaneseq
      %v2720 = vshrl.u32 %v2719, 7
      %v2721 = vsub.s32 0, %v2720
      %v2722 = vrot.slane %v2717, %v2721
      %v2724 = vadd.f32 %v2701, %v2722
      %v2725 = vadd.f32 %v2702, %v2722
      %v2726 = vadd.f32 %v2703, %v2722
      %v2727 = vadd.f32 %v2704, %v2722
      %v2728 = vadd.f32 %v2705, %v2722
      %v2729 = vadd.f32 %v2706, %v2722
      %v2730 = vadd.f32 %v2707, %v2722
      %v2731 = vadd.f32 %v2708, %v2722
      %v2732 = vadd.f32 %v2709, %v2722
      %v2733 = vadd.f32 %v2710, %v2722
      %v2734 = vadd.f32 %v2711, %v2722
      %v2735 = vadd.f32 %v2712, %v2722
      %v2736 = vadd.f32 %v2713, %v2722
      %v2737 = vadd.f32 %v2714, %v2722
      %v2738 = vadd.f32 %v2715, %v2722
      %v2739 = vadd.f32 %v2716, %v2722
      %v2740 = vadd.f32 %v2724, %v2725
      %v2741 = vadd.f32 %v2740, %v2726
      %v2742 = vadd.f32 %v2741, %v2727
      %v2743 = vadd.f32 %v2742, %v2728
      %v2744 = vadd.f32 %v2743, %v2729
      %v2745 = vadd.f32 %v2744, %v2730
      %v2746 = vadd.f32 %v2745, %v2731
      %v2747 = vadd.f32 %v2746, %v2732
      %v2748 = vadd.f32 %v2747, %v2733
      %v2749 = vadd.f32 %v2748, %v2734
      %v2750 = vadd.f32 %v2749, %v2735
      %v2751 = vadd.f32 %v2750, %v2736
      %v2752 = vadd.f32 %v2751, %v2737
      %v2753 = vadd.f32 %v2752, %v2738
      %v2754 = vadd.f32 %v2753, %v2739
      %v2755 = vrot.slane %v2754, 4
      %v2756 = vadd.f32 %v2754, %v2755
      %v2757 = vrot.slane %v2756, 2
      %v2758 = vadd.f32 %v2756, %v2757
      %v2759 = vrot.slane %v2758, 1
      %v2760 = vadd.f32 %v2758, %v2759
      %2761 = vst [vmem:[%s263] sm:$0x1] %v2760
      %v2762 = vmul.f32 %v2724, %v2724
      %v2763 = vmul.f32 %v2725, %v2725
      %v2764 = vmul.f32 %v2726, %v2726
      %v2765 = vmul.f32 %v2727, %v2727
      %v2766 = vmul.f32 %v2728, %v2728
      %v2767 = vmul.f32 %v2729, %v2729
      %v2768 = vmul.f32 %v2730, %v2730
      %v2769 = vmul.f32 %v2731, %v2731
      %v2770 = vmul.f32 %v2732, %v2732
      %v2771 = vmul.f32 %v2733, %v2733
      %v2772 = vmul.f32 %v2734, %v2734
      %v2773 = vmul.f32 %v2735, %v2735
      %v2774 = vmul.f32 %v2736, %v2736
      %v2775 = vmul.f32 %v2737, %v2737
      %v2776 = vmul.f32 %v2738, %v2738
      %v2777 = vmul.f32 %v2739, %v2739
      %v2778 = vadd.f32 %v2762, %v2763
      %v2779 = vadd.f32 %v2778, %v2764
      %v2780 = vadd.f32 %v2779, %v2765
      %v2781 = vadd.f32 %v2780, %v2766
      %v2782 = vadd.f32 %v2781, %v2767
      %v2783 = vadd.f32 %v2782, %v2768
      %v2784 = vadd.f32 %v2783, %v2769
      %v2785 = vadd.f32 %v2784, %v2770
      %v2786 = vadd.f32 %v2785, %v2771
      %v2787 = vadd.f32 %v2786, %v2772
      %v2788 = vadd.f32 %v2787, %v2773
      %v2789 = vadd.f32 %v2788, %v2774
      %v2790 = vadd.f32 %v2789, %v2775
      %v2791 = vadd.f32 %v2790, %v2776
      %v2792 = vadd.f32 %v2791, %v2777
      %v2793 = vrot.slane %v2792, 4
      %v2794 = vadd.f32 %v2792, %v2793
      %v2795 = vrot.slane %v2794, 2
      %v2796 = vadd.f32 %v2794, %v2795
      %v2797 = vrot.slane %v2796, 1
      %v2798 = vadd.f32 %v2796, %v2797
      %2799 = vst [vmem:[%s263 + $0x1] sm:$0x1] %v2798
      %2800 = vst [vmem:[%s258] sm:$0xff] %v2724
      %2801 = vst [vmem:[%s258 + $0x8] sm:$0xff] %v2725
      %2802 = vst [vmem:[%s258 + $0x10] sm:$0xff] %v2726
      %2803 = vst [vmem:[%s258 + $0x18] sm:$0xff] %v2727
      %2804 = vst [vmem:[%s258 + $0x20] sm:$0xff] %v2728
      %2805 = vst [vmem:[%s258 + $0x28] sm:$0xff] %v2729
      %2806 = vst [vmem:[%s258 + $0x30] sm:$0xff] %v2730
      %2807 = vst [vmem:[%s258 + $0x38] sm:$0xff] %v2731
      %2808 = vst [vmem:[%s258 + $0x40] sm:$0xff] %v2732
      %2809 = vst [vmem:[%s258 + $0x48] sm:$0xff] %v2733
      %2810 = vst [vmem:[%s258 + $0x50] sm:$0xff] %v2734
      %2811 = vst [vmem:[%s258 + $0x58] sm:$0xff] %v2735
      %2812 = vst [vmem:[%s258 + $0x60] sm:$0xff] %v2736
      %2813 = vst [vmem:[%s258 + $0x68] sm:$0xff] %v2737
      %2814 = vst [vmem:[%s258 + $0x70] sm:$0xff] %v2738
      %2815 = vst [vmem:[%s258 + $0x78] sm:$0xff] %v2739
      %s2816 = smul.u32 16, %s18
      %p2817 = scmp.lt.s32.totalorder %s2816, 31
      %s2818 = scalar_select %p2817, %s2816, 31
      %s2819 = smul.addr %s2818, 8
      %s2820 = scalar_lea.vmem %s5, %s2819
      %p2821 = scmp.lt.s32.totalorder %s18, 1
      %s2822 = scalar_select %p2821, %s18, 1
      %s2823 = smul.addr %s2822, 2
      %s2824 = scalar_lea.vmem %s6, %s2823
      // Predicated region
      $region45: #{generator_forward.6} parent=39 // pred_check
        %p2825 = pneg %p146
      $region46: #{generator_forward.6} parent=39 // pred_check_branch
        %2827 = sbr.rel (%p2825) target = $region48
      $region47: #{generator_forward.6} parent=39 // pred_region
        %s2828 = smul.u32 16, %s18
      $region48: #{generator_forward.6} parent=39 // pred_fallthru
        _
      // Predicated region
      $region49: #{generator_forward.6} parent=39 // pred_check
        %p2829 = pneg %p172
      $region50: #{generator_forward.6} parent=39 // pred_check_branch
        %2831 = sbr.rel (%p2829) target = $region52
      $region51: #{generator_forward.6} parent=39 // pred_region
        _
      $region52: #{generator_forward.6} parent=39 // pred_fallthru
        _
    $region40: #{generator_forward.6} parent=5 // pred_fallthru
      _
    %p2832 = scmp.le.s32.totalorder 2, %s13
    // Predicated region
    $region53: #{generator_forward.6} parent=5 // pred_check
      %p2833 = pneg %p2832
    $region54: #{generator_forward.6} parent=5 // pred_check_branch
      %2835 = sbr.rel (%p2833) target = $region56
    $region55: #{generator_forward.6} parent=5 // pred_region
      %s2836 = ssub.s32 %s13, 2
      // Predicated region
      $region57: #{generator_forward.6} parent=55 // pred_check
        %p2837 = pneg %p152
      $region58: #{generator_forward.6} parent=55 // pred_check_branch
        %2839 = sbr.rel (%p2837) target = $region60
      $region59: #{generator_forward.6} parent=55 // pred_region
        %s2840 = smul.u32 16, %s19
        %p2841 = scmp.lt.s32.totalorder %s2840, 31
        %s2842 = scalar_select %p2841, %s2840, 31
        %s2843 = smul.addr %s2842, 8
        %s2844 = scalar_lea.vmem %s5, %s2843
      $region60: #{generator_forward.6} parent=55 // pred_fallthru
        _
      // Predicated region
      $region61: #{generator_forward.6} parent=55 // pred_check
        %p2845 = pneg %p178
      $region62: #{generator_forward.6} parent=55 // pred_check_branch
        %2847 = sbr.rel (%p2845) target = $region64
      $region63: #{generator_forward.6} parent=55 // pred_region
        %p2848 = scmp.lt.s32.totalorder %s19, 1
        %s2849 = scalar_select %p2848, %s19, 1
        %s2850 = smul.addr %s2849, 2
        %s2851 = scalar_lea.vmem %s6, %s2850
      $region64: #{generator_forward.6} parent=55 // pred_fallthru
        _
    $region56: #{generator_forward.6} parent=5 // pred_fallthru
      _
  $region6: #{generator_forward.6} parent=0 // loop_footer
    %s17 = sadd.s32 1, %s13
  $region7: #{generator_forward.6} parent=0 // loop_footer_branch
    %12 = sbr.rel target = $region3
  $region8: #{generator_forward.6} parent=0 // loop_exit
    _

// kernel: generator_forward.7
$region0: #{generator_forward.7}
  #allocation0 [shape = 'u32[]', space=smem, size = 0x4, offset = 0x4, fixed_abs, tag = 'smem constant byte address 0x4 - core index']
  #allocation1 [shape = 'u32[144,128]{1,0:T(1,128)}', space=vmem, size = 0x12000, scoped, tag = 'internal scratch']
  #allocation2 [shape = 'bf16[1,18,18,64]{3,2,1,0:T(8,128)(2,1)}', space=vmem, size = 0x1b000, scoped, tag = 'scratch operand']
  %s0 = inlined_call_operand.vmem [shape: f32[2,16,16,64], index: 0, kind: input, shape index: {}]
  %s1 = inlined_call_operand.vmem [shape: f32[1,64], index: 1, kind: input, shape index: {}]
  %s2 = inlined_call_operand.vmem [shape: f32[1,64], index: 2, kind: input, shape index: {}]
  %s3 = inlined_call_operand.vmem [shape: bf16[576,128], index: 3, kind: input, shape index: {}]
  %s4 = inlined_call_operand.vmem [shape: f32[1,128], index: 4, kind: input, shape index: {}]
  %s5 = inlined_call_operand.vmem [shape: f32[512,128], index: 5, kind: output, shape index: {}]
  %s6 = sld [smem:[#allocation0]]
  $region57: #{generator_forward.7} parent=0
    _
  %s8 = ssub.s32 1, %s6
  %s9 = scalar_select 0, %s8, %s6
  loop: start=0, step=1, limit=4
  $region2: #{generator_forward.7} parent=0 // loop_pre_header
    _
  $region3: #{generator_forward.7} parent=0 // loop_header
    %s11 = sphi 0, %s15
    %p12 = scmp.ge.s32.totalorder %s11, 4
    %s21 = sphi 0, %s23
    %s24 = sphi 0, %s21
    %s25 = sphi 0, %s24
    %s41 = sphi 0, %s25
    %s45 = sphi 0, %s45
    %s47 = sphi 0, %s45
    %s48 = sphi 0, %s47
    %s62 = sphi 0, %s48
    %s66 = sphi 0, %s66
    %s68 = sphi 0, %s66
    %s69 = sphi 0, %s68
    %s83 = sphi 0, %s69
    %s87 = sphi 0, %s87
    %s89 = sphi 0, %s87
    %s90 = sphi 0, %s89
    %s104 = sphi 0, %s90
    %s108 = sphi 0, %s108
    %s110 = sphi 0, %s108
    %s111 = sphi 0, %s110
    %s125 = sphi 0, %s111
    %s131 = sphi 0, %s133
    %s134 = sphi 0, %s131
    %s135 = sphi 0, %s134
    %s151 = sphi 0, %s135
  $region4: #{generator_forward.7} parent=0 // loop_header_branch
    %14 = sbr.rel (%p12) target = $region8
  $region5: #{generator_forward.7} parent=0 // loop_body
    %s16 = ssub.s32 %s11, 1
    %s17 = ssub.s32 %s11, 2
    %s18 = sadd.s32 %s11, 1
    %s19 = ssub.s32 %s11, %s18
    %p20 = scmp.eq.s32.totalorder %s19, 0
    %s22 = sadd.s32 %s21, 1
    %s23 = scalar_select %p20, %s21, %s22
    %p26 = pneg %p20
    %p27 = scmp.eq.s32.totalorder %s11, 1
    %p28 = por %p26, %p27
    %p29 = scmp.ne.s32.totalorder %s21, %s24
    %p30 = scmp.eq.s32.totalorder %s11, 0
    %p31 = por %p29, %p30
    %p32 = scmp.ne.s32.totalorder %s21, %s24
    %p33 = scmp.eq.s32.totalorder %s16, 1
    %p34 = por %p32, %p33
    %p35 = scmp.ne.s32.totalorder %s24, %s25
    %p36 = scmp.eq.s32.totalorder %s16, 0
    %p37 = por %p35, %p36
    %p38 = scmp.ne.s32.totalorder %s24, %s25
    %p39 = scmp.eq.s32.totalorder %s17, 1
    %p40 = por %p38, %p39
    %p42 = scmp.ne.s32.totalorder %s25, %s41
    %p43 = scmp.eq.s32.totalorder %s17, 0
    %p44 = por %p42, %p43
    %s46 = sadd.s32 %s45, 1
    %p49 = scmp.eq.s32.totalorder %s11, 1
    %p50 = scmp.ne.s32.totalorder %s45, %s47
    %p51 = scmp.eq.s32.totalorder %s11, 0
    %p52 = por %p50, %p51
    %p53 = scmp.ne.s32.totalorder %s45, %s47
    %p54 = scmp.eq.s32.totalorder %s16, 1
    %p55 = por %p53, %p54
    %p56 = scmp.ne.s32.totalorder %s47, %s48
    %p57 = scmp.eq.s32.totalorder %s16, 0
    %p58 = por %p56, %p57
    %p59 = scmp.ne.s32.totalorder %s47, %s48
    %p60 = scmp.eq.s32.totalorder %s17, 1
    %p61 = por %p59, %p60
    %p63 = scmp.ne.s32.totalorder %s48, %s62
    %p64 = scmp.eq.s32.totalorder %s17, 0
    %p65 = por %p63, %p64
    %s67 = sadd.s32 %s66, 1
    %p70 = scmp.eq.s32.totalorder %s11, 1
    %p71 = scmp.ne.s32.totalorder %s66, %s68
    %p72 = scmp.eq.s32.totalorder %s11, 0
    %p73 = por %p71, %p72
    %p74 = scmp.ne.s32.totalorder %s66, %s68
    %p75 = scmp.eq.s32.totalorder %s16, 1
    %p76 = por %p74, %p75
    %p77 = scmp.ne.s32.totalorder %s68, %s69
    %p78 = scmp.eq.s32.totalorder %s16, 0
    %p79 = por %p77, %p78
    %p80 = scmp.ne.s32.totalorder %s68, %s69
    %p81 = scmp.eq.s32.totalorder %s17, 1
    %p82 = por %p80, %p81
    %p84 = scmp.ne.s32.totalorder %s69, %s83
    %p85 = scmp.eq.s32.totalorder %s17, 0
    %p86 = por %p84, %p85
    %s88 = sadd.s32 %s87, 1
    %p91 = scmp.eq.s32.totalorder %s11, 1
    %p92 = scmp.ne.s32.totalorder %s87, %s89
    %p93 = scmp.eq.s32.totalorder %s11, 0
    %p94 = por %p92, %p93
    %p95 = scmp.ne.s32.totalorder %s87, %s89
    %p96 = scmp.eq.s32.totalorder %s16, 1
    %p97 = por %p95, %p96
    %p98 = scmp.ne.s32.totalorder %s89, %s90
    %p99 = scmp.eq.s32.totalorder %s16, 0
    %p100 = por %p98, %p99
    %p101 = scmp.ne.s32.totalorder %s89, %s90
    %p102 = scmp.eq.s32.totalorder %s17, 1
    %p103 = por %p101, %p102
    %p105 = scmp.ne.s32.totalorder %s90, %s104
    %p106 = scmp.eq.s32.totalorder %s17, 0
    %p107 = por %p105, %p106
    %s109 = sadd.s32 %s108, 1
    %p112 = scmp.eq.s32.totalorder %s11, 1
    %p113 = scmp.ne.s32.totalorder %s108, %s110
    %p114 = scmp.eq.s32.totalorder %s11, 0
    %p115 = por %p113, %p114
    %p116 = scmp.ne.s32.totalorder %s108, %s110
    %p117 = scmp.eq.s32.totalorder %s16, 1
    %p118 = por %p116, %p117
    %p119 = scmp.ne.s32.totalorder %s110, %s111
    %p120 = scmp.eq.s32.totalorder %s16, 0
    %p121 = por %p119, %p120
    %p122 = scmp.ne.s32.totalorder %s110, %s111
    %p123 = scmp.eq.s32.totalorder %s17, 1
    %p124 = por %p122, %p123
    %p126 = scmp.ne.s32.totalorder %s111, %s125
    %p127 = scmp.eq.s32.totalorder %s17, 0
    %p128 = por %p126, %p127
    %s129 = ssub.s32 %s11, %s18
    %p130 = scmp.eq.s32.totalorder %s129, 0
    %s132 = sadd.s32 %s131, 1
    %s133 = scalar_select %p130, %s131, %s132
    %p136 = pneg %p130
    %p137 = scmp.eq.s32.totalorder %s11, 1
    %p138 = por %p136, %p137
    %p139 = scmp.ne.s32.totalorder %s131, %s134
    %p140 = scmp.eq.s32.totalorder %s11, 0
    %p141 = por %p139, %p140
    %p142 = scmp.ne.s32.totalorder %s131, %s134
    %p143 = scmp.eq.s32.totalorder %s16, 1
    %p144 = por %p142, %p143
    %p145 = scmp.ne.s32.totalorder %s134, %s135
    %p146 = scmp.eq.s32.totalorder %s16, 0
    %p147 = por %p145, %p146
    %p148 = scmp.ne.s32.totalorder %s134, %s135
    %p149 = scmp.eq.s32.totalorder %s17, 1
    %p150 = por %p148, %p149
    %p152 = scmp.ne.s32.totalorder %s135, %s151
    %p153 = scmp.eq.s32.totalorder %s17, 0
    %p154 = por %p152, %p153
    %p155 = scmp.le.s32.totalorder 1, %s11
    %p156 = scmp.lt.s32.totalorder %s11, 3
    %p157 = pnand %p155, %p156
    %p158 = pneg %p157
    // Predicated region
    $region9: #{generator_forward.7} parent=5 // pred_check
      _
    $region10: #{generator_forward.7} parent=5 // pred_check_branch
      %160 = sbr.rel (%p157) target = $region12
    $region11: #{generator_forward.7} parent=5 // pred_region
      %s161 = ssub.s32 %s11, 1
      // Predicated region
      $region13: #{generator_forward.7} parent=11 // pred_check
        %p162 = pneg %p58
      $region14: #{generator_forward.7} parent=11 // pred_check_branch
        %164 = sbr.rel (%p162) target = $region16
      $region15: #{generator_forward.7} parent=11 // pred_region
        _
      $region16: #{generator_forward.7} parent=11 // pred_fallthru
        _
      // Predicated region
      $region17: #{generator_forward.7} parent=11 // pred_check
        %p165 = pneg %p79
      $region18: #{generator_forward.7} parent=11 // pred_check_branch
        %167 = sbr.rel (%p165) target = $region20
      $region19: #{generator_forward.7} parent=11 // pred_region
        _
      $region20: #{generator_forward.7} parent=11 // pred_fallthru
        _
      // Predicated region
      $region21: #{generator_forward.7} parent=11 // pred_check
        %p168 = pneg %p100
      $region22: #{generator_forward.7} parent=11 // pred_check_branch
        %170 = sbr.rel (%p168) target = $region24
      $region23: #{generator_forward.7} parent=11 // pred_region
        _
      $region24: #{generator_forward.7} parent=11 // pred_fallthru
        _
      // Predicated region
      $region25: #{generator_forward.7} parent=11 // pred_check
        %p171 = pneg %p121
      $region26: #{generator_forward.7} parent=11 // pred_check_branch
        %173 = sbr.rel (%p171) target = $region28
      $region27: #{generator_forward.7} parent=11 // pred_region
        _
      $region28: #{generator_forward.7} parent=11 // pred_fallthru
        _
    $region12: #{generator_forward.7} parent=5 // pred_fallthru
      _
    %p174 = scmp.lt.s32.totalorder %s11, 2
    // Predicated region
    $region29: #{generator_forward.7} parent=5 // pred_check
      %p175 = pneg %p174
    $region30: #{generator_forward.7} parent=5 // pred_check_branch
      %177 = sbr.rel (%p175) target = $region32
    $region31: #{generator_forward.7} parent=5 // pred_region
      // Predicated region
      $region33: #{generator_forward.7} parent=31 // pred_check
        %p178 = pneg %p31
      $region34: #{generator_forward.7} parent=31 // pred_check_branch
        %180 = sbr.rel (%p178) target = $region36
      $region35: #{generator_forward.7} parent=31 // pred_region
        %p181 = scmp.lt.s32.totalorder %s11, 1
        %s182 = scalar_select %p181, %s11, 1
        %s183 = smul.addr %s182, 32
        %s184 = smul.addr %s183, 8
        %s185 = scalar_lea.vmem %s0, %s184
      $region36: #{generator_forward.7} parent=31 // pred_fallthru
        _
    $region32: #{generator_forward.7} parent=5 // pred_fallthru
      _
    %p186 = scmp.le.s32.totalorder 1, %s11
    %p187 = scmp.lt.s32.totalorder %s11, 3
    %p188 = pnand %p186, %p187
    %p189 = pneg %p188
    // Predicated region
    $region37: #{generator_forward.7} parent=5 // pred_check
      _
    $region38: #{generator_forward.7} parent=5 // pred_check_branch
      %191 = sbr.rel (%p188) target = $region40
    $region39: #{generator_forward.7} parent=5 // pred_region
      %s192 = ssub.s32 %s11, 1
      %p193 = scmp.lt.s32.totalorder %s16, 1
      %s194 = scalar_select %p193, %s16, 1
      %s195 = smul.addr %s194, 32
      %s196 = smul.addr %s195, 8
      %s197 = scalar_lea.vmem %s0, %s196
      %p198 = pneg %p37
      %p199 = pneg %p34
      %p200 = pneg %p58
      %p201 = pneg %p55
      %p202 = pneg %p79
      %p203 = pneg %p76
      %p204 = pneg %p100
      %p205 = pneg %p97
      %p206 = pneg %p121
      %p207 = pneg %p118
      %p208 = pneg %p147
      %p209 = pneg %p144
      %s210 = smul.u32 32, %s16
      %p211 = scmp.lt.s32.totalorder %s210, 63
      %s212 = scalar_select %p211, %s210, 63
      %s213 = smul.addr %s212, 8
      %s214 = scalar_lea.vmem %s5, %s213
      %p215 = scmp.lt.s32.totalorder %s16, 1
      %s216 = scalar_select %p215, %s16, 1
      %s217 = smul.addr %s216, 32
      %s218 = smul.addr %s217, 8
      %s219 = scalar_lea.vmem %s0, %s218
      %s220 = smul.u32 32, %s16
      %p221 = scmp.lt.s32.totalorder %s220, 63
      %s222 = scalar_select %p221, %s220, 63
      %s223 = smul.addr %s222, 8
      %s224 = scalar_lea.vmem %s5, %s223
      %s225 = smul.u32 32, %s16
      %v227 = vld [vmem:[%s219] sm:$0xff]
      %v228 = vld [vmem:[%s219 + $0x8] sm:$0xff]
      %v229 = vld [vmem:[%s219 + $0x10] sm:$0xff]
      %v230 = vld [vmem:[%s219 + $0x18] sm:$0xff]
      %v231 = vld [vmem:[%s219 + $0x20] sm:$0xff]
      %v232 = vld [vmem:[%s219 + $0x28] sm:$0xff]
      %v233 = vld [vmem:[%s219 + $0x30] sm:$0xff]
      %v234 = vld [vmem:[%s219 + $0x38] sm:$0xff]
      %v235 = vld [vmem:[%s219 + $0x40] sm:$0xff]
      %v236 = vld [vmem:[%s219 + $0x48] sm:$0xff]
      %v237 = vld [vmem:[%s219 + $0x50] sm:$0xff]
      %v238 = vld [vmem:[%s219 + $0x58] sm:$0xff]
      %v239 = vld [vmem:[%s219 + $0x60] sm:$0xff]
      %v240 = vld [vmem:[%s219 + $0x68] sm:$0xff]
      %v241 = vld [vmem:[%s219 + $0x70] sm:$0xff]
      %v242 = vld [vmem:[%s219 + $0x78] sm:$0xff]
      %v243 = vld [vmem:[%s219 + $0x80] sm:$0xff]
      %v244 = vld [vmem:[%s219 + $0x88] sm:$0xff]
      %v245 = vld [vmem:[%s219 + $0x90] sm:$0xff]
      %v246 = vld [vmem:[%s219 + $0x98] sm:$0xff]
      %v247 = vld [vmem:[%s219 + $0xa0] sm:$0xff]
      %v248 = vld [vmem:[%s219 + $0xa8] sm:$0xff]
      %v249 = vld [vmem:[%s219 + $0xb0] sm:$0xff]
      %v250 = vld [vmem:[%s219 + $0xb8] sm:$0xff]
      %v251 = vld [vmem:[%s219 + $0xc0] sm:$0xff]
      %v252 = vld [vmem:[%s219 + $0xc8] sm:$0xff]
      %v253 = vld [vmem:[%s219 + $0xd0] sm:$0xff]
      %v254 = vld [vmem:[%s219 + $0xd8] sm:$0xff]
      %v255 = vld [vmem:[%s219 + $0xe0] sm:$0xff]
      %v256 = vld [vmem:[%s219 + $0xe8] sm:$0xff]
      %v257 = vld [vmem:[%s219 + $0xf0] sm:$0xff]
      %v258 = vld [vmem:[%s219 + $0xf8] sm:$0xff]
      %v259 = vld [vmem:[%s1] sm:$0x1]
      %v261 = vlaneseq
      %v262 = vshrl.u32 %v261, 7
      %v263 = vsub.s32 0, %v262
      %v264 = vrot.slane %v259, %v263
      %v266 = vmul.f32 %v227, %v264
      %v267 = vmul.f32 %v228, %v264
      %v268 = vmul.f32 %v229, %v264
      %v269 = vmul.f32 %v230, %v264
      %v270 = vmul.f32 %v231, %v264
      %v271 = vmul.f32 %v232, %v264
      %v272 = vmul.f32 %v233, %v264
      %v273 = vmul.f32 %v234, %v264
      %v274 = vmul.f32 %v235, %v264
      %v275 = vmul.f32 %v236, %v264
      %v276 = vmul.f32 %v237, %v264
      %v277 = vmul.f32 %v238, %v264
      %v278 = vmul.f32 %v239, %v264
      %v279 = vmul.f32 %v240, %v264
      %v280 = vmul.f32 %v241, %v264
      %v281 = vmul.f32 %v242, %v264
      %v282 = vmul.f32 %v243, %v264
      %v283 = vmul.f32 %v244, %v264
      %v284 = vmul.f32 %v245, %v264
      %v285 = vmul.f32 %v246, %v264
      %v286 = vmul.f32 %v247, %v264
      %v287 = vmul.f32 %v248, %v264
      %v288 = vmul.f32 %v249, %v264
      %v289 = vmul.f32 %v250, %v264
      %v290 = vmul.f32 %v251, %v264
      %v291 = vmul.f32 %v252, %v264
      %v292 = vmul.f32 %v253, %v264
      %v293 = vmul.f32 %v254, %v264
      %v294 = vmul.f32 %v255, %v264
      %v295 = vmul.f32 %v256, %v264
      %v296 = vmul.f32 %v257, %v264
      %v297 = vmul.f32 %v258, %v264
      %v298 = vld [vmem:[%s2] sm:$0x1]
      %v300 = vlaneseq
      %v301 = vshrl.u32 %v300, 7
      %v302 = vsub.s32 0, %v301
      %v303 = vrot.slane %v298, %v302
      %v305 = vadd.f32 %v266, %v303
      %v306 = vadd.f32 %v267, %v303
      %v307 = vadd.f32 %v268, %v303
      %v308 = vadd.f32 %v269, %v303
      %v309 = vadd.f32 %v270, %v303
      %v310 = vadd.f32 %v271, %v303
      %v311 = vadd.f32 %v272, %v303
      %v312 = vadd.f32 %v273, %v303
      %v313 = vadd.f32 %v274, %v303
      %v314 = vadd.f32 %v275, %v303
      %v315 = vadd.f32 %v276, %v303
      %v316 = vadd.f32 %v277, %v303
      %v317 = vadd.f32 %v278, %v303
      %v318 = vadd.f32 %v279, %v303
      %v319 = vadd.f32 %v280, %v303
      %v320 = vadd.f32 %v281, %v303
      %v321 = vadd.f32 %v282, %v303
      %v322 = vadd.f32 %v283, %v303
      %v323 = vadd.f32 %v284, %v303
      %v324 = vadd.f32 %v285, %v303
      %v325 = vadd.f32 %v286, %v303
      %v326 = vadd.f32 %v287, %v303
      %v327 = vadd.f32 %v288, %v303
      %v328 = vadd.f32 %v289, %v303
      %v329 = vadd.f32 %v290, %v303
      %v330 = vadd.f32 %v291, %v303
      %v331 = vadd.f32 %v292, %v303
      %v332 = vadd.f32 %v293, %v303
      %v333 = vadd.f32 %v294, %v303
      %v334 = vadd.f32 %v295, %v303
      %v335 = vadd.f32 %v296, %v303
      %v336 = vadd.f32 %v297, %v303
      %vm337 = vcmp.gt.f32.partialorder %v305, 0.0
      %vm338 = vcmp.gt.f32.partialorder %v306, 0.0
      %vm339 = vcmp.gt.f32.partialorder %v307, 0.0
      %vm340 = vcmp.gt.f32.partialorder %v308, 0.0
      %vm341 = vcmp.gt.f32.partialorder %v309, 0.0
      %vm342 = vcmp.gt.f32.partialorder %v310, 0.0
      %vm343 = vcmp.gt.f32.partialorder %v311, 0.0
      %vm344 = vcmp.gt.f32.partialorder %v312, 0.0
      %vm345 = vcmp.gt.f32.partialorder %v313, 0.0
      %vm346 = vcmp.gt.f32.partialorder %v314, 0.0
      %vm347 = vcmp.gt.f32.partialorder %v315, 0.0
      %vm348 = vcmp.gt.f32.partialorder %v316, 0.0
      %vm349 = vcmp.gt.f32.partialorder %v317, 0.0
      %vm350 = vcmp.gt.f32.partialorder %v318, 0.0
      %vm351 = vcmp.gt.f32.partialorder %v319, 0.0
      %vm352 = vcmp.gt.f32.partialorder %v320, 0.0
      %vm353 = vcmp.gt.f32.partialorder %v321, 0.0
      %vm354 = vcmp.gt.f32.partialorder %v322, 0.0
      %vm355 = vcmp.gt.f32.partialorder %v323, 0.0
      %vm356 = vcmp.gt.f32.partialorder %v324, 0.0
      %vm357 = vcmp.gt.f32.partialorder %v325, 0.0
      %vm358 = vcmp.gt.f32.partialorder %v326, 0.0
      %vm359 = vcmp.gt.f32.partialorder %v327, 0.0
      %vm360 = vcmp.gt.f32.partialorder %v328, 0.0
      %vm361 = vcmp.gt.f32.partialorder %v329, 0.0
      %vm362 = vcmp.gt.f32.partialorder %v330, 0.0
      %vm363 = vcmp.gt.f32.partialorder %v331, 0.0
      %vm364 = vcmp.gt.f32.partialorder %v332, 0.0
      %vm365 = vcmp.gt.f32.partialorder %v333, 0.0
      %vm366 = vcmp.gt.f32.partialorder %v334, 0.0
      %vm367 = vcmp.gt.f32.partialorder %v335, 0.0
      %vm368 = vcmp.gt.f32.partialorder %v336, 0.0
      %v369 = vmul.f32 %v305, 0.2
      %v370 = vmul.f32 %v306, 0.2
      %v371 = vmul.f32 %v307, 0.2
      %v372 = vmul.f32 %v308, 0.2
      %v373 = vmul.f32 %v309, 0.2
      %v374 = vmul.f32 %v310, 0.2
      %v375 = vmul.f32 %v311, 0.2
      %v376 = vmul.f32 %v312, 0.2
      %v377 = vmul.f32 %v313, 0.2
      %v378 = vmul.f32 %v314, 0.2
      %v379 = vmul.f32 %v315, 0.2
      %v380 = vmul.f32 %v316, 0.2
      %v381 = vmul.f32 %v317, 0.2
      %v382 = vmul.f32 %v318, 0.2
      %v383 = vmul.f32 %v319, 0.2
      %v384 = vmul.f32 %v320, 0.2
      %v385 = vmul.f32 %v321, 0.2
      %v386 = vmul.f32 %v322, 0.2
      %v387 = vmul.f32 %v323, 0.2
      %v388 = vmul.f32 %v324, 0.2
      %v389 = vmul.f32 %v325, 0.2
      %v390 = vmul.f32 %v326, 0.2
      %v391 = vmul.f32 %v327, 0.2
      %v392 = vmul.f32 %v328, 0.2
      %v393 = vmul.f32 %v329, 0.2
      %v394 = vmul.f32 %v330, 0.2
      %v395 = vmul.f32 %v331, 0.2
      %v396 = vmul.f32 %v332, 0.2
      %v397 = vmul.f32 %v333, 0.2
      %v398 = vmul.f32 %v334, 0.2
      %v399 = vmul.f32 %v335, 0.2
      %v400 = vmul.f32 %v336, 0.2
      %v401 = vsel %vm337, %v305, %v369
      %v402 = vsel %vm338, %v306, %v370
      %v403 = vsel %vm339, %v307, %v371
      %v404 = vsel %vm340, %v308, %v372
      %v405 = vsel %vm341, %v309, %v373
      %v406 = vsel %vm342, %v310, %v374
      %v407 = vsel %vm343, %v311, %v375
      %v408 = vsel %vm344, %v312, %v376
      %v409 = vsel %vm345, %v313, %v377
      %v410 = vsel %vm346, %v314, %v378
      %v411 = vsel %vm347, %v315, %v379
      %v412 = vsel %vm348, %v316, %v380
      %v413 = vsel %vm349, %v317, %v381
      %v414 = vsel %vm350, %v318, %v382
      %v415 = vsel %vm351, %v319, %v383
      %v416 = vsel %vm352, %v320, %v384
      %v417 = vsel %vm353, %v321, %v385
      %v418 = vsel %vm354, %v322, %v386
      %v419 = vsel %vm355, %v323, %v387
      %v420 = vsel %vm356, %v324, %v388
      %v421 = vsel %vm357, %v325, %v389
      %v422 = vsel %vm358, %v326, %v390
      %v423 = vsel %vm359, %v327, %v391
      %v424 = vsel %vm360, %v328, %v392
      %v425 = vsel %vm361, %v329, %v393
      %v426 = vsel %vm362, %v330, %v394
      %v427 = vsel %vm363, %v331, %v395
      %v428 = vsel %vm364, %v332, %v396
      %v429 = vsel %vm365, %v333, %v397
      %v430 = vsel %vm366, %v334, %v398
      %v431 = vsel %vm367, %v335, %v399
      %v432 = vsel %vm368, %v336, %v400
      %v433 = vpack.c.bf16 %v402, %v401
      %v434 = vpack.c.bf16 %v404, %v403
      %v435 = vpack.c.bf16 %v406, %v405
      %v436 = vpack.c.bf16 %v408, %v407
      %v437 = vpack.c.bf16 %v410, %v409
      %v438 = vpack.c.bf16 %v412, %v411
      %v439 = vpack.c.bf16 %v414, %v413
      %v440 = vpack.c.bf16 %v416, %v415
      %v441 = vpack.c.bf16 %v418, %v417
      %v442 = vpack.c.bf16 %v420, %v419
      %v443 = vpack.c.bf16 %v422, %v421
      %v444 = vpack.c.bf16 %v424, %v423
      %v445 = vpack.c.bf16 %v426, %v425
      %v446 = vpack.c.bf16 %v428, %v427
      %v447 = vpack.c.bf16 %v430, %v429
      %v448 = vpack.c.bf16 %v432, %v431
      %p449 = scmp.eq.s32.totalorder %s16, 0
      // Predicated region
      $region41: #{generator_forward.7} parent=39 // pred_check
        %p450 = pneg %p449
      $region42: #{generator_forward.7} parent=39 // pred_check_branch
        %452 = sbr.rel (%p450) target = $region44
      $region43: #{generator_forward.7} parent=39 // pred_region
        %vm453 = vcmask 519168
        %454 = vst.msk [vmem:[#allocation2] sm:$0xf] %vm453, 0
        %455 = vst.msk [vmem:[#allocation2 + $0x4] sm:$0xf] %vm453, 0
        %vm456 = vcmask 516096
        %457 = vst.msk [vmem:[#allocation2 + $0x8] sm:$0x1] %vm456, 0
        %458 = vst.msk [vmem:[#allocation2 + $0xc] sm:$0xf] %vm453, 0
        %459 = vst.msk [vmem:[#allocation2 + $0x10] sm:$0xf] %vm453, 0
        %460 = vst.msk [vmem:[#allocation2 + $0x14] sm:$0x1] %vm456, 0
        %461 = vst.msk [vmem:[#allocation2 + $0x18] sm:$0xf] %vm453, 0
        %462 = vst.msk [vmem:[#allocation2 + $0x1c] sm:$0xf] %vm453, 0
        %463 = vst.msk [vmem:[#allocation2 + $0x20] sm:$0x1] %vm456, 0
        %464 = vst.msk [vmem:[#allocation2 + $0x24] sm:$0xf] %vm453, 0
        %465 = vst.msk [vmem:[#allocation2 + $0x28] sm:$0xf] %vm453, 0
        %466 = vst.msk [vmem:[#allocation2 + $0x2c] sm:$0x1] %vm456, 0
        %467 = vst.msk [vmem:[#allocation2 + $0x30] sm:$0xf] %vm453, 0
        %468 = vst.msk [vmem:[#allocation2 + $0x34] sm:$0xf] %vm453, 0
        %469 = vst.msk [vmem:[#allocation2 + $0x38] sm:$0x1] %vm456, 0
        %470 = vst.msk [vmem:[#allocation2 + $0x3c] sm:$0xf] %vm453, 0
        %471 = vst.msk [vmem:[#allocation2 + $0x40] sm:$0xf] %vm453, 0
        %472 = vst.msk [vmem:[#allocation2 + $0x44] sm:$0x1] %vm456, 0
        %473 = vst.msk [vmem:[#allocation2 + $0x48] sm:$0xf] %vm453, 0
        %474 = vst.msk [vmem:[#allocation2 + $0x4c] sm:$0xf] %vm453, 0
        %475 = vst.msk [vmem:[#allocation2 + $0x50] sm:$0x1] %vm456, 0
        %476 = vst.msk [vmem:[#allocation2 + $0x54] sm:$0xf] %vm453, 0
        %477 = vst.msk [vmem:[#allocation2 + $0x58] sm:$0xf] %vm453, 0
        %478 = vst.msk [vmem:[#allocation2 + $0x5c] sm:$0x1] %vm456, 0
        %479 = vst.msk [vmem:[#allocation2 + $0x60] sm:$0xf] %vm453, 0
        %480 = vst.msk [vmem:[#allocation2 + $0x64] sm:$0xf] %vm453, 0
        %481 = vst.msk [vmem:[#allocation2 + $0x68] sm:$0x1] %vm456, 0
        %482 = vst.msk [vmem:[#allocation2 + $0x6c] sm:$0xf] %vm453, 0
        %483 = vst.msk [vmem:[#allocation2 + $0x70] sm:$0xf] %vm453, 0
        %484 = vst.msk [vmem:[#allocation2 + $0x74] sm:$0x1] %vm456, 0
        %485 = vst.msk [vmem:[#allocation2 + $0x78] sm:$0xf] %vm453, 0
        %486 = vst.msk [vmem:[#allocation2 + $0x7c] sm:$0xf] %vm453, 0
        %487 = vst.msk [vmem:[#allocation2 + $0x80] sm:$0x1] %vm456, 0
        %488 = vst.msk [vmem:[#allocation2 + $0x84] sm:$0xf] %vm453, 0
        %489 = vst.msk [vmem:[#allocation2 + $0x88] sm:$0xf] %vm453, 0
        %490 = vst.msk [vmem:[#allocation2 + $0x8c] sm:$0x1] %vm456, 0
        %491 = vst.msk [vmem:[#allocation2 + $0x90] sm:$0xf] %vm453, 0
        %492 = vst.msk [vmem:[#allocation2 + $0x94] sm:$0xf] %vm453, 0
        %493 = vst.msk [vmem:[#allocation2 + $0x98] sm:$0x1] %vm456, 0
        %494 = vst.msk [vmem:[#allocation2 + $0x9c] sm:$0xf] %vm453, 0
        %495 = vst.msk [vmem:[#allocation2 + $0xa0] sm:$0xf] %vm453, 0
        %496 = vst.msk [vmem:[#allocation2 + $0xa4] sm:$0x1] %vm456, 0
        %497 = vst.msk [vmem:[#allocation2 + $0xa8] sm:$0xf] %vm453, 0
        %498 = vst.msk [vmem:[#allocation2 + $0xac] sm:$0xf] %vm453, 0
        %499 = vst.msk [vmem:[#allocation2 + $0xb0] sm:$0x1] %vm456, 0
        %500 = vst.msk [vmem:[#allocation2 + $0xb4] sm:$0xf] %vm453, 0
        %501 = vst.msk [vmem:[#allocation2 + $0xb8] sm:$0xf] %vm453, 0
        %502 = vst.msk [vmem:[#allocation2 + $0xbc] sm:$0x1] %vm456, 0
        %503 = vst.msk [vmem:[#allocation2 + $0xc0] sm:$0xf] %vm453, 0
        %504 = vst.msk [vmem:[#allocation2 + $0xc4] sm:$0xf] %vm453, 0
        %505 = vst.msk [vmem:[#allocation2 + $0xc8] sm:$0x1] %vm456, 0
        %506 = vst.msk [vmem:[#allocation2 + $0xcc] sm:$0xf] %vm453, 0
        %507 = vst.msk [vmem:[#allocation2 + $0xd0] sm:$0xf] %vm453, 0
        %508 = vst.msk [vmem:[#allocation2 + $0xd4] sm:$0x1] %vm456, 0
      $region44: #{generator_forward.7} parent=39 // pred_fallthru
        _
      %v525 = vunpack.c.l.b16 %v433
      %v526 = vunpack.c.h.b16 %v433
      %v527 = vunpack.c.l.b16 %v434
      %v528 = vunpack.c.h.b16 %v434
      %v529 = vunpack.c.l.b16 %v435
      %v530 = vunpack.c.h.b16 %v435
      %v531 = vunpack.c.l.b16 %v436
      %v532 = vunpack.c.h.b16 %v436
      %v533 = vunpack.c.l.b16 %v437
      %v534 = vunpack.c.h.b16 %v437
      %v535 = vunpack.c.l.b16 %v438
      %v536 = vunpack.c.h.b16 %v438
      %v537 = vunpack.c.l.b16 %v439
      %v538 = vunpack.c.h.b16 %v439
      %v539 = vunpack.c.l.b16 %v440
      %v540 = vunpack.c.h.b16 %v440
      %v541 = vunpack.c.l.b16 %v441
      %v542 = vunpack.c.h.b16 %v441
      %v543 = vunpack.c.l.b16 %v442
      %v544 = vunpack.c.h.b16 %v442
      %v545 = vunpack.c.l.b16 %v443
      %v546 = vunpack.c.h.b16 %v443
      %v547 = vunpack.c.l.b16 %v444
      %v548 = vunpack.c.h.b16 %v444
      %v549 = vunpack.c.l.b16 %v445
      %v550 = vunpack.c.h.b16 %v445
      %v551 = vunpack.c.l.b16 %v446
      %v552 = vunpack.c.h.b16 %v446
      %v553 = vunpack.c.l.b16 %v447
      %v554 = vunpack.c.h.b16 %v447
      %v555 = vunpack.c.l.b16 %v448
      %v556 = vunpack.c.h.b16 %v448
      %v557 = vpack.c.b16 %v525, %v525
      %v558 = vpack.c.b16 %v526, %v526
      %v559 = vpack.c.b16 %v527, %v527
      %v560 = vpack.c.b16 %v528, %v528
      %v561 = vpack.c.b16 %v529, %v529
      %v562 = vpack.c.b16 %v530, %v530
      %v563 = vpack.c.b16 %v531, %v531
      %v564 = vpack.c.b16 %v532, %v532
      %v565 = vpack.c.b16 %v533, %v533
      %v566 = vpack.c.b16 %v534, %v534
      %v567 = vpack.c.b16 %v535, %v535
      %v568 = vpack.c.b16 %v536, %v536
      %v569 = vpack.c.b16 %v537, %v537
      %v570 = vpack.c.b16 %v538, %v538
      %v571 = vpack.c.b16 %v539, %v539
      %v572 = vpack.c.b16 %v540, %v540
      %v573 = vpack.c.b16 %v541, %v541
      %v574 = vpack.c.b16 %v542, %v542
      %v575 = vpack.c.b16 %v543, %v543
      %v576 = vpack.c.b16 %v544, %v544
      %v577 = vpack.c.b16 %v545, %v545
      %v578 = vpack.c.b16 %v546, %v546
      %v579 = vpack.c.b16 %v547, %v547
      %v580 = vpack.c.b16 %v548, %v548
      %v581 = vpack.c.b16 %v549, %v549
      %v582 = vpack.c.b16 %v550, %v550
      %v583 = vpack.c.b16 %v551, %v551
      %v584 = vpack.c.b16 %v552, %v552
      %v585 = vpack.c.b16 %v553, %v553
      %v586 = vpack.c.b16 %v554, %v554
      %v587 = vpack.c.b16 %v555, %v555
      %v588 = vpack.c.b16 %v556, %v556
      %vm589 = vsmask.f32 256
      %vm590 = vsmask.f32 4368
      %vm591 = vmor %vm589, %vm590
      %v593 = vshrl.u32 %v557, 16
      %v595 = vrot.slane %v593, 7
      %v596 = vshll.u32 %v557, 16
      %v598 = vor.u32 %v595, %v596
      %v599 = vrot.slane %v595, 4
      %v601 = vshrl.u32 %v558, 16
      %v603 = vrot.slane %v601, 7
      %v604 = vshll.u32 %v558, 16
      %v606 = vor.u32 %v603, %v604
      %v607 = vsel %vm591, %v599, %v606
      %v608 = vrot.slane %v603, 4
      %v610 = vshrl.u32 %v559, 16
      %v612 = vrot.slane %v610, 7
      %v613 = vshll.u32 %v559, 16
      %v615 = vor.u32 %v612, %v613
      %v616 = vrot.slane %v612, 4
      %v618 = vshrl.u32 %v560, 16
      %v620 = vrot.slane %v618, 7
      %v621 = vshll.u32 %v560, 16
      %v623 = vor.u32 %v620, %v621
      %v624 = vsel %vm591, %v616, %v623
      %v625 = vrot.slane %v620, 4
      %v627 = vshrl.u32 %v561, 16
      %v629 = vrot.slane %v627, 7
      %v630 = vshll.u32 %v561, 16
      %v632 = vor.u32 %v629, %v630
      %v633 = vrot.slane %v629, 4
      %v635 = vshrl.u32 %v562, 16
      %v637 = vrot.slane %v635, 7
      %v638 = vshll.u32 %v562, 16
      %v640 = vor.u32 %v637, %v638
      %v641 = vsel %vm591, %v633, %v640
      %v642 = vrot.slane %v637, 4
      %v644 = vshrl.u32 %v563, 16
      %v646 = vrot.slane %v644, 7
      %v647 = vshll.u32 %v563, 16
      %v649 = vor.u32 %v646, %v647
      %v650 = vrot.slane %v646, 4
      %v652 = vshrl.u32 %v564, 16
      %v654 = vrot.slane %v652, 7
      %v655 = vshll.u32 %v564, 16
      %v657 = vor.u32 %v654, %v655
      %v658 = vsel %vm591, %v650, %v657
      %v659 = vrot.slane %v654, 4
      %v661 = vshrl.u32 %v565, 16
      %v663 = vrot.slane %v661, 7
      %v664 = vshll.u32 %v565, 16
      %v666 = vor.u32 %v663, %v664
      %v667 = vrot.slane %v663, 4
      %v669 = vshrl.u32 %v566, 16
      %v671 = vrot.slane %v669, 7
      %v672 = vshll.u32 %v566, 16
      %v674 = vor.u32 %v671, %v672
      %v675 = vsel %vm591, %v667, %v674
      %v676 = vrot.slane %v671, 4
      %v678 = vshrl.u32 %v567, 16
      %v680 = vrot.slane %v678, 7
      %v681 = vshll.u32 %v567, 16
      %v683 = vor.u32 %v680, %v681
      %v684 = vrot.slane %v680, 4
      %v686 = vshrl.u32 %v568, 16
      %v688 = vrot.slane %v686, 7
      %v689 = vshll.u32 %v568, 16
      %v691 = vor.u32 %v688, %v689
      %v692 = vsel %vm591, %v684, %v691
      %v693 = vrot.slane %v688, 4
      %v695 = vshrl.u32 %v569, 16
      %v697 = vrot.slane %v695, 7
      %v698 = vshll.u32 %v569, 16
      %v700 = vor.u32 %v697, %v698
      %v701 = vrot.slane %v697, 4
      %v703 = vshrl.u32 %v570, 16
      %v705 = vrot.slane %v703, 7
      %v706 = vshll.u32 %v570, 16
      %v708 = vor.u32 %v705, %v706
      %v709 = vsel %vm591, %v701, %v708
      %v710 = vrot.slane %v705, 4
      %v712 = vshrl.u32 %v571, 16
      %v714 = vrot.slane %v712, 7
      %v715 = vshll.u32 %v571, 16
      %v717 = vor.u32 %v714, %v715
      %v718 = vrot.slane %v714, 4
      %v720 = vshrl.u32 %v572, 16
      %v722 = vrot.slane %v720, 7
      %v723 = vshll.u32 %v572, 16
      %v725 = vor.u32 %v722, %v723
      %v726 = vsel %vm591, %v718, %v725
      %v727 = vrot.slane %v722, 4
      %v729 = vshrl.u32 %v573, 16
      %v731 = vrot.slane %v729, 7
      %v732 = vshll.u32 %v573, 16
      %v734 = vor.u32 %v731, %v732
      %v735 = vrot.slane %v731, 4
      %v737 = vshrl.u32 %v574, 16
      %v739 = vrot.slane %v737, 7
      %v740 = vshll.u32 %v574, 16
      %v742 = vor.u32 %v739, %v740
      %v743 = vsel %vm591, %v735, %v742
      %v744 = vrot.slane %v739, 4
      %v746 = vshrl.u32 %v575, 16
      %v748 = vrot.slane %v746, 7
      %v749 = vshll.u32 %v575, 16
      %v751 = vor.u32 %v748, %v749
      %v752 = vrot.slane %v748, 4
      %v754 = vshrl.u32 %v576, 16
      %v756 = vrot.slane %v754, 7
      %v757 = vshll.u32 %v576, 16
      %v759 = vor.u32 %v756, %v757
      %v760 = vsel %vm591, %v752, %v759
      %v761 = vrot.slane %v756, 4
      %v763 = vshrl.u32 %v577, 16
      %v765 = vrot.slane %v763, 7
      %v766 = vshll.u32 %v577, 16
      %v768 = vor.u32 %v765, %v766
      %v769 = vrot.slane %v765, 4
      %v771 = vshrl.u32 %v578, 16
      %v773 = vrot.slane %v771, 7
      %v774 = vshll.u32 %v578, 16
      %v776 = vor.u32 %v773, %v774
      %v777 = vsel %vm591, %v769, %v776
      %v778 = vrot.slane %v773, 4
      %v780 = vshrl.u32 %v579, 16
      %v782 = vrot.slane %v780, 7
      %v783 = vshll.u32 %v579, 16
      %v785 = vor.u32 %v782, %v783
      %v786 = vrot.slane %v782, 4
      %v788 = vshrl.u32 %v580, 16
      %v790 = vrot.slane %v788, 7
      %v791 = vshll.u32 %v580, 16
      %v793 = vor.u32 %v790, %v791
      %v794 = vsel %vm591, %v786, %v793
      %v795 = vrot.slane %v790, 4
      %v797 = vshrl.u32 %v581, 16
      %v799 = vrot.slane %v797, 7
      %v800 = vshll.u32 %v581, 16
      %v802 = vor.u32 %v799, %v800
      %v803 = vrot.slane %v799, 4
      %v805 = vshrl.u32 %v582, 16
      %v807 = vrot.slane %v805, 7
      %v808 = vshll.u32 %v582, 16
      %v810 = vor.u32 %v807, %v808
      %v811 = vsel %vm591, %v803, %v810
      %v812 = vrot.slane %v807, 4
      %v814 = vshrl.u32 %v583, 16
      %v816 = vrot.slane %v814, 7
      %v817 = vshll.u32 %v583, 16
      %v819 = vor.u32 %v816, %v817
      %v820 = vrot.slane %v816, 4
      %v822 = vshrl.u32 %v584, 16
      %v824 = vrot.slane %v822, 7
      %v825 = vshll.u32 %v584, 16
      %v827 = vor.u32 %v824, %v825
      %v828 = vsel %vm591, %v820, %v827
      %v829 = vrot.slane %v824, 4
      %v831 = vshrl.u32 %v585, 16
      %v833 = vrot.slane %v831, 7
      %v834 = vshll.u32 %v585, 16
      %v836 = vor.u32 %v833, %v834
      %v837 = vrot.slane %v833, 4
      %v839 = vshrl.u32 %v586, 16
      %v841 = vrot.slane %v839, 7
      %v842 = vshll.u32 %v586, 16
      %v844 = vor.u32 %v841, %v842
      %v845 = vsel %vm591, %v837, %v844
      %v846 = vrot.slane %v841, 4
      %v848 = vshrl.u32 %v587, 16
      %v850 = vrot.slane %v848, 7
      %v851 = vshll.u32 %v587, 16
      %v853 = vor.u32 %v850, %v851
      %v854 = vrot.slane %v850, 4
      %v856 = vshrl.u32 %v588, 16
      %v858 = vrot.slane %v856, 7
      %v859 = vshll.u32 %v588, 16
      %v861 = vor.u32 %v858, %v859
      %v862 = vsel %vm591, %v854, %v861
      %v863 = vrot.slane %v858, 4
      %s912 = scalar_lea.vmem [#allocation2], 12
      %vm913 = vcmask 519168
      %vm914 = vsmask.f32 7938
      %vm915 = vmand %vm913, %vm914
      %v916 = vld [vmem:[%s912] sm:$0xf]
      %v917 = vsel %vm915, %v598, %v916
      %918 = vst [vmem:[%s912] sm:$0xf] %v917
      %vm919 = vcmask 519168
      %920 = vst.msk [vmem:[%s912 + $0x4] sm:$0xf] %vm919, %v607
      %vm921 = vcmask 516096
      %vm922 = vmand %vm921, %vm589
      %v923 = vld [vmem:[%s912 + $0x8] sm:$0x1]
      %v924 = vsel %vm922, %v608, %v923
      %925 = vst [vmem:[%s912 + $0x8] sm:$0x1] %v924
      %v926 = vld [vmem:[%s912 + $0xc] sm:$0xf]
      %v927 = vsel %vm915, %v615, %v926
      %928 = vst [vmem:[%s912 + $0xc] sm:$0xf] %v927
      %929 = vst.msk [vmem:[%s912 + $0x10] sm:$0xf] %vm919, %v624
      %v930 = vld [vmem:[%s912 + $0x14] sm:$0x1]
      %v931 = vsel %vm922, %v625, %v930
      %932 = vst [vmem:[%s912 + $0x14] sm:$0x1] %v931
      %v933 = vld [vmem:[%s912 + $0x18] sm:$0xf]
      %v934 = vsel %vm915, %v632, %v933
      %935 = vst [vmem:[%s912 + $0x18] sm:$0xf] %v934
      %936 = vst.msk [vmem:[%s912 + $0x1c] sm:$0xf] %vm919, %v641
      %v937 = vld [vmem:[%s912 + $0x20] sm:$0x1]
      %v938 = vsel %vm922, %v642, %v937
      %939 = vst [vmem:[%s912 + $0x20] sm:$0x1] %v938
      %v940 = vld [vmem:[%s912 + $0x24] sm:$0xf]
      %v941 = vsel %vm915, %v649, %v940
      %942 = vst [vmem:[%s912 + $0x24] sm:$0xf] %v941
      %943 = vst.msk [vmem:[%s912 + $0x28] sm:$0xf] %vm919, %v658
      %v944 = vld [vmem:[%s912 + $0x2c] sm:$0x1]
      %v945 = vsel %vm922, %v659, %v944
      %946 = vst [vmem:[%s912 + $0x2c] sm:$0x1] %v945
      %v947 = vld [vmem:[%s912 + $0x30] sm:$0xf]
      %v948 = vsel %vm915, %v666, %v947
      %949 = vst [vmem:[%s912 + $0x30] sm:$0xf] %v948
      %950 = vst.msk [vmem:[%s912 + $0x34] sm:$0xf] %vm919, %v675
      %v951 = vld [vmem:[%s912 + $0x38] sm:$0x1]
      %v952 = vsel %vm922, %v676, %v951
      %953 = vst [vmem:[%s912 + $0x38] sm:$0x1] %v952
      %v954 = vld [vmem:[%s912 + $0x3c] sm:$0xf]
      %v955 = vsel %vm915, %v683, %v954
      %956 = vst [vmem:[%s912 + $0x3c] sm:$0xf] %v955
      %957 = vst.msk [vmem:[%s912 + $0x40] sm:$0xf] %vm919, %v692
      %v958 = vld [vmem:[%s912 + $0x44] sm:$0x1]
      %v959 = vsel %vm922, %v693, %v958
      %960 = vst [vmem:[%s912 + $0x44] sm:$0x1] %v959
      %v961 = vld [vmem:[%s912 + $0x48] sm:$0xf]
      %v962 = vsel %vm915, %v700, %v961
      %963 = vst [vmem:[%s912 + $0x48] sm:$0xf] %v962
      %964 = vst.msk [vmem:[%s912 + $0x4c] sm:$0xf] %vm919, %v709
      %v965 = vld [vmem:[%s912 + $0x50] sm:$0x1]
      %v966 = vsel %vm922, %v710, %v965
      %967 = vst [vmem:[%s912 + $0x50] sm:$0x1] %v966
      %v968 = vld [vmem:[%s912 + $0x54] sm:$0xf]
      %v969 = vsel %vm915, %v717, %v968
      %970 = vst [vmem:[%s912 + $0x54] sm:$0xf] %v969
      %971 = vst.msk [vmem:[%s912 + $0x58] sm:$0xf] %vm919, %v726
      %v972 = vld [vmem:[%s912 + $0x5c] sm:$0x1]
      %v973 = vsel %vm922, %v727, %v972
      %974 = vst [vmem:[%s912 + $0x5c] sm:$0x1] %v973
      %v975 = vld [vmem:[%s912 + $0x60] sm:$0xf]
      %v976 = vsel %vm915, %v734, %v975
      %977 = vst [vmem:[%s912 + $0x60] sm:$0xf] %v976
      %978 = vst.msk [vmem:[%s912 + $0x64] sm:$0xf] %vm919, %v743
      %v979 = vld [vmem:[%s912 + $0x68] sm:$0x1]
      %v980 = vsel %vm922, %v744, %v979
      %981 = vst [vmem:[%s912 + $0x68] sm:$0x1] %v980
      %v982 = vld [vmem:[%s912 + $0x6c] sm:$0xf]
      %v983 = vsel %vm915, %v751, %v982
      %984 = vst [vmem:[%s912 + $0x6c] sm:$0xf] %v983
      %985 = vst.msk [vmem:[%s912 + $0x70] sm:$0xf] %vm919, %v760
      %v986 = vld [vmem:[%s912 + $0x74] sm:$0x1]
      %v987 = vsel %vm922, %v761, %v986
      %988 = vst [vmem:[%s912 + $0x74] sm:$0x1] %v987
      %v989 = vld [vmem:[%s912 + $0x78] sm:$0xf]
      %v990 = vsel %vm915, %v768, %v989
      %991 = vst [vmem:[%s912 + $0x78] sm:$0xf] %v990
      %992 = vst.msk [vmem:[%s912 + $0x7c] sm:$0xf] %vm919, %v777
      %v993 = vld [vmem:[%s912 + $0x80] sm:$0x1]
      %v994 = vsel %vm922, %v778, %v993
      %995 = vst [vmem:[%s912 + $0x80] sm:$0x1] %v994
      %v996 = vld [vmem:[%s912 + $0x84] sm:$0xf]
      %v997 = vsel %vm915, %v785, %v996
      %998 = vst [vmem:[%s912 + $0x84] sm:$0xf] %v997
      %999 = vst.msk [vmem:[%s912 + $0x88] sm:$0xf] %vm919, %v794
      %v1000 = vld [vmem:[%s912 + $0x8c] sm:$0x1]
      %v1001 = vsel %vm922, %v795, %v1000
      %1002 = vst [vmem:[%s912 + $0x8c] sm:$0x1] %v1001
      %v1003 = vld [vmem:[%s912 + $0x90] sm:$0xf]
      %v1004 = vsel %vm915, %v802, %v1003
      %1005 = vst [vmem:[%s912 + $0x90] sm:$0xf] %v1004
      %1006 = vst.msk [vmem:[%s912 + $0x94] sm:$0xf] %vm919, %v811
      %v1007 = vld [vmem:[%s912 + $0x98] sm:$0x1]
      %v1008 = vsel %vm922, %v812, %v1007
      %1009 = vst [vmem:[%s912 + $0x98] sm:$0x1] %v1008
      %v1010 = vld [vmem:[%s912 + $0x9c] sm:$0xf]
      %v1011 = vsel %vm915, %v819, %v1010
      %1012 = vst [vmem:[%s912 + $0x9c] sm:$0xf] %v1011
      %1013 = vst.msk [vmem:[%s912 + $0xa0] sm:$0xf] %vm919, %v828
      %v1014 = vld [vmem:[%s912 + $0xa4] sm:$0x1]
      %v1015 = vsel %vm922, %v829, %v1014
      %1016 = vst [vmem:[%s912 + $0xa4] sm:$0x1] %v1015
      %v1017 = vld [vmem:[%s912 + $0xa8] sm:$0xf]
      %v1018 = vsel %vm915, %v836, %v1017
      %1019 = vst [vmem:[%s912 + $0xa8] sm:$0xf] %v1018
      %1020 = vst.msk [vmem:[%s912 + $0xac] sm:$0xf] %vm919, %v845
      %v1021 = vld [vmem:[%s912 + $0xb0] sm:$0x1]
      %v1022 = vsel %vm922, %v846, %v1021
      %1023 = vst [vmem:[%s912 + $0xb0] sm:$0x1] %v1022
      %v1024 = vld [vmem:[%s912 + $0xb4] sm:$0xf]
      %v1025 = vsel %vm915, %v853, %v1024
      %1026 = vst [vmem:[%s912 + $0xb4] sm:$0xf] %v1025
      %1027 = vst.msk [vmem:[%s912 + $0xb8] sm:$0xf] %vm919, %v862
      %v1028 = vld [vmem:[%s912 + $0xbc] sm:$0x1]
      %v1029 = vsel %vm922, %v863, %v1028
      %1030 = vst [vmem:[%s912 + $0xbc] sm:$0x1] %v1029
      %v1031 = vld [vmem:[#allocation2] sm:$0xf]
      %v1032 = vld [vmem:[#allocation2 + $0x4] sm:$0xf]
      %v1033 = vld [vmem:[#allocation2 + $0x8] sm:$0x1]
      %v1034 = vld [vmem:[#allocation2 + $0xc] sm:$0xf]
      %v1035 = vld [vmem:[#allocation2 + $0x10] sm:$0xf]
      %v1036 = vld [vmem:[#allocation2 + $0x14] sm:$0x1]
      %v1037 = vld [vmem:[#allocation2 + $0x18] sm:$0xf]
      %v1038 = vld [vmem:[#allocation2 + $0x1c] sm:$0xf]
      %v1039 = vld [vmem:[#allocation2 + $0x20] sm:$0x1]
      %v1040 = vld [vmem:[#allocation2 + $0x24] sm:$0xf]
      %v1041 = vld [vmem:[#allocation2 + $0x28] sm:$0xf]
      %v1042 = vld [vmem:[#allocation2 + $0x2c] sm:$0x1]
      %v1043 = vld [vmem:[#allocation2 + $0x30] sm:$0xf]
      %v1044 = vld [vmem:[#allocation2 + $0x34] sm:$0xf]
      %v1045 = vld [vmem:[#allocation2 + $0x38] sm:$0x1]
      %v1046 = vld [vmem:[#allocation2 + $0x3c] sm:$0xf]
      %v1047 = vld [vmem:[#allocation2 + $0x40] sm:$0xf]
      %v1048 = vld [vmem:[#allocation2 + $0x44] sm:$0x1]
      %v1049 = vld [vmem:[#allocation2 + $0x48] sm:$0xf]
      %v1050 = vld [vmem:[#allocation2 + $0x4c] sm:$0xf]
      %v1051 = vld [vmem:[#allocation2 + $0x50] sm:$0x1]
      %v1052 = vld [vmem:[#allocation2 + $0x54] sm:$0xf]
      %v1053 = vld [vmem:[#allocation2 + $0x58] sm:$0xf]
      %v1054 = vld [vmem:[#allocation2 + $0x5c] sm:$0x1]
      %v1055 = vld [vmem:[#allocation2 + $0x60] sm:$0xf]
      %v1056 = vld [vmem:[#allocation2 + $0x64] sm:$0xf]
      %v1057 = vld [vmem:[#allocation2 + $0x68] sm:$0x1]
      %v1058 = vld [vmem:[#allocation2 + $0x6c] sm:$0xf]
      %v1059 = vld [vmem:[#allocation2 + $0x70] sm:$0xf]
      %v1060 = vld [vmem:[#allocation2 + $0x74] sm:$0x1]
      %v1061 = vld [vmem:[#allocation2 + $0x78] sm:$0xf]
      %v1062 = vld [vmem:[#allocation2 + $0x7c] sm:$0xf]
      %v1063 = vld [vmem:[#allocation2 + $0x80] sm:$0x1]
      %v1064 = vld [vmem:[#allocation2 + $0x84] sm:$0xf]
      %v1065 = vld [vmem:[#allocation2 + $0x88] sm:$0xf]
      %v1066 = vld [vmem:[#allocation2 + $0x8c] sm:$0x1]
      %v1067 = vld [vmem:[#allocation2 + $0x90] sm:$0xf]
      %v1068 = vld [vmem:[#allocation2 + $0x94] sm:$0xf]
      %v1069 = vld [vmem:[#allocation2 + $0x98] sm:$0x1]
      %v1070 = vld [vmem:[#allocation2 + $0x9c] sm:$0xf]
      %v1071 = vld [vmem:[#allocation2 + $0xa0] sm:$0xf]
      %v1072 = vld [vmem:[#allocation2 + $0xa4] sm:$0x1]
      %v1073 = vld [vmem:[#allocation2 + $0xa8] sm:$0xf]
      %v1074 = vld [vmem:[#allocation2 + $0xac] sm:$0xf]
      %v1075 = vld [vmem:[#allocation2 + $0xb0] sm:$0x1]
      %v1076 = vld [vmem:[#allocation2 + $0xb4] sm:$0xf]
      %v1077 = vld [vmem:[#allocation2 + $0xb8] sm:$0xf]
      %v1078 = vld [vmem:[#allocation2 + $0xbc] sm:$0x1]
      %v1111 = vunpack.c.l.b16 %v1031
      %v1112 = vunpack.c.l.b16 %v1032
      %v1113 = vunpack.c.l.b16 %v1034
      %v1114 = vunpack.c.l.b16 %v1035
      %v1115 = vunpack.c.l.b16 %v1037
      %v1116 = vunpack.c.l.b16 %v1038
      %v1117 = vunpack.c.l.b16 %v1040
      %v1118 = vunpack.c.l.b16 %v1041
      %v1119 = vunpack.c.l.b16 %v1043
      %v1120 = vunpack.c.l.b16 %v1044
      %v1121 = vunpack.c.l.b16 %v1046
      %v1122 = vunpack.c.l.b16 %v1047
      %v1123 = vunpack.c.l.b16 %v1049
      %v1124 = vunpack.c.l.b16 %v1050
      %v1125 = vunpack.c.l.b16 %v1052
      %v1126 = vunpack.c.l.b16 %v1053
      %v1127 = vunpack.c.l.b16 %v1055
      %v1128 = vunpack.c.l.b16 %v1056
      %v1129 = vunpack.c.l.b16 %v1058
      %v1130 = vunpack.c.l.b16 %v1059
      %v1131 = vunpack.c.l.b16 %v1061
      %v1132 = vunpack.c.l.b16 %v1062
      %v1133 = vunpack.c.l.b16 %v1064
      %v1134 = vunpack.c.l.b16 %v1065
      %v1135 = vunpack.c.l.b16 %v1067
      %v1136 = vunpack.c.l.b16 %v1068
      %v1137 = vunpack.c.l.b16 %v1070
      %v1138 = vunpack.c.l.b16 %v1071
      %v1139 = vunpack.c.l.b16 %v1073
      %v1140 = vunpack.c.l.b16 %v1074
      %v1141 = vunpack.c.l.b16 %v1076
      %v1142 = vunpack.c.l.b16 %v1077
      %v1143 = vpack.c.b16 %v1112, %v1111
      %v1144 = vpack.c.b16 %v1114, %v1113
      %v1145 = vpack.c.b16 %v1116, %v1115
      %v1146 = vpack.c.b16 %v1118, %v1117
      %v1147 = vpack.c.b16 %v1120, %v1119
      %v1148 = vpack.c.b16 %v1122, %v1121
      %v1149 = vpack.c.b16 %v1124, %v1123
      %v1150 = vpack.c.b16 %v1126, %v1125
      %v1151 = vpack.c.b16 %v1128, %v1127
      %v1152 = vpack.c.b16 %v1130, %v1129
      %v1153 = vpack.c.b16 %v1132, %v1131
      %v1154 = vpack.c.b16 %v1134, %v1133
      %v1155 = vpack.c.b16 %v1136, %v1135
      %v1156 = vpack.c.b16 %v1138, %v1137
      %v1157 = vpack.c.b16 %v1140, %v1139
      %v1158 = vpack.c.b16 %v1142, %v1141
      %v1175 = vunpack.c.l.b16 %v1033
      %v1176 = vunpack.c.l.b16 %v1036
      %v1177 = vunpack.c.l.b16 %v1039
      %v1178 = vunpack.c.l.b16 %v1042
      %v1179 = vunpack.c.l.b16 %v1045
      %v1180 = vunpack.c.l.b16 %v1048
      %v1181 = vunpack.c.l.b16 %v1051
      %v1182 = vunpack.c.l.b16 %v1054
      %v1183 = vunpack.c.l.b16 %v1057
      %v1184 = vunpack.c.l.b16 %v1060
      %v1185 = vunpack.c.l.b16 %v1063
      %v1186 = vunpack.c.l.b16 %v1066
      %v1187 = vunpack.c.l.b16 %v1069
      %v1188 = vunpack.c.l.b16 %v1072
      %v1189 = vunpack.c.l.b16 %v1075
      %v1190 = vunpack.c.l.b16 %v1078
      %v1191 = vpack.c.b16 %v1175, %v1175
      %v1192 = vpack.c.b16 %v1176, %v1176
      %v1193 = vpack.c.b16 %v1177, %v1177
      %v1194 = vpack.c.b16 %v1178, %v1178
      %v1195 = vpack.c.b16 %v1179, %v1179
      %v1196 = vpack.c.b16 %v1180, %v1180
      %v1197 = vpack.c.b16 %v1181, %v1181
      %v1198 = vpack.c.b16 %v1182, %v1182
      %v1199 = vpack.c.b16 %v1183, %v1183
      %v1200 = vpack.c.b16 %v1184, %v1184
      %v1201 = vpack.c.b16 %v1185, %v1185
      %v1202 = vpack.c.b16 %v1186, %v1186
      %v1203 = vpack.c.b16 %v1187, %v1187
      %v1204 = vpack.c.b16 %v1188, %v1188
      %v1205 = vpack.c.b16 %v1189, %v1189
      %v1206 = vpack.c.b16 %v1190, %v1190
      %vm1207 = vsmask.f32 7424
      %v1209 = vshrl.u32 %v1143, 16
      %v1211 = vshll.u32 %v1143, 16
      %v1213 = vrot.slane %v1211, 1
      %v1214 = vor.u32 %v1209, %v1213
      %v1216 = vshll.u32 %v1191, 16
      %v1218 = vrot.slane %v1216, 1
      %v1219 = vsel %vm1207, %v1214, %v1218
      %v1221 = vshrl.u32 %v1144, 16
      %v1223 = vshll.u32 %v1144, 16
      %v1225 = vrot.slane %v1223, 1
      %v1226 = vor.u32 %v1221, %v1225
      %v1228 = vshll.u32 %v1192, 16
      %v1230 = vrot.slane %v1228, 1
      %v1231 = vsel %vm1207, %v1226, %v1230
      %v1233 = vshrl.u32 %v1145, 16
      %v1235 = vshll.u32 %v1145, 16
      %v1237 = vrot.slane %v1235, 1
      %v1238 = vor.u32 %v1233, %v1237
      %v1240 = vshll.u32 %v1193, 16
      %v1242 = vrot.slane %v1240, 1
      %v1243 = vsel %vm1207, %v1238, %v1242
      %v1245 = vshrl.u32 %v1146, 16
      %v1247 = vshll.u32 %v1146, 16
      %v1249 = vrot.slane %v1247, 1
      %v1250 = vor.u32 %v1245, %v1249
      %v1252 = vshll.u32 %v1194, 16
      %v1254 = vrot.slane %v1252, 1
      %v1255 = vsel %vm1207, %v1250, %v1254
      %v1257 = vshrl.u32 %v1147, 16
      %v1259 = vshll.u32 %v1147, 16
      %v1261 = vrot.slane %v1259, 1
      %v1262 = vor.u32 %v1257, %v1261
      %v1264 = vshll.u32 %v1195, 16
      %v1266 = vrot.slane %v1264, 1
      %v1267 = vsel %vm1207, %v1262, %v1266
      %v1269 = vshrl.u32 %v1148, 16
      %v1271 = vshll.u32 %v1148, 16
      %v1273 = vrot.slane %v1271, 1
      %v1274 = vor.u32 %v1269, %v1273
      %v1276 = vshll.u32 %v1196, 16
      %v1278 = vrot.slane %v1276, 1
      %v1279 = vsel %vm1207, %v1274, %v1278
      %v1281 = vshrl.u32 %v1149, 16
      %v1283 = vshll.u32 %v1149, 16
      %v1285 = vrot.slane %v1283, 1
      %v1286 = vor.u32 %v1281, %v1285
      %v1288 = vshll.u32 %v1197, 16
      %v1290 = vrot.slane %v1288, 1
      %v1291 = vsel %vm1207, %v1286, %v1290
      %v1293 = vshrl.u32 %v1150, 16
      %v1295 = vshll.u32 %v1150, 16
      %v1297 = vrot.slane %v1295, 1
      %v1298 = vor.u32 %v1293, %v1297
      %v1300 = vshll.u32 %v1198, 16
      %v1302 = vrot.slane %v1300, 1
      %v1303 = vsel %vm1207, %v1298, %v1302
      %v1305 = vshrl.u32 %v1151, 16
      %v1307 = vshll.u32 %v1151, 16
      %v1309 = vrot.slane %v1307, 1
      %v1310 = vor.u32 %v1305, %v1309
      %v1312 = vshll.u32 %v1199, 16
      %v1314 = vrot.slane %v1312, 1
      %v1315 = vsel %vm1207, %v1310, %v1314
      %v1317 = vshrl.u32 %v1152, 16
      %v1319 = vshll.u32 %v1152, 16
      %v1321 = vrot.slane %v1319, 1
      %v1322 = vor.u32 %v1317, %v1321
      %v1324 = vshll.u32 %v1200, 16
      %v1326 = vrot.slane %v1324, 1
      %v1327 = vsel %vm1207, %v1322, %v1326
      %v1329 = vshrl.u32 %v1153, 16
      %v1331 = vshll.u32 %v1153, 16
      %v1333 = vrot.slane %v1331, 1
      %v1334 = vor.u32 %v1329, %v1333
      %v1336 = vshll.u32 %v1201, 16
      %v1338 = vrot.slane %v1336, 1
      %v1339 = vsel %vm1207, %v1334, %v1338
      %v1341 = vshrl.u32 %v1154, 16
      %v1343 = vshll.u32 %v1154, 16
      %v1345 = vrot.slane %v1343, 1
      %v1346 = vor.u32 %v1341, %v1345
      %v1348 = vshll.u32 %v1202, 16
      %v1350 = vrot.slane %v1348, 1
      %v1351 = vsel %vm1207, %v1346, %v1350
      %v1353 = vshrl.u32 %v1155, 16
      %v1355 = vshll.u32 %v1155, 16
      %v1357 = vrot.slane %v1355, 1
      %v1358 = vor.u32 %v1353, %v1357
      %v1360 = vshll.u32 %v1203, 16
      %v1362 = vrot.slane %v1360, 1
      %v1363 = vsel %vm1207, %v1358, %v1362
      %v1365 = vshrl.u32 %v1156, 16
      %v1367 = vshll.u32 %v1156, 16
      %v1369 = vrot.slane %v1367, 1
      %v1370 = vor.u32 %v1365, %v1369
      %v1372 = vshll.u32 %v1204, 16
      %v1374 = vrot.slane %v1372, 1
      %v1375 = vsel %vm1207, %v1370, %v1374
      %v1377 = vshrl.u32 %v1157, 16
      %v1379 = vshll.u32 %v1157, 16
      %v1381 = vrot.slane %v1379, 1
      %v1382 = vor.u32 %v1377, %v1381
      %v1384 = vshll.u32 %v1205, 16
      %v1386 = vrot.slane %v1384, 1
      %v1387 = vsel %vm1207, %v1382, %v1386
      %v1389 = vshrl.u32 %v1158, 16
      %v1391 = vshll.u32 %v1158, 16
      %v1393 = vrot.slane %v1391, 1
      %v1394 = vor.u32 %v1389, %v1393
      %v1396 = vshll.u32 %v1206, 16
      %v1398 = vrot.slane %v1396, 1
      %v1399 = vsel %vm1207, %v1394, %v1398
      %1400 = vrot.lane.b32.xlu0 %v1219, 64
      %v1401 = vpop.permute.xlu0 %1400
      %1402 = vrot.lane.b32.xlu0 %v1231, 64
      %v1403 = vpop.permute.xlu0 %1402
      %1404 = vrot.lane.b32.xlu0 %v1243, 64
      %v1405 = vpop.permute.xlu0 %1404
      %1406 = vrot.lane.b32.xlu0 %v1255, 64
      %v1407 = vpop.permute.xlu0 %1406
      %1408 = vrot.lane.b32.xlu0 %v1267, 64
      %v1409 = vpop.permute.xlu0 %1408
      %1410 = vrot.lane.b32.xlu0 %v1279, 64
      %v1411 = vpop.permute.xlu0 %1410
      %1412 = vrot.lane.b32.xlu0 %v1291, 64
      %v1413 = vpop.permute.xlu0 %1412
      %1414 = vrot.lane.b32.xlu0 %v1303, 64
      %v1415 = vpop.permute.xlu0 %1414
      %1416 = vrot.lane.b32.xlu0 %v1315, 64
      %v1417 = vpop.permute.xlu0 %1416
      %1418 = vrot.lane.b32.xlu0 %v1327, 64
      %v1419 = vpop.permute.xlu0 %1418
      %1420 = vrot.lane.b32.xlu0 %v1339, 64
      %v1421 = vpop.permute.xlu0 %1420
      %1422 = vrot.lane.b32.xlu0 %v1351, 64
      %v1423 = vpop.permute.xlu0 %1422
      %1424 = vrot.lane.b32.xlu0 %v1363, 64
      %v1425 = vpop.permute.xlu0 %1424
      %1426 = vrot.lane.b32.xlu0 %v1375, 64
      %v1427 = vpop.permute.xlu0 %1426
      %1428 = vrot.lane.b32.xlu0 %v1387, 64
      %v1429 = vpop.permute.xlu0 %1428
      %1430 = vrot.lane.b32.xlu0 %v1399, 64
      %v1431 = vpop.permute.xlu0 %1430
      %vm1432 = vcmask 1046528
      %v1433 = vrot.slane %v1143, 1
      %v1434 = vrot.slane %v1191, 1
      %v1435 = vsel %vm1432, %v1433, %v1434
      %v1436 = vrot.slane %v1144, 1
      %v1437 = vrot.slane %v1192, 1
      %v1438 = vsel %vm1432, %v1436, %v1437
      %v1439 = vrot.slane %v1145, 1
      %v1440 = vrot.slane %v1193, 1
      %v1441 = vsel %vm1432, %v1439, %v1440
      %v1442 = vrot.slane %v1146, 1
      %v1443 = vrot.slane %v1194, 1
      %v1444 = vsel %vm1432, %v1442, %v1443
      %v1445 = vrot.slane %v1147, 1
      %v1446 = vrot.slane %v1195, 1
      %v1447 = vsel %vm1432, %v1445, %v1446
      %v1448 = vrot.slane %v1148, 1
      %v1449 = vrot.slane %v1196, 1
      %v1450 = vsel %vm1432, %v1448, %v1449
      %v1451 = vrot.slane %v1149, 1
      %v1452 = vrot.slane %v1197, 1
      %v1453 = vsel %vm1432, %v1451, %v1452
      %v1454 = vrot.slane %v1150, 1
      %v1455 = vrot.slane %v1198, 1
      %v1456 = vsel %vm1432, %v1454, %v1455
      %v1457 = vrot.slane %v1151, 1
      %v1458 = vrot.slane %v1199, 1
      %v1459 = vsel %vm1432, %v1457, %v1458
      %v1460 = vrot.slane %v1152, 1
      %v1461 = vrot.slane %v1200, 1
      %v1462 = vsel %vm1432, %v1460, %v1461
      %v1463 = vrot.slane %v1153, 1
      %v1464 = vrot.slane %v1201, 1
      %v1465 = vsel %vm1432, %v1463, %v1464
      %v1466 = vrot.slane %v1154, 1
      %v1467 = vrot.slane %v1202, 1
      %v1468 = vsel %vm1432, %v1466, %v1467
      %v1469 = vrot.slane %v1155, 1
      %v1470 = vrot.slane %v1203, 1
      %v1471 = vsel %vm1432, %v1469, %v1470
      %v1472 = vrot.slane %v1156, 1
      %v1473 = vrot.slane %v1204, 1
      %v1474 = vsel %vm1432, %v1472, %v1473
      %v1475 = vrot.slane %v1157, 1
      %v1476 = vrot.slane %v1205, 1
      %v1477 = vsel %vm1432, %v1475, %v1476
      %v1478 = vrot.slane %v1158, 1
      %v1479 = vrot.slane %v1206, 1
      %v1480 = vsel %vm1432, %v1478, %v1479
      %vm1481 = vcmask 523264
      %v1483 = vsel %vm1481, %v1143, %v1401
      %v1486 = vsel %vm1481, %v1144, %v1403
      %v1489 = vsel %vm1481, %v1145, %v1405
      %v1492 = vsel %vm1481, %v1146, %v1407
      %v1495 = vsel %vm1481, %v1147, %v1409
      %v1498 = vsel %vm1481, %v1148, %v1411
      %v1501 = vsel %vm1481, %v1149, %v1413
      %v1504 = vsel %vm1481, %v1150, %v1415
      %v1507 = vsel %vm1481, %v1151, %v1417
      %v1510 = vsel %vm1481, %v1152, %v1419
      %v1513 = vsel %vm1481, %v1153, %v1421
      %v1516 = vsel %vm1481, %v1154, %v1423
      %v1519 = vsel %vm1481, %v1155, %v1425
      %v1522 = vsel %vm1481, %v1156, %v1427
      %v1525 = vsel %vm1481, %v1157, %v1429
      %v1528 = vsel %vm1481, %v1158, %v1431
      %v1530 = vld [vmem:[%s3] sm:$0xf]
      %v1531 = vld [vmem:[%s3 + $0x4] sm:$0xf]
      %v1532 = vld [vmem:[%s3 + $0x8] sm:$0xf]
      %v1533 = vld [vmem:[%s3 + $0xc] sm:$0xf]
      %v1534 = vld [vmem:[%s3 + $0x10] sm:$0xf]
      %v1535 = vld [vmem:[%s3 + $0x14] sm:$0xf]
      %v1536 = vld [vmem:[%s3 + $0x18] sm:$0xf]
      %v1537 = vld [vmem:[%s3 + $0x1c] sm:$0xf]
      %v1538 = vld [vmem:[%s3 + $0x20] sm:$0xf]
      %v1539 = vld [vmem:[%s3 + $0x24] sm:$0xf]
      %v1540 = vld [vmem:[%s3 + $0x28] sm:$0xf]
      %v1541 = vld [vmem:[%s3 + $0x2c] sm:$0xf]
      %v1542 = vld [vmem:[%s3 + $0x30] sm:$0xf]
      %v1543 = vld [vmem:[%s3 + $0x34] sm:$0xf]
      %v1544 = vld [vmem:[%s3 + $0x38] sm:$0xf]
      %v1545 = vld [vmem:[%s3 + $0x3c] sm:$0xf]
      %v1546 = vld [vmem:[%s3 + $0x40] sm:$0xf]
      %v1547 = vld [vmem:[%s3 + $0x44] sm:$0xf]
      %v1548 = vld [vmem:[%s3 + $0x48] sm:$0xf]
      %v1549 = vld [vmem:[%s3 + $0x4c] sm:$0xf]
      %v1550 = vld [vmem:[%s3 + $0x50] sm:$0xf]
      %v1551 = vld [vmem:[%s3 + $0x54] sm:$0xf]
      %v1552 = vld [vmem:[%s3 + $0x58] sm:$0xf]
      %v1553 = vld [vmem:[%s3 + $0x5c] sm:$0xf]
      %v1554 = vld [vmem:[%s912] sm:$0xf]
      %v1555 = vld [vmem:[%s912 + $0x4] sm:$0xf]
      %v1556 = vld [vmem:[%s912 + $0x8] sm:$0x1]
      %v1557 = vld [vmem:[%s912 + $0xc] sm:$0xf]
      %v1558 = vld [vmem:[%s912 + $0x10] sm:$0xf]
      %v1559 = vld [vmem:[%s912 + $0x14] sm:$0x1]
      %v1560 = vld [vmem:[%s912 + $0x18] sm:$0xf]
      %v1561 = vld [vmem:[%s912 + $0x1c] sm:$0xf]
      %v1562 = vld [vmem:[%s912 + $0x20] sm:$0x1]
      %v1563 = vld [vmem:[%s912 + $0x24] sm:$0xf]
      %v1564 = vld [vmem:[%s912 + $0x28] sm:$0xf]
      %v1565 = vld [vmem:[%s912 + $0x2c] sm:$0x1]
      %v1566 = vld [vmem:[%s912 + $0x30] sm:$0xf]
      %v1567 = vld [vmem:[%s912 + $0x34] sm:$0xf]
      %v1568 = vld [vmem:[%s912 + $0x38] sm:$0x1]
      %v1569 = vld [vmem:[%s912 + $0x3c] sm:$0xf]
      %v1570 = vld [vmem:[%s912 + $0x40] sm:$0xf]
      %v1571 = vld [vmem:[%s912 + $0x44] sm:$0x1]
      %v1572 = vld [vmem:[%s912 + $0x48] sm:$0xf]
      %v1573 = vld [vmem:[%s912 + $0x4c] sm:$0xf]
      %v1574 = vld [vmem:[%s912 + $0x50] sm:$0x1]
      %v1575 = vld [vmem:[%s912 + $0x54] sm:$0xf]
      %v1576 = vld [vmem:[%s912 + $0x58] sm:$0xf]
      %v1577 = vld [vmem:[%s912 + $0x5c] sm:$0x1]
      %v1578 = vld [vmem:[%s912 + $0x60] sm:$0xf]
      %v1579 = vld [vmem:[%s912 + $0x64] sm:$0xf]
      %v1580 = vld [vmem:[%s912 + $0x68] sm:$0x1]
      %v1581 = vld [vmem:[%s912 + $0x6c] sm:$0xf]
      %v1582 = vld [vmem:[%s912 + $0x70] sm:$0xf]
      %v1583 = vld [vmem:[%s912 + $0x74] sm:$0x1]
      %v1584 = vld [vmem:[%s912 + $0x78] sm:$0xf]
      %v1585 = vld [vmem:[%s912 + $0x7c] sm:$0xf]
      %v1586 = vld [vmem:[%s912 + $0x80] sm:$0x1]
      %v1587 = vld [vmem:[%s912 + $0x84] sm:$0xf]
      %v1588 = vld [vmem:[%s912 + $0x88] sm:$0xf]
      %v1589 = vld [vmem:[%s912 + $0x8c] sm:$0x1]
      %v1590 = vld [vmem:[%s912 + $0x90] sm:$0xf]
      %v1591 = vld [vmem:[%s912 + $0x94] sm:$0xf]
      %v1592 = vld [vmem:[%s912 + $0x98] sm:$0x1]
      %v1593 = vld [vmem:[%s912 + $0x9c] sm:$0xf]
      %v1594 = vld [vmem:[%s912 + $0xa0] sm:$0xf]
      %v1595 = vld [vmem:[%s912 + $0xa4] sm:$0x1]
      %v1596 = vld [vmem:[%s912 + $0xa8] sm:$0xf]
      %v1597 = vld [vmem:[%s912 + $0xac] sm:$0xf]
      %v1598 = vld [vmem:[%s912 + $0xb0] sm:$0x1]
      %v1599 = vld [vmem:[%s912 + $0xb4] sm:$0xf]
      %v1600 = vld [vmem:[%s912 + $0xb8] sm:$0xf]
      %v1601 = vld [vmem:[%s912 + $0xbc] sm:$0x1]
      %v1634 = vunpack.c.l.b16 %v1554
      %v1635 = vunpack.c.l.b16 %v1555
      %v1636 = vunpack.c.l.b16 %v1557
      %v1637 = vunpack.c.l.b16 %v1558
      %v1638 = vunpack.c.l.b16 %v1560
      %v1639 = vunpack.c.l.b16 %v1561
      %v1640 = vunpack.c.l.b16 %v1563
      %v1641 = vunpack.c.l.b16 %v1564
      %v1642 = vunpack.c.l.b16 %v1566
      %v1643 = vunpack.c.l.b16 %v1567
      %v1644 = vunpack.c.l.b16 %v1569
      %v1645 = vunpack.c.l.b16 %v1570
      %v1646 = vunpack.c.l.b16 %v1572
      %v1647 = vunpack.c.l.b16 %v1573
      %v1648 = vunpack.c.l.b16 %v1575
      %v1649 = vunpack.c.l.b16 %v1576
      %v1650 = vunpack.c.l.b16 %v1578
      %v1651 = vunpack.c.l.b16 %v1579
      %v1652 = vunpack.c.l.b16 %v1581
      %v1653 = vunpack.c.l.b16 %v1582
      %v1654 = vunpack.c.l.b16 %v1584
      %v1655 = vunpack.c.l.b16 %v1585
      %v1656 = vunpack.c.l.b16 %v1587
      %v1657 = vunpack.c.l.b16 %v1588
      %v1658 = vunpack.c.l.b16 %v1590
      %v1659 = vunpack.c.l.b16 %v1591
      %v1660 = vunpack.c.l.b16 %v1593
      %v1661 = vunpack.c.l.b16 %v1594
      %v1662 = vunpack.c.l.b16 %v1596
      %v1663 = vunpack.c.l.b16 %v1597
      %v1664 = vunpack.c.l.b16 %v1599
      %v1665 = vunpack.c.l.b16 %v1600
      %v1666 = vpack.c.b16 %v1635, %v1634
      %v1667 = vpack.c.b16 %v1637, %v1636
      %v1668 = vpack.c.b16 %v1639, %v1638
      %v1669 = vpack.c.b16 %v1641, %v1640
      %v1670 = vpack.c.b16 %v1643, %v1642
      %v1671 = vpack.c.b16 %v1645, %v1644
      %v1672 = vpack.c.b16 %v1647, %v1646
      %v1673 = vpack.c.b16 %v1649, %v1648
      %v1674 = vpack.c.b16 %v1651, %v1650
      %v1675 = vpack.c.b16 %v1653, %v1652
      %v1676 = vpack.c.b16 %v1655, %v1654
      %v1677 = vpack.c.b16 %v1657, %v1656
      %v1678 = vpack.c.b16 %v1659, %v1658
      %v1679 = vpack.c.b16 %v1661, %v1660
      %v1680 = vpack.c.b16 %v1663, %v1662
      %v1681 = vpack.c.b16 %v1665, %v1664
      %v1698 = vunpack.c.l.b16 %v1556
      %v1699 = vunpack.c.l.b16 %v1559
      %v1700 = vunpack.c.l.b16 %v1562
      %v1701 = vunpack.c.l.b16 %v1565
      %v1702 = vunpack.c.l.b16 %v1568
      %v1703 = vunpack.c.l.b16 %v1571
      %v1704 = vunpack.c.l.b16 %v1574
      %v1705 = vunpack.c.l.b16 %v1577
      %v1706 = vunpack.c.l.b16 %v1580
      %v1707 = vunpack.c.l.b16 %v1583
      %v1708 = vunpack.c.l.b16 %v1586
      %v1709 = vunpack.c.l.b16 %v1589
      %v1710 = vunpack.c.l.b16 %v1592
      %v1711 = vunpack.c.l.b16 %v1595
      %v1712 = vunpack.c.l.b16 %v1598
      %v1713 = vunpack.c.l.b16 %v1601
      %v1714 = vpack.c.b16 %v1698, %v1698
      %v1715 = vpack.c.b16 %v1699, %v1699
      %v1716 = vpack.c.b16 %v1700, %v1700
      %v1717 = vpack.c.b16 %v1701, %v1701
      %v1718 = vpack.c.b16 %v1702, %v1702
      %v1719 = vpack.c.b16 %v1703, %v1703
      %v1720 = vpack.c.b16 %v1704, %v1704
      %v1721 = vpack.c.b16 %v1705, %v1705
      %v1722 = vpack.c.b16 %v1706, %v1706
      %v1723 = vpack.c.b16 %v1707, %v1707
      %v1724 = vpack.c.b16 %v1708, %v1708
      %v1725 = vpack.c.b16 %v1709, %v1709
      %v1726 = vpack.c.b16 %v1710, %v1710
      %v1727 = vpack.c.b16 %v1711, %v1711
      %v1728 = vpack.c.b16 %v1712, %v1712
      %v1729 = vpack.c.b16 %v1713, %v1713
      %v1731 = vshrl.u32 %v1666, 16
      %v1733 = vshll.u32 %v1666, 16
      %v1735 = vrot.slane %v1733, 1
      %v1736 = vor.u32 %v1731, %v1735
      %v1738 = vshll.u32 %v1714, 16
      %v1740 = vrot.slane %v1738, 1
      %v1741 = vsel %vm1207, %v1736, %v1740
      %v1743 = vshrl.u32 %v1667, 16
      %v1745 = vshll.u32 %v1667, 16
      %v1747 = vrot.slane %v1745, 1
      %v1748 = vor.u32 %v1743, %v1747
      %v1750 = vshll.u32 %v1715, 16
      %v1752 = vrot.slane %v1750, 1
      %v1753 = vsel %vm1207, %v1748, %v1752
      %v1755 = vshrl.u32 %v1668, 16
      %v1757 = vshll.u32 %v1668, 16
      %v1759 = vrot.slane %v1757, 1
      %v1760 = vor.u32 %v1755, %v1759
      %v1762 = vshll.u32 %v1716, 16
      %v1764 = vrot.slane %v1762, 1
      %v1765 = vsel %vm1207, %v1760, %v1764
      %v1767 = vshrl.u32 %v1669, 16
      %v1769 = vshll.u32 %v1669, 16
      %v1771 = vrot.slane %v1769, 1
      %v1772 = vor.u32 %v1767, %v1771
      %v1774 = vshll.u32 %v1717, 16
      %v1776 = vrot.slane %v1774, 1
      %v1777 = vsel %vm1207, %v1772, %v1776
      %v1779 = vshrl.u32 %v1670, 16
      %v1781 = vshll.u32 %v1670, 16
      %v1783 = vrot.slane %v1781, 1
      %v1784 = vor.u32 %v1779, %v1783
      %v1786 = vshll.u32 %v1718, 16
      %v1788 = vrot.slane %v1786, 1
      %v1789 = vsel %vm1207, %v1784, %v1788
      %v1791 = vshrl.u32 %v1671, 16
      %v1793 = vshll.u32 %v1671, 16
      %v1795 = vrot.slane %v1793, 1
      %v1796 = vor.u32 %v1791, %v1795
      %v1798 = vshll.u32 %v1719, 16
      %v1800 = vrot.slane %v1798, 1
      %v1801 = vsel %vm1207, %v1796, %v1800
      %v1803 = vshrl.u32 %v1672, 16
      %v1805 = vshll.u32 %v1672, 16
      %v1807 = vrot.slane %v1805, 1
      %v1808 = vor.u32 %v1803, %v1807
      %v1810 = vshll.u32 %v1720, 16
      %v1812 = vrot.slane %v1810, 1
      %v1813 = vsel %vm1207, %v1808, %v1812
      %v1815 = vshrl.u32 %v1673, 16
      %v1817 = vshll.u32 %v1673, 16
      %v1819 = vrot.slane %v1817, 1
      %v1820 = vor.u32 %v1815, %v1819
      %v1822 = vshll.u32 %v1721, 16
      %v1824 = vrot.slane %v1822, 1
      %v1825 = vsel %vm1207, %v1820, %v1824
      %v1827 = vshrl.u32 %v1674, 16
      %v1829 = vshll.u32 %v1674, 16
      %v1831 = vrot.slane %v1829, 1
      %v1832 = vor.u32 %v1827, %v1831
      %v1834 = vshll.u32 %v1722, 16
      %v1836 = vrot.slane %v1834, 1
      %v1837 = vsel %vm1207, %v1832, %v1836
      %v1839 = vshrl.u32 %v1675, 16
      %v1841 = vshll.u32 %v1675, 16
      %v1843 = vrot.slane %v1841, 1
      %v1844 = vor.u32 %v1839, %v1843
      %v1846 = vshll.u32 %v1723, 16
      %v1848 = vrot.slane %v1846, 1
      %v1849 = vsel %vm1207, %v1844, %v1848
      %v1851 = vshrl.u32 %v1676, 16
      %v1853 = vshll.u32 %v1676, 16
      %v1855 = vrot.slane %v1853, 1
      %v1856 = vor.u32 %v1851, %v1855
      %v1858 = vshll.u32 %v1724, 16
      %v1860 = vrot.slane %v1858, 1
      %v1861 = vsel %vm1207, %v1856, %v1860
      %v1863 = vshrl.u32 %v1677, 16
      %v1865 = vshll.u32 %v1677, 16
      %v1867 = vrot.slane %v1865, 1
      %v1868 = vor.u32 %v1863, %v1867
      %v1870 = vshll.u32 %v1725, 16
      %v1872 = vrot.slane %v1870, 1
      %v1873 = vsel %vm1207, %v1868, %v1872
      %v1875 = vshrl.u32 %v1678, 16
      %v1877 = vshll.u32 %v1678, 16
      %v1879 = vrot.slane %v1877, 1
      %v1880 = vor.u32 %v1875, %v1879
      %v1882 = vshll.u32 %v1726, 16
      %v1884 = vrot.slane %v1882, 1
      %v1885 = vsel %vm1207, %v1880, %v1884
      %v1887 = vshrl.u32 %v1679, 16
      %v1889 = vshll.u32 %v1679, 16
      %v1891 = vrot.slane %v1889, 1
      %v1892 = vor.u32 %v1887, %v1891
      %v1894 = vshll.u32 %v1727, 16
      %v1896 = vrot.slane %v1894, 1
      %v1897 = vsel %vm1207, %v1892, %v1896
      %v1899 = vshrl.u32 %v1680, 16
      %v1901 = vshll.u32 %v1680, 16
      %v1903 = vrot.slane %v1901, 1
      %v1904 = vor.u32 %v1899, %v1903
      %v1906 = vshll.u32 %v1728, 16
      %v1908 = vrot.slane %v1906, 1
      %v1909 = vsel %vm1207, %v1904, %v1908
      %v1911 = vshrl.u32 %v1681, 16
      %v1913 = vshll.u32 %v1681, 16
      %v1915 = vrot.slane %v1913, 1
      %v1916 = vor.u32 %v1911, %v1915
      %v1918 = vshll.u32 %v1729, 16
      %v1920 = vrot.slane %v1918, 1
      %v1921 = vsel %vm1207, %v1916, %v1920
      %1922 = vrot.lane.b32.xlu0 %v1741, 64
      %v1923 = vpop.permute.xlu0 %1922
      %1924 = vrot.lane.b32.xlu0 %v1753, 64
      %v1925 = vpop.permute.xlu0 %1924
      %1926 = vrot.lane.b32.xlu0 %v1765, 64
      %v1927 = vpop.permute.xlu0 %1926
      %1928 = vrot.lane.b32.xlu0 %v1777, 64
      %v1929 = vpop.permute.xlu0 %1928
      %1930 = vrot.lane.b32.xlu0 %v1789, 64
      %v1931 = vpop.permute.xlu0 %1930
      %1932 = vrot.lane.b32.xlu0 %v1801, 64
      %v1933 = vpop.permute.xlu0 %1932
      %1934 = vrot.lane.b32.xlu0 %v1813, 64
      %v1935 = vpop.permute.xlu0 %1934
      %1936 = vrot.lane.b32.xlu0 %v1825, 64
      %v1937 = vpop.permute.xlu0 %1936
      %1938 = vrot.lane.b32.xlu0 %v1837, 64
      %v1939 = vpop.permute.xlu0 %1938
      %1940 = vrot.lane.b32.xlu0 %v1849, 64
      %v1941 = vpop.permute.xlu0 %1940
      %1942 = vrot.lane.b32.xlu0 %v1861, 64
      %v1943 = vpop.permute.xlu0 %1942
      %1944 = vrot.lane.b32.xlu0 %v1873, 64
      %v1945 = vpop.permute.xlu0 %1944
      %1946 = vrot.lane.b32.xlu0 %v1885, 64
      %v1947 = vpop.permute.xlu0 %1946
      %1948 = vrot.lane.b32.xlu0 %v1897, 64
      %v1949 = vpop.permute.xlu0 %1948
      %1950 = vrot.lane.b32.xlu0 %v1909, 64
      %v1951 = vpop.permute.xlu0 %1950
      %1952 = vrot.lane.b32.xlu0 %v1921, 64
      %v1953 = vpop.permute.xlu0 %1952
      %v1954 = vrot.slane %v1666, 1
      %v1955 = vrot.slane %v1714, 1
      %v1956 = vsel %vm1432, %v1954, %v1955
      %v1957 = vrot.slane %v1667, 1
      %v1958 = vrot.slane %v1715, 1
      %v1959 = vsel %vm1432, %v1957, %v1958
      %v1960 = vrot.slane %v1668, 1
      %v1961 = vrot.slane %v1716, 1
      %v1962 = vsel %vm1432, %v1960, %v1961
      %v1963 = vrot.slane %v1669, 1
      %v1964 = vrot.slane %v1717, 1
      %v1965 = vsel %vm1432, %v1963, %v1964
      %v1966 = vrot.slane %v1670, 1
      %v1967 = vrot.slane %v1718, 1
      %v1968 = vsel %vm1432, %v1966, %v1967
      %v1969 = vrot.slane %v1671, 1
      %v1970 = vrot.slane %v1719, 1
      %v1971 = vsel %vm1432, %v1969, %v1970
      %v1972 = vrot.slane %v1672, 1
      %v1973 = vrot.slane %v1720, 1
      %v1974 = vsel %vm1432, %v1972, %v1973
      %v1975 = vrot.slane %v1673, 1
      %v1976 = vrot.slane %v1721, 1
      %v1977 = vsel %vm1432, %v1975, %v1976
      %v1978 = vrot.slane %v1674, 1
      %v1979 = vrot.slane %v1722, 1
      %v1980 = vsel %vm1432, %v1978, %v1979
      %v1981 = vrot.slane %v1675, 1
      %v1982 = vrot.slane %v1723, 1
      %v1983 = vsel %vm1432, %v1981, %v1982
      %v1984 = vrot.slane %v1676, 1
      %v1985 = vrot.slane %v1724, 1
      %v1986 = vsel %vm1432, %v1984, %v1985
      %v1987 = vrot.slane %v1677, 1
      %v1988 = vrot.slane %v1725, 1
      %v1989 = vsel %vm1432, %v1987, %v1988
      %v1990 = vrot.slane %v1678, 1
      %v1991 = vrot.slane %v1726, 1
      %v1992 = vsel %vm1432, %v1990, %v1991
      %v1993 = vrot.slane %v1679, 1
      %v1994 = vrot.slane %v1727, 1
      %v1995 = vsel %vm1432, %v1993, %v1994
      %v1996 = vrot.slane %v1680, 1
      %v1997 = vrot.slane %v1728, 1
      %v1998 = vsel %vm1432, %v1996, %v1997
      %v1999 = vrot.slane %v1681, 1
      %v2000 = vrot.slane %v1729, 1
      %v2001 = vsel %vm1432, %v1999, %v2000
      %v2003 = vsel %vm1481, %v1666, %v1923
      %v2006 = vsel %vm1481, %v1667, %v1925
      %v2009 = vsel %vm1481, %v1668, %v1927
      %v2012 = vsel %vm1481, %v1669, %v1929
      %v2015 = vsel %vm1481, %v1670, %v1931
      %v2018 = vsel %vm1481, %v1671, %v1933
      %v2021 = vsel %vm1481, %v1672, %v1935
      %v2024 = vsel %vm1481, %v1673, %v1937
      %v2027 = vsel %vm1481, %v1674, %v1939
      %v2030 = vsel %vm1481, %v1675, %v1941
      %v2033 = vsel %vm1481, %v1676, %v1943
      %v2036 = vsel %vm1481, %v1677, %v1945
      %v2039 = vsel %vm1481, %v1678, %v1947
      %v2042 = vsel %vm1481, %v1679, %v1949
      %v2045 = vsel %vm1481, %v1680, %v1951
      %v2048 = vsel %vm1481, %v1681, %v1953
      %v2050 = vld [vmem:[%s3 + $0x60] sm:$0xf]
      %v2051 = vld [vmem:[%s3 + $0x64] sm:$0xf]
      %v2052 = vld [vmem:[%s3 + $0x68] sm:$0xf]
      %v2053 = vld [vmem:[%s3 + $0x6c] sm:$0xf]
      %v2054 = vld [vmem:[%s3 + $0x70] sm:$0xf]
      %v2055 = vld [vmem:[%s3 + $0x74] sm:$0xf]
      %v2056 = vld [vmem:[%s3 + $0x78] sm:$0xf]
      %v2057 = vld [vmem:[%s3 + $0x7c] sm:$0xf]
      %v2058 = vld [vmem:[%s3 + $0x80] sm:$0xf]
      %v2059 = vld [vmem:[%s3 + $0x84] sm:$0xf]
      %v2060 = vld [vmem:[%s3 + $0x88] sm:$0xf]
      %v2061 = vld [vmem:[%s3 + $0x8c] sm:$0xf]
      %v2062 = vld [vmem:[%s3 + $0x90] sm:$0xf]
      %v2063 = vld [vmem:[%s3 + $0x94] sm:$0xf]
      %v2064 = vld [vmem:[%s3 + $0x98] sm:$0xf]
      %v2065 = vld [vmem:[%s3 + $0x9c] sm:$0xf]
      %v2066 = vld [vmem:[%s3 + $0xa0] sm:$0xf]
      %v2067 = vld [vmem:[%s3 + $0xa4] sm:$0xf]
      %v2068 = vld [vmem:[%s3 + $0xa8] sm:$0xf]
      %v2069 = vld [vmem:[%s3 + $0xac] sm:$0xf]
      %v2070 = vld [vmem:[%s3 + $0xb0] sm:$0xf]
      %v2071 = vld [vmem:[%s3 + $0xb4] sm:$0xf]
      %v2072 = vld [vmem:[%s3 + $0xb8] sm:$0xf]
      %v2073 = vld [vmem:[%s3 + $0xbc] sm:$0xf]
      %v2098 = vunpack.c.l.b16 %v2050
      %v2099 = vunpack.c.l.b16 %v2051
      %v2100 = vunpack.c.l.b16 %v2052
      %v2101 = vunpack.c.l.b16 %v2053
      %v2102 = vunpack.c.l.b16 %v2054
      %v2103 = vunpack.c.l.b16 %v2055
      %v2104 = vunpack.c.l.b16 %v2056
      %v2105 = vunpack.c.l.b16 %v2057
      %v2106 = vunpack.c.l.b16 %v2058
      %v2107 = vunpack.c.l.b16 %v2059
      %v2108 = vunpack.c.l.b16 %v2060
      %v2109 = vunpack.c.l.b16 %v2061
      %v2110 = vunpack.c.l.b16 %v2062
      %v2111 = vunpack.c.l.b16 %v2063
      %v2112 = vunpack.c.l.b16 %v2064
      %v2113 = vunpack.c.l.b16 %v2065
      %v2114 = vunpack.c.l.b16 %v2066
      %v2115 = vunpack.c.l.b16 %v2067
      %v2116 = vunpack.c.l.b16 %v2068
      %v2117 = vunpack.c.l.b16 %v2069
      %v2118 = vunpack.c.l.b16 %v2070
      %v2119 = vunpack.c.l.b16 %v2071
      %v2120 = vunpack.c.l.b16 %v2072
      %v2121 = vunpack.c.l.b16 %v2073
      %v2122 = vpack.c.b16 %v2099, %v2098
      %v2123 = vpack.c.b16 %v2101, %v2100
      %v2124 = vpack.c.b16 %v2103, %v2102
      %v2125 = vpack.c.b16 %v2105, %v2104
      %v2126 = vpack.c.b16 %v2107, %v2106
      %v2127 = vpack.c.b16 %v2109, %v2108
      %v2128 = vpack.c.b16 %v2111, %v2110
      %v2129 = vpack.c.b16 %v2113, %v2112
      %v2130 = vpack.c.b16 %v2115, %v2114
      %v2131 = vpack.c.b16 %v2117, %v2116
      %v2132 = vpack.c.b16 %v2119, %v2118
      %v2133 = vpack.c.b16 %v2121, %v2120
      %v2147 = vsel %vm1481, %v1956, 0
      %v2150 = vsel %vm1481, %v1959, 0
      %v2153 = vsel %vm1481, %v1962, 0
      %v2156 = vsel %vm1481, %v1965, 0
      %v2159 = vsel %vm1481, %v1968, 0
      %v2162 = vsel %vm1481, %v1971, 0
      %v2165 = vsel %vm1481, %v1974, 0
      %v2168 = vsel %vm1481, %v1977, 0
      %v2171 = vsel %vm1481, %v1980, 0
      %v2174 = vsel %vm1481, %v1983, 0
      %v2177 = vsel %vm1481, %v1986, 0
      %v2180 = vsel %vm1481, %v1989, 0
      %v2183 = vsel %vm1481, %v1992, 0
      %v2186 = vsel %vm1481, %v1995, 0
      %v2189 = vsel %vm1481, %v1998, 0
      %v2192 = vsel %vm1481, %v2001, 0
      %2194 = vmatprep.subr.bf16.mxu0 0
      %2195 = vmatpush1.bf16.msra.mxu0 %v2129
      %2196 = vmatprep.subr.bf16.mxu0 0
      %2197 = vmatpush1.bf16.msra.mxu0 %v2128
      %2198 = vmatprep.subr.bf16.mxu0 0
      %2199 = vmatpush1.bf16.msra.mxu0 %v2127
      %2200 = vmatprep.subr.bf16.mxu0 0
      %2201 = vmatpush1.bf16.msra.mxu0 %v2126
      %2202 = vmatprep.subr.bf16.mxu0 0
      %2203 = vmatpush1.bf16.msra.mxu0 %v2125
      %2204 = vmatprep.subr.bf16.mxu0 0
      %2205 = vmatpush1.bf16.msra.mxu0 %v2124
      %2206 = vmatprep.subr.bf16.mxu0 0
      %2207 = vmatpush1.bf16.msra.mxu0 %v2123
      %2208 = vmatprep.subr.bf16.mxu0 0
      %2209 = vmatpush1.bf16.msra.mxu0 %v2122
      %2210 = vmatprep.subr.bf16.mxu0 0
      %2211 = vmatpush2.bf16.msra.mxu0 0
      %2212 = vmatprep.subr.bf16.mxu0 0
      %2213 = vmatpush2.bf16.msra.mxu0 0
      %2214 = vmatprep.subr.bf16.mxu0 0
      %2215 = vmatpush2.bf16.msra.mxu0 0
      %2216 = vmatprep.subr.bf16.mxu0 0
      %2217 = vmatpush2.bf16.msra.mxu0 0
      %2218 = vmatprep.subr.bf16.mxu0 0
      %2219 = vmatpush2.bf16.msra.mxu0 %v2133
      %2220 = vmatprep.subr.bf16.mxu0 0
      %2221 = vmatpush2.bf16.msra.mxu0 %v2132
      %2222 = vmatprep.subr.bf16.mxu0 0
      %2223 = vmatpush2.bf16.msra.mxu0 %v2131
      %2224 = vmatprep.subr.bf16.mxu0 0
      %2225 = vmatpush2.bf16.msra.mxu0 %v2130
      %2226 = vmatprep.mubr.bf16.mxu0 %v2147
      %2227 = vmatmul.mubr.bf16.gmra.mxu0 %v2003
      %v2228 = vpop.f32.mrf.mxu0
      %v2229 = vadd.f32 0.0, %v2228
      %v2230 = vpop.f32.mrf.mxu0
      %v2231 = vpop.f32.mrf.mxu0
      %v2232 = vadd.f32 0.0, %v2231
      %v2233 = vpop.f32.mrf.mxu0
      %2234 = vmatprep.mubr.bf16.mxu0 %v2150
      %2235 = vmatmul.mubr.bf16.gmra.mxu0 %v2006
      %v2236 = vpop.f32.mrf.mxu0
      %v2237 = vadd.f32 0.0, %v2236
      %v2238 = vpop.f32.mrf.mxu0
      %v2239 = vpop.f32.mrf.mxu0
      %v2240 = vadd.f32 0.0, %v2239
      %v2241 = vpop.f32.mrf.mxu0
      %2242 = vmatprep.mubr.bf16.mxu0 %v2153
      %2243 = vmatmul.mubr.bf16.gmra.mxu0 %v2009
      %v2244 = vpop.f32.mrf.mxu0
      %v2245 = vadd.f32 0.0, %v2244
      %v2246 = vpop.f32.mrf.mxu0
      %v2247 = vpop.f32.mrf.mxu0
      %v2248 = vadd.f32 0.0, %v2247
      %v2249 = vpop.f32.mrf.mxu0
      %2250 = vmatprep.mubr.bf16.mxu0 %v2156
      %2251 = vmatmul.mubr.bf16.gmra.mxu0 %v2012
      %v2252 = vpop.f32.mrf.mxu0
      %v2253 = vadd.f32 0.0, %v2252
      %v2254 = vpop.f32.mrf.mxu0
      %v2255 = vpop.f32.mrf.mxu0
      %v2256 = vadd.f32 0.0, %v2255
      %v2257 = vpop.f32.mrf.mxu0
      %2258 = vmatprep.mubr.bf16.mxu0 %v2159
      %2259 = vmatmul.mubr.bf16.gmra.mxu0 %v2015
      %v2260 = vpop.f32.mrf.mxu0
      %v2261 = vadd.f32 0.0, %v2260
      %v2262 = vpop.f32.mrf.mxu0
      %v2263 = vpop.f32.mrf.mxu0
      %v2264 = vadd.f32 0.0, %v2263
      %v2265 = vpop.f32.mrf.mxu0
      %2266 = vmatprep.mubr.bf16.mxu0 %v2162
      %2267 = vmatmul.mubr.bf16.gmra.mxu0 %v2018
      %v2268 = vpop.f32.mrf.mxu0
      %v2269 = vadd.f32 0.0, %v2268
      %v2270 = vpop.f32.mrf.mxu0
      %v2271 = vpop.f32.mrf.mxu0
      %v2272 = vadd.f32 0.0, %v2271
      %v2273 = vpop.f32.mrf.mxu0
      %2274 = vmatprep.mubr.bf16.mxu0 %v2165
      %2275 = vmatmul.mubr.bf16.gmra.mxu0 %v2021
      %v2276 = vpop.f32.mrf.mxu0
      %v2277 = vadd.f32 0.0, %v2276
      %v2278 = vpop.f32.mrf.mxu0
      %v2279 = vpop.f32.mrf.mxu0
      %v2280 = vadd.f32 0.0, %v2279
      %v2281 = vpop.f32.mrf.mxu0
      %2282 = vmatprep.mubr.bf16.mxu0 %v2168
      %2283 = vmatmul.mubr.bf16.gmra.mxu0 %v2024
      %v2284 = vpop.f32.mrf.mxu0
      %v2285 = vadd.f32 0.0, %v2284
      %v2286 = vpop.f32.mrf.mxu0
      %v2287 = vpop.f32.mrf.mxu0
      %v2288 = vadd.f32 0.0, %v2287
      %v2289 = vpop.f32.mrf.mxu0
      %2290 = vmatprep.mubr.bf16.mxu0 %v2171
      %2291 = vmatmul.mubr.bf16.gmra.mxu0 %v2027
      %v2292 = vpop.f32.mrf.mxu0
      %v2293 = vadd.f32 0.0, %v2292
      %v2294 = vpop.f32.mrf.mxu0
      %v2295 = vpop.f32.mrf.mxu0
      %v2296 = vadd.f32 0.0, %v2295
      %v2297 = vpop.f32.mrf.mxu0
      %2298 = vmatprep.mubr.bf16.mxu0 %v2174
      %2299 = vmatmul.mubr.bf16.gmra.mxu0 %v2030
      %v2300 = vpop.f32.mrf.mxu0
      %v2301 = vadd.f32 0.0, %v2300
      %v2302 = vpop.f32.mrf.mxu0
      %v2303 = vpop.f32.mrf.mxu0
      %v2304 = vadd.f32 0.0, %v2303
      %v2305 = vpop.f32.mrf.mxu0
      %2306 = vmatprep.mubr.bf16.mxu0 %v2177
      %2307 = vmatmul.mubr.bf16.gmra.mxu0 %v2033
      %v2308 = vpop.f32.mrf.mxu0
      %v2309 = vadd.f32 0.0, %v2308
      %v2310 = vpop.f32.mrf.mxu0
      %v2311 = vpop.f32.mrf.mxu0
      %v2312 = vadd.f32 0.0, %v2311
      %v2313 = vpop.f32.mrf.mxu0
      %2314 = vmatprep.mubr.bf16.mxu0 %v2180
      %2315 = vmatmul.mubr.bf16.gmra.mxu0 %v2036
      %v2316 = vpop.f32.mrf.mxu0
      %v2317 = vadd.f32 0.0, %v2316
      %v2318 = vpop.f32.mrf.mxu0
      %v2319 = vpop.f32.mrf.mxu0
      %v2320 = vadd.f32 0.0, %v2319
      %v2321 = vpop.f32.mrf.mxu0
      %2322 = vmatprep.mubr.bf16.mxu0 %v2183
      %2323 = vmatmul.mubr.bf16.gmra.mxu0 %v2039
      %v2324 = vpop.f32.mrf.mxu0
      %v2325 = vadd.f32 0.0, %v2324
      %v2326 = vpop.f32.mrf.mxu0
      %v2327 = vpop.f32.mrf.mxu0
      %v2328 = vadd.f32 0.0, %v2327
      %v2329 = vpop.f32.mrf.mxu0
      %2330 = vmatprep.mubr.bf16.mxu0 %v2186
      %2331 = vmatmul.mubr.bf16.gmra.mxu0 %v2042
      %v2332 = vpop.f32.mrf.mxu0
      %v2333 = vadd.f32 0.0, %v2332
      %v2334 = vpop.f32.mrf.mxu0
      %v2335 = vpop.f32.mrf.mxu0
      %v2336 = vadd.f32 0.0, %v2335
      %v2337 = vpop.f32.mrf.mxu0
      %2338 = vmatprep.mubr.bf16.mxu0 %v2189
      %2339 = vmatmul.mubr.bf16.gmra.mxu0 %v2045
      %v2340 = vpop.f32.mrf.mxu0
      %v2341 = vadd.f32 0.0, %v2340
      %v2342 = vpop.f32.mrf.mxu0
      %v2343 = vpop.f32.mrf.mxu0
      %v2344 = vadd.f32 0.0, %v2343
      %v2345 = vpop.f32.mrf.mxu0
      %2346 = vmatprep.mubr.bf16.mxu0 %v2192
      %2347 = vmatmul.mubr.bf16.gmra.mxu0 %v2048
      %v2348 = vpop.f32.mrf.mxu0
      %v2349 = vadd.f32 0.0, %v2348
      %v2350 = vpop.f32.mrf.mxu0
      %v2351 = vpop.f32.mrf.mxu0
      %v2352 = vadd.f32 0.0, %v2351
      %v2353 = vpop.f32.mrf.mxu0
      %2354 = vdwg.mxu0
      %v2379 = vunpack.c.l.b16 %v1530
      %v2380 = vunpack.c.l.b16 %v1531
      %v2381 = vunpack.c.l.b16 %v1532
      %v2382 = vunpack.c.l.b16 %v1533
      %v2383 = vunpack.c.l.b16 %v1534
      %v2384 = vunpack.c.l.b16 %v1535
      %v2385 = vunpack.c.l.b16 %v1536
      %v2386 = vunpack.c.l.b16 %v1537
      %v2387 = vunpack.c.l.b16 %v1538
      %v2388 = vunpack.c.l.b16 %v1539
      %v2389 = vunpack.c.l.b16 %v1540
      %v2390 = vunpack.c.l.b16 %v1541
      %v2391 = vunpack.c.l.b16 %v1542
      %v2392 = vunpack.c.l.b16 %v1543
      %v2393 = vunpack.c.l.b16 %v1544
      %v2394 = vunpack.c.l.b16 %v1545
      %v2395 = vunpack.c.l.b16 %v1546
      %v2396 = vunpack.c.l.b16 %v1547
      %v2397 = vunpack.c.l.b16 %v1548
      %v2398 = vunpack.c.l.b16 %v1549
      %v2399 = vunpack.c.l.b16 %v1550
      %v2400 = vunpack.c.l.b16 %v1551
      %v2401 = vunpack.c.l.b16 %v1552
      %v2402 = vunpack.c.l.b16 %v1553
      %v2403 = vpack.c.b16 %v2380, %v2379
      %v2404 = vpack.c.b16 %v2382, %v2381
      %v2405 = vpack.c.b16 %v2384, %v2383
      %v2406 = vpack.c.b16 %v2386, %v2385
      %v2407 = vpack.c.b16 %v2388, %v2387
      %v2408 = vpack.c.b16 %v2390, %v2389
      %v2409 = vpack.c.b16 %v2392, %v2391
      %v2410 = vpack.c.b16 %v2394, %v2393
      %v2411 = vpack.c.b16 %v2396, %v2395
      %v2412 = vpack.c.b16 %v2398, %v2397
      %v2413 = vpack.c.b16 %v2400, %v2399
      %v2414 = vpack.c.b16 %v2402, %v2401
      %v2428 = vsel %vm1481, %v1435, 0
      %v2431 = vsel %vm1481, %v1438, 0
      %v2434 = vsel %vm1481, %v1441, 0
      %v2437 = vsel %vm1481, %v1444, 0
      %v2440 = vsel %vm1481, %v1447, 0
      %v2443 = vsel %vm1481, %v1450, 0
      %v2446 = vsel %vm1481, %v1453, 0
      %v2449 = vsel %vm1481, %v1456, 0
      %v2452 = vsel %vm1481, %v1459, 0
      %v2455 = vsel %vm1481, %v1462, 0
      %v2458 = vsel %vm1481, %v1465, 0
      %v2461 = vsel %vm1481, %v1468, 0
      %v2464 = vsel %vm1481, %v1471, 0
      %v2467 = vsel %vm1481, %v1474, 0
      %v2470 = vsel %vm1481, %v1477, 0
      %v2473 = vsel %vm1481, %v1480, 0
      %2475 = vmatprep.subr.bf16.mxu0 0
      %2476 = vmatpush1.bf16.msra.mxu0 %v2410
      %2477 = vmatprep.subr.bf16.mxu0 0
      %2478 = vmatpush1.bf16.msra.mxu0 %v2409
      %2479 = vmatprep.subr.bf16.mxu0 0
      %2480 = vmatpush1.bf16.msra.mxu0 %v2408
      %2481 = vmatprep.subr.bf16.mxu0 0
      %2482 = vmatpush1.bf16.msra.mxu0 %v2407
      %2483 = vmatprep.subr.bf16.mxu0 0
      %2484 = vmatpush1.bf16.msra.mxu0 %v2406
      %2485 = vmatprep.subr.bf16.mxu0 0
      %2486 = vmatpush1.bf16.msra.mxu0 %v2405
      %2487 = vmatprep.subr.bf16.mxu0 0
      %2488 = vmatpush1.bf16.msra.mxu0 %v2404
      %2489 = vmatprep.subr.bf16.mxu0 0
      %2490 = vmatpush1.bf16.msra.mxu0 %v2403
      %2491 = vmatprep.subr.bf16.mxu0 0
      %2492 = vmatpush2.bf16.msra.mxu0 0
      %2493 = vmatprep.subr.bf16.mxu0 0
      %2494 = vmatpush2.bf16.msra.mxu0 0
      %2495 = vmatprep.subr.bf16.mxu0 0
      %2496 = vmatpush2.bf16.msra.mxu0 0
      %2497 = vmatprep.subr.bf16.mxu0 0
      %2498 = vmatpush2.bf16.msra.mxu0 0
      %2499 = vmatprep.subr.bf16.mxu0 0
      %2500 = vmatpush2.bf16.msra.mxu0 %v2414
      %2501 = vmatprep.subr.bf16.mxu0 0
      %2502 = vmatpush2.bf16.msra.mxu0 %v2413
      %2503 = vmatprep.subr.bf16.mxu0 0
      %2504 = vmatpush2.bf16.msra.mxu0 %v2412
      %2505 = vmatprep.subr.bf16.mxu0 0
      %2506 = vmatpush2.bf16.msra.mxu0 %v2411
      %2507 = vmatprep.mubr.bf16.mxu0 %v2428
      %2508 = vmatmul.mubr.bf16.gmra.mxu0 %v1483
      %v2509 = vpop.f32.mrf.mxu0
      %v2510 = vadd.f32 %v2229, %v2509
      %v2511 = vpop.f32.mrf.mxu0
      %v2512 = vpop.f32.mrf.mxu0
      %v2513 = vadd.f32 %v2232, %v2512
      %v2514 = vpop.f32.mrf.mxu0
      %2515 = vmatprep.mubr.bf16.mxu0 %v2431
      %2516 = vmatmul.mubr.bf16.gmra.mxu0 %v1486
      %v2517 = vpop.f32.mrf.mxu0
      %v2518 = vadd.f32 %v2237, %v2517
      %v2519 = vpop.f32.mrf.mxu0
      %v2520 = vpop.f32.mrf.mxu0
      %v2521 = vadd.f32 %v2240, %v2520
      %v2522 = vpop.f32.mrf.mxu0
      %2523 = vmatprep.mubr.bf16.mxu0 %v2434
      %2524 = vmatmul.mubr.bf16.gmra.mxu0 %v1489
      %v2525 = vpop.f32.mrf.mxu0
      %v2526 = vadd.f32 %v2245, %v2525
      %v2527 = vpop.f32.mrf.mxu0
      %v2528 = vpop.f32.mrf.mxu0
      %v2529 = vadd.f32 %v2248, %v2528
      %v2530 = vpop.f32.mrf.mxu0
      %2531 = vmatprep.mubr.bf16.mxu0 %v2437
      %2532 = vmatmul.mubr.bf16.gmra.mxu0 %v1492
      %v2533 = vpop.f32.mrf.mxu0
      %v2534 = vadd.f32 %v2253, %v2533
      %v2535 = vpop.f32.mrf.mxu0
      %v2536 = vpop.f32.mrf.mxu0
      %v2537 = vadd.f32 %v2256, %v2536
      %v2538 = vpop.f32.mrf.mxu0
      %2539 = vmatprep.mubr.bf16.mxu0 %v2440
      %2540 = vmatmul.mubr.bf16.gmra.mxu0 %v1495
      %v2541 = vpop.f32.mrf.mxu0
      %v2542 = vadd.f32 %v2261, %v2541
      %v2543 = vpop.f32.mrf.mxu0
      %v2544 = vpop.f32.mrf.mxu0
      %v2545 = vadd.f32 %v2264, %v2544
      %v2546 = vpop.f32.mrf.mxu0
      %2547 = vmatprep.mubr.bf16.mxu0 %v2443
      %2548 = vmatmul.mubr.bf16.gmra.mxu0 %v1498
      %v2549 = vpop.f32.mrf.mxu0
      %v2550 = vadd.f32 %v2269, %v2549
      %v2551 = vpop.f32.mrf.mxu0
      %v2552 = vpop.f32.mrf.mxu0
      %v2553 = vadd.f32 %v2272, %v2552
      %v2554 = vpop.f32.mrf.mxu0
      %2555 = vmatprep.mubr.bf16.mxu0 %v2446
      %2556 = vmatmul.mubr.bf16.gmra.mxu0 %v1501
      %v2557 = vpop.f32.mrf.mxu0
      %v2558 = vadd.f32 %v2277, %v2557
      %v2559 = vpop.f32.mrf.mxu0
      %v2560 = vpop.f32.mrf.mxu0
      %v2561 = vadd.f32 %v2280, %v2560
      %v2562 = vpop.f32.mrf.mxu0
      %2563 = vmatprep.mubr.bf16.mxu0 %v2449
      %2564 = vmatmul.mubr.bf16.gmra.mxu0 %v1504
      %v2565 = vpop.f32.mrf.mxu0
      %v2566 = vadd.f32 %v2285, %v2565
      %v2567 = vpop.f32.mrf.mxu0
      %v2568 = vpop.f32.mrf.mxu0
      %v2569 = vadd.f32 %v2288, %v2568
      %v2570 = vpop.f32.mrf.mxu0
      %2571 = vmatprep.mubr.bf16.mxu0 %v2452
      %2572 = vmatmul.mubr.bf16.gmra.mxu0 %v1507
      %v2573 = vpop.f32.mrf.mxu0
      %v2574 = vadd.f32 %v2293, %v2573
      %v2575 = vpop.f32.mrf.mxu0
      %v2576 = vpop.f32.mrf.mxu0
      %v2577 = vadd.f32 %v2296, %v2576
      %v2578 = vpop.f32.mrf.mxu0
      %2579 = vmatprep.mubr.bf16.mxu0 %v2455
      %2580 = vmatmul.mubr.bf16.gmra.mxu0 %v1510
      %v2581 = vpop.f32.mrf.mxu0
      %v2582 = vadd.f32 %v2301, %v2581
      %v2583 = vpop.f32.mrf.mxu0
      %v2584 = vpop.f32.mrf.mxu0
      %v2585 = vadd.f32 %v2304, %v2584
      %v2586 = vpop.f32.mrf.mxu0
      %2587 = vmatprep.mubr.bf16.mxu0 %v2458
      %2588 = vmatmul.mubr.bf16.gmra.mxu0 %v1513
      %v2589 = vpop.f32.mrf.mxu0
      %v2590 = vadd.f32 %v2309, %v2589
      %v2591 = vpop.f32.mrf.mxu0
      %v2592 = vpop.f32.mrf.mxu0
      %v2593 = vadd.f32 %v2312, %v2592
      %v2594 = vpop.f32.mrf.mxu0
      %2595 = vmatprep.mubr.bf16.mxu0 %v2461
      %2596 = vmatmul.mubr.bf16.gmra.mxu0 %v1516
      %v2597 = vpop.f32.mrf.mxu0
      %v2598 = vadd.f32 %v2317, %v2597
      %v2599 = vpop.f32.mrf.mxu0
      %v2600 = vpop.f32.mrf.mxu0
      %v2601 = vadd.f32 %v2320, %v2600
      %v2602 = vpop.f32.mrf.mxu0
      %2603 = vmatprep.mubr.bf16.mxu0 %v2464
      %2604 = vmatmul.mubr.bf16.gmra.mxu0 %v1519
      %v2605 = vpop.f32.mrf.mxu0
      %v2606 = vadd.f32 %v2325, %v2605
      %v2607 = vpop.f32.mrf.mxu0
      %v2608 = vpop.f32.mrf.mxu0
      %v2609 = vadd.f32 %v2328, %v2608
      %v2610 = vpop.f32.mrf.mxu0
      %2611 = vmatprep.mubr.bf16.mxu0 %v2467
      %2612 = vmatmul.mubr.bf16.gmra.mxu0 %v1522
      %v2613 = vpop.f32.mrf.mxu0
      %v2614 = vadd.f32 %v2333, %v2613
      %v2615 = vpop.f32.mrf.mxu0
      %v2616 = vpop.f32.mrf.mxu0
      %v2617 = vadd.f32 %v2336, %v2616
      %v2618 = vpop.f32.mrf.mxu0
      %2619 = vmatprep.mubr.bf16.mxu0 %v2470
      %2620 = vmatmul.mubr.bf16.gmra.mxu0 %v1525
      %v2621 = vpop.f32.mrf.mxu0
      %v2622 = vadd.f32 %v2341, %v2621
      %v2623 = vpop.f32.mrf.mxu0
      %v2624 = vpop.f32.mrf.mxu0
      %v2625 = vadd.f32 %v2344, %v2624
      %v2626 = vpop.f32.mrf.mxu0
      %2627 = vmatprep.mubr.bf16.mxu0 %v2473
      %2628 = vmatmul.mubr.bf16.gmra.mxu0 %v1528
      %v2629 = vpop.f32.mrf.mxu0
      %v2630 = vadd.f32 %v2349, %v2629
      %v2631 = vpop.f32.mrf.mxu0
      %v2632 = vpop.f32.mrf.mxu0
      %v2633 = vadd.f32 %v2352, %v2632
      %v2634 = vpop.f32.mrf.mxu0
      %2635 = vdwg.mxu0
      %s2636 = scalar_lea.vmem [#allocation2], 24
      %v2637 = vld [vmem:[%s2636] sm:$0xf]
      %v2638 = vld [vmem:[%s2636 + $0x4] sm:$0xf]
      %v2639 = vld [vmem:[%s2636 + $0x8] sm:$0x1]
      %v2640 = vld [vmem:[%s2636 + $0xc] sm:$0xf]
      %v2641 = vld [vmem:[%s2636 + $0x10] sm:$0xf]
      %v2642 = vld [vmem:[%s2636 + $0x14] sm:$0x1]
      %v2643 = vld [vmem:[%s2636 + $0x18] sm:$0xf]
      %v2644 = vld [vmem:[%s2636 + $0x1c] sm:$0xf]
      %v2645 = vld [vmem:[%s2636 + $0x20] sm:$0x1]
      %v2646 = vld [vmem:[%s2636 + $0x24] sm:$0xf]
      %v2647 = vld [vmem:[%s2636 + $0x28] sm:$0xf]
      %v2648 = vld [vmem:[%s2636 + $0x2c] sm:$0x1]
      %v2649 = vld [vmem:[%s2636 + $0x30] sm:$0xf]
      %v2650 = vld [vmem:[%s2636 + $0x34] sm:$0xf]
      %v2651 = vld [vmem:[%s2636 + $0x38] sm:$0x1]
      %v2652 = vld [vmem:[%s2636 + $0x3c] sm:$0xf]
      %v2653 = vld [vmem:[%s2636 + $0x40] sm:$0xf]
      %v2654 = vld [vmem:[%s2636 + $0x44] sm:$0x1]
      %v2655 = vld [vmem:[%s2636 + $0x48] sm:$0xf]
      %v2656 = vld [vmem:[%s2636 + $0x4c] sm:$0xf]
      %v2657 = vld [vmem:[%s2636 + $0x50] sm:$0x1]
      %v2658 = vld [vmem:[%s2636 + $0x54] sm:$0xf]
      %v2659 = vld [vmem:[%s2636 + $0x58] sm:$0xf]
      %v2660 = vld [vmem:[%s2636 + $0x5c] sm:$0x1]
      %v2661 = vld [vmem:[%s2636 + $0x60] sm:$0xf]
      %v2662 = vld [vmem:[%s2636 + $0x64] sm:$0xf]
      %v2663 = vld [vmem:[%s2636 + $0x68] sm:$0x1]
      %v2664 = vld [vmem:[%s2636 + $0x6c] sm:$0xf]
      %v2665 = vld [vmem:[%s2636 + $0x70] sm:$0xf]
      %v2666 = vld [vmem:[%s2636 + $0x74] sm:$0x1]
      %v2667 = vld [vmem:[%s2636 + $0x78] sm:$0xf]
      %v2668 = vld [vmem:[%s2636 + $0x7c] sm:$0xf]
      %v2669 = vld [vmem:[%s2636 + $0x80] sm:$0x1]
      %v2670 = vld [vmem:[%s2636 + $0x84] sm:$0xf]
      %v2671 = vld [vmem:[%s2636 + $0x88] sm:$0xf]
      %v2672 = vld [vmem:[%s2636 + $0x8c] sm:$0x1]
      %v2673 = vld [vmem:[%s2636 + $0x90] sm:$0xf]
      %v2674 = vld [vmem:[%s2636 + $0x94] sm:$0xf]
      %v2675 = vld [vmem:[%s2636 + $0x98] sm:$0x1]
      %v2676 = vld [vmem:[%s2636 + $0x9c] sm:$0xf]
      %v2677 = vld [vmem:[%s2636 + $0xa0] sm:$0xf]
      %v2678 = vld [vmem:[%s2636 + $0xa4] sm:$0x1]
      %v2679 = vld [vmem:[%s2636 + $0xa8] sm:$0xf]
      %v2680 = vld [vmem:[%s2636 + $0xac] sm:$0xf]
      %v2681 = vld [vmem:[%s2636 + $0xb0] sm:$0x1]
      %v2682 = vld [vmem:[%s2636 + $0xb4] sm:$0xf]
      %v2683 = vld [vmem:[%s2636 + $0xb8] sm:$0xf]
      %v2684 = vld [vmem:[%s2636 + $0xbc] sm:$0x1]
      %v2717 = vunpack.c.l.b16 %v2637
      %v2718 = vunpack.c.l.b16 %v2638
      %v2719 = vunpack.c.l.b16 %v2640
      %v2720 = vunpack.c.l.b16 %v2641
      %v2721 = vunpack.c.l.b16 %v2643
      %v2722 = vunpack.c.l.b16 %v2644
      %v2723 = vunpack.c.l.b16 %v2646
      %v2724 = vunpack.c.l.b16 %v2647
      %v2725 = vunpack.c.l.b16 %v2649
      %v2726 = vunpack.c.l.b16 %v2650
      %v2727 = vunpack.c.l.b16 %v2652
      %v2728 = vunpack.c.l.b16 %v2653
      %v2729 = vunpack.c.l.b16 %v2655
      %v2730 = vunpack.c.l.b16 %v2656
      %v2731 = vunpack.c.l.b16 %v2658
      %v2732 = vunpack.c.l.b16 %v2659
      %v2733 = vunpack.c.l.b16 %v2661
      %v2734 = vunpack.c.l.b16 %v2662
      %v2735 = vunpack.c.l.b16 %v2664
      %v2736 = vunpack.c.l.b16 %v2665
      %v2737 = vunpack.c.l.b16 %v2667
      %v2738 = vunpack.c.l.b16 %v2668
      %v2739 = vunpack.c.l.b16 %v2670
      %v2740 = vunpack.c.l.b16 %v2671
      %v2741 = vunpack.c.l.b16 %v2673
      %v2742 = vunpack.c.l.b16 %v2674
      %v2743 = vunpack.c.l.b16 %v2676
      %v2744 = vunpack.c.l.b16 %v2677
      %v2745 = vunpack.c.l.b16 %v2679
      %v2746 = vunpack.c.l.b16 %v2680
      %v2747 = vunpack.c.l.b16 %v2682
      %v2748 = vunpack.c.l.b16 %v2683
      %v2749 = vpack.c.b16 %v2718, %v2717
      %v2750 = vpack.c.b16 %v2720, %v2719
      %v2751 = vpack.c.b16 %v2722, %v2721
      %v2752 = vpack.c.b16 %v2724, %v2723
      %v2753 = vpack.c.b16 %v2726, %v2725
      %v2754 = vpack.c.b16 %v2728, %v2727
      %v2755 = vpack.c.b16 %v2730, %v2729
      %v2756 = vpack.c.b16 %v2732, %v2731
      %v2757 = vpack.c.b16 %v2734, %v2733
      %v2758 = vpack.c.b16 %v2736, %v2735
      %v2759 = vpack.c.b16 %v2738, %v2737
      %v2760 = vpack.c.b16 %v2740, %v2739
      %v2761 = vpack.c.b16 %v2742, %v2741
      %v2762 = vpack.c.b16 %v2744, %v2743
      %v2763 = vpack.c.b16 %v2746, %v2745
      %v2764 = vpack.c.b16 %v2748, %v2747
      %v2781 = vunpack.c.l.b16 %v2639
      %v2782 = vunpack.c.l.b16 %v2642
      %v2783 = vunpack.c.l.b16 %v2645
      %v2784 = vunpack.c.l.b16 %v2648
      %v2785 = vunpack.c.l.b16 %v2651
      %v2786 = vunpack.c.l.b16 %v2654
      %v2787 = vunpack.c.l.b16 %v2657
      %v2788 = vunpack.c.l.b16 %v2660
      %v2789 = vunpack.c.l.b16 %v2663
      %v2790 = vunpack.c.l.b16 %v2666
      %v2791 = vunpack.c.l.b16 %v2669
      %v2792 = vunpack.c.l.b16 %v2672
      %v2793 = vunpack.c.l.b16 %v2675
      %v2794 = vunpack.c.l.b16 %v2678
      %v2795 = vunpack.c.l.b16 %v2681
      %v2796 = vunpack.c.l.b16 %v2684
      %v2797 = vpack.c.b16 %v2781, %v2781
      %v2798 = vpack.c.b16 %v2782, %v2782
      %v2799 = vpack.c.b16 %v2783, %v2783
      %v2800 = vpack.c.b16 %v2784, %v2784
      %v2801 = vpack.c.b16 %v2785, %v2785
      %v2802 = vpack.c.b16 %v2786, %v2786
      %v2803 = vpack.c.b16 %v2787, %v2787
      %v2804 = vpack.c.b16 %v2788, %v2788
      %v2805 = vpack.c.b16 %v2789, %v2789
      %v2806 = vpack.c.b16 %v2790, %v2790
      %v2807 = vpack.c.b16 %v2791, %v2791
      %v2808 = vpack.c.b16 %v2792, %v2792
      %v2809 = vpack.c.b16 %v2793, %v2793
      %v2810 = vpack.c.b16 %v2794, %v2794
      %v2811 = vpack.c.b16 %v2795, %v2795
      %v2812 = vpack.c.b16 %v2796, %v2796
      %v2814 = vshrl.u32 %v2749, 16
      %v2816 = vshll.u32 %v2749, 16
      %v2818 = vrot.slane %v2816, 1
      %v2819 = vor.u32 %v2814, %v2818
      %v2821 = vshll.u32 %v2797, 16
      %v2823 = vrot.slane %v2821, 1
      %v2824 = vsel %vm1207, %v2819, %v2823
      %v2826 = vshrl.u32 %v2750, 16
      %v2828 = vshll.u32 %v2750, 16
      %v2830 = vrot.slane %v2828, 1
      %v2831 = vor.u32 %v2826, %v2830
      %v2833 = vshll.u32 %v2798, 16
      %v2835 = vrot.slane %v2833, 1
      %v2836 = vsel %vm1207, %v2831, %v2835
      %v2838 = vshrl.u32 %v2751, 16
      %v2840 = vshll.u32 %v2751, 16
      %v2842 = vrot.slane %v2840, 1
      %v2843 = vor.u32 %v2838, %v2842
      %v2845 = vshll.u32 %v2799, 16
      %v2847 = vrot.slane %v2845, 1
      %v2848 = vsel %vm1207, %v2843, %v2847
      %v2850 = vshrl.u32 %v2752, 16
      %v2852 = vshll.u32 %v2752, 16
      %v2854 = vrot.slane %v2852, 1
      %v2855 = vor.u32 %v2850, %v2854
      %v2857 = vshll.u32 %v2800, 16
      %v2859 = vrot.slane %v2857, 1
      %v2860 = vsel %vm1207, %v2855, %v2859
      %v2862 = vshrl.u32 %v2753, 16
      %v2864 = vshll.u32 %v2753, 16
      %v2866 = vrot.slane %v2864, 1
      %v2867 = vor.u32 %v2862, %v2866
      %v2869 = vshll.u32 %v2801, 16
      %v2871 = vrot.slane %v2869, 1
      %v2872 = vsel %vm1207, %v2867, %v2871
      %v2874 = vshrl.u32 %v2754, 16
      %v2876 = vshll.u32 %v2754, 16
      %v2878 = vrot.slane %v2876, 1
      %v2879 = vor.u32 %v2874, %v2878
      %v2881 = vshll.u32 %v2802, 16
      %v2883 = vrot.slane %v2881, 1
      %v2884 = vsel %vm1207, %v2879, %v2883
      %v2886 = vshrl.u32 %v2755, 16
      %v2888 = vshll.u32 %v2755, 16
      %v2890 = vrot.slane %v2888, 1
      %v2891 = vor.u32 %v2886, %v2890
      %v2893 = vshll.u32 %v2803, 16
      %v2895 = vrot.slane %v2893, 1
      %v2896 = vsel %vm1207, %v2891, %v2895
      %v2898 = vshrl.u32 %v2756, 16
      %v2900 = vshll.u32 %v2756, 16
      %v2902 = vrot.slane %v2900, 1
      %v2903 = vor.u32 %v2898, %v2902
      %v2905 = vshll.u32 %v2804, 16
      %v2907 = vrot.slane %v2905, 1
      %v2908 = vsel %vm1207, %v2903, %v2907
      %v2910 = vshrl.u32 %v2757, 16
      %v2912 = vshll.u32 %v2757, 16
      %v2914 = vrot.slane %v2912, 1
      %v2915 = vor.u32 %v2910, %v2914
      %v2917 = vshll.u32 %v2805, 16
      %v2919 = vrot.slane %v2917, 1
      %v2920 = vsel %vm1207, %v2915, %v2919
      %v2922 = vshrl.u32 %v2758, 16
      %v2924 = vshll.u32 %v2758, 16
      %v2926 = vrot.slane %v2924, 1
      %v2927 = vor.u32 %v2922, %v2926
      %v2929 = vshll.u32 %v2806, 16
      %v2931 = vrot.slane %v2929, 1
      %v2932 = vsel %vm1207, %v2927, %v2931
      %v2934 = vshrl.u32 %v2759, 16
      %v2936 = vshll.u32 %v2759, 16
      %v2938 = vrot.slane %v2936, 1
      %v2939 = vor.u32 %v2934, %v2938
      %v2941 = vshll.u32 %v2807, 16
      %v2943 = vrot.slane %v2941, 1
      %v2944 = vsel %vm1207, %v2939, %v2943
      %v2946 = vshrl.u32 %v2760, 16
      %v2948 = vshll.u32 %v2760, 16
      %v2950 = vrot.slane %v2948, 1
      %v2951 = vor.u32 %v2946, %v2950
      %v2953 = vshll.u32 %v2808, 16
      %v2955 = vrot.slane %v2953, 1
      %v2956 = vsel %vm1207, %v2951, %v2955
      %v2958 = vshrl.u32 %v2761, 16
      %v2960 = vshll.u32 %v2761, 16
      %v2962 = vrot.slane %v2960, 1
      %v2963 = vor.u32 %v2958, %v2962
      %v2965 = vshll.u32 %v2809, 16
      %v2967 = vrot.slane %v2965, 1
      %v2968 = vsel %vm1207, %v2963, %v2967
      %v2970 = vshrl.u32 %v2762, 16
      %v2972 = vshll.u32 %v2762, 16
      %v2974 = vrot.slane %v2972, 1
      %v2975 = vor.u32 %v2970, %v2974
      %v2977 = vshll.u32 %v2810, 16
      %v2979 = vrot.slane %v2977, 1
      %v2980 = vsel %vm1207, %v2975, %v2979
      %v2982 = vshrl.u32 %v2763, 16
      %v2984 = vshll.u32 %v2763, 16
      %v2986 = vrot.slane %v2984, 1
      %v2987 = vor.u32 %v2982, %v2986
      %v2989 = vshll.u32 %v2811, 16
      %v2991 = vrot.slane %v2989, 1
      %v2992 = vsel %vm1207, %v2987, %v2991
      %v2994 = vshrl.u32 %v2764, 16
      %v2996 = vshll.u32 %v2764, 16
      %v2998 = vrot.slane %v2996, 1
      %v2999 = vor.u32 %v2994, %v2998
      %v3001 = vshll.u32 %v2812, 16
      %v3003 = vrot.slane %v3001, 1
      %v3004 = vsel %vm1207, %v2999, %v3003
      %3005 = vrot.lane.b32.xlu0 %v2824, 64
      %v3006 = vpop.permute.xlu0 %3005
      %3007 = vrot.lane.b32.xlu0 %v2836, 64
      %v3008 = vpop.permute.xlu0 %3007
      %3009 = vrot.lane.b32.xlu0 %v2848, 64
      %v3010 = vpop.permute.xlu0 %3009
      %3011 = vrot.lane.b32.xlu0 %v2860, 64
      %v3012 = vpop.permute.xlu0 %3011
      %3013 = vrot.lane.b32.xlu0 %v2872, 64
      %v3014 = vpop.permute.xlu0 %3013
      %3015 = vrot.lane.b32.xlu0 %v2884, 64
      %v3016 = vpop.permute.xlu0 %3015
      %3017 = vrot.lane.b32.xlu0 %v2896, 64
      %v3018 = vpop.permute.xlu0 %3017
      %3019 = vrot.lane.b32.xlu0 %v2908, 64
      %v3020 = vpop.permute.xlu0 %3019
      %3021 = vrot.lane.b32.xlu0 %v2920, 64
      %v3022 = vpop.permute.xlu0 %3021
      %3023 = vrot.lane.b32.xlu0 %v2932, 64
      %v3024 = vpop.permute.xlu0 %3023
      %3025 = vrot.lane.b32.xlu0 %v2944, 64
      %v3026 = vpop.permute.xlu0 %3025
      %3027 = vrot.lane.b32.xlu0 %v2956, 64
      %v3028 = vpop.permute.xlu0 %3027
      %3029 = vrot.lane.b32.xlu0 %v2968, 64
      %v3030 = vpop.permute.xlu0 %3029
      %3031 = vrot.lane.b32.xlu0 %v2980, 64
      %v3032 = vpop.permute.xlu0 %3031
      %3033 = vrot.lane.b32.xlu0 %v2992, 64
      %v3034 = vpop.permute.xlu0 %3033
      %3035 = vrot.lane.b32.xlu0 %v3004, 64
      %v3036 = vpop.permute.xlu0 %3035
      %v3037 = vrot.slane %v2749, 1
      %v3038 = vrot.slane %v2797, 1
      %v3039 = vsel %vm1432, %v3037, %v3038
      %v3040 = vrot.slane %v2750, 1
      %v3041 = vrot.slane %v2798, 1
      %v3042 = vsel %vm1432, %v3040, %v3041
      %v3043 = vrot.slane %v2751, 1
      %v3044 = vrot.slane %v2799, 1
      %v3045 = vsel %vm1432, %v3043, %v3044
      %v3046 = vrot.slane %v2752, 1
      %v3047 = vrot.slane %v2800, 1
      %v3048 = vsel %vm1432, %v3046, %v3047
      %v3049 = vrot.slane %v2753, 1
      %v3050 = vrot.slane %v2801, 1
      %v3051 = vsel %vm1432, %v3049, %v3050
      %v3052 = vrot.slane %v2754, 1
      %v3053 = vrot.slane %v2802, 1
      %v3054 = vsel %vm1432, %v3052, %v3053
      %v3055 = vrot.slane %v2755, 1
      %v3056 = vrot.slane %v2803, 1
      %v3057 = vsel %vm1432, %v3055, %v3056
      %v3058 = vrot.slane %v2756, 1
      %v3059 = vrot.slane %v2804, 1
      %v3060 = vsel %vm1432, %v3058, %v3059
      %v3061 = vrot.slane %v2757, 1
      %v3062 = vrot.slane %v2805, 1
      %v3063 = vsel %vm1432, %v3061, %v3062
      %v3064 = vrot.slane %v2758, 1
      %v3065 = vrot.slane %v2806, 1
      %v3066 = vsel %vm1432, %v3064, %v3065
      %v3067 = vrot.slane %v2759, 1
      %v3068 = vrot.slane %v2807, 1
      %v3069 = vsel %vm1432, %v3067, %v3068
      %v3070 = vrot.slane %v2760, 1
      %v3071 = vrot.slane %v2808, 1
      %v3072 = vsel %vm1432, %v3070, %v3071
      %v3073 = vrot.slane %v2761, 1
      %v3074 = vrot.slane %v2809, 1
      %v3075 = vsel %vm1432, %v3073, %v3074
      %v3076 = vrot.slane %v2762, 1
      %v3077 = vrot.slane %v2810, 1
      %v3078 = vsel %vm1432, %v3076, %v3077
      %v3079 = vrot.slane %v2763, 1
      %v3080 = vrot.slane %v2811, 1
      %v3081 = vsel %vm1432, %v3079, %v3080
      %v3082 = vrot.slane %v2764, 1
      %v3083 = vrot.slane %v2812, 1
      %v3084 = vsel %vm1432, %v3082, %v3083
      %v3086 = vsel %vm1481, %v2749, %v3006
      %v3089 = vsel %vm1481, %v2750, %v3008
      %v3092 = vsel %vm1481, %v2751, %v3010
      %v3095 = vsel %vm1481, %v2752, %v3012
      %v3098 = vsel %vm1481, %v2753, %v3014
      %v3101 = vsel %vm1481, %v2754, %v3016
      %v3104 = vsel %vm1481, %v2755, %v3018
      %v3107 = vsel %vm1481, %v2756, %v3020
      %v3110 = vsel %vm1481, %v2757, %v3022
      %v3113 = vsel %vm1481, %v2758, %v3024
      %v3116 = vsel %vm1481, %v2759, %v3026
      %v3119 = vsel %vm1481, %v2760, %v3028
      %v3122 = vsel %vm1481, %v2761, %v3030
      %v3125 = vsel %vm1481, %v2762, %v3032
      %v3128 = vsel %vm1481, %v2763, %v3034
      %v3131 = vsel %vm1481, %v2764, %v3036
      %v3133 = vld [vmem:[%s3 + $0xc0] sm:$0xf]
      %v3134 = vld [vmem:[%s3 + $0xc4] sm:$0xf]
      %v3135 = vld [vmem:[%s3 + $0xc8] sm:$0xf]
      %v3136 = vld [vmem:[%s3 + $0xcc] sm:$0xf]
      %v3137 = vld [vmem:[%s3 + $0xd0] sm:$0xf]
      %v3138 = vld [vmem:[%s3 + $0xd4] sm:$0xf]
      %v3139 = vld [vmem:[%s3 + $0xd8] sm:$0xf]
      %v3140 = vld [vmem:[%s3 + $0xdc] sm:$0xf]
      %v3141 = vld [vmem:[%s3 + $0xe0] sm:$0xf]
      %v3142 = vld [vmem:[%s3 + $0xe4] sm:$0xf]
      %v3143 = vld [vmem:[%s3 + $0xe8] sm:$0xf]
      %v3144 = vld [vmem:[%s3 + $0xec] sm:$0xf]
      %v3145 = vld [vmem:[%s3 + $0xf0] sm:$0xf]
      %v3146 = vld [vmem:[%s3 + $0xf4] sm:$0xf]
      %v3147 = vld [vmem:[%s3 + $0xf8] sm:$0xf]
      %v3148 = vld [vmem:[%s3 + $0xfc] sm:$0xf]
      %v3149 = vld [vmem:[%s3 + $0x100] sm:$0xf]
      %v3150 = vld [vmem:[%s3 + $0x104] sm:$0xf]
      %v3151 = vld [vmem:[%s3 + $0x108] sm:$0xf]
      %v3152 = vld [vmem:[%s3 + $0x10c] sm:$0xf]
      %v3153 = vld [vmem:[%s3 + $0x110] sm:$0xf]
      %v3154 = vld [vmem:[%s3 + $0x114] sm:$0xf]
      %v3155 = vld [vmem:[%s3 + $0x118] sm:$0xf]
      %v3156 = vld [vmem:[%s3 + $0x11c] sm:$0xf]
      %v3181 = vunpack.c.l.b16 %v3133
      %v3182 = vunpack.c.l.b16 %v3134
      %v3183 = vunpack.c.l.b16 %v3135
      %v3184 = vunpack.c.l.b16 %v3136
      %v3185 = vunpack.c.l.b16 %v3137
      %v3186 = vunpack.c.l.b16 %v3138
      %v3187 = vunpack.c.l.b16 %v3139
      %v3188 = vunpack.c.l.b16 %v3140
      %v3189 = vunpack.c.l.b16 %v3141
      %v3190 = vunpack.c.l.b16 %v3142
      %v3191 = vunpack.c.l.b16 %v3143
      %v3192 = vunpack.c.l.b16 %v3144
      %v3193 = vunpack.c.l.b16 %v3145
      %v3194 = vunpack.c.l.b16 %v3146
      %v3195 = vunpack.c.l.b16 %v3147
      %v3196 = vunpack.c.l.b16 %v3148
      %v3197 = vunpack.c.l.b16 %v3149
      %v3198 = vunpack.c.l.b16 %v3150
      %v3199 = vunpack.c.l.b16 %v3151
      %v3200 = vunpack.c.l.b16 %v3152
      %v3201 = vunpack.c.l.b16 %v3153
      %v3202 = vunpack.c.l.b16 %v3154
      %v3203 = vunpack.c.l.b16 %v3155
      %v3204 = vunpack.c.l.b16 %v3156
      %v3205 = vpack.c.b16 %v3182, %v3181
      %v3206 = vpack.c.b16 %v3184, %v3183
      %v3207 = vpack.c.b16 %v3186, %v3185
      %v3208 = vpack.c.b16 %v3188, %v3187
      %v3209 = vpack.c.b16 %v3190, %v3189
      %v3210 = vpack.c.b16 %v3192, %v3191
      %v3211 = vpack.c.b16 %v3194, %v3193
      %v3212 = vpack.c.b16 %v3196, %v3195
      %v3213 = vpack.c.b16 %v3198, %v3197
      %v3214 = vpack.c.b16 %v3200, %v3199
      %v3215 = vpack.c.b16 %v3202, %v3201
      %v3216 = vpack.c.b16 %v3204, %v3203
      %v3230 = vsel %vm1481, %v3039, 0
      %v3233 = vsel %vm1481, %v3042, 0
      %v3236 = vsel %vm1481, %v3045, 0
      %v3239 = vsel %vm1481, %v3048, 0
      %v3242 = vsel %vm1481, %v3051, 0
      %v3245 = vsel %vm1481, %v3054, 0
      %v3248 = vsel %vm1481, %v3057, 0
      %v3251 = vsel %vm1481, %v3060, 0
      %v3254 = vsel %vm1481, %v3063, 0
      %v3257 = vsel %vm1481, %v3066, 0
      %v3260 = vsel %vm1481, %v3069, 0
      %v3263 = vsel %vm1481, %v3072, 0
      %v3266 = vsel %vm1481, %v3075, 0
      %v3269 = vsel %vm1481, %v3078, 0
      %v3272 = vsel %vm1481, %v3081, 0
      %v3275 = vsel %vm1481, %v3084, 0
      %3277 = vmatprep.subr.bf16.mxu0 0
      %3278 = vmatpush1.bf16.msra.mxu0 %v3212
      %3279 = vmatprep.subr.bf16.mxu0 0
      %3280 = vmatpush1.bf16.msra.mxu0 %v3211
      %3281 = vmatprep.subr.bf16.mxu0 0
      %3282 = vmatpush1.bf16.msra.mxu0 %v3210
      %3283 = vmatprep.subr.bf16.mxu0 0
      %3284 = vmatpush1.bf16.msra.mxu0 %v3209
      %3285 = vmatprep.subr.bf16.mxu0 0
      %3286 = vmatpush1.bf16.msra.mxu0 %v3208
      %3287 = vmatprep.subr.bf16.mxu0 0
      %3288 = vmatpush1.bf16.msra.mxu0 %v3207
      %3289 = vmatprep.subr.bf16.mxu0 0
      %3290 = vmatpush1.bf16.msra.mxu0 %v3206
      %3291 = vmatprep.subr.bf16.mxu0 0
      %3292 = vmatpush1.bf16.msra.mxu0 %v3205
      %3293 = vmatprep.subr.bf16.mxu0 0
      %3294 = vmatpush2.bf16.msra.mxu0 0
      %3295 = vmatprep.subr.bf16.mxu0 0
      %3296 = vmatpush2.bf16.msra.mxu0 0
      %3297 = vmatprep.subr.bf16.mxu0 0
      %3298 = vmatpush2.bf16.msra.mxu0 0
      %3299 = vmatprep.subr.bf16.mxu0 0
      %3300 = vmatpush2.bf16.msra.mxu0 0
      %3301 = vmatprep.subr.bf16.mxu0 0
      %3302 = vmatpush2.bf16.msra.mxu0 %v3216
      %3303 = vmatprep.subr.bf16.mxu0 0
      %3304 = vmatpush2.bf16.msra.mxu0 %v3215
      %3305 = vmatprep.subr.bf16.mxu0 0
      %3306 = vmatpush2.bf16.msra.mxu0 %v3214
      %3307 = vmatprep.subr.bf16.mxu0 0
      %3308 = vmatpush2.bf16.msra.mxu0 %v3213
      %3309 = vmatprep.mubr.bf16.mxu0 %v3230
      %3310 = vmatmul.mubr.bf16.gmra.mxu0 %v3086
      %v3311 = vpop.f32.mrf.mxu0
      %v3312 = vadd.f32 0.0, %v3311
      %v3313 = vpop.f32.mrf.mxu0
      %v3314 = vpop.f32.mrf.mxu0
      %v3315 = vadd.f32 0.0, %v3314
      %v3316 = vpop.f32.mrf.mxu0
      %3317 = vmatprep.mubr.bf16.mxu0 %v3233
      %3318 = vmatmul.mubr.bf16.gmra.mxu0 %v3089
      %v3319 = vpop.f32.mrf.mxu0
      %v3320 = vadd.f32 0.0, %v3319
      %v3321 = vpop.f32.mrf.mxu0
      %v3322 = vpop.f32.mrf.mxu0
      %v3323 = vadd.f32 0.0, %v3322
      %v3324 = vpop.f32.mrf.mxu0
      %3325 = vmatprep.mubr.bf16.mxu0 %v3236
      %3326 = vmatmul.mubr.bf16.gmra.mxu0 %v3092
      %v3327 = vpop.f32.mrf.mxu0
      %v3328 = vadd.f32 0.0, %v3327
      %v3329 = vpop.f32.mrf.mxu0
      %v3330 = vpop.f32.mrf.mxu0
      %v3331 = vadd.f32 0.0, %v3330
      %v3332 = vpop.f32.mrf.mxu0
      %3333 = vmatprep.mubr.bf16.mxu0 %v3239
      %3334 = vmatmul.mubr.bf16.gmra.mxu0 %v3095
      %v3335 = vpop.f32.mrf.mxu0
      %v3336 = vadd.f32 0.0, %v3335
      %v3337 = vpop.f32.mrf.mxu0
      %v3338 = vpop.f32.mrf.mxu0
      %v3339 = vadd.f32 0.0, %v3338
      %v3340 = vpop.f32.mrf.mxu0
      %3341 = vmatprep.mubr.bf16.mxu0 %v3242
      %3342 = vmatmul.mubr.bf16.gmra.mxu0 %v3098
      %v3343 = vpop.f32.mrf.mxu0
      %v3344 = vadd.f32 0.0, %v3343
      %v3345 = vpop.f32.mrf.mxu0
      %v3346 = vpop.f32.mrf.mxu0
      %v3347 = vadd.f32 0.0, %v3346
      %v3348 = vpop.f32.mrf.mxu0
      %3349 = vmatprep.mubr.bf16.mxu0 %v3245
      %3350 = vmatmul.mubr.bf16.gmra.mxu0 %v3101
      %v3351 = vpop.f32.mrf.mxu0
      %v3352 = vadd.f32 0.0, %v3351
      %v3353 = vpop.f32.mrf.mxu0
      %v3354 = vpop.f32.mrf.mxu0
      %v3355 = vadd.f32 0.0, %v3354
      %v3356 = vpop.f32.mrf.mxu0
      %3357 = vmatprep.mubr.bf16.mxu0 %v3248
      %3358 = vmatmul.mubr.bf16.gmra.mxu0 %v3104
      %v3359 = vpop.f32.mrf.mxu0
      %v3360 = vadd.f32 0.0, %v3359
      %v3361 = vpop.f32.mrf.mxu0
      %v3362 = vpop.f32.mrf.mxu0
      %v3363 = vadd.f32 0.0, %v3362
      %v3364 = vpop.f32.mrf.mxu0
      %3365 = vmatprep.mubr.bf16.mxu0 %v3251
      %3366 = vmatmul.mubr.bf16.gmra.mxu0 %v3107
      %v3367 = vpop.f32.mrf.mxu0
      %v3368 = vadd.f32 0.0, %v3367
      %v3369 = vpop.f32.mrf.mxu0
      %v3370 = vpop.f32.mrf.mxu0
      %v3371 = vadd.f32 0.0, %v3370
      %v3372 = vpop.f32.mrf.mxu0
      %3373 = vmatprep.mubr.bf16.mxu0 %v3254
      %3374 = vmatmul.mubr.bf16.gmra.mxu0 %v3110
      %v3375 = vpop.f32.mrf.mxu0
      %v3376 = vadd.f32 0.0, %v3375
      %v3377 = vpop.f32.mrf.mxu0
      %v3378 = vpop.f32.mrf.mxu0
      %v3379 = vadd.f32 0.0, %v3378
      %v3380 = vpop.f32.mrf.mxu0
      %3381 = vmatprep.mubr.bf16.mxu0 %v3257
      %3382 = vmatmul.mubr.bf16.gmra.mxu0 %v3113
      %v3383 = vpop.f32.mrf.mxu0
      %v3384 = vadd.f32 0.0, %v3383
      %v3385 = vpop.f32.mrf.mxu0
      %v3386 = vpop.f32.mrf.mxu0
      %v3387 = vadd.f32 0.0, %v3386
      %v3388 = vpop.f32.mrf.mxu0
      %3389 = vmatprep.mubr.bf16.mxu0 %v3260
      %3390 = vmatmul.mubr.bf16.gmra.mxu0 %v3116
      %v3391 = vpop.f32.mrf.mxu0
      %v3392 = vadd.f32 0.0, %v3391
      %v3393 = vpop.f32.mrf.mxu0
      %v3394 = vpop.f32.mrf.mxu0
      %v3395 = vadd.f32 0.0, %v3394
      %v3396 = vpop.f32.mrf.mxu0
      %3397 = vmatprep.mubr.bf16.mxu0 %v3263
      %3398 = vmatmul.mubr.bf16.gmra.mxu0 %v3119
      %v3399 = vpop.f32.mrf.mxu0
      %v3400 = vadd.f32 0.0, %v3399
      %v3401 = vpop.f32.mrf.mxu0
      %v3402 = vpop.f32.mrf.mxu0
      %v3403 = vadd.f32 0.0, %v3402
      %v3404 = vpop.f32.mrf.mxu0
      %3405 = vmatprep.mubr.bf16.mxu0 %v3266
      %3406 = vmatmul.mubr.bf16.gmra.mxu0 %v3122
      %v3407 = vpop.f32.mrf.mxu0
      %v3408 = vadd.f32 0.0, %v3407
      %v3409 = vpop.f32.mrf.mxu0
      %v3410 = vpop.f32.mrf.mxu0
      %v3411 = vadd.f32 0.0, %v3410
      %v3412 = vpop.f32.mrf.mxu0
      %3413 = vmatprep.mubr.bf16.mxu0 %v3269
      %3414 = vmatmul.mubr.bf16.gmra.mxu0 %v3125
      %v3415 = vpop.f32.mrf.mxu0
      %v3416 = vadd.f32 0.0, %v3415
      %v3417 = vpop.f32.mrf.mxu0
      %v3418 = vpop.f32.mrf.mxu0
      %v3419 = vadd.f32 0.0, %v3418
      %v3420 = vpop.f32.mrf.mxu0
      %3421 = vmatprep.mubr.bf16.mxu0 %v3272
      %3422 = vmatmul.mubr.bf16.gmra.mxu0 %v3128
      %v3423 = vpop.f32.mrf.mxu0
      %v3424 = vadd.f32 0.0, %v3423
      %v3425 = vpop.f32.mrf.mxu0
      %v3426 = vpop.f32.mrf.mxu0
      %v3427 = vadd.f32 0.0, %v3426
      %v3428 = vpop.f32.mrf.mxu0
      %3429 = vmatprep.mubr.bf16.mxu0 %v3275
      %3430 = vmatmul.mubr.bf16.gmra.mxu0 %v3131
      %v3431 = vpop.f32.mrf.mxu0
      %v3432 = vadd.f32 0.0, %v3431
      %v3433 = vpop.f32.mrf.mxu0
      %v3434 = vpop.f32.mrf.mxu0
      %v3435 = vadd.f32 0.0, %v3434
      %v3436 = vpop.f32.mrf.mxu0
      %3437 = vdwg.mxu0
      %v3438 = vadd.f32 %v2510, %v3312
      %v3439 = vadd.f32 %v2513, %v3315
      %v3440 = vadd.f32 %v2518, %v3320
      %v3441 = vadd.f32 %v2521, %v3323
      %v3442 = vadd.f32 %v2526, %v3328
      %v3443 = vadd.f32 %v2529, %v3331
      %v3444 = vadd.f32 %v2534, %v3336
      %v3445 = vadd.f32 %v2537, %v3339
      %v3446 = vadd.f32 %v2542, %v3344
      %v3447 = vadd.f32 %v2545, %v3347
      %v3448 = vadd.f32 %v2550, %v3352
      %v3449 = vadd.f32 %v2553, %v3355
      %v3450 = vadd.f32 %v2558, %v3360
      %v3451 = vadd.f32 %v2561, %v3363
      %v3452 = vadd.f32 %v2566, %v3368
      %v3453 = vadd.f32 %v2569, %v3371
      %v3454 = vadd.f32 %v2574, %v3376
      %v3455 = vadd.f32 %v2577, %v3379
      %v3456 = vadd.f32 %v2582, %v3384
      %v3457 = vadd.f32 %v2585, %v3387
      %v3458 = vadd.f32 %v2590, %v3392
      %v3459 = vadd.f32 %v2593, %v3395
      %v3460 = vadd.f32 %v2598, %v3400
      %v3461 = vadd.f32 %v2601, %v3403
      %v3462 = vadd.f32 %v2606, %v3408
      %v3463 = vadd.f32 %v2609, %v3411
      %v3464 = vadd.f32 %v2614, %v3416
      %v3465 = vadd.f32 %v2617, %v3419
      %v3466 = vadd.f32 %v2622, %v3424
      %v3467 = vadd.f32 %v2625, %v3427
      %v3468 = vadd.f32 %v2630, %v3432
      %v3469 = vadd.f32 %v2633, %v3435
      %v3470 = vld [vmem:[%s4] sm:$0x1]
      %v3472 = vlaneseq
      %v3473 = vshrl.u32 %v3472, 7
      %v3474 = vsub.s32 0, %v3473
      %v3475 = vrot.slane %v3470, %v3474
      %v3477 = vadd.f32 %v3438, %v3475
      %v3478 = vadd.f32 %v3439, %v3475
      %v3479 = vadd.f32 %v3440, %v3475
      %v3480 = vadd.f32 %v3441, %v3475
      %v3481 = vadd.f32 %v3442, %v3475
      %v3482 = vadd.f32 %v3443, %v3475
      %v3483 = vadd.f32 %v3444, %v3475
      %v3484 = vadd.f32 %v3445, %v3475
      %v3485 = vadd.f32 %v3446, %v3475
      %v3486 = vadd.f32 %v3447, %v3475
      %v3487 = vadd.f32 %v3448, %v3475
      %v3488 = vadd.f32 %v3449, %v3475
      %v3489 = vadd.f32 %v3450, %v3475
      %v3490 = vadd.f32 %v3451, %v3475
      %v3491 = vadd.f32 %v3452, %v3475
      %v3492 = vadd.f32 %v3453, %v3475
      %v3493 = vadd.f32 %v3454, %v3475
      %v3494 = vadd.f32 %v3455, %v3475
      %v3495 = vadd.f32 %v3456, %v3475
      %v3496 = vadd.f32 %v3457, %v3475
      %v3497 = vadd.f32 %v3458, %v3475
      %v3498 = vadd.f32 %v3459, %v3475
      %v3499 = vadd.f32 %v3460, %v3475
      %v3500 = vadd.f32 %v3461, %v3475
      %v3501 = vadd.f32 %v3462, %v3475
      %v3502 = vadd.f32 %v3463, %v3475
      %v3503 = vadd.f32 %v3464, %v3475
      %v3504 = vadd.f32 %v3465, %v3475
      %v3505 = vadd.f32 %v3466, %v3475
      %v3506 = vadd.f32 %v3467, %v3475
      %v3507 = vadd.f32 %v3468, %v3475
      %v3508 = vadd.f32 %v3469, %v3475
      %v3509 = vtanh.pop %v3477
      %v3510 = vtanh.pop %v3478
      %v3511 = vtanh.pop %v3479
      %v3512 = vtanh.pop %v3480
      %v3513 = vtanh.pop %v3481
      %v3514 = vtanh.pop %v3482
      %v3515 = vtanh.pop %v3483
      %v3516 = vtanh.pop %v3484
      %v3517 = vtanh.pop %v3485
      %v3518 = vtanh.pop %v3486
      %v3519 = vtanh.pop %v3487
      %v3520 = vtanh.pop %v3488
      %v3521 = vtanh.pop %v3489
      %v3522 = vtanh.pop %v3490
      %v3523 = vtanh.pop %v3491
      %v3524 = vtanh.pop %v3492
      %v3525 = vtanh.pop %v3493
      %v3526 = vtanh.pop %v3494
      %v3527 = vtanh.pop %v3495
      %v3528 = vtanh.pop %v3496
      %v3529 = vtanh.pop %v3497
      %v3530 = vtanh.pop %v3498
      %v3531 = vtanh.pop %v3499
      %v3532 = vtanh.pop %v3500
      %v3533 = vtanh.pop %v3501
      %v3534 = vtanh.pop %v3502
      %v3535 = vtanh.pop %v3503
      %v3536 = vtanh.pop %v3504
      %v3537 = vtanh.pop %v3505
      %v3538 = vtanh.pop %v3506
      %v3539 = vtanh.pop %v3507
      %v3540 = vtanh.pop %v3508
      %3541 = vst [vmem:[%s224] sm:$0xff] %v3509
      %3542 = vst [vmem:[%s224 + $0x8] sm:$0xff] %v3510
      %3543 = vst [vmem:[%s224 + $0x10] sm:$0xff] %v3511
      %3544 = vst [vmem:[%s224 + $0x18] sm:$0xff] %v3512
      %3545 = vst [vmem:[%s224 + $0x20] sm:$0xff] %v3513
      %3546 = vst [vmem:[%s224 + $0x28] sm:$0xff] %v3514
      %3547 = vst [vmem:[%s224 + $0x30] sm:$0xff] %v3515
      %3548 = vst [vmem:[%s224 + $0x38] sm:$0xff] %v3516
      %3549 = vst [vmem:[%s224 + $0x40] sm:$0xff] %v3517
      %3550 = vst [vmem:[%s224 + $0x48] sm:$0xff] %v3518
      %3551 = vst [vmem:[%s224 + $0x50] sm:$0xff] %v3519
      %3552 = vst [vmem:[%s224 + $0x58] sm:$0xff] %v3520
      %3553 = vst [vmem:[%s224 + $0x60] sm:$0xff] %v3521
      %3554 = vst [vmem:[%s224 + $0x68] sm:$0xff] %v3522
      %3555 = vst [vmem:[%s224 + $0x70] sm:$0xff] %v3523
      %3556 = vst [vmem:[%s224 + $0x78] sm:$0xff] %v3524
      %3557 = vst [vmem:[%s224 + $0x80] sm:$0xff] %v3525
      %3558 = vst [vmem:[%s224 + $0x88] sm:$0xff] %v3526
      %3559 = vst [vmem:[%s224 + $0x90] sm:$0xff] %v3527
      %3560 = vst [vmem:[%s224 + $0x98] sm:$0xff] %v3528
      %3561 = vst [vmem:[%s224 + $0xa0] sm:$0xff] %v3529
      %3562 = vst [vmem:[%s224 + $0xa8] sm:$0xff] %v3530
      %3563 = vst [vmem:[%s224 + $0xb0] sm:$0xff] %v3531
      %3564 = vst [vmem:[%s224 + $0xb8] sm:$0xff] %v3532
      %3565 = vst [vmem:[%s224 + $0xc0] sm:$0xff] %v3533
      %3566 = vst [vmem:[%s224 + $0xc8] sm:$0xff] %v3534
      %3567 = vst [vmem:[%s224 + $0xd0] sm:$0xff] %v3535
      %3568 = vst [vmem:[%s224 + $0xd8] sm:$0xff] %v3536
      %3569 = vst [vmem:[%s224 + $0xe0] sm:$0xff] %v3537
      %3570 = vst [vmem:[%s224 + $0xe8] sm:$0xff] %v3538
      %3571 = vst [vmem:[%s224 + $0xf0] sm:$0xff] %v3539
      %3572 = vst [vmem:[%s224 + $0xf8] sm:$0xff] %v3540
      %s3573 = smul.u32 32, %s16
      %p3574 = scmp.lt.s32.totalorder %s3573, 63
      %s3575 = scalar_select %p3574, %s3573, 63
      %s3576 = smul.addr %s3575, 8
      %s3577 = scalar_lea.vmem %s5, %s3576
      // Predicated region
      $region45: #{generator_forward.7} parent=39 // pred_check
        %p3578 = pneg %p144
      $region46: #{generator_forward.7} parent=39 // pred_check_branch
        %3580 = sbr.rel (%p3578) target = $region48
      $region47: #{generator_forward.7} parent=39 // pred_region
        %s3581 = smul.u32 32, %s16
      $region48: #{generator_forward.7} parent=39 // pred_fallthru
        _
    $region40: #{generator_forward.7} parent=5 // pred_fallthru
      _
    %p3582 = scmp.le.s32.totalorder 2, %s11
    // Predicated region
    $region49: #{generator_forward.7} parent=5 // pred_check
      %p3583 = pneg %p3582
    $region50: #{generator_forward.7} parent=5 // pred_check_branch
      %3585 = sbr.rel (%p3583) target = $region52
    $region51: #{generator_forward.7} parent=5 // pred_region
      %s3586 = ssub.s32 %s11, 2
      // Predicated region
      $region53: #{generator_forward.7} parent=51 // pred_check
        %p3587 = pneg %p150
      $region54: #{generator_forward.7} parent=51 // pred_check_branch
        %3589 = sbr.rel (%p3587) target = $region56
      $region55: #{generator_forward.7} parent=51 // pred_region
        %s3590 = smul.u32 32, %s17
        %p3591 = scmp.lt.s32.totalorder %s3590, 63
        %s3592 = scalar_select %p3591, %s3590, 63
        %s3593 = smul.addr %s3592, 8
        %s3594 = scalar_lea.vmem %s5, %s3593
      $region56: #{generator_forward.7} parent=51 // pred_fallthru
        _
    $region52: #{generator_forward.7} parent=5 // pred_fallthru
      _
  $region6: #{generator_forward.7} parent=0 // loop_footer
    %s15 = sadd.s32 1, %s11
  $region7: #{generator_forward.7} parent=0 // loop_footer_branch
    %10 = sbr.rel target = $region3
  $region8: #{generator_forward.7} parent=0 // loop_exit
    _

</llo_original>
